<compile_context>
chip_gen: v5e
topology: v5e:2x2
jax: 0.10.0
libtpu: 0.0.40
codegen_flags: <defaults>
</compile_context>

<pallas_src>
import functools
import math

import jax
import jax.numpy as jnp
import numpy as np
from jax.experimental import pallas as pl
from jax.experimental.pallas import tpu as pltpu

BN_EPS = 1e-5
BN_EVAL_SCALE = 1.0 / math.sqrt(1.0 + BN_EPS)  # eval BatchNorm3d(affine=False), default stats


# --------------------------------------------------------------------------
# Host-side precomputation: expanded weights and 0/1 selection matrices
# --------------------------------------------------------------------------
def _expand_conv_weight(w, W):
    """(3,3,3,Cin,Cout) -> bf16 (3,3,W*Cin,W*Cout); absorbs the W zero-padding."""
    k = jnp.arange(3)[:, None, None]
    wi = jnp.arange(W)[None, :, None]
    wo = jnp.arange(W)[None, None, :]
    sel = (wi == wo + k - 1).astype(w.dtype)                  # (3, W, W)
    we = jnp.einsum("kpq,dhkco->dhpcqo", sel, w)              # (3,3,W,Cin,W,Cout)
    cin, cout = w.shape[3], w.shape[4]
    return we.reshape(3, 3, W * cin, W * cout).astype(jnp.bfloat16)


def _tile_bias(b, W):
    return jnp.tile(b, W).reshape(1, W * b.shape[0]).astype(jnp.float32)


def _halo_from_compact(D, H):
    """((D+2)*(H+2), D*H): scatter compact rows (d*H+h) into the zero-haloed layout."""
    H2 = H + 2
    m = np.zeros(((D + 2) * H2, D * H), np.float32)
    for d in range(D):
        for h in range(H):
            m[(d + 1) * H2 + (h + 1), d * H + h] = 1.0
    return m


def _halo_from_padded(D, H, nr_in):
    """((D+2)*(H+2), nr_in): scatter padded-row conv outputs (d*(H+2)+h, h<H) into the
    zero-haloed layout, dropping the h>=H halo-crossing garbage rows."""
    H2 = H + 2
    m = np.zeros(((D + 2) * H2, nr_in), np.float32)
    for d in range(D):
        for h in range(H):
            src = d * H2 + h
            if src < nr_in:
                m[(d + 1) * H2 + (h + 1), src] = 1.0
    return m


def _pool_row_selectors(D, H, nr_in, nr_out):
    """(4, nr_out, nr_in): the four (dd,hh) candidate-row picks of the 2x2x2 max pool,
    padded-row full res -> padded-row half res."""
    H2, Do, Ho = H + 2, D // 2, H // 2
    Ho2 = Ho + 2
    m = np.zeros((4, nr_out, nr_in), np.float32)
    for j, (dd, hh) in enumerate(((0, 0), (0, 1), (1, 0), (1, 1))):
        for do in range(Do):
            for ho in range(Ho):
                m[j, do * Ho2 + ho, (2 * do + dd) * H2 + (2 * ho + hh)] = 1.0
    return m


def _pool_lane_selectors(W, C):
    """(2, W*C, (W//2)*C): the two (ww) candidate-lane picks of the pool (channel-preserving)."""
    Wo = W // 2
    m = np.zeros((2, W * C, Wo * C), np.float32)
    for j in range(2):
        for wo in range(Wo):
            for c in range(C):
                m[j, (2 * wo + j) * C + c, wo * C + c] = 1.0
    return m


def _upsample_row_selector(D, H, nr_in):
    """((D+2)*(H+2), nr_in): nearest D/H upsample of the half-res padded-row bottom output
    straight into the zero-haloed full-res layout."""
    H2, Ho2 = H + 2, H // 2 + 2
    m = np.zeros(((D + 2) * H2, nr_in), np.float32)
    for d in range(D):
        for h in range(H):
            m[(d + 1) * H2 + (h + 1), (d // 2) * Ho2 + (h // 2)] = 1.0
    return m


def _concat_lane_selectors(W, C1, C2):
    """Ty (W*C1, W*Cc) places y channels; Tz ((W//2)*C2, W*Cc) places the W-upsampled
    (implicitly right-padded) bottom channels after C1."""
    Wo, Cc = W // 2, C1 + C2
    ty = np.zeros((W * C1, W * Cc), np.float32)
    tz = np.zeros((Wo * C2, W * Cc), np.float32)
    for w in range(W):
        for c in range(C1):
            ty[w * C1 + c, w * Cc + c] = 1.0
        if w // 2 < Wo:
            for c in range(C2):
                tz[(w // 2) * C2 + c, w * Cc + C1 + c] = 1.0
    return ty, tz


def _dense_out_selectors(D, H, W, C1, nr_in):
    """E (2, D*H//2, nr_in) row picks + L (2, W*C1, 2*W*C1) lane placements: fold pairs of
    h-rows into 128-lane output rows for a lane-dense HBM store."""
    H2 = H + 2
    e = np.zeros((2, D * H // 2, nr_in), np.float32)
    for j in range(2):
        for r in range(D * H // 2):
            i = 2 * r + j
            e[j, r, (i // H) * H2 + (i % H)] = 1.0
    l = np.zeros((2, W * C1, 2 * W * C1), np.float32)
    for j in range(2):
        for c in range(W * C1):
            l[j, c, j * W * C1 + c] = 1.0
    return e, l


# --------------------------------------------------------------------------
# Fused kernel: down(+pool) -> bottom -> up, whole volume per batch in VMEM
# --------------------------------------------------------------------------
def _unet3d_fused_kernel(
        x_ref, sx_ref, pf_ref, pfb_ref, rp_ref, sp_ref, uz_ref, ty_ref, tz_ref,
        eo_ref, lo_ref,
        wd1_ref, bd1_ref, wd2_ref, bd2_ref,
        wb1_ref, bb1_ref, wb2_ref, bb2_ref,
        wu1_ref, bu1_ref, wu2_ref, bu2_ref,
        o_ref,
        xp, a1p, y_s, pp, g1p, catp, u1p,
        *, D, H, Do, Ho, bn_scale, neg_slope):
    H2, Ho2 = H + 2, Ho + 2
    nrf = D * H2 - 2          # full-res padded-row count (last 2 garbage rows dropped)
    nrb = Do * Ho2 - 2        # half-res padded-row count
    bf16 = jnp.bfloat16

    def dotf(a, b):
        return jnp.dot(a, b, preferred_element_type=jnp.float32)

    def conv9(src, w_ref, nrows, h2):
        # one (nrows, W*Cin) x (W*Cin, W*Cout) MXU dot per (kd, kh) tap, batched over depth
        acc = None
        for kd in range(3):
            for kh in range(3):
                off = kd * h2 + kh
                t = dotf(src[off:off + nrows, :].astype(bf16), w_ref[kd, kh])
                acc = t if acc is None else acc + t
        return acc

    # ---- down block: Conv(C0->C1) + LeakyReLU(True) + Conv(C1->C1) (+ Dropout3d eval=id) ----
    xp[...] = dotf(sx_ref[...], x_ref[0].astype(bf16))          # zero-haloed input fill
    a1 = conv9(xp, wd1_ref, nrf, H2) + bd1_ref[...]
    a1 = jnp.where(a1 >= 0.0, a1, a1 * neg_slope)               # nn.LeakyReLU(True): slope==1
    a1p[...] = dotf(pf_ref[...], a1.astype(bf16))
    y = conv9(a1p, wd2_ref, nrf, H2) + bd2_ref[...]             # skip-connection activation
    y_s[...] = y                                                # padded-row layout, f32

    # ---- fused MaxPool3d(2): 4 row-pair picks + 2 lane-pair picks + elementwise max ----------
    yb = y_s[...].astype(bf16)
    m = dotf(rp_ref[0], yb)
    for j in range(1, 4):
        m = jnp.maximum(m, dotf(rp_ref[j], yb))                 # depth/height pairs
    mb = m.astype(bf16)                                         # exact (values already bf16)
    pooled = jnp.maximum(dotf(mb, sp_ref[0]), dotf(mb, sp_ref[1]))   # width pairs
    pp[...] = dotf(pfb_ref[...], pooled.astype(bf16))

    # ---- bottom block: Conv + ReLU + Conv + eval BatchNorm3d(affine=False) -------------------
    g1 = conv9(pp, wb1_ref, nrb, Ho2) + bb1_ref[...]
    g1 = jnp.maximum(g1, 0.0)
    g1p[...] = dotf(pfb_ref[...], g1.astype(bf16))
    bot = (conv9(g1p, wb2_ref, nrb, Ho2) + bb2_ref[...]) * bn_scale

    # ---- up block: upsample + right-pad + concat via selectors, then Conv + ReLU + Conv ------
    cat_y = dotf(dotf(pf_ref[...], y_s[...].astype(bf16)).astype(bf16), ty_ref[...])
    cat_z = dotf(dotf(uz_ref[...], bot.astype(bf16)).astype(bf16), tz_ref[...])
    catp[...] = cat_y + cat_z
    u1 = conv9(catp, wu1_ref, nrf, H2) + bu1_ref[...]
    u1 = jnp.maximum(u1, 0.0)
    u1p[...] = dotf(pf_ref[...], u1.astype(bf16))
    out = conv9(u1p, wu2_ref, nrf, H2) + bu2_ref[...]           # (nrf, W*C1) f32

    # ---- lane-dense (2*W*C1 >= 128 lane) output store (exact f32 0/1 selections) -------------
    o_ref[0] = (dotf(dotf(eo_ref[0], out), lo_ref[0])
                + dotf(dotf(eo_ref[1], out), lo_ref[1]))


# --------------------------------------------------------------------------
# Forward pass wrapper
# --------------------------------------------------------------------------
def unet3d_layer_forward(x, p):
    N, D, H, W, C0 = x.shape
    C1 = p["d1_w"].shape[-1]
    C2 = p["b1_w"].shape[-1]
    assert D % 2 == 0 and H % 2 == 0 and W % 2 == 0, "even spatial dims assumed"
    Do, Ho, Wo = D // 2, H // 2, W // 2
    Cc = C1 + C2
    H2, Ho2 = H + 2, Ho + 2
    nrf = D * H2 - 2
    nrb = Do * Ho2 - 2
    bf = jnp.bfloat16

    x2 = x.reshape(N, D * H, W * C0).astype(jnp.float32)        # free row-major reshape

    # expanded (kw-folded) conv weights + tiled biases
    wd1, bd1 = _expand_conv_weight(p["d1_w"], W), _tile_bias(p["d1_b"], W)
    wd2, bd2 = _expand_conv_weight(p["d2_w"], W), _tile_bias(p["d2_b"], W)
    wb1, bb1 = _expand_conv_weight(p["b1_w"], Wo), _tile_bias(p["b1_b"], Wo)
    wb2, bb2 = _expand_conv_weight(p["b2_w"], Wo), _tile_bias(p["b2_b"], Wo)
    wu1, bu1 = _expand_conv_weight(p["u1_w"], W), _tile_bias(p["u1_b"], W)
    wu2, bu2 = _expand_conv_weight(p["u2_w"], W), _tile_bias(p["u2_b"], W)

    # 0/1 layout/selection matrices (compile-time constants; exact in bf16)
    sx = jnp.asarray(_halo_from_compact(D, H), bf)
    pf = jnp.asarray(_halo_from_padded(D, H, nrf), bf)
    pfb = jnp.asarray(_halo_from_padded(Do, Ho, nrb), bf)
    rp = jnp.asarray(_pool_row_selectors(D, H, nrf, nrb), bf)
    sp = jnp.asarray(_pool_lane_selectors(W, C1), bf)
    uz = jnp.asarray(_upsample_row_selector(D, H, nrb), bf)
    ty_np, tz_np = _concat_lane_selectors(W, C1, C2)
    ty, tz = jnp.asarray(ty_np, bf), jnp.asarray(tz_np, bf)
    eo_np, lo_np = _dense_out_selectors(D, H, W, C1, nrf)
    eo, lo = jnp.asarray(eo_np, jnp.float32), jnp.asarray(lo_np, jnp.float32)

    kern = functools.partial(_unet3d_fused_kernel, D=D, H=H, Do=Do, Ho=Ho,
                             bn_scale=BN_EVAL_SCALE, neg_slope=1.0)

    def cspec(shape):
        zeros = (0,) * len(shape)
        return pl.BlockSpec(tuple(shape), lambda n, _z=zeros: _z)

    out = pl.pallas_call(
        kern,
        out_shape=jax.ShapeDtypeStruct((N, D * H // 2, 2 * W * C1), jnp.float32),
        grid=(N,),
        in_specs=[
            pl.BlockSpec((1, D * H, W * C0), lambda n: (n, 0, 0)),
            cspec(sx.shape), cspec(pf.shape), cspec(pfb.shape),
            cspec(rp.shape), cspec(sp.shape), cspec(uz.shape),
            cspec(ty.shape), cspec(tz.shape), cspec(eo.shape), cspec(lo.shape),
            cspec(wd1.shape), cspec(bd1.shape), cspec(wd2.shape), cspec(bd2.shape),
            cspec(wb1.shape), cspec(bb1.shape), cspec(wb2.shape), cspec(bb2.shape),
            cspec(wu1.shape), cspec(bu1.shape), cspec(wu2.shape), cspec(bu2.shape),
        ],
        out_specs=pl.BlockSpec((1, D * H // 2, 2 * W * C1), lambda n: (n, 0, 0)),
        scratch_shapes=[
            pltpu.VMEM(((D + 2) * H2, W * C0), jnp.float32),      # xp   : haloed input
            pltpu.VMEM(((D + 2) * H2, W * C1), jnp.float32),      # a1p  : haloed down act1
            pltpu.VMEM((nrf, W * C1), jnp.float32),               # y_s  : skip (padded rows)
            pltpu.VMEM(((Do + 2) * Ho2, Wo * C1), jnp.float32),   # pp   : haloed pooled
            pltpu.VMEM(((Do + 2) * Ho2, Wo * C2), jnp.float32),   # g1p  : haloed bottom act1
            pltpu.VMEM(((D + 2) * H2, W * Cc), jnp.float32),      # catp : haloed concat
            pltpu.VMEM(((D + 2) * H2, W * C1), jnp.float32),      # u1p  : haloed up act1
        ],
        compiler_params=pltpu.CompilerParams(dimension_semantics=("parallel",)),
    )(x2, sx, pf, pfb, rp, sp, uz, ty, tz, eo, lo,
      wd1, bd1, wd2, bd2, wb1, bb1, wb2, bb2, wu1, bu1, wu2, bu2)

    return out.reshape(N, D, H, W, C1)                           # free row-major reshape


def init_params(key, channels=(4, 8, 16)):
    c0, c1, c2 = channels
    shapes = {"d1": (c0, c1), "d2": (c1, c1),
              "b1": (c1, c2), "b2": (c2, c2),
              "u1": (c1 + c2, c1), "u2": (c1, c1)}
    params = {}
    for name, (cin, cout) in shapes.items():
        key, kw, kb = jax.random.split(key, 3)
        bound = 1.0 / math.sqrt(cin * 27)                 # PyTorch Conv3d default bound
        params[name + "_w"] = jax.random.uniform(
            kw, (3, 3, 3, cin, cout), jnp.float32, -bound, bound)
        params[name + "_b"] = jax.random.uniform(
            kb, (cout,), jnp.float32, -bound, bound)
    return params


# --------------------------------------------------------------------------
# Pure-JAX reference (correctness check only)
# --------------------------------------------------------------------------
def _upsample_nearest2(x):
    x = jnp.repeat(x, 2, axis=1)
    x = jnp.repeat(x, 2, axis=2)
    x = jnp.repeat(x, 2, axis=3)
    return x


def _ref_conv(x, w, b, act="none", negative_slope=0.01, out_scale=1.0):
    out = jax.lax.conv_general_dilated(
        x, w, window_strides=(1, 1, 1), padding=((1, 1), (1, 1), (1, 1)),
        dimension_numbers=("NDHWC", "DHWIO", "NDHWC"),
        precision=jax.lax.Precision.HIGHEST) + b
    if act == "relu":
        out = jnp.maximum(out, 0.0)
    elif act == "leaky_relu":
        out = jnp.where(out >= 0.0, out, out * negative_slope)
    return out * out_scale


def _ref_forward(x, p):
    h = _ref_conv(x, p["d1_w"], p["d1_b"], act="leaky_relu", negative_slope=1.0)
    y = _ref_conv(h, p["d2_w"], p["d2_b"])
    pooled = jax.lax.reduce_window(y, -jnp.inf, jax.lax.max,
                                   (1, 2, 2, 2, 1), (1, 2, 2, 2, 1), "VALID")
    g = _ref_conv(pooled, p["b1_w"], p["b1_b"], act="relu")
    bot = _ref_conv(g, p["b2_w"], p["b2_b"], out_scale=BN_EVAL_SCALE)
    z = _upsample_nearest2(bot)
    cat = jnp.concatenate([y, z], axis=-1)
    u = _ref_conv(cat, p["u1_w"], p["u1_b"], act="relu")
    return _ref_conv(u, p["u2_w"], p["u2_b"])


if __name__ == "__main__":
    key = jax.random.PRNGKey(0)
    kx, kp = jax.random.split(key)
    N, D, H, W = 2, 8, 8, 8
    channels = (4, 8, 16)

    x = jax.random.normal(kx, (N, D, H, W, channels[0]), jnp.float32)
    params = init_params(kp, channels)

    out = jax.jit(unet3d_layer_forward)(x, params)
    out = jax.block_until_ready(out)
    assert out.shape == (N, D, H, W, channels[1]), out.shape

    ref = _ref_forward(x, params)
    # tolerance reflects bf16 MXU operands (f32 accumulation) through 6 chained convs
    np.testing.assert_allclose(np.asarray(out), np.asarray(ref), rtol=1e-2, atol=1e-2)
    print("KERNEL_OK")
</pallas_src>

<mosaic_0001>
module attributes {stable_mosaic.version = 11 : i64} {
  func.func @_unet3d_fused_kernel(%arg0: i32, %arg1: memref<1x64x32xf32, #tpu.memory_space<vmem>>, %arg2: memref<100x64xbf16, #tpu.memory_space<vmem>>, %arg3: memref<100x78xbf16, #tpu.memory_space<vmem>>, %arg4: memref<36x22xbf16, #tpu.memory_space<vmem>>, %arg5: memref<4x22x78xbf16, #tpu.memory_space<vmem>>, %arg6: memref<2x64x32xbf16, #tpu.memory_space<vmem>>, %arg7: memref<100x22xbf16, #tpu.memory_space<vmem>>, %arg8: memref<64x192xbf16, #tpu.memory_space<vmem>>, %arg9: memref<64x192xbf16, #tpu.memory_space<vmem>>, %arg10: memref<2x32x78xf32, #tpu.memory_space<vmem>>, %arg11: memref<2x64x128xf32, #tpu.memory_space<vmem>>, %arg12: memref<3x3x32x64xbf16, #tpu.memory_space<vmem>>, %arg13: memref<1x64xf32, #tpu.memory_space<vmem>>, %arg14: memref<3x3x64x64xbf16, #tpu.memory_space<vmem>>, %arg15: memref<1x64xf32, #tpu.memory_space<vmem>>, %arg16: memref<3x3x32x64xbf16, #tpu.memory_space<vmem>>, %arg17: memref<1x64xf32, #tpu.memory_space<vmem>>, %arg18: memref<3x3x64x64xbf16, #tpu.memory_space<vmem>>, %arg19: memref<1x64xf32, #tpu.memory_space<vmem>>, %arg20: memref<3x3x192x64xbf16, #tpu.memory_space<vmem>>, %arg21: memref<1x64xf32, #tpu.memory_space<vmem>>, %arg22: memref<3x3x64x64xbf16, #tpu.memory_space<vmem>>, %arg23: memref<1x64xf32, #tpu.memory_space<vmem>>, %arg24: memref<1x32x128xf32, #tpu.memory_space<vmem>>, %arg25: memref<100x32xf32, #tpu.memory_space<vmem>>, %arg26: memref<100x64xf32, #tpu.memory_space<vmem>>, %arg27: memref<78x64xf32, #tpu.memory_space<vmem>>, %arg28: memref<36x32xf32, #tpu.memory_space<vmem>>, %arg29: memref<36x64xf32, #tpu.memory_space<vmem>>, %arg30: memref<100x192xf32, #tpu.memory_space<vmem>>, %arg31: memref<100x64xf32, #tpu.memory_space<vmem>>) attributes {dimension_semantics = [#tpu.dimension_semantics<parallel>], iteration_bounds = array<i64: 2>, scalar_prefetch = 0 : i64, scratch_operands = 7 : i64, tpu.core_type = #tpu.core_type<tc>, window_params = [{transform_indices = @transform_0, window_bounds = array<i64: 1, 64, 32>}, {pipeline_mode = #tpu.pipeline_mode<synchronous>, transform_indices = @transform_1, window_bounds = array<i64: 100, 64>}, {pipeline_mode = #tpu.pipeline_mode<synchronous>, transform_indices = @transform_2, window_bounds = array<i64: 100, 78>}, {pipeline_mode = #tpu.pipeline_mode<synchronous>, transform_indices = @transform_3, window_bounds = array<i64: 36, 22>}, {pipeline_mode = #tpu.pipeline_mode<synchronous>, transform_indices = @transform_4, window_bounds = array<i64: 4, 22, 78>}, {pipeline_mode = #tpu.pipeline_mode<synchronous>, transform_indices = @transform_5, window_bounds = array<i64: 2, 64, 32>}, {pipeline_mode = #tpu.pipeline_mode<synchronous>, transform_indices = @transform_6, window_bounds = array<i64: 100, 22>}, {pipeline_mode = #tpu.pipeline_mode<synchronous>, transform_indices = @transform_7, window_bounds = array<i64: 64, 192>}, {pipeline_mode = #tpu.pipeline_mode<synchronous>, transform_indices = @transform_8, window_bounds = array<i64: 64, 192>}, {pipeline_mode = #tpu.pipeline_mode<synchronous>, transform_indices = @transform_9, window_bounds = array<i64: 2, 32, 78>}, {pipeline_mode = #tpu.pipeline_mode<synchronous>, transform_indices = @transform_10, window_bounds = array<i64: 2, 64, 128>}, {pipeline_mode = #tpu.pipeline_mode<synchronous>, transform_indices = @transform_11, window_bounds = array<i64: 3, 3, 32, 64>}, {pipeline_mode = #tpu.pipeline_mode<synchronous>, transform_indices = @transform_12, window_bounds = array<i64: 1, 64>}, {pipeline_mode = #tpu.pipeline_mode<synchronous>, transform_indices = @transform_13, window_bounds = array<i64: 3, 3, 64, 64>}, {pipeline_mode = #tpu.pipeline_mode<synchronous>, transform_indices = @transform_14, window_bounds = array<i64: 1, 64>}, {pipeline_mode = #tpu.pipeline_mode<synchronous>, transform_indices = @transform_15, window_bounds = array<i64: 3, 3, 32, 64>}, {pipeline_mode = #tpu.pipeline_mode<synchronous>, transform_indices = @transform_16, window_bounds = array<i64: 1, 64>}, {pipeline_mode = #tpu.pipeline_mode<synchronous>, transform_indices = @transform_17, window_bounds = array<i64: 3, 3, 64, 64>}, {pipeline_mode = #tpu.pipeline_mode<synchronous>, transform_indices = @transform_18, window_bounds = array<i64: 1, 64>}, {pipeline_mode = #tpu.pipeline_mode<synchronous>, transform_indices = @transform_19, window_bounds = array<i64: 3, 3, 192, 64>}, {pipeline_mode = #tpu.pipeline_mode<synchronous>, transform_indices = @transform_20, window_bounds = array<i64: 1, 64>}, {pipeline_mode = #tpu.pipeline_mode<synchronous>, transform_indices = @transform_21, window_bounds = array<i64: 3, 3, 64, 64>}, {pipeline_mode = #tpu.pipeline_mode<synchronous>, transform_indices = @transform_22, window_bounds = array<i64: 1, 64>}, {transform_indices = @transform_23, window_bounds = array<i64: 1, 32, 128>}]} {
    %c0 = arith.constant 0 : index
    %c0_0 = arith.constant 0 : index
    %0 = vector.load %arg2[%c0, %c0_0] : memref<100x64xbf16, #tpu.memory_space<vmem>>, vector<100x64xbf16>
    %c0_1 = arith.constant 0 : index
    %c0_2 = arith.constant 0 : index
    %c0_3 = arith.constant 0 : index
    %1 = vector.load %arg1[%c0_1, %c0_2, %c0_3] : memref<1x64x32xf32, #tpu.memory_space<vmem>>, vector<1x64x32xf32>
    %2 = vector.shape_cast %1 : vector<1x64x32xf32> to vector<64x32xf32>
    %3 = arith.truncf %2 : vector<64x32xf32> to vector<64x32xbf16>
    %cst = arith.constant dense<0.000000e+00> : vector<100x32xf32>
    %4 = tpu.matmul %0, %3, %cst {dimension_numbers = #tpu.dot_dimension_numbers<[1], [0], [0], [1], [0, 0, 1, 1], [], []>} : vector<100x64xbf16>, vector<64x32xbf16>, vector<100x32xf32> -> vector<100x32xf32>
    %c0_4 = arith.constant 0 : index
    %c0_5 = arith.constant 0 : index
    %5 = vector.load %arg25[%c0_4, %c0_5] : memref<100x32xf32, #tpu.memory_space<vmem>>, vector<100x32xf32>
    tpu.vector_store %arg25[%c0_4, %c0_5], %4 {strides = array<i32>} : memref<100x32xf32, #tpu.memory_space<vmem>>, vector<100x32xf32>,
    %c0_6 = arith.constant 0 : index
    %c0_7 = arith.constant 0 : index
    %6 = vector.load %arg25[%c0_6, %c0_7] : memref<100x32xf32, #tpu.memory_space<vmem>>, vector<78x32xf32>
    %7 = arith.truncf %6 : vector<78x32xf32> to vector<78x32xbf16>
    %c0_8 = arith.constant 0 : index
    %c0_9 = arith.constant 0 : index
    %c0_10 = arith.constant 0 : index
    %c0_11 = arith.constant 0 : index
    %8 = vector.load %arg12[%c0_8, %c0_9, %c0_10, %c0_11] : memref<3x3x32x64xbf16, #tpu.memory_space<vmem>>, vector<1x1x32x64xbf16>
    %9 = vector.shape_cast %8 : vector<1x1x32x64xbf16> to vector<32x64xbf16>
    %cst_12 = arith.constant dense<0.000000e+00> : vector<78x64xf32>
    %10 = tpu.matmul %7, %9, %cst_12 {dimension_numbers = #tpu.dot_dimension_numbers<[1], [0], [0], [1], [0, 0, 1, 1], [], []>} : vector<78x32xbf16>, vector<32x64xbf16>, vector<78x64xf32> -> vector<78x64xf32>
    %c1 = arith.constant 1 : index
    %c0_13 = arith.constant 0 : index
    %11 = vector.load %arg25[%c1, %c0_13] : memref<100x32xf32, #tpu.memory_space<vmem>>, vector<78x32xf32>
    %12 = arith.truncf %11 : vector<78x32xf32> to vector<78x32xbf16>
    %c0_14 = arith.constant 0 : index
    %c1_15 = arith.constant 1 : index
    %c0_16 = arith.constant 0 : index
    %c0_17 = arith.constant 0 : index
    %13 = vector.load %arg12[%c0_14, %c1_15, %c0_16, %c0_17] : memref<3x3x32x64xbf16, #tpu.memory_space<vmem>>, vector<1x1x32x64xbf16>
    %14 = vector.shape_cast %13 : vector<1x1x32x64xbf16> to vector<32x64xbf16>
    %cst_18 = arith.constant dense<0.000000e+00> : vector<78x64xf32>
    %15 = tpu.matmul %12, %14, %cst_18 {dimension_numbers = #tpu.dot_dimension_numbers<[1], [0], [0], [1], [0, 0, 1, 1], [], []>} : vector<78x32xbf16>, vector<32x64xbf16>, vector<78x64xf32> -> vector<78x64xf32>
    %16 = arith.addf %10, %15 : vector<78x64xf32>
    %c2 = arith.constant 2 : index
    %c0_19 = arith.constant 0 : index
    %17 = vector.load %arg25[%c2, %c0_19] : memref<100x32xf32, #tpu.memory_space<vmem>>, vector<78x32xf32>
    %18 = arith.truncf %17 : vector<78x32xf32> to vector<78x32xbf16>
    %c0_20 = arith.constant 0 : index
    %c2_21 = arith.constant 2 : index
    %c0_22 = arith.constant 0 : index
    %c0_23 = arith.constant 0 : index
    %19 = vector.load %arg12[%c0_20, %c2_21, %c0_22, %c0_23] : memref<3x3x32x64xbf16, #tpu.memory_space<vmem>>, vector<1x1x32x64xbf16>
    %20 = vector.shape_cast %19 : vector<1x1x32x64xbf16> to vector<32x64xbf16>
    %cst_24 = arith.constant dense<0.000000e+00> : vector<78x64xf32>
    %21 = tpu.matmul %18, %20, %cst_24 {dimension_numbers = #tpu.dot_dimension_numbers<[1], [0], [0], [1], [0, 0, 1, 1], [], []>} : vector<78x32xbf16>, vector<32x64xbf16>, vector<78x64xf32> -> vector<78x64xf32>
    %22 = arith.addf %16, %21 : vector<78x64xf32>
    %c10 = arith.constant 10 : index
    %c0_25 = arith.constant 0 : index
    %23 = vector.load %arg25[%c10, %c0_25] : memref<100x32xf32, #tpu.memory_space<vmem>>, vector<78x32xf32>
    %24 = arith.truncf %23 : vector<78x32xf32> to vector<78x32xbf16>
    %c1_26 = arith.constant 1 : index
    %c0_27 = arith.constant 0 : index
    %c0_28 = arith.constant 0 : index
    %c0_29 = arith.constant 0 : index
    %25 = vector.load %arg12[%c1_26, %c0_27, %c0_28, %c0_29] : memref<3x3x32x64xbf16, #tpu.memory_space<vmem>>, vector<1x1x32x64xbf16>
    %26 = vector.shape_cast %25 : vector<1x1x32x64xbf16> to vector<32x64xbf16>
    %cst_30 = arith.constant dense<0.000000e+00> : vector<78x64xf32>
    %27 = tpu.matmul %24, %26, %cst_30 {dimension_numbers = #tpu.dot_dimension_numbers<[1], [0], [0], [1], [0, 0, 1, 1], [], []>} : vector<78x32xbf16>, vector<32x64xbf16>, vector<78x64xf32> -> vector<78x64xf32>
    %28 = arith.addf %22, %27 : vector<78x64xf32>
    %c11 = arith.constant 11 : index
    %c0_31 = arith.constant 0 : index
    %29 = vector.load %arg25[%c11, %c0_31] : memref<100x32xf32, #tpu.memory_space<vmem>>, vector<78x32xf32>
    %30 = arith.truncf %29 : vector<78x32xf32> to vector<78x32xbf16>
    %c1_32 = arith.constant 1 : index
    %c1_33 = arith.constant 1 : index
    %c0_34 = arith.constant 0 : index
    %c0_35 = arith.constant 0 : index
    %31 = vector.load %arg12[%c1_32, %c1_33, %c0_34, %c0_35] : memref<3x3x32x64xbf16, #tpu.memory_space<vmem>>, vector<1x1x32x64xbf16>
    %32 = vector.shape_cast %31 : vector<1x1x32x64xbf16> to vector<32x64xbf16>
    %cst_36 = arith.constant dense<0.000000e+00> : vector<78x64xf32>
    %33 = tpu.matmul %30, %32, %cst_36 {dimension_numbers = #tpu.dot_dimension_numbers<[1], [0], [0], [1], [0, 0, 1, 1], [], []>} : vector<78x32xbf16>, vector<32x64xbf16>, vector<78x64xf32> -> vector<78x64xf32>
    %34 = arith.addf %28, %33 : vector<78x64xf32>
    %c12 = arith.constant 12 : index
    %c0_37 = arith.constant 0 : index
    %35 = vector.load %arg25[%c12, %c0_37] : memref<100x32xf32, #tpu.memory_space<vmem>>, vector<78x32xf32>
    %36 = arith.truncf %35 : vector<78x32xf32> to vector<78x32xbf16>
    %c1_38 = arith.constant 1 : index
    %c2_39 = arith.constant 2 : index
    %c0_40 = arith.constant 0 : index
    %c0_41 = arith.constant 0 : index
    %37 = vector.load %arg12[%c1_38, %c2_39, %c0_40, %c0_41] : memref<3x3x32x64xbf16, #tpu.memory_space<vmem>>, vector<1x1x32x64xbf16>
    %38 = vector.shape_cast %37 : vector<1x1x32x64xbf16> to vector<32x64xbf16>
    %cst_42 = arith.constant dense<0.000000e+00> : vector<78x64xf32>
    %39 = tpu.matmul %36, %38, %cst_42 {dimension_numbers = #tpu.dot_dimension_numbers<[1], [0], [0], [1], [0, 0, 1, 1], [], []>} : vector<78x32xbf16>, vector<32x64xbf16>, vector<78x64xf32> -> vector<78x64xf32>
    %40 = arith.addf %34, %39 : vector<78x64xf32>
    %c20 = arith.constant 20 : index
    %c0_43 = arith.constant 0 : index
    %41 = vector.load %arg25[%c20, %c0_43] : memref<100x32xf32, #tpu.memory_space<vmem>>, vector<78x32xf32>
    %42 = arith.truncf %41 : vector<78x32xf32> to vector<78x32xbf16>
    %c2_44 = arith.constant 2 : index
    %c0_45 = arith.constant 0 : index
    %c0_46 = arith.constant 0 : index
    %c0_47 = arith.constant 0 : index
    %43 = vector.load %arg12[%c2_44, %c0_45, %c0_46, %c0_47] : memref<3x3x32x64xbf16, #tpu.memory_space<vmem>>, vector<1x1x32x64xbf16>
    %44 = vector.shape_cast %43 : vector<1x1x32x64xbf16> to vector<32x64xbf16>
    %cst_48 = arith.constant dense<0.000000e+00> : vector<78x64xf32>
    %45 = tpu.matmul %42, %44, %cst_48 {dimension_numbers = #tpu.dot_dimension_numbers<[1], [0], [0], [1], [0, 0, 1, 1], [], []>} : vector<78x32xbf16>, vector<32x64xbf16>, vector<78x64xf32> -> vector<78x64xf32>
    %46 = arith.addf %40, %45 : vector<78x64xf32>
    %c21 = arith.constant 21 : index
    %c0_49 = arith.constant 0 : index
    %47 = vector.load %arg25[%c21, %c0_49] : memref<100x32xf32, #tpu.memory_space<vmem>>, vector<78x32xf32>
    %48 = arith.truncf %47 : vector<78x32xf32> to vector<78x32xbf16>
    %c2_50 = arith.constant 2 : index
    %c1_51 = arith.constant 1 : index
    %c0_52 = arith.constant 0 : index
    %c0_53 = arith.constant 0 : index
    %49 = vector.load %arg12[%c2_50, %c1_51, %c0_52, %c0_53] : memref<3x3x32x64xbf16, #tpu.memory_space<vmem>>, vector<1x1x32x64xbf16>
    %50 = vector.shape_cast %49 : vector<1x1x32x64xbf16> to vector<32x64xbf16>
    %cst_54 = arith.constant dense<0.000000e+00> : vector<78x64xf32>
    %51 = tpu.matmul %48, %50, %cst_54 {dimension_numbers = #tpu.dot_dimension_numbers<[1], [0], [0], [1], [0, 0, 1, 1], [], []>} : vector<78x32xbf16>, vector<32x64xbf16>, vector<78x64xf32> -> vector<78x64xf32>
    %52 = arith.addf %46, %51 : vector<78x64xf32>
    %c22 = arith.constant 22 : index
    %c0_55 = arith.constant 0 : index
    %53 = vector.load %arg25[%c22, %c0_55] : memref<100x32xf32, #tpu.memory_space<vmem>>, vector<78x32xf32>
    %54 = arith.truncf %53 : vector<78x32xf32> to vector<78x32xbf16>
    %c2_56 = arith.constant 2 : index
    %c2_57 = arith.constant 2 : index
    %c0_58 = arith.constant 0 : index
    %c0_59 = arith.constant 0 : index
    %55 = vector.load %arg12[%c2_56, %c2_57, %c0_58, %c0_59] : memref<3x3x32x64xbf16, #tpu.memory_space<vmem>>, vector<1x1x32x64xbf16>
    %56 = vector.shape_cast %55 : vector<1x1x32x64xbf16> to vector<32x64xbf16>
    %cst_60 = arith.constant dense<0.000000e+00> : vector<78x64xf32>
    %57 = tpu.matmul %54, %56, %cst_60 {dimension_numbers = #tpu.dot_dimension_numbers<[1], [0], [0], [1], [0, 0, 1, 1], [], []>} : vector<78x32xbf16>, vector<32x64xbf16>, vector<78x64xf32> -> vector<78x64xf32>
    %58 = arith.addf %52, %57 : vector<78x64xf32>
    %c0_61 = arith.constant 0 : index
    %c0_62 = arith.constant 0 : index
    %59 = vector.load %arg13[%c0_61, %c0_62] : memref<1x64xf32, #tpu.memory_space<vmem>>, vector<1x64xf32>
    %60 = vector.broadcast %59 : vector<1x64xf32> to vector<78x64xf32>
    %61 = arith.addf %58, %60 : vector<78x64xf32>
    %cst_63 = arith.constant 0.000000e+00 : f32
    %62 = vector.broadcast %cst_63 : f32 to vector<78x64xf32>
    %63 = arith.cmpf oge, %61, %62 : vector<78x64xf32>
    %cst_64 = arith.constant 1.000000e+00 : f32
    %64 = vector.broadcast %cst_64 : f32 to vector<78x64xf32>
    %65 = arith.mulf %61, %64 : vector<78x64xf32>
    %66 = arith.select %63, %61, %65 : vector<78x64xi1>, vector<78x64xf32>
    %c0_65 = arith.constant 0 : index
    %c0_66 = arith.constant 0 : index
    %67 = vector.load %arg3[%c0_65, %c0_66] : memref<100x78xbf16, #tpu.memory_space<vmem>>, vector<100x78xbf16>
    %68 = arith.truncf %66 : vector<78x64xf32> to vector<78x64xbf16>
    %cst_67 = arith.constant dense<0.000000e+00> : vector<100x64xf32>
    %69 = tpu.matmul %67, %68, %cst_67 {dimension_numbers = #tpu.dot_dimension_numbers<[1], [0], [0], [1], [0, 0, 1, 1], [], []>} : vector<100x78xbf16>, vector<78x64xbf16>, vector<100x64xf32> -> vector<100x64xf32>
    %c0_68 = arith.constant 0 : index
    %c0_69 = arith.constant 0 : index
    %70 = vector.load %arg26[%c0_68, %c0_69] : memref<100x64xf32, #tpu.memory_space<vmem>>, vector<100x64xf32>
    tpu.vector_store %arg26[%c0_68, %c0_69], %69 {strides = array<i32>} : memref<100x64xf32, #tpu.memory_space<vmem>>, vector<100x64xf32>,
    %c0_70 = arith.constant 0 : index
    %c0_71 = arith.constant 0 : index
    %71 = vector.load %arg26[%c0_70, %c0_71] : memref<100x64xf32, #tpu.memory_space<vmem>>, vector<78x64xf32>
    %72 = arith.truncf %71 : vector<78x64xf32> to vector<78x64xbf16>
    %c0_72 = arith.constant 0 : index
    %c0_73 = arith.constant 0 : index
    %c0_74 = arith.constant 0 : index
    %c0_75 = arith.constant 0 : index
    %73 = vector.load %arg14[%c0_72, %c0_73, %c0_74, %c0_75] : memref<3x3x64x64xbf16, #tpu.memory_space<vmem>>, vector<1x1x64x64xbf16>
    %74 = vector.shape_cast %73 : vector<1x1x64x64xbf16> to vector<64x64xbf16>
    %cst_76 = arith.constant dense<0.000000e+00> : vector<78x64xf32>
    %75 = tpu.matmul %72, %74, %cst_76 {dimension_numbers = #tpu.dot_dimension_numbers<[1], [0], [0], [1], [0, 0, 1, 1], [], []>} : vector<78x64xbf16>, vector<64x64xbf16>, vector<78x64xf32> -> vector<78x64xf32>
    %c1_77 = arith.constant 1 : index
    %c0_78 = arith.constant 0 : index
    %76 = vector.load %arg26[%c1_77, %c0_78] : memref<100x64xf32, #tpu.memory_space<vmem>>, vector<78x64xf32>
    %77 = arith.truncf %76 : vector<78x64xf32> to vector<78x64xbf16>
    %c0_79 = arith.constant 0 : index
    %c1_80 = arith.constant 1 : index
    %c0_81 = arith.constant 0 : index
    %c0_82 = arith.constant 0 : index
    %78 = vector.load %arg14[%c0_79, %c1_80, %c0_81, %c0_82] : memref<3x3x64x64xbf16, #tpu.memory_space<vmem>>, vector<1x1x64x64xbf16>
    %79 = vector.shape_cast %78 : vector<1x1x64x64xbf16> to vector<64x64xbf16>
    %cst_83 = arith.constant dense<0.000000e+00> : vector<78x64xf32>
    %80 = tpu.matmul %77, %79, %cst_83 {dimension_numbers = #tpu.dot_dimension_numbers<[1], [0], [0], [1], [0, 0, 1, 1], [], []>} : vector<78x64xbf16>, vector<64x64xbf16>, vector<78x64xf32> -> vector<78x64xf32>
    %81 = arith.addf %75, %80 : vector<78x64xf32>
    %c2_84 = arith.constant 2 : index
    %c0_85 = arith.constant 0 : index
    %82 = vector.load %arg26[%c2_84, %c0_85] : memref<100x64xf32, #tpu.memory_space<vmem>>, vector<78x64xf32>
    %83 = arith.truncf %82 : vector<78x64xf32> to vector<78x64xbf16>
    %c0_86 = arith.constant 0 : index
    %c2_87 = arith.constant 2 : index
    %c0_88 = arith.constant 0 : index
    %c0_89 = arith.constant 0 : index
    %84 = vector.load %arg14[%c0_86, %c2_87, %c0_88, %c0_89] : memref<3x3x64x64xbf16, #tpu.memory_space<vmem>>, vector<1x1x64x64xbf16>
    %85 = vector.shape_cast %84 : vector<1x1x64x64xbf16> to vector<64x64xbf16>
    %cst_90 = arith.constant dense<0.000000e+00> : vector<78x64xf32>
    %86 = tpu.matmul %83, %85, %cst_90 {dimension_numbers = #tpu.dot_dimension_numbers<[1], [0], [0], [1], [0, 0, 1, 1], [], []>} : vector<78x64xbf16>, vector<64x64xbf16>, vector<78x64xf32> -> vector<78x64xf32>
    %87 = arith.addf %81, %86 : vector<78x64xf32>
    %c10_91 = arith.constant 10 : index
    %c0_92 = arith.constant 0 : index
    %88 = vector.load %arg26[%c10_91, %c0_92] : memref<100x64xf32, #tpu.memory_space<vmem>>, vector<78x64xf32>
    %89 = arith.truncf %88 : vector<78x64xf32> to vector<78x64xbf16>
    %c1_93 = arith.constant 1 : index
    %c0_94 = arith.constant 0 : index
    %c0_95 = arith.constant 0 : index
    %c0_96 = arith.constant 0 : index
    %90 = vector.load %arg14[%c1_93, %c0_94, %c0_95, %c0_96] : memref<3x3x64x64xbf16, #tpu.memory_space<vmem>>, vector<1x1x64x64xbf16>
    %91 = vector.shape_cast %90 : vector<1x1x64x64xbf16> to vector<64x64xbf16>
    %cst_97 = arith.constant dense<0.000000e+00> : vector<78x64xf32>
    %92 = tpu.matmul %89, %91, %cst_97 {dimension_numbers = #tpu.dot_dimension_numbers<[1], [0], [0], [1], [0, 0, 1, 1], [], []>} : vector<78x64xbf16>, vector<64x64xbf16>, vector<78x64xf32> -> vector<78x64xf32>
    %93 = arith.addf %87, %92 : vector<78x64xf32>
    %c11_98 = arith.constant 11 : index
    %c0_99 = arith.constant 0 : index
    %94 = vector.load %arg26[%c11_98, %c0_99] : memref<100x64xf32, #tpu.memory_space<vmem>>, vector<78x64xf32>
    %95 = arith.truncf %94 : vector<78x64xf32> to vector<78x64xbf16>
    %c1_100 = arith.constant 1 : index
    %c1_101 = arith.constant 1 : index
    %c0_102 = arith.constant 0 : index
    %c0_103 = arith.constant 0 : index
    %96 = vector.load %arg14[%c1_100, %c1_101, %c0_102, %c0_103] : memref<3x3x64x64xbf16, #tpu.memory_space<vmem>>, vector<1x1x64x64xbf16>
    %97 = vector.shape_cast %96 : vector<1x1x64x64xbf16> to vector<64x64xbf16>
    %cst_104 = arith.constant dense<0.000000e+00> : vector<78x64xf32>
    %98 = tpu.matmul %95, %97, %cst_104 {dimension_numbers = #tpu.dot_dimension_numbers<[1], [0], [0], [1], [0, 0, 1, 1], [], []>} : vector<78x64xbf16>, vector<64x64xbf16>, vector<78x64xf32> -> vector<78x64xf32>
    %99 = arith.addf %93, %98 : vector<78x64xf32>
    %c12_105 = arith.constant 12 : index
    %c0_106 = arith.constant 0 : index
    %100 = vector.load %arg26[%c12_105, %c0_106] : memref<100x64xf32, #tpu.memory_space<vmem>>, vector<78x64xf32>
    %101 = arith.truncf %100 : vector<78x64xf32> to vector<78x64xbf16>
    %c1_107 = arith.constant 1 : index
    %c2_108 = arith.constant 2 : index
    %c0_109 = arith.constant 0 : index
    %c0_110 = arith.constant 0 : index
    %102 = vector.load %arg14[%c1_107, %c2_108, %c0_109, %c0_110] : memref<3x3x64x64xbf16, #tpu.memory_space<vmem>>, vector<1x1x64x64xbf16>
    %103 = vector.shape_cast %102 : vector<1x1x64x64xbf16> to vector<64x64xbf16>
    %cst_111 = arith.constant dense<0.000000e+00> : vector<78x64xf32>
    %104 = tpu.matmul %101, %103, %cst_111 {dimension_numbers = #tpu.dot_dimension_numbers<[1], [0], [0], [1], [0, 0, 1, 1], [], []>} : vector<78x64xbf16>, vector<64x64xbf16>, vector<78x64xf32> -> vector<78x64xf32>
    %105 = arith.addf %99, %104 : vector<78x64xf32>
    %c20_112 = arith.constant 20 : index
    %c0_113 = arith.constant 0 : index
    %106 = vector.load %arg26[%c20_112, %c0_113] : memref<100x64xf32, #tpu.memory_space<vmem>>, vector<78x64xf32>
    %107 = arith.truncf %106 : vector<78x64xf32> to vector<78x64xbf16>
    %c2_114 = arith.constant 2 : index
    %c0_115 = arith.constant 0 : index
    %c0_116 = arith.constant 0 : index
    %c0_117 = arith.constant 0 : index
    %108 = vector.load %arg14[%c2_114, %c0_115, %c0_116, %c0_117] : memref<3x3x64x64xbf16, #tpu.memory_space<vmem>>, vector<1x1x64x64xbf16>
    %109 = vector.shape_cast %108 : vector<1x1x64x64xbf16> to vector<64x64xbf16>
    %cst_118 = arith.constant dense<0.000000e+00> : vector<78x64xf32>
    %110 = tpu.matmul %107, %109, %cst_118 {dimension_numbers = #tpu.dot_dimension_numbers<[1], [0], [0], [1], [0, 0, 1, 1], [], []>} : vector<78x64xbf16>, vector<64x64xbf16>, vector<78x64xf32> -> vector<78x64xf32>
    %111 = arith.addf %105, %110 : vector<78x64xf32>
    %c21_119 = arith.constant 21 : index
    %c0_120 = arith.constant 0 : index
    %112 = vector.load %arg26[%c21_119, %c0_120] : memref<100x64xf32, #tpu.memory_space<vmem>>, vector<78x64xf32>
    %113 = arith.truncf %112 : vector<78x64xf32> to vector<78x64xbf16>
    %c2_121 = arith.constant 2 : index
    %c1_122 = arith.constant 1 : index
    %c0_123 = arith.constant 0 : index
    %c0_124 = arith.constant 0 : index
    %114 = vector.load %arg14[%c2_121, %c1_122, %c0_123, %c0_124] : memref<3x3x64x64xbf16, #tpu.memory_space<vmem>>, vector<1x1x64x64xbf16>
    %115 = vector.shape_cast %114 : vector<1x1x64x64xbf16> to vector<64x64xbf16>
    %cst_125 = arith.constant dense<0.000000e+00> : vector<78x64xf32>
    %116 = tpu.matmul %113, %115, %cst_125 {dimension_numbers = #tpu.dot_dimension_numbers<[1], [0], [0], [1], [0, 0, 1, 1], [], []>} : vector<78x64xbf16>, vector<64x64xbf16>, vector<78x64xf32> -> vector<78x64xf32>
    %117 = arith.addf %111, %116 : vector<78x64xf32>
    %c22_126 = arith.constant 22 : index
    %c0_127 = arith.constant 0 : index
    %118 = vector.load %arg26[%c22_126, %c0_127] : memref<100x64xf32, #tpu.memory_space<vmem>>, vector<78x64xf32>
    %119 = arith.truncf %118 : vector<78x64xf32> to vector<78x64xbf16>
    %c2_128 = arith.constant 2 : index
    %c2_129 = arith.constant 2 : index
    %c0_130 = arith.constant 0 : index
    %c0_131 = arith.constant 0 : index
    %120 = vector.load %arg14[%c2_128, %c2_129, %c0_130, %c0_131] : memref<3x3x64x64xbf16, #tpu.memory_space<vmem>>, vector<1x1x64x64xbf16>
    %121 = vector.shape_cast %120 : vector<1x1x64x64xbf16> to vector<64x64xbf16>
    %cst_132 = arith.constant dense<0.000000e+00> : vector<78x64xf32>
    %122 = tpu.matmul %119, %121, %cst_132 {dimension_numbers = #tpu.dot_dimension_numbers<[1], [0], [0], [1], [0, 0, 1, 1], [], []>} : vector<78x64xbf16>, vector<64x64xbf16>, vector<78x64xf32> -> vector<78x64xf32>
    %123 = arith.addf %117, %122 : vector<78x64xf32>
    %c0_133 = arith.constant 0 : index
    %c0_134 = arith.constant 0 : index
    %124 = vector.load %arg15[%c0_133, %c0_134] : memref<1x64xf32, #tpu.memory_space<vmem>>, vector<1x64xf32>
    %125 = vector.broadcast %124 : vector<1x64xf32> to vector<78x64xf32>
    %126 = arith.addf %123, %125 : vector<78x64xf32>
    %c0_135 = arith.constant 0 : index
    %c0_136 = arith.constant 0 : index
    %127 = vector.load %arg27[%c0_135, %c0_136] : memref<78x64xf32, #tpu.memory_space<vmem>>, vector<78x64xf32>
    tpu.vector_store %arg27[%c0_135, %c0_136], %126 {strides = array<i32>} : memref<78x64xf32, #tpu.memory_space<vmem>>, vector<78x64xf32>,
    %c0_137 = arith.constant 0 : index
    %c0_138 = arith.constant 0 : index
    %128 = vector.load %arg27[%c0_137, %c0_138] : memref<78x64xf32, #tpu.memory_space<vmem>>, vector<78x64xf32>
    %129 = arith.truncf %128 : vector<78x64xf32> to vector<78x64xbf16>
    %c0_139 = arith.constant 0 : index
    %c0_140 = arith.constant 0 : index
    %c0_141 = arith.constant 0 : index
    %130 = vector.load %arg5[%c0_139, %c0_140, %c0_141] : memref<4x22x78xbf16, #tpu.memory_space<vmem>>, vector<1x22x78xbf16>
    %131 = vector.shape_cast %130 : vector<1x22x78xbf16> to vector<22x78xbf16>
    %cst_142 = arith.constant dense<0.000000e+00> : vector<22x64xf32>
    %132 = tpu.matmul %131, %129, %cst_142 {dimension_numbers = #tpu.dot_dimension_numbers<[1], [0], [0], [1], [0, 0, 1, 1], [], []>} : vector<22x78xbf16>, vector<78x64xbf16>, vector<22x64xf32> -> vector<22x64xf32>
    %c1_143 = arith.constant 1 : index
    %c0_144 = arith.constant 0 : index
    %c0_145 = arith.constant 0 : index
    %133 = vector.load %arg5[%c1_143, %c0_144, %c0_145] : memref<4x22x78xbf16, #tpu.memory_space<vmem>>, vector<1x22x78xbf16>
    %134 = vector.shape_cast %133 : vector<1x22x78xbf16> to vector<22x78xbf16>
    %cst_146 = arith.constant dense<0.000000e+00> : vector<22x64xf32>
    %135 = tpu.matmul %134, %129, %cst_146 {dimension_numbers = #tpu.dot_dimension_numbers<[1], [0], [0], [1], [0, 0, 1, 1], [], []>} : vector<22x78xbf16>, vector<78x64xbf16>, vector<22x64xf32> -> vector<22x64xf32>
    %136 = arith.maximumf %132, %135 : vector<22x64xf32>
    %c2_147 = arith.constant 2 : index
    %c0_148 = arith.constant 0 : index
    %c0_149 = arith.constant 0 : index
    %137 = vector.load %arg5[%c2_147, %c0_148, %c0_149] : memref<4x22x78xbf16, #tpu.memory_space<vmem>>, vector<1x22x78xbf16>
    %138 = vector.shape_cast %137 : vector<1x22x78xbf16> to vector<22x78xbf16>
    %cst_150 = arith.constant dense<0.000000e+00> : vector<22x64xf32>
    %139 = tpu.matmul %138, %129, %cst_150 {dimension_numbers = #tpu.dot_dimension_numbers<[1], [0], [0], [1], [0, 0, 1, 1], [], []>} : vector<22x78xbf16>, vector<78x64xbf16>, vector<22x64xf32> -> vector<22x64xf32>
    %140 = arith.maximumf %136, %139 : vector<22x64xf32>
    %c3 = arith.constant 3 : index
    %c0_151 = arith.constant 0 : index
    %c0_152 = arith.constant 0 : index
    %141 = vector.load %arg5[%c3, %c0_151, %c0_152] : memref<4x22x78xbf16, #tpu.memory_space<vmem>>, vector<1x22x78xbf16>
    %142 = vector.shape_cast %141 : vector<1x22x78xbf16> to vector<22x78xbf16>
    %cst_153 = arith.constant dense<0.000000e+00> : vector<22x64xf32>
    %143 = tpu.matmul %142, %129, %cst_153 {dimension_numbers = #tpu.dot_dimension_numbers<[1], [0], [0], [1], [0, 0, 1, 1], [], []>} : vector<22x78xbf16>, vector<78x64xbf16>, vector<22x64xf32> -> vector<22x64xf32>
    %144 = arith.maximumf %140, %143 : vector<22x64xf32>
    %145 = arith.truncf %144 : vector<22x64xf32> to vector<22x64xbf16>
    %c0_154 = arith.constant 0 : index
    %c0_155 = arith.constant 0 : index
    %c0_156 = arith.constant 0 : index
    %146 = vector.load %arg6[%c0_154, %c0_155, %c0_156] : memref<2x64x32xbf16, #tpu.memory_space<vmem>>, vector<1x64x32xbf16>
    %147 = vector.shape_cast %146 : vector<1x64x32xbf16> to vector<64x32xbf16>
    %cst_157 = arith.constant dense<0.000000e+00> : vector<22x32xf32>
    %148 = tpu.matmul %145, %147, %cst_157 {dimension_numbers = #tpu.dot_dimension_numbers<[1], [0], [0], [1], [0, 0, 1, 1], [], []>} : vector<22x64xbf16>, vector<64x32xbf16>, vector<22x32xf32> -> vector<22x32xf32>
    %c1_158 = arith.constant 1 : index
    %c0_159 = arith.constant 0 : index
    %c0_160 = arith.constant 0 : index
    %149 = vector.load %arg6[%c1_158, %c0_159, %c0_160] : memref<2x64x32xbf16, #tpu.memory_space<vmem>>, vector<1x64x32xbf16>
    %150 = vector.shape_cast %149 : vector<1x64x32xbf16> to vector<64x32xbf16>
    %cst_161 = arith.constant dense<0.000000e+00> : vector<22x32xf32>
    %151 = tpu.matmul %145, %150, %cst_161 {dimension_numbers = #tpu.dot_dimension_numbers<[1], [0], [0], [1], [0, 0, 1, 1], [], []>} : vector<22x64xbf16>, vector<64x32xbf16>, vector<22x32xf32> -> vector<22x32xf32>
    %152 = arith.maximumf %148, %151 : vector<22x32xf32>
    %c0_162 = arith.constant 0 : index
    %c0_163 = arith.constant 0 : index
    %153 = vector.load %arg4[%c0_162, %c0_163] : memref<36x22xbf16, #tpu.memory_space<vmem>>, vector<36x22xbf16>
    %154 = arith.truncf %152 : vector<22x32xf32> to vector<22x32xbf16>
    %cst_164 = arith.constant dense<0.000000e+00> : vector<36x32xf32>
    %155 = tpu.matmul %153, %154, %cst_164 {dimension_numbers = #tpu.dot_dimension_numbers<[1], [0], [0], [1], [0, 0, 1, 1], [], []>} : vector<36x22xbf16>, vector<22x32xbf16>, vector<36x32xf32> -> vector<36x32xf32>
    %c0_165 = arith.constant 0 : index
    %c0_166 = arith.constant 0 : index
    %156 = vector.load %arg28[%c0_165, %c0_166] : memref<36x32xf32, #tpu.memory_space<vmem>>, vector<36x32xf32>
    tpu.vector_store %arg28[%c0_165, %c0_166], %155 {strides = array<i32>} : memref<36x32xf32, #tpu.memory_space<vmem>>, vector<36x32xf32>,
    %c0_167 = arith.constant 0 : index
    %c0_168 = arith.constant 0 : index
    %157 = vector.load %arg28[%c0_167, %c0_168] : memref<36x32xf32, #tpu.memory_space<vmem>>, vector<22x32xf32>
    %158 = arith.truncf %157 : vector<22x32xf32> to vector<22x32xbf16>
    %c0_169 = arith.constant 0 : index
    %c0_170 = arith.constant 0 : index
    %c0_171 = arith.constant 0 : index
    %c0_172 = arith.constant 0 : index
    %159 = vector.load %arg16[%c0_169, %c0_170, %c0_171, %c0_172] : memref<3x3x32x64xbf16, #tpu.memory_space<vmem>>, vector<1x1x32x64xbf16>
    %160 = vector.shape_cast %159 : vector<1x1x32x64xbf16> to vector<32x64xbf16>
    %cst_173 = arith.constant dense<0.000000e+00> : vector<22x64xf32>
    %161 = tpu.matmul %158, %160, %cst_173 {dimension_numbers = #tpu.dot_dimension_numbers<[1], [0], [0], [1], [0, 0, 1, 1], [], []>} : vector<22x32xbf16>, vector<32x64xbf16>, vector<22x64xf32> -> vector<22x64xf32>
    %c1_174 = arith.constant 1 : index
    %c0_175 = arith.constant 0 : index
    %162 = vector.load %arg28[%c1_174, %c0_175] : memref<36x32xf32, #tpu.memory_space<vmem>>, vector<22x32xf32>
    %163 = arith.truncf %162 : vector<22x32xf32> to vector<22x32xbf16>
    %c0_176 = arith.constant 0 : index
    %c1_177 = arith.constant 1 : index
    %c0_178 = arith.constant 0 : index
    %c0_179 = arith.constant 0 : index
    %164 = vector.load %arg16[%c0_176, %c1_177, %c0_178, %c0_179] : memref<3x3x32x64xbf16, #tpu.memory_space<vmem>>, vector<1x1x32x64xbf16>
    %165 = vector.shape_cast %164 : vector<1x1x32x64xbf16> to vector<32x64xbf16>
    %cst_180 = arith.constant dense<0.000000e+00> : vector<22x64xf32>
    %166 = tpu.matmul %163, %165, %cst_180 {dimension_numbers = #tpu.dot_dimension_numbers<[1], [0], [0], [1], [0, 0, 1, 1], [], []>} : vector<22x32xbf16>, vector<32x64xbf16>, vector<22x64xf32> -> vector<22x64xf32>
    %167 = arith.addf %161, %166 : vector<22x64xf32>
    %c2_181 = arith.constant 2 : index
    %c0_182 = arith.constant 0 : index
    %168 = vector.load %arg28[%c2_181, %c0_182] : memref<36x32xf32, #tpu.memory_space<vmem>>, vector<22x32xf32>
    %169 = arith.truncf %168 : vector<22x32xf32> to vector<22x32xbf16>
    %c0_183 = arith.constant 0 : index
    %c2_184 = arith.constant 2 : index
    %c0_185 = arith.constant 0 : index
    %c0_186 = arith.constant 0 : index
    %170 = vector.load %arg16[%c0_183, %c2_184, %c0_185, %c0_186] : memref<3x3x32x64xbf16, #tpu.memory_space<vmem>>, vector<1x1x32x64xbf16>
    %171 = vector.shape_cast %170 : vector<1x1x32x64xbf16> to vector<32x64xbf16>
    %cst_187 = arith.constant dense<0.000000e+00> : vector<22x64xf32>
    %172 = tpu.matmul %169, %171, %cst_187 {dimension_numbers = #tpu.dot_dimension_numbers<[1], [0], [0], [1], [0, 0, 1, 1], [], []>} : vector<22x32xbf16>, vector<32x64xbf16>, vector<22x64xf32> -> vector<22x64xf32>
    %173 = arith.addf %167, %172 : vector<22x64xf32>
    %c6 = arith.constant 6 : index
    %c0_188 = arith.constant 0 : index
    %174 = vector.load %arg28[%c6, %c0_188] : memref<36x32xf32, #tpu.memory_space<vmem>>, vector<22x32xf32>
    %175 = arith.truncf %174 : vector<22x32xf32> to vector<22x32xbf16>
    %c1_189 = arith.constant 1 : index
    %c0_190 = arith.constant 0 : index
    %c0_191 = arith.constant 0 : index
    %c0_192 = arith.constant 0 : index
    %176 = vector.load %arg16[%c1_189, %c0_190, %c0_191, %c0_192] : memref<3x3x32x64xbf16, #tpu.memory_space<vmem>>, vector<1x1x32x64xbf16>
    %177 = vector.shape_cast %176 : vector<1x1x32x64xbf16> to vector<32x64xbf16>
    %cst_193 = arith.constant dense<0.000000e+00> : vector<22x64xf32>
    %178 = tpu.matmul %175, %177, %cst_193 {dimension_numbers = #tpu.dot_dimension_numbers<[1], [0], [0], [1], [0, 0, 1, 1], [], []>} : vector<22x32xbf16>, vector<32x64xbf16>, vector<22x64xf32> -> vector<22x64xf32>
    %179 = arith.addf %173, %178 : vector<22x64xf32>
    %c7 = arith.constant 7 : index
    %c0_194 = arith.constant 0 : index
    %180 = vector.load %arg28[%c7, %c0_194] : memref<36x32xf32, #tpu.memory_space<vmem>>, vector<22x32xf32>
    %181 = arith.truncf %180 : vector<22x32xf32> to vector<22x32xbf16>
    %c1_195 = arith.constant 1 : index
    %c1_196 = arith.constant 1 : index
    %c0_197 = arith.constant 0 : index
    %c0_198 = arith.constant 0 : index
    %182 = vector.load %arg16[%c1_195, %c1_196, %c0_197, %c0_198] : memref<3x3x32x64xbf16, #tpu.memory_space<vmem>>, vector<1x1x32x64xbf16>
    %183 = vector.shape_cast %182 : vector<1x1x32x64xbf16> to vector<32x64xbf16>
    %cst_199 = arith.constant dense<0.000000e+00> : vector<22x64xf32>
    %184 = tpu.matmul %181, %183, %cst_199 {dimension_numbers = #tpu.dot_dimension_numbers<[1], [0], [0], [1], [0, 0, 1, 1], [], []>} : vector<22x32xbf16>, vector<32x64xbf16>, vector<22x64xf32> -> vector<22x64xf32>
    %185 = arith.addf %179, %184 : vector<22x64xf32>
    %c8 = arith.constant 8 : index
    %c0_200 = arith.constant 0 : index
    %186 = vector.load %arg28[%c8, %c0_200] : memref<36x32xf32, #tpu.memory_space<vmem>>, vector<22x32xf32>
    %187 = arith.truncf %186 : vector<22x32xf32> to vector<22x32xbf16>
    %c1_201 = arith.constant 1 : index
    %c2_202 = arith.constant 2 : index
    %c0_203 = arith.constant 0 : index
    %c0_204 = arith.constant 0 : index
    %188 = vector.load %arg16[%c1_201, %c2_202, %c0_203, %c0_204] : memref<3x3x32x64xbf16, #tpu.memory_space<vmem>>, vector<1x1x32x64xbf16>
    %189 = vector.shape_cast %188 : vector<1x1x32x64xbf16> to vector<32x64xbf16>
    %cst_205 = arith.constant dense<0.000000e+00> : vector<22x64xf32>
    %190 = tpu.matmul %187, %189, %cst_205 {dimension_numbers = #tpu.dot_dimension_numbers<[1], [0], [0], [1], [0, 0, 1, 1], [], []>} : vector<22x32xbf16>, vector<32x64xbf16>, vector<22x64xf32> -> vector<22x64xf32>
    %191 = arith.addf %185, %190 : vector<22x64xf32>
    %c12_206 = arith.constant 12 : index
    %c0_207 = arith.constant 0 : index
    %192 = vector.load %arg28[%c12_206, %c0_207] : memref<36x32xf32, #tpu.memory_space<vmem>>, vector<22x32xf32>
    %193 = arith.truncf %192 : vector<22x32xf32> to vector<22x32xbf16>
    %c2_208 = arith.constant 2 : index
    %c0_209 = arith.constant 0 : index
    %c0_210 = arith.constant 0 : index
    %c0_211 = arith.constant 0 : index
    %194 = vector.load %arg16[%c2_208, %c0_209, %c0_210, %c0_211] : memref<3x3x32x64xbf16, #tpu.memory_space<vmem>>, vector<1x1x32x64xbf16>
    %195 = vector.shape_cast %194 : vector<1x1x32x64xbf16> to vector<32x64xbf16>
    %cst_212 = arith.constant dense<0.000000e+00> : vector<22x64xf32>
    %196 = tpu.matmul %193, %195, %cst_212 {dimension_numbers = #tpu.dot_dimension_numbers<[1], [0], [0], [1], [0, 0, 1, 1], [], []>} : vector<22x32xbf16>, vector<32x64xbf16>, vector<22x64xf32> -> vector<22x64xf32>
    %197 = arith.addf %191, %196 : vector<22x64xf32>
    %c13 = arith.constant 13 : index
    %c0_213 = arith.constant 0 : index
    %198 = vector.load %arg28[%c13, %c0_213] : memref<36x32xf32, #tpu.memory_space<vmem>>, vector<22x32xf32>
    %199 = arith.truncf %198 : vector<22x32xf32> to vector<22x32xbf16>
    %c2_214 = arith.constant 2 : index
    %c1_215 = arith.constant 1 : index
    %c0_216 = arith.constant 0 : index
    %c0_217 = arith.constant 0 : index
    %200 = vector.load %arg16[%c2_214, %c1_215, %c0_216, %c0_217] : memref<3x3x32x64xbf16, #tpu.memory_space<vmem>>, vector<1x1x32x64xbf16>
    %201 = vector.shape_cast %200 : vector<1x1x32x64xbf16> to vector<32x64xbf16>
    %cst_218 = arith.constant dense<0.000000e+00> : vector<22x64xf32>
    %202 = tpu.matmul %199, %201, %cst_218 {dimension_numbers = #tpu.dot_dimension_numbers<[1], [0], [0], [1], [0, 0, 1, 1], [], []>} : vector<22x32xbf16>, vector<32x64xbf16>, vector<22x64xf32> -> vector<22x64xf32>
    %203 = arith.addf %197, %202 : vector<22x64xf32>
    %c14 = arith.constant 14 : index
    %c0_219 = arith.constant 0 : index
    %204 = vector.load %arg28[%c14, %c0_219] : memref<36x32xf32, #tpu.memory_space<vmem>>, vector<22x32xf32>
    %205 = arith.truncf %204 : vector<22x32xf32> to vector<22x32xbf16>
    %c2_220 = arith.constant 2 : index
    %c2_221 = arith.constant 2 : index
    %c0_222 = arith.constant 0 : index
    %c0_223 = arith.constant 0 : index
    %206 = vector.load %arg16[%c2_220, %c2_221, %c0_222, %c0_223] : memref<3x3x32x64xbf16, #tpu.memory_space<vmem>>, vector<1x1x32x64xbf16>
    %207 = vector.shape_cast %206 : vector<1x1x32x64xbf16> to vector<32x64xbf16>
    %cst_224 = arith.constant dense<0.000000e+00> : vector<22x64xf32>
    %208 = tpu.matmul %205, %207, %cst_224 {dimension_numbers = #tpu.dot_dimension_numbers<[1], [0], [0], [1], [0, 0, 1, 1], [], []>} : vector<22x32xbf16>, vector<32x64xbf16>, vector<22x64xf32> -> vector<22x64xf32>
    %209 = arith.addf %203, %208 : vector<22x64xf32>
    %c0_225 = arith.constant 0 : index
    %c0_226 = arith.constant 0 : index
    %210 = vector.load %arg17[%c0_225, %c0_226] : memref<1x64xf32, #tpu.memory_space<vmem>>, vector<1x64xf32>
    %211 = vector.broadcast %210 : vector<1x64xf32> to vector<22x64xf32>
    %212 = arith.addf %209, %211 : vector<22x64xf32>
    %cst_227 = arith.constant 0.000000e+00 : f32
    %213 = vector.broadcast %cst_227 : f32 to vector<22x64xf32>
    %214 = arith.maximumf %212, %213 : vector<22x64xf32>
    %c0_228 = arith.constant 0 : index
    %c0_229 = arith.constant 0 : index
    %215 = vector.load %arg4[%c0_228, %c0_229] : memref<36x22xbf16, #tpu.memory_space<vmem>>, vector<36x22xbf16>
    %216 = arith.truncf %214 : vector<22x64xf32> to vector<22x64xbf16>
    %cst_230 = arith.constant dense<0.000000e+00> : vector<36x64xf32>
    %217 = tpu.matmul %215, %216, %cst_230 {dimension_numbers = #tpu.dot_dimension_numbers<[1], [0], [0], [1], [0, 0, 1, 1], [], []>} : vector<36x22xbf16>, vector<22x64xbf16>, vector<36x64xf32> -> vector<36x64xf32>
    %c0_231 = arith.constant 0 : index
    %c0_232 = arith.constant 0 : index
    %218 = vector.load %arg29[%c0_231, %c0_232] : memref<36x64xf32, #tpu.memory_space<vmem>>, vector<36x64xf32>
    tpu.vector_store %arg29[%c0_231, %c0_232], %217 {strides = array<i32>} : memref<36x64xf32, #tpu.memory_space<vmem>>, vector<36x64xf32>,
    %c0_233 = arith.constant 0 : index
    %c0_234 = arith.constant 0 : index
    %219 = vector.load %arg29[%c0_233, %c0_234] : memref<36x64xf32, #tpu.memory_space<vmem>>, vector<22x64xf32>
    %220 = arith.truncf %219 : vector<22x64xf32> to vector<22x64xbf16>
    %c0_235 = arith.constant 0 : index
    %c0_236 = arith.constant 0 : index
    %c0_237 = arith.constant 0 : index
    %c0_238 = arith.constant 0 : index
    %221 = vector.load %arg18[%c0_235, %c0_236, %c0_237, %c0_238] : memref<3x3x64x64xbf16, #tpu.memory_space<vmem>>, vector<1x1x64x64xbf16>
    %222 = vector.shape_cast %221 : vector<1x1x64x64xbf16> to vector<64x64xbf16>
    %cst_239 = arith.constant dense<0.000000e+00> : vector<22x64xf32>
    %223 = tpu.matmul %220, %222, %cst_239 {dimension_numbers = #tpu.dot_dimension_numbers<[1], [0], [0], [1], [0, 0, 1, 1], [], []>} : vector<22x64xbf16>, vector<64x64xbf16>, vector<22x64xf32> -> vector<22x64xf32>
    %c1_240 = arith.constant 1 : index
    %c0_241 = arith.constant 0 : index
    %224 = vector.load %arg29[%c1_240, %c0_241] : memref<36x64xf32, #tpu.memory_space<vmem>>, vector<22x64xf32>
    %225 = arith.truncf %224 : vector<22x64xf32> to vector<22x64xbf16>
    %c0_242 = arith.constant 0 : index
    %c1_243 = arith.constant 1 : index
    %c0_244 = arith.constant 0 : index
    %c0_245 = arith.constant 0 : index
    %226 = vector.load %arg18[%c0_242, %c1_243, %c0_244, %c0_245] : memref<3x3x64x64xbf16, #tpu.memory_space<vmem>>, vector<1x1x64x64xbf16>
    %227 = vector.shape_cast %226 : vector<1x1x64x64xbf16> to vector<64x64xbf16>
    %cst_246 = arith.constant dense<0.000000e+00> : vector<22x64xf32>
    %228 = tpu.matmul %225, %227, %cst_246 {dimension_numbers = #tpu.dot_dimension_numbers<[1], [0], [0], [1], [0, 0, 1, 1], [], []>} : vector<22x64xbf16>, vector<64x64xbf16>, vector<22x64xf32> -> vector<22x64xf32>
    %229 = arith.addf %223, %228 : vector<22x64xf32>
    %c2_247 = arith.constant 2 : index
    %c0_248 = arith.constant 0 : index
    %230 = vector.load %arg29[%c2_247, %c0_248] : memref<36x64xf32, #tpu.memory_space<vmem>>, vector<22x64xf32>
    %231 = arith.truncf %230 : vector<22x64xf32> to vector<22x64xbf16>
    %c0_249 = arith.constant 0 : index
    %c2_250 = arith.constant 2 : index
    %c0_251 = arith.constant 0 : index
    %c0_252 = arith.constant 0 : index
    %232 = vector.load %arg18[%c0_249, %c2_250, %c0_251, %c0_252] : memref<3x3x64x64xbf16, #tpu.memory_space<vmem>>, vector<1x1x64x64xbf16>
    %233 = vector.shape_cast %232 : vector<1x1x64x64xbf16> to vector<64x64xbf16>
    %cst_253 = arith.constant dense<0.000000e+00> : vector<22x64xf32>
    %234 = tpu.matmul %231, %233, %cst_253 {dimension_numbers = #tpu.dot_dimension_numbers<[1], [0], [0], [1], [0, 0, 1, 1], [], []>} : vector<22x64xbf16>, vector<64x64xbf16>, vector<22x64xf32> -> vector<22x64xf32>
    %235 = arith.addf %229, %234 : vector<22x64xf32>
    %c6_254 = arith.constant 6 : index
    %c0_255 = arith.constant 0 : index
    %236 = vector.load %arg29[%c6_254, %c0_255] : memref<36x64xf32, #tpu.memory_space<vmem>>, vector<22x64xf32>
    %237 = arith.truncf %236 : vector<22x64xf32> to vector<22x64xbf16>
    %c1_256 = arith.constant 1 : index
    %c0_257 = arith.constant 0 : index
    %c0_258 = arith.constant 0 : index
    %c0_259 = arith.constant 0 : index
    %238 = vector.load %arg18[%c1_256, %c0_257, %c0_258, %c0_259] : memref<3x3x64x64xbf16, #tpu.memory_space<vmem>>, vector<1x1x64x64xbf16>
    %239 = vector.shape_cast %238 : vector<1x1x64x64xbf16> to vector<64x64xbf16>
    %cst_260 = arith.constant dense<0.000000e+00> : vector<22x64xf32>
    %240 = tpu.matmul %237, %239, %cst_260 {dimension_numbers = #tpu.dot_dimension_numbers<[1], [0], [0], [1], [0, 0, 1, 1], [], []>} : vector<22x64xbf16>, vector<64x64xbf16>, vector<22x64xf32> -> vector<22x64xf32>
    %241 = arith.addf %235, %240 : vector<22x64xf32>
    %c7_261 = arith.constant 7 : index
    %c0_262 = arith.constant 0 : index
    %242 = vector.load %arg29[%c7_261, %c0_262] : memref<36x64xf32, #tpu.memory_space<vmem>>, vector<22x64xf32>
    %243 = arith.truncf %242 : vector<22x64xf32> to vector<22x64xbf16>
    %c1_263 = arith.constant 1 : index
    %c1_264 = arith.constant 1 : index
    %c0_265 = arith.constant 0 : index
    %c0_266 = arith.constant 0 : index
    %244 = vector.load %arg18[%c1_263, %c1_264, %c0_265, %c0_266] : memref<3x3x64x64xbf16, #tpu.memory_space<vmem>>, vector<1x1x64x64xbf16>
    %245 = vector.shape_cast %244 : vector<1x1x64x64xbf16> to vector<64x64xbf16>
    %cst_267 = arith.constant dense<0.000000e+00> : vector<22x64xf32>
    %246 = tpu.matmul %243, %245, %cst_267 {dimension_numbers = #tpu.dot_dimension_numbers<[1], [0], [0], [1], [0, 0, 1, 1], [], []>} : vector<22x64xbf16>, vector<64x64xbf16>, vector<22x64xf32> -> vector<22x64xf32>
    %247 = arith.addf %241, %246 : vector<22x64xf32>
    %c8_268 = arith.constant 8 : index
    %c0_269 = arith.constant 0 : index
    %248 = vector.load %arg29[%c8_268, %c0_269] : memref<36x64xf32, #tpu.memory_space<vmem>>, vector<22x64xf32>
    %249 = arith.truncf %248 : vector<22x64xf32> to vector<22x64xbf16>
    %c1_270 = arith.constant 1 : index
    %c2_271 = arith.constant 2 : index
    %c0_272 = arith.constant 0 : index
    %c0_273 = arith.constant 0 : index
    %250 = vector.load %arg18[%c1_270, %c2_271, %c0_272, %c0_273] : memref<3x3x64x64xbf16, #tpu.memory_space<vmem>>, vector<1x1x64x64xbf16>
    %251 = vector.shape_cast %250 : vector<1x1x64x64xbf16> to vector<64x64xbf16>
    %cst_274 = arith.constant dense<0.000000e+00> : vector<22x64xf32>
    %252 = tpu.matmul %249, %251, %cst_274 {dimension_numbers = #tpu.dot_dimension_numbers<[1], [0], [0], [1], [0, 0, 1, 1], [], []>} : vector<22x64xbf16>, vector<64x64xbf16>, vector<22x64xf32> -> vector<22x64xf32>
    %253 = arith.addf %247, %252 : vector<22x64xf32>
    %c12_275 = arith.constant 12 : index
    %c0_276 = arith.constant 0 : index
    %254 = vector.load %arg29[%c12_275, %c0_276] : memref<36x64xf32, #tpu.memory_space<vmem>>, vector<22x64xf32>
    %255 = arith.truncf %254 : vector<22x64xf32> to vector<22x64xbf16>
    %c2_277 = arith.constant 2 : index
    %c0_278 = arith.constant 0 : index
    %c0_279 = arith.constant 0 : index
    %c0_280 = arith.constant 0 : index
    %256 = vector.load %arg18[%c2_277, %c0_278, %c0_279, %c0_280] : memref<3x3x64x64xbf16, #tpu.memory_space<vmem>>, vector<1x1x64x64xbf16>
    %257 = vector.shape_cast %256 : vector<1x1x64x64xbf16> to vector<64x64xbf16>
    %cst_281 = arith.constant dense<0.000000e+00> : vector<22x64xf32>
    %258 = tpu.matmul %255, %257, %cst_281 {dimension_numbers = #tpu.dot_dimension_numbers<[1], [0], [0], [1], [0, 0, 1, 1], [], []>} : vector<22x64xbf16>, vector<64x64xbf16>, vector<22x64xf32> -> vector<22x64xf32>
    %259 = arith.addf %253, %258 : vector<22x64xf32>
    %c13_282 = arith.constant 13 : index
    %c0_283 = arith.constant 0 : index
    %260 = vector.load %arg29[%c13_282, %c0_283] : memref<36x64xf32, #tpu.memory_space<vmem>>, vector<22x64xf32>
    %261 = arith.truncf %260 : vector<22x64xf32> to vector<22x64xbf16>
    %c2_284 = arith.constant 2 : index
    %c1_285 = arith.constant 1 : index
    %c0_286 = arith.constant 0 : index
    %c0_287 = arith.constant 0 : index
    %262 = vector.load %arg18[%c2_284, %c1_285, %c0_286, %c0_287] : memref<3x3x64x64xbf16, #tpu.memory_space<vmem>>, vector<1x1x64x64xbf16>
    %263 = vector.shape_cast %262 : vector<1x1x64x64xbf16> to vector<64x64xbf16>
    %cst_288 = arith.constant dense<0.000000e+00> : vector<22x64xf32>
    %264 = tpu.matmul %261, %263, %cst_288 {dimension_numbers = #tpu.dot_dimension_numbers<[1], [0], [0], [1], [0, 0, 1, 1], [], []>} : vector<22x64xbf16>, vector<64x64xbf16>, vector<22x64xf32> -> vector<22x64xf32>
    %265 = arith.addf %259, %264 : vector<22x64xf32>
    %c14_289 = arith.constant 14 : index
    %c0_290 = arith.constant 0 : index
    %266 = vector.load %arg29[%c14_289, %c0_290] : memref<36x64xf32, #tpu.memory_space<vmem>>, vector<22x64xf32>
    %267 = arith.truncf %266 : vector<22x64xf32> to vector<22x64xbf16>
    %c2_291 = arith.constant 2 : index
    %c2_292 = arith.constant 2 : index
    %c0_293 = arith.constant 0 : index
    %c0_294 = arith.constant 0 : index
    %268 = vector.load %arg18[%c2_291, %c2_292, %c0_293, %c0_294] : memref<3x3x64x64xbf16, #tpu.memory_space<vmem>>, vector<1x1x64x64xbf16>
    %269 = vector.shape_cast %268 : vector<1x1x64x64xbf16> to vector<64x64xbf16>
    %cst_295 = arith.constant dense<0.000000e+00> : vector<22x64xf32>
    %270 = tpu.matmul %267, %269, %cst_295 {dimension_numbers = #tpu.dot_dimension_numbers<[1], [0], [0], [1], [0, 0, 1, 1], [], []>} : vector<22x64xbf16>, vector<64x64xbf16>, vector<22x64xf32> -> vector<22x64xf32>
    %271 = arith.addf %265, %270 : vector<22x64xf32>
    %c0_296 = arith.constant 0 : index
    %c0_297 = arith.constant 0 : index
    %272 = vector.load %arg19[%c0_296, %c0_297] : memref<1x64xf32, #tpu.memory_space<vmem>>, vector<1x64xf32>
    %273 = vector.broadcast %272 : vector<1x64xf32> to vector<22x64xf32>
    %274 = arith.addf %271, %273 : vector<22x64xf32>
    %cst_298 = arith.constant 0.999994993 : f32
    %275 = vector.broadcast %cst_298 : f32 to vector<22x64xf32>
    %276 = arith.mulf %274, %275 : vector<22x64xf32>
    %c0_299 = arith.constant 0 : index
    %c0_300 = arith.constant 0 : index
    %277 = vector.load %arg3[%c0_299, %c0_300] : memref<100x78xbf16, #tpu.memory_space<vmem>>, vector<100x78xbf16>
    %c0_301 = arith.constant 0 : index
    %c0_302 = arith.constant 0 : index
    %278 = vector.load %arg27[%c0_301, %c0_302] : memref<78x64xf32, #tpu.memory_space<vmem>>, vector<78x64xf32>
    %279 = arith.truncf %278 : vector<78x64xf32> to vector<78x64xbf16>
    %cst_303 = arith.constant dense<0.000000e+00> : vector<100x64xf32>
    %280 = tpu.matmul %277, %279, %cst_303 {dimension_numbers = #tpu.dot_dimension_numbers<[1], [0], [0], [1], [0, 0, 1, 1], [], []>} : vector<100x78xbf16>, vector<78x64xbf16>, vector<100x64xf32> -> vector<100x64xf32>
    %281 = arith.truncf %280 : vector<100x64xf32> to vector<100x64xbf16>
    %c0_304 = arith.constant 0 : index
    %c0_305 = arith.constant 0 : index
    %282 = vector.load %arg8[%c0_304, %c0_305] : memref<64x192xbf16, #tpu.memory_space<vmem>>, vector<64x192xbf16>
    %cst_306 = arith.constant dense<0.000000e+00> : vector<100x192xf32>
    %283 = tpu.matmul %281, %282, %cst_306 {dimension_numbers = #tpu.dot_dimension_numbers<[1], [0], [0], [1], [0, 0, 1, 1], [], []>} : vector<100x64xbf16>, vector<64x192xbf16>, vector<100x192xf32> -> vector<100x192xf32>
    %c0_307 = arith.constant 0 : index
    %c0_308 = arith.constant 0 : index
    %284 = vector.load %arg7[%c0_307, %c0_308] : memref<100x22xbf16, #tpu.memory_space<vmem>>, vector<100x22xbf16>
    %285 = arith.truncf %276 : vector<22x64xf32> to vector<22x64xbf16>
    %cst_309 = arith.constant dense<0.000000e+00> : vector<100x64xf32>
    %286 = tpu.matmul %284, %285, %cst_309 {dimension_numbers = #tpu.dot_dimension_numbers<[1], [0], [0], [1], [0, 0, 1, 1], [], []>} : vector<100x22xbf16>, vector<22x64xbf16>, vector<100x64xf32> -> vector<100x64xf32>
    %287 = arith.truncf %286 : vector<100x64xf32> to vector<100x64xbf16>
    %c0_310 = arith.constant 0 : index
    %c0_311 = arith.constant 0 : index
    %288 = vector.load %arg9[%c0_310, %c0_311] : memref<64x192xbf16, #tpu.memory_space<vmem>>, vector<64x192xbf16>
    %cst_312 = arith.constant dense<0.000000e+00> : vector<100x192xf32>
    %289 = tpu.matmul %287, %288, %cst_312 {dimension_numbers = #tpu.dot_dimension_numbers<[1], [0], [0], [1], [0, 0, 1, 1], [], []>} : vector<100x64xbf16>, vector<64x192xbf16>, vector<100x192xf32> -> vector<100x192xf32>
    %290 = arith.addf %283, %289 : vector<100x192xf32>
    %c0_313 = arith.constant 0 : index
    %c0_314 = arith.constant 0 : index
    %291 = vector.load %arg30[%c0_313, %c0_314] : memref<100x192xf32, #tpu.memory_space<vmem>>, vector<100x192xf32>
    tpu.vector_store %arg30[%c0_313, %c0_314], %290 {strides = array<i32>} : memref<100x192xf32, #tpu.memory_space<vmem>>, vector<100x192xf32>,
    %c0_315 = arith.constant 0 : index
    %c0_316 = arith.constant 0 : index
    %292 = vector.load %arg30[%c0_315, %c0_316] : memref<100x192xf32, #tpu.memory_space<vmem>>, vector<78x192xf32>
    %293 = arith.truncf %292 : vector<78x192xf32> to vector<78x192xbf16>
    %c0_317 = arith.constant 0 : index
    %c0_318 = arith.constant 0 : index
    %c0_319 = arith.constant 0 : index
    %c0_320 = arith.constant 0 : index
    %294 = vector.load %arg20[%c0_317, %c0_318, %c0_319, %c0_320] : memref<3x3x192x64xbf16, #tpu.memory_space<vmem>>, vector<1x1x192x64xbf16>
    %295 = vector.shape_cast %294 : vector<1x1x192x64xbf16> to vector<192x64xbf16>
    %cst_321 = arith.constant dense<0.000000e+00> : vector<78x64xf32>
    %296 = tpu.matmul %293, %295, %cst_321 {dimension_numbers = #tpu.dot_dimension_numbers<[1], [0], [0], [1], [0, 0, 1, 1], [], []>} : vector<78x192xbf16>, vector<192x64xbf16>, vector<78x64xf32> -> vector<78x64xf32>
    %c1_322 = arith.constant 1 : index
    %c0_323 = arith.constant 0 : index
    %297 = vector.load %arg30[%c1_322, %c0_323] : memref<100x192xf32, #tpu.memory_space<vmem>>, vector<78x192xf32>
    %298 = arith.truncf %297 : vector<78x192xf32> to vector<78x192xbf16>
    %c0_324 = arith.constant 0 : index
    %c1_325 = arith.constant 1 : index
    %c0_326 = arith.constant 0 : index
    %c0_327 = arith.constant 0 : index
    %299 = vector.load %arg20[%c0_324, %c1_325, %c0_326, %c0_327] : memref<3x3x192x64xbf16, #tpu.memory_space<vmem>>, vector<1x1x192x64xbf16>
    %300 = vector.shape_cast %299 : vector<1x1x192x64xbf16> to vector<192x64xbf16>
    %cst_328 = arith.constant dense<0.000000e+00> : vector<78x64xf32>
    %301 = tpu.matmul %298, %300, %cst_328 {dimension_numbers = #tpu.dot_dimension_numbers<[1], [0], [0], [1], [0, 0, 1, 1], [], []>} : vector<78x192xbf16>, vector<192x64xbf16>, vector<78x64xf32> -> vector<78x64xf32>
    %302 = arith.addf %296, %301 : vector<78x64xf32>
    %c2_329 = arith.constant 2 : index
    %c0_330 = arith.constant 0 : index
    %303 = vector.load %arg30[%c2_329, %c0_330] : memref<100x192xf32, #tpu.memory_space<vmem>>, vector<78x192xf32>
    %304 = arith.truncf %303 : vector<78x192xf32> to vector<78x192xbf16>
    %c0_331 = arith.constant 0 : index
    %c2_332 = arith.constant 2 : index
    %c0_333 = arith.constant 0 : index
    %c0_334 = arith.constant 0 : index
    %305 = vector.load %arg20[%c0_331, %c2_332, %c0_333, %c0_334] : memref<3x3x192x64xbf16, #tpu.memory_space<vmem>>, vector<1x1x192x64xbf16>
    %306 = vector.shape_cast %305 : vector<1x1x192x64xbf16> to vector<192x64xbf16>
    %cst_335 = arith.constant dense<0.000000e+00> : vector<78x64xf32>
    %307 = tpu.matmul %304, %306, %cst_335 {dimension_numbers = #tpu.dot_dimension_numbers<[1], [0], [0], [1], [0, 0, 1, 1], [], []>} : vector<78x192xbf16>, vector<192x64xbf16>, vector<78x64xf32> -> vector<78x64xf32>
    %308 = arith.addf %302, %307 : vector<78x64xf32>
    %c10_336 = arith.constant 10 : index
    %c0_337 = arith.constant 0 : index
    %309 = vector.load %arg30[%c10_336, %c0_337] : memref<100x192xf32, #tpu.memory_space<vmem>>, vector<78x192xf32>
    %310 = arith.truncf %309 : vector<78x192xf32> to vector<78x192xbf16>
    %c1_338 = arith.constant 1 : index
    %c0_339 = arith.constant 0 : index
    %c0_340 = arith.constant 0 : index
    %c0_341 = arith.constant 0 : index
    %311 = vector.load %arg20[%c1_338, %c0_339, %c0_340, %c0_341] : memref<3x3x192x64xbf16, #tpu.memory_space<vmem>>, vector<1x1x192x64xbf16>
    %312 = vector.shape_cast %311 : vector<1x1x192x64xbf16> to vector<192x64xbf16>
    %cst_342 = arith.constant dense<0.000000e+00> : vector<78x64xf32>
    %313 = tpu.matmul %310, %312, %cst_342 {dimension_numbers = #tpu.dot_dimension_numbers<[1], [0], [0], [1], [0, 0, 1, 1], [], []>} : vector<78x192xbf16>, vector<192x64xbf16>, vector<78x64xf32> -> vector<78x64xf32>
    %314 = arith.addf %308, %313 : vector<78x64xf32>
    %c11_343 = arith.constant 11 : index
    %c0_344 = arith.constant 0 : index
    %315 = vector.load %arg30[%c11_343, %c0_344] : memref<100x192xf32, #tpu.memory_space<vmem>>, vector<78x192xf32>
    %316 = arith.truncf %315 : vector<78x192xf32> to vector<78x192xbf16>
    %c1_345 = arith.constant 1 : index
    %c1_346 = arith.constant 1 : index
    %c0_347 = arith.constant 0 : index
    %c0_348 = arith.constant 0 : index
    %317 = vector.load %arg20[%c1_345, %c1_346, %c0_347, %c0_348] : memref<3x3x192x64xbf16, #tpu.memory_space<vmem>>, vector<1x1x192x64xbf16>
    %318 = vector.shape_cast %317 : vector<1x1x192x64xbf16> to vector<192x64xbf16>
    %cst_349 = arith.constant dense<0.000000e+00> : vector<78x64xf32>
    %319 = tpu.matmul %316, %318, %cst_349 {dimension_numbers = #tpu.dot_dimension_numbers<[1], [0], [0], [1], [0, 0, 1, 1], [], []>} : vector<78x192xbf16>, vector<192x64xbf16>, vector<78x64xf32> -> vector<78x64xf32>
    %320 = arith.addf %314, %319 : vector<78x64xf32>
    %c12_350 = arith.constant 12 : index
    %c0_351 = arith.constant 0 : index
    %321 = vector.load %arg30[%c12_350, %c0_351] : memref<100x192xf32, #tpu.memory_space<vmem>>, vector<78x192xf32>
    %322 = arith.truncf %321 : vector<78x192xf32> to vector<78x192xbf16>
    %c1_352 = arith.constant 1 : index
    %c2_353 = arith.constant 2 : index
    %c0_354 = arith.constant 0 : index
    %c0_355 = arith.constant 0 : index
    %323 = vector.load %arg20[%c1_352, %c2_353, %c0_354, %c0_355] : memref<3x3x192x64xbf16, #tpu.memory_space<vmem>>, vector<1x1x192x64xbf16>
    %324 = vector.shape_cast %323 : vector<1x1x192x64xbf16> to vector<192x64xbf16>
    %cst_356 = arith.constant dense<0.000000e+00> : vector<78x64xf32>
    %325 = tpu.matmul %322, %324, %cst_356 {dimension_numbers = #tpu.dot_dimension_numbers<[1], [0], [0], [1], [0, 0, 1, 1], [], []>} : vector<78x192xbf16>, vector<192x64xbf16>, vector<78x64xf32> -> vector<78x64xf32>
    %326 = arith.addf %320, %325 : vector<78x64xf32>
    %c20_357 = arith.constant 20 : index
    %c0_358 = arith.constant 0 : index
    %327 = vector.load %arg30[%c20_357, %c0_358] : memref<100x192xf32, #tpu.memory_space<vmem>>, vector<78x192xf32>
    %328 = arith.truncf %327 : vector<78x192xf32> to vector<78x192xbf16>
    %c2_359 = arith.constant 2 : index
    %c0_360 = arith.constant 0 : index
    %c0_361 = arith.constant 0 : index
    %c0_362 = arith.constant 0 : index
    %329 = vector.load %arg20[%c2_359, %c0_360, %c0_361, %c0_362] : memref<3x3x192x64xbf16, #tpu.memory_space<vmem>>, vector<1x1x192x64xbf16>
    %330 = vector.shape_cast %329 : vector<1x1x192x64xbf16> to vector<192x64xbf16>
    %cst_363 = arith.constant dense<0.000000e+00> : vector<78x64xf32>
    %331 = tpu.matmul %328, %330, %cst_363 {dimension_numbers = #tpu.dot_dimension_numbers<[1], [0], [0], [1], [0, 0, 1, 1], [], []>} : vector<78x192xbf16>, vector<192x64xbf16>, vector<78x64xf32> -> vector<78x64xf32>
    %332 = arith.addf %326, %331 : vector<78x64xf32>
    %c21_364 = arith.constant 21 : index
    %c0_365 = arith.constant 0 : index
    %333 = vector.load %arg30[%c21_364, %c0_365] : memref<100x192xf32, #tpu.memory_space<vmem>>, vector<78x192xf32>
    %334 = arith.truncf %333 : vector<78x192xf32> to vector<78x192xbf16>
    %c2_366 = arith.constant 2 : index
    %c1_367 = arith.constant 1 : index
    %c0_368 = arith.constant 0 : index
    %c0_369 = arith.constant 0 : index
    %335 = vector.load %arg20[%c2_366, %c1_367, %c0_368, %c0_369] : memref<3x3x192x64xbf16, #tpu.memory_space<vmem>>, vector<1x1x192x64xbf16>
    %336 = vector.shape_cast %335 : vector<1x1x192x64xbf16> to vector<192x64xbf16>
    %cst_370 = arith.constant dense<0.000000e+00> : vector<78x64xf32>
    %337 = tpu.matmul %334, %336, %cst_370 {dimension_numbers = #tpu.dot_dimension_numbers<[1], [0], [0], [1], [0, 0, 1, 1], [], []>} : vector<78x192xbf16>, vector<192x64xbf16>, vector<78x64xf32> -> vector<78x64xf32>
    %338 = arith.addf %332, %337 : vector<78x64xf32>
    %c22_371 = arith.constant 22 : index
    %c0_372 = arith.constant 0 : index
    %339 = vector.load %arg30[%c22_371, %c0_372] : memref<100x192xf32, #tpu.memory_space<vmem>>, vector<78x192xf32>
    %340 = arith.truncf %339 : vector<78x192xf32> to vector<78x192xbf16>
    %c2_373 = arith.constant 2 : index
    %c2_374 = arith.constant 2 : index
    %c0_375 = arith.constant 0 : index
    %c0_376 = arith.constant 0 : index
    %341 = vector.load %arg20[%c2_373, %c2_374, %c0_375, %c0_376] : memref<3x3x192x64xbf16, #tpu.memory_space<vmem>>, vector<1x1x192x64xbf16>
    %342 = vector.shape_cast %341 : vector<1x1x192x64xbf16> to vector<192x64xbf16>
    %cst_377 = arith.constant dense<0.000000e+00> : vector<78x64xf32>
    %343 = tpu.matmul %340, %342, %cst_377 {dimension_numbers = #tpu.dot_dimension_numbers<[1], [0], [0], [1], [0, 0, 1, 1], [], []>} : vector<78x192xbf16>, vector<192x64xbf16>, vector<78x64xf32> -> vector<78x64xf32>
    %344 = arith.addf %338, %343 : vector<78x64xf32>
    %c0_378 = arith.constant 0 : index
    %c0_379 = arith.constant 0 : index
    %345 = vector.load %arg21[%c0_378, %c0_379] : memref<1x64xf32, #tpu.memory_space<vmem>>, vector<1x64xf32>
    %346 = vector.broadcast %345 : vector<1x64xf32> to vector<78x64xf32>
    %347 = arith.addf %344, %346 : vector<78x64xf32>
    %cst_380 = arith.constant 0.000000e+00 : f32
    %348 = vector.broadcast %cst_380 : f32 to vector<78x64xf32>
    %349 = arith.maximumf %347, %348 : vector<78x64xf32>
    %c0_381 = arith.constant 0 : index
    %c0_382 = arith.constant 0 : index
    %350 = vector.load %arg3[%c0_381, %c0_382] : memref<100x78xbf16, #tpu.memory_space<vmem>>, vector<100x78xbf16>
    %351 = arith.truncf %349 : vector<78x64xf32> to vector<78x64xbf16>
    %cst_383 = arith.constant dense<0.000000e+00> : vector<100x64xf32>
    %352 = tpu.matmul %350, %351, %cst_383 {dimension_numbers = #tpu.dot_dimension_numbers<[1], [0], [0], [1], [0, 0, 1, 1], [], []>} : vector<100x78xbf16>, vector<78x64xbf16>, vector<100x64xf32> -> vector<100x64xf32>
    %c0_384 = arith.constant 0 : index
    %c0_385 = arith.constant 0 : index
    %353 = vector.load %arg31[%c0_384, %c0_385] : memref<100x64xf32, #tpu.memory_space<vmem>>, vector<100x64xf32>
    tpu.vector_store %arg31[%c0_384, %c0_385], %352 {strides = array<i32>} : memref<100x64xf32, #tpu.memory_space<vmem>>, vector<100x64xf32>,
    %c0_386 = arith.constant 0 : index
    %c0_387 = arith.constant 0 : index
    %354 = vector.load %arg31[%c0_386, %c0_387] : memref<100x64xf32, #tpu.memory_space<vmem>>, vector<78x64xf32>
    %355 = arith.truncf %354 : vector<78x64xf32> to vector<78x64xbf16>
    %c0_388 = arith.constant 0 : index
    %c0_389 = arith.constant 0 : index
    %c0_390 = arith.constant 0 : index
    %c0_391 = arith.constant 0 : index
    %356 = vector.load %arg22[%c0_388, %c0_389, %c0_390, %c0_391] : memref<3x3x64x64xbf16, #tpu.memory_space<vmem>>, vector<1x1x64x64xbf16>
    %357 = vector.shape_cast %356 : vector<1x1x64x64xbf16> to vector<64x64xbf16>
    %cst_392 = arith.constant dense<0.000000e+00> : vector<78x64xf32>
    %358 = tpu.matmul %355, %357, %cst_392 {dimension_numbers = #tpu.dot_dimension_numbers<[1], [0], [0], [1], [0, 0, 1, 1], [], []>} : vector<78x64xbf16>, vector<64x64xbf16>, vector<78x64xf32> -> vector<78x64xf32>
    %c1_393 = arith.constant 1 : index
    %c0_394 = arith.constant 0 : index
    %359 = vector.load %arg31[%c1_393, %c0_394] : memref<100x64xf32, #tpu.memory_space<vmem>>, vector<78x64xf32>
    %360 = arith.truncf %359 : vector<78x64xf32> to vector<78x64xbf16>
    %c0_395 = arith.constant 0 : index
    %c1_396 = arith.constant 1 : index
    %c0_397 = arith.constant 0 : index
    %c0_398 = arith.constant 0 : index
    %361 = vector.load %arg22[%c0_395, %c1_396, %c0_397, %c0_398] : memref<3x3x64x64xbf16, #tpu.memory_space<vmem>>, vector<1x1x64x64xbf16>
    %362 = vector.shape_cast %361 : vector<1x1x64x64xbf16> to vector<64x64xbf16>
    %cst_399 = arith.constant dense<0.000000e+00> : vector<78x64xf32>
    %363 = tpu.matmul %360, %362, %cst_399 {dimension_numbers = #tpu.dot_dimension_numbers<[1], [0], [0], [1], [0, 0, 1, 1], [], []>} : vector<78x64xbf16>, vector<64x64xbf16>, vector<78x64xf32> -> vector<78x64xf32>
    %364 = arith.addf %358, %363 : vector<78x64xf32>
    %c2_400 = arith.constant 2 : index
    %c0_401 = arith.constant 0 : index
    %365 = vector.load %arg31[%c2_400, %c0_401] : memref<100x64xf32, #tpu.memory_space<vmem>>, vector<78x64xf32>
    %366 = arith.truncf %365 : vector<78x64xf32> to vector<78x64xbf16>
    %c0_402 = arith.constant 0 : index
    %c2_403 = arith.constant 2 : index
    %c0_404 = arith.constant 0 : index
    %c0_405 = arith.constant 0 : index
    %367 = vector.load %arg22[%c0_402, %c2_403, %c0_404, %c0_405] : memref<3x3x64x64xbf16, #tpu.memory_space<vmem>>, vector<1x1x64x64xbf16>
    %368 = vector.shape_cast %367 : vector<1x1x64x64xbf16> to vector<64x64xbf16>
    %cst_406 = arith.constant dense<0.000000e+00> : vector<78x64xf32>
    %369 = tpu.matmul %366, %368, %cst_406 {dimension_numbers = #tpu.dot_dimension_numbers<[1], [0], [0], [1], [0, 0, 1, 1], [], []>} : vector<78x64xbf16>, vector<64x64xbf16>, vector<78x64xf32> -> vector<78x64xf32>
    %370 = arith.addf %364, %369 : vector<78x64xf32>
    %c10_407 = arith.constant 10 : index
    %c0_408 = arith.constant 0 : index
    %371 = vector.load %arg31[%c10_407, %c0_408] : memref<100x64xf32, #tpu.memory_space<vmem>>, vector<78x64xf32>
    %372 = arith.truncf %371 : vector<78x64xf32> to vector<78x64xbf16>
    %c1_409 = arith.constant 1 : index
    %c0_410 = arith.constant 0 : index
    %c0_411 = arith.constant 0 : index
    %c0_412 = arith.constant 0 : index
    %373 = vector.load %arg22[%c1_409, %c0_410, %c0_411, %c0_412] : memref<3x3x64x64xbf16, #tpu.memory_space<vmem>>, vector<1x1x64x64xbf16>
    %374 = vector.shape_cast %373 : vector<1x1x64x64xbf16> to vector<64x64xbf16>
    %cst_413 = arith.constant dense<0.000000e+00> : vector<78x64xf32>
    %375 = tpu.matmul %372, %374, %cst_413 {dimension_numbers = #tpu.dot_dimension_numbers<[1], [0], [0], [1], [0, 0, 1, 1], [], []>} : vector<78x64xbf16>, vector<64x64xbf16>, vector<78x64xf32> -> vector<78x64xf32>
    %376 = arith.addf %370, %375 : vector<78x64xf32>
    %c11_414 = arith.constant 11 : index
    %c0_415 = arith.constant 0 : index
    %377 = vector.load %arg31[%c11_414, %c0_415] : memref<100x64xf32, #tpu.memory_space<vmem>>, vector<78x64xf32>
    %378 = arith.truncf %377 : vector<78x64xf32> to vector<78x64xbf16>
    %c1_416 = arith.constant 1 : index
    %c1_417 = arith.constant 1 : index
    %c0_418 = arith.constant 0 : index
    %c0_419 = arith.constant 0 : index
    %379 = vector.load %arg22[%c1_416, %c1_417, %c0_418, %c0_419] : memref<3x3x64x64xbf16, #tpu.memory_space<vmem>>, vector<1x1x64x64xbf16>
    %380 = vector.shape_cast %379 : vector<1x1x64x64xbf16> to vector<64x64xbf16>
    %cst_420 = arith.constant dense<0.000000e+00> : vector<78x64xf32>
    %381 = tpu.matmul %378, %380, %cst_420 {dimension_numbers = #tpu.dot_dimension_numbers<[1], [0], [0], [1], [0, 0, 1, 1], [], []>} : vector<78x64xbf16>, vector<64x64xbf16>, vector<78x64xf32> -> vector<78x64xf32>
    %382 = arith.addf %376, %381 : vector<78x64xf32>
    %c12_421 = arith.constant 12 : index
    %c0_422 = arith.constant 0 : index
    %383 = vector.load %arg31[%c12_421, %c0_422] : memref<100x64xf32, #tpu.memory_space<vmem>>, vector<78x64xf32>
    %384 = arith.truncf %383 : vector<78x64xf32> to vector<78x64xbf16>
    %c1_423 = arith.constant 1 : index
    %c2_424 = arith.constant 2 : index
    %c0_425 = arith.constant 0 : index
    %c0_426 = arith.constant 0 : index
    %385 = vector.load %arg22[%c1_423, %c2_424, %c0_425, %c0_426] : memref<3x3x64x64xbf16, #tpu.memory_space<vmem>>, vector<1x1x64x64xbf16>
    %386 = vector.shape_cast %385 : vector<1x1x64x64xbf16> to vector<64x64xbf16>
    %cst_427 = arith.constant dense<0.000000e+00> : vector<78x64xf32>
    %387 = tpu.matmul %384, %386, %cst_427 {dimension_numbers = #tpu.dot_dimension_numbers<[1], [0], [0], [1], [0, 0, 1, 1], [], []>} : vector<78x64xbf16>, vector<64x64xbf16>, vector<78x64xf32> -> vector<78x64xf32>
    %388 = arith.addf %382, %387 : vector<78x64xf32>
    %c20_428 = arith.constant 20 : index
    %c0_429 = arith.constant 0 : index
    %389 = vector.load %arg31[%c20_428, %c0_429] : memref<100x64xf32, #tpu.memory_space<vmem>>, vector<78x64xf32>
    %390 = arith.truncf %389 : vector<78x64xf32> to vector<78x64xbf16>
    %c2_430 = arith.constant 2 : index
    %c0_431 = arith.constant 0 : index
    %c0_432 = arith.constant 0 : index
    %c0_433 = arith.constant 0 : index
    %391 = vector.load %arg22[%c2_430, %c0_431, %c0_432, %c0_433] : memref<3x3x64x64xbf16, #tpu.memory_space<vmem>>, vector<1x1x64x64xbf16>
    %392 = vector.shape_cast %391 : vector<1x1x64x64xbf16> to vector<64x64xbf16>
    %cst_434 = arith.constant dense<0.000000e+00> : vector<78x64xf32>
    %393 = tpu.matmul %390, %392, %cst_434 {dimension_numbers = #tpu.dot_dimension_numbers<[1], [0], [0], [1], [0, 0, 1, 1], [], []>} : vector<78x64xbf16>, vector<64x64xbf16>, vector<78x64xf32> -> vector<78x64xf32>
    %394 = arith.addf %388, %393 : vector<78x64xf32>
    %c21_435 = arith.constant 21 : index
    %c0_436 = arith.constant 0 : index
    %395 = vector.load %arg31[%c21_435, %c0_436] : memref<100x64xf32, #tpu.memory_space<vmem>>, vector<78x64xf32>
    %396 = arith.truncf %395 : vector<78x64xf32> to vector<78x64xbf16>
    %c2_437 = arith.constant 2 : index
    %c1_438 = arith.constant 1 : index
    %c0_439 = arith.constant 0 : index
    %c0_440 = arith.constant 0 : index
    %397 = vector.load %arg22[%c2_437, %c1_438, %c0_439, %c0_440] : memref<3x3x64x64xbf16, #tpu.memory_space<vmem>>, vector<1x1x64x64xbf16>
    %398 = vector.shape_cast %397 : vector<1x1x64x64xbf16> to vector<64x64xbf16>
    %cst_441 = arith.constant dense<0.000000e+00> : vector<78x64xf32>
    %399 = tpu.matmul %396, %398, %cst_441 {dimension_numbers = #tpu.dot_dimension_numbers<[1], [0], [0], [1], [0, 0, 1, 1], [], []>} : vector<78x64xbf16>, vector<64x64xbf16>, vector<78x64xf32> -> vector<78x64xf32>
    %400 = arith.addf %394, %399 : vector<78x64xf32>
    %c22_442 = arith.constant 22 : index
    %c0_443 = arith.constant 0 : index
    %401 = vector.load %arg31[%c22_442, %c0_443] : memref<100x64xf32, #tpu.memory_space<vmem>>, vector<78x64xf32>
    %402 = arith.truncf %401 : vector<78x64xf32> to vector<78x64xbf16>
    %c2_444 = arith.constant 2 : index
    %c2_445 = arith.constant 2 : index
    %c0_446 = arith.constant 0 : index
    %c0_447 = arith.constant 0 : index
    %403 = vector.load %arg22[%c2_444, %c2_445, %c0_446, %c0_447] : memref<3x3x64x64xbf16, #tpu.memory_space<vmem>>, vector<1x1x64x64xbf16>
    %404 = vector.shape_cast %403 : vector<1x1x64x64xbf16> to vector<64x64xbf16>
    %cst_448 = arith.constant dense<0.000000e+00> : vector<78x64xf32>
    %405 = tpu.matmul %402, %404, %cst_448 {dimension_numbers = #tpu.dot_dimension_numbers<[1], [0], [0], [1], [0, 0, 1, 1], [], []>} : vector<78x64xbf16>, vector<64x64xbf16>, vector<78x64xf32> -> vector<78x64xf32>
    %406 = arith.addf %400, %405 : vector<78x64xf32>
    %c0_449 = arith.constant 0 : index
    %c0_450 = arith.constant 0 : index
    %407 = vector.load %arg23[%c0_449, %c0_450] : memref<1x64xf32, #tpu.memory_space<vmem>>, vector<1x64xf32>
    %408 = vector.broadcast %407 : vector<1x64xf32> to vector<78x64xf32>
    %409 = arith.addf %406, %408 : vector<78x64xf32>
    %c0_451 = arith.constant 0 : index
    %c0_452 = arith.constant 0 : index
    %c0_453 = arith.constant 0 : index
    %410 = vector.load %arg10[%c0_451, %c0_452, %c0_453] : memref<2x32x78xf32, #tpu.memory_space<vmem>>, vector<1x32x78xf32>
    %411 = vector.shape_cast %410 : vector<1x32x78xf32> to vector<32x78xf32>
    %cst_454 = arith.constant dense<0.000000e+00> : vector<32x64xf32>
    %412 = tpu.matmul %411, %409, %cst_454 {dimension_numbers = #tpu.dot_dimension_numbers<[1], [0], [0], [1], [0, 0, 1, 1], [], []>} : vector<32x78xf32>, vector<78x64xf32>, vector<32x64xf32> -> vector<32x64xf32>
    %c0_455 = arith.constant 0 : index
    %c0_456 = arith.constant 0 : index
    %c0_457 = arith.constant 0 : index
    %413 = vector.load %arg11[%c0_455, %c0_456, %c0_457] : memref<2x64x128xf32, #tpu.memory_space<vmem>>, vector<1x64x128xf32>
    %414 = vector.shape_cast %413 : vector<1x64x128xf32> to vector<64x128xf32>
    %cst_458 = arith.constant dense<0.000000e+00> : vector<32x128xf32>
    %415 = tpu.matmul %412, %414, %cst_458 {dimension_numbers = #tpu.dot_dimension_numbers<[1], [0], [0], [1], [0, 0, 1, 1], [], []>} : vector<32x64xf32>, vector<64x128xf32>, vector<32x128xf32> -> vector<32x128xf32>
    %c1_459 = arith.constant 1 : index
    %c0_460 = arith.constant 0 : index
    %c0_461 = arith.constant 0 : index
    %416 = vector.load %arg10[%c1_459, %c0_460, %c0_461] : memref<2x32x78xf32, #tpu.memory_space<vmem>>, vector<1x32x78xf32>
    %417 = vector.shape_cast %416 : vector<1x32x78xf32> to vector<32x78xf32>
    %cst_462 = arith.constant dense<0.000000e+00> : vector<32x64xf32>
    %418 = tpu.matmul %417, %409, %cst_462 {dimension_numbers = #tpu.dot_dimension_numbers<[1], [0], [0], [1], [0, 0, 1, 1], [], []>} : vector<32x78xf32>, vector<78x64xf32>, vector<32x64xf32> -> vector<32x64xf32>
    %c1_463 = arith.constant 1 : index
    %c0_464 = arith.constant 0 : index
    %c0_465 = arith.constant 0 : index
    %419 = vector.load %arg11[%c1_463, %c0_464, %c0_465] : memref<2x64x128xf32, #tpu.memory_space<vmem>>, vector<1x64x128xf32>
    %420 = vector.shape_cast %419 : vector<1x64x128xf32> to vector<64x128xf32>
    %cst_466 = arith.constant dense<0.000000e+00> : vector<32x128xf32>
    %421 = tpu.matmul %418, %420, %cst_466 {dimension_numbers = #tpu.dot_dimension_numbers<[1], [0], [0], [1], [0, 0, 1, 1], [], []>} : vector<32x64xf32>, vector<64x128xf32>, vector<32x128xf32> -> vector<32x128xf32>
    %422 = arith.addf %415, %421 : vector<32x128xf32>
    %c0_467 = arith.constant 0 : index
    %c0_468 = arith.constant 0 : index
    %c0_469 = arith.constant 0 : index
    %423 = vector.load %arg24[%c0_467, %c0_468, %c0_469] : memref<1x32x128xf32, #tpu.memory_space<vmem>>, vector<1x32x128xf32>
    %424 = vector.shape_cast %423 : vector<1x32x128xf32> to vector<32x128xf32>
    %425 = vector.shape_cast %422 : vector<32x128xf32> to vector<1x32x128xf32>
    tpu.vector_store %arg24[%c0_467, %c0_468, %c0_469], %425 {strides = array<i32>} : memref<1x32x128xf32, #tpu.memory_space<vmem>>, vector<1x32x128xf32>,
    return
  }
  func.func @transform_0(%arg0: i32) -> (i32, i32, i32) {
    %c0_i32 = arith.constant 0 : i32
    %c0_i32_0 = arith.constant 0 : i32
    %c0_i32_1 = arith.constant 0 : i32
    return %arg0, %c0_i32, %c0_i32_0 : i32, i32, i32
  }
  func.func @transform_1(%arg0: i32) -> (i32, i32) {
    %c0_i32 = arith.constant 0 : i32
    %c0_i32_0 = arith.constant 0 : i32
    %c0_i32_1 = arith.constant 0 : i32
    return %c0_i32, %c0_i32_0 : i32, i32
  }
  func.func @transform_2(%arg0: i32) -> (i32, i32) {
    %c0_i32 = arith.constant 0 : i32
    %c0_i32_0 = arith.constant 0 : i32
    %c0_i32_1 = arith.constant 0 : i32
    return %c0_i32, %c0_i32_0 : i32, i32
  }
  func.func @transform_3(%arg0: i32) -> (i32, i32) {
    %c0_i32 = arith.constant 0 : i32
    %c0_i32_0 = arith.constant 0 : i32
    %c0_i32_1 = arith.constant 0 : i32
    return %c0_i32, %c0_i32_0 : i32, i32
  }
  func.func @transform_4(%arg0: i32) -> (i32, i32, i32) {
    %c0_i32 = arith.constant 0 : i32
    %c0_i32_0 = arith.constant 0 : i32
    %c0_i32_1 = arith.constant 0 : i32
    %c0_i32_2 = arith.constant 0 : i32
    return %c0_i32, %c0_i32_0, %c0_i32_1 : i32, i32, i32
  }
  func.func @transform_5(%arg0: i32) -> (i32, i32, i32) {
    %c0_i32 = arith.constant 0 : i32
    %c0_i32_0 = arith.constant 0 : i32
    %c0_i32_1 = arith.constant 0 : i32
    %c0_i32_2 = arith.constant 0 : i32
    return %c0_i32, %c0_i32_0, %c0_i32_1 : i32, i32, i32
  }
  func.func @transform_6(%arg0: i32) -> (i32, i32) {
    %c0_i32 = arith.constant 0 : i32
    %c0_i32_0 = arith.constant 0 : i32
    %c0_i32_1 = arith.constant 0 : i32
    return %c0_i32, %c0_i32_0 : i32, i32
  }
  func.func @transform_7(%arg0: i32) -> (i32, i32) {
    %c0_i32 = arith.constant 0 : i32
    %c0_i32_0 = arith.constant 0 : i32
    %c0_i32_1 = arith.constant 0 : i32
    return %c0_i32, %c0_i32_0 : i32, i32
  }
  func.func @transform_8(%arg0: i32) -> (i32, i32) {
    %c0_i32 = arith.constant 0 : i32
    %c0_i32_0 = arith.constant 0 : i32
    %c0_i32_1 = arith.constant 0 : i32
    return %c0_i32, %c0_i32_0 : i32, i32
  }
  func.func @transform_9(%arg0: i32) -> (i32, i32, i32) {
    %c0_i32 = arith.constant 0 : i32
    %c0_i32_0 = arith.constant 0 : i32
    %c0_i32_1 = arith.constant 0 : i32
    %c0_i32_2 = arith.constant 0 : i32
    return %c0_i32, %c0_i32_0, %c0_i32_1 : i32, i32, i32
  }
  func.func @transform_10(%arg0: i32) -> (i32, i32, i32) {
    %c0_i32 = arith.constant 0 : i32
    %c0_i32_0 = arith.constant 0 : i32
    %c0_i32_1 = arith.constant 0 : i32
    %c0_i32_2 = arith.constant 0 : i32
    return %c0_i32, %c0_i32_0, %c0_i32_1 : i32, i32, i32
  }
  func.func @transform_11(%arg0: i32) -> (i32, i32, i32, i32) {
    %c0_i32 = arith.constant 0 : i32
    %c0_i32_0 = arith.constant 0 : i32
    %c0_i32_1 = arith.constant 0 : i32
    %c0_i32_2 = arith.constant 0 : i32
    %c0_i32_3 = arith.constant 0 : i32
    return %c0_i32, %c0_i32_0, %c0_i32_1, %c0_i32_2 : i32, i32, i32, i32
  }
  func.func @transform_12(%arg0: i32) -> (i32, i32) {
    %c0_i32 = arith.constant 0 : i32
    %c0_i32_0 = arith.constant 0 : i32
    %c0_i32_1 = arith.constant 0 : i32
    return %c0_i32, %c0_i32_0 : i32, i32
  }
  func.func @transform_13(%arg0: i32) -> (i32, i32, i32, i32) {
    %c0_i32 = arith.constant 0 : i32
    %c0_i32_0 = arith.constant 0 : i32
    %c0_i32_1 = arith.constant 0 : i32
    %c0_i32_2 = arith.constant 0 : i32
    %c0_i32_3 = arith.constant 0 : i32
    return %c0_i32, %c0_i32_0, %c0_i32_1, %c0_i32_2 : i32, i32, i32, i32
  }
  func.func @transform_14(%arg0: i32) -> (i32, i32) {
    %c0_i32 = arith.constant 0 : i32
    %c0_i32_0 = arith.constant 0 : i32
    %c0_i32_1 = arith.constant 0 : i32
    return %c0_i32, %c0_i32_0 : i32, i32
  }
  func.func @transform_15(%arg0: i32) -> (i32, i32, i32, i32) {
    %c0_i32 = arith.constant 0 : i32
    %c0_i32_0 = arith.constant 0 : i32
    %c0_i32_1 = arith.constant 0 : i32
    %c0_i32_2 = arith.constant 0 : i32
    %c0_i32_3 = arith.constant 0 : i32
    return %c0_i32, %c0_i32_0, %c0_i32_1, %c0_i32_2 : i32, i32, i32, i32
  }
  func.func @transform_16(%arg0: i32) -> (i32, i32) {
    %c0_i32 = arith.constant 0 : i32
    %c0_i32_0 = arith.constant 0 : i32
    %c0_i32_1 = arith.constant 0 : i32
    return %c0_i32, %c0_i32_0 : i32, i32
  }
  func.func @transform_17(%arg0: i32) -> (i32, i32, i32, i32) {
    %c0_i32 = arith.constant 0 : i32
    %c0_i32_0 = arith.constant 0 : i32
    %c0_i32_1 = arith.constant 0 : i32
    %c0_i32_2 = arith.constant 0 : i32
    %c0_i32_3 = arith.constant 0 : i32
    return %c0_i32, %c0_i32_0, %c0_i32_1, %c0_i32_2 : i32, i32, i32, i32
  }
  func.func @transform_18(%arg0: i32) -> (i32, i32) {
    %c0_i32 = arith.constant 0 : i32
    %c0_i32_0 = arith.constant 0 : i32
    %c0_i32_1 = arith.constant 0 : i32
    return %c0_i32, %c0_i32_0 : i32, i32
  }
  func.func @transform_19(%arg0: i32) -> (i32, i32, i32, i32) {
    %c0_i32 = arith.constant 0 : i32
    %c0_i32_0 = arith.constant 0 : i32
    %c0_i32_1 = arith.constant 0 : i32
    %c0_i32_2 = arith.constant 0 : i32
    %c0_i32_3 = arith.constant 0 : i32
    return %c0_i32, %c0_i32_0, %c0_i32_1, %c0_i32_2 : i32, i32, i32, i32
  }
  func.func @transform_20(%arg0: i32) -> (i32, i32) {
    %c0_i32 = arith.constant 0 : i32
    %c0_i32_0 = arith.constant 0 : i32
    %c0_i32_1 = arith.constant 0 : i32
    return %c0_i32, %c0_i32_0 : i32, i32
  }
  func.func @transform_21(%arg0: i32) -> (i32, i32, i32, i32) {
    %c0_i32 = arith.constant 0 : i32
    %c0_i32_0 = arith.constant 0 : i32
    %c0_i32_1 = arith.constant 0 : i32
    %c0_i32_2 = arith.constant 0 : i32
    %c0_i32_3 = arith.constant 0 : i32
    return %c0_i32, %c0_i32_0, %c0_i32_1, %c0_i32_2 : i32, i32, i32, i32
  }
  func.func @transform_22(%arg0: i32) -> (i32, i32) {
    %c0_i32 = arith.constant 0 : i32
    %c0_i32_0 = arith.constant 0 : i32
    %c0_i32_1 = arith.constant 0 : i32
    return %c0_i32, %c0_i32_0 : i32, i32
  }
  func.func @transform_23(%arg0: i32) -> (i32, i32, i32) {
    %c0_i32 = arith.constant 0 : i32
    %c0_i32_0 = arith.constant 0 : i32
    %c0_i32_1 = arith.constant 0 : i32
    return %arg0, %c0_i32, %c0_i32_0 : i32, i32, i32
  }
}

</mosaic_0001>

<llo_original>
// kernel: tile.33
$region0: #{tile.33}
  #allocation0 [shape = 's32[1]{0}', space=sflag, size = 0x4, scoped, tag = 'scoped memory for tile.33']
  %s0 = inlined_call_operand.vmem [shape: f32[8], index: 0, kind: input, shape index: {}]
  %s1 = inlined_call_operand.vmem [shape: f32[8,8], index: 1, kind: output, shape index: {}]
  // Predicated region
  $region2: #{tile.33} parent=0 // pred_check
    _
  $region3: #{tile.33} parent=0 // pred_check_branch
    %3 = sbr.rel (0) target = $region5
  $region4: #{tile.33} parent=0 // pred_region
    _
  $region5: #{tile.33} parent=0 // pred_fallthru
    _
  %v4 = vld [vmem:[%s0] ss:$0 sm:$0xff]
  %5 = vst [vmem:[%s1] sm:$0xff] %v4

// kernel: tile.34
$region0: #{tile.34}
  %s0 = inlined_call_operand.vmem [shape: f32[8,8], index: 0, kind: input, shape index: {}]
  %s1 = inlined_call_operand.vmem [shape: f32[1,64], index: 1, kind: output, shape index: {}]
  $region1: #{tile.34} parent=0
    #allocation0 [shape = 'u8[4096]{0}', space=vmem, size = 0x1000, scoped, tag = 'scoped mem for output reshape']
    %v2 = vld [vmem:[%s0] sm:$0x1]
    %vm3 = vcmask 64512
    %4 = vst.msk [vmem:[#allocation0] sm:$0x1] %vm3, %v2
    %s5 = scalar_lea.vmem %s0, 7
    %v6 = vld [vmem:[%s5] sm:$0x1]
    %7 = vrot.lane.b32.xlu0 %v6, 56
    %v8 = vpop.permute.xlu0 %7
    %vm9 = vcmask 523712
    %10 = vst.msk [vmem:[#allocation0] sm:$0x1] %vm9, %v8
    %s11 = scalar_lea.vmem %s0, 6
    %v12 = vld [vmem:[%s11] sm:$0x1]
    %13 = vrot.lane.b32.xlu0 %v12, 48
    %v14 = vpop.permute.xlu0 %13
    %vm15 = vcmask 458112
    %16 = vst.msk [vmem:[#allocation0] sm:$0x1] %vm15, %v14
    %s17 = scalar_lea.vmem %s0, 5
    %v18 = vld [vmem:[%s17] sm:$0x1]
    %19 = vrot.lane.b32.xlu0 %v18, 40
    %v20 = vpop.permute.xlu0 %19
    %vm21 = vcmask 392512
    %22 = vst.msk [vmem:[#allocation0] sm:$0x1] %vm21, %v20
    %s23 = scalar_lea.vmem %s0, 4
    %v24 = vld [vmem:[%s23] sm:$0x1]
    %25 = vrot.lane.b32.xlu0 %v24, 32
    %v26 = vpop.permute.xlu0 %25
    %vm27 = vcmask 326912
    %28 = vst.msk [vmem:[#allocation0] sm:$0x1] %vm27, %v26
    %s29 = scalar_lea.vmem %s0, 3
    %v30 = vld [vmem:[%s29] sm:$0x1]
    %31 = vrot.lane.b32.xlu0 %v30, 24
    %v32 = vpop.permute.xlu0 %31
    %vm33 = vcmask 261312
    %34 = vst.msk [vmem:[#allocation0] sm:$0x1] %vm33, %v32
    %s35 = scalar_lea.vmem %s0, 2
    %v36 = vld [vmem:[%s35] sm:$0x1]
    %37 = vrot.lane.b32.xlu0 %v36, 16
    %v38 = vpop.permute.xlu0 %37
    %vm39 = vcmask 195712
    %40 = vst.msk [vmem:[#allocation0] sm:$0x1] %vm39, %v38
    %s41 = scalar_lea.vmem %s0, 1
    %v42 = vld [vmem:[%s41] sm:$0x1]
    %43 = vrot.lane.b32.xlu0 %v42, 8
    %v44 = vpop.permute.xlu0 %43
    %vm45 = vcmask 130112
    %46 = vst.msk [vmem:[#allocation0] sm:$0x1] %vm45, %v44
    %s48 = ssub.s32 2, 1
    %v49 = vld [vmem:[#allocation0] sm:%s48]
    %s51 = ssub.s32 2, 1
    %52 = vst [vmem:[%s1] sm:%s51] %v49

// kernel: tile.43
$region0: #{tile.43}
  #allocation0 [shape = 's32[1]{0}', space=sflag, size = 0x4, scoped, tag = 'scoped memory for tile.43']
  %s0 = inlined_call_operand.vmem [shape: f32[16], index: 0, kind: input, shape index: {}]
  %s1 = inlined_call_operand.vmem [shape: f32[4,16], index: 1, kind: output, shape index: {}]
  // Predicated region
  $region2: #{tile.43} parent=0 // pred_check
    _
  $region3: #{tile.43} parent=0 // pred_check_branch
    %3 = sbr.rel (0) target = $region5
  $region4: #{tile.43} parent=0 // pred_region
    _
  $region5: #{tile.43} parent=0 // pred_fallthru
    _
  %v4 = vld [vmem:[%s0] ss:$0 sm:$0xff]
  %5 = vst [vmem:[%s1] sm:$0xf] %v4

// kernel: tile.44
$region0: #{tile.44}
  %s0 = inlined_call_operand.vmem [shape: f32[4,16], index: 0, kind: input, shape index: {}]
  %s1 = inlined_call_operand.vmem [shape: f32[1,64], index: 1, kind: output, shape index: {}]
  $region1: #{tile.44} parent=0
    #allocation0 [shape = 'u8[4096]{0}', space=vmem, size = 0x1000, scoped, tag = 'scoped mem for output reshape']
    #allocation1 [shape = 'u8[4096]{0}', space=vmem, size = 0x1000, scoped, tag = 'scoped mem for input reshape']
    %s3 = ssub.s32 16, 1
    %v4 = vld [vmem:[%s0] sm:%s3]
    %5 = vst [vmem:[#allocation1] sm:%s3] %v4
    %v6 = vld [vmem:[#allocation1] sm:$0x1]
    %vm7 = vcmask 130048
    %8 = vst.msk [vmem:[#allocation0] sm:$0x1] %vm7, %v6
    %s9 = scalar_lea.vmem [#allocation1], 3
    %v10 = vld [vmem:[%s9] sm:$0x1]
    %11 = vrot.lane.b32.xlu0 %v10, 48
    %v12 = vpop.permute.xlu0 %11
    %vm13 = vcmask 523648
    %14 = vst.msk [vmem:[#allocation0] sm:$0x1] %vm13, %v12
    %s15 = scalar_lea.vmem [#allocation1], 2
    %v16 = vld [vmem:[%s15] sm:$0x1]
    %17 = vrot.lane.b32.xlu0 %v16, 32
    %v18 = vpop.permute.xlu0 %17
    %vm19 = vcmask 392448
    %20 = vst.msk [vmem:[#allocation0] sm:$0x1] %vm19, %v18
    %s21 = scalar_lea.vmem [#allocation1], 1
    %v22 = vld [vmem:[%s21] sm:$0x1]
    %23 = vrot.lane.b32.xlu0 %v22, 16
    %v24 = vpop.permute.xlu0 %23
    %vm25 = vcmask 261248
    %26 = vst.msk [vmem:[#allocation0] sm:$0x1] %vm25, %v24
    %s28 = ssub.s32 2, 1
    %v29 = vld [vmem:[#allocation0] sm:%s28]
    %s31 = ssub.s32 2, 1
    %32 = vst [vmem:[%s1] sm:%s31] %v29

// kernel: unet3d_layer_forward.1
$region0: #{unet3d_layer_forward.1}
  #allocation0 [shape = 'u32[]', space=smem, size = 0x4, offset = 0x4, fixed_abs, tag = 'smem constant byte address 0x4 - core index']
  #allocation1 [shape = 'u32[72,128]{1,0:T(1,128)}', space=vmem, size = 0x9000, scoped, tag = 'internal scratch']
  #allocation2 [shape = 'f32[100,32]{1,0:T(8,128)}', space=vmem, size = 0xd000, scoped, tag = 'scratch operand']
  #allocation3 [shape = 'f32[100,64]{1,0:T(8,128)}', space=vmem, size = 0xd000, scoped, tag = 'scratch operand']
  #allocation4 [shape = 'f32[78,64]{1,0:T(8,128)}', space=vmem, size = 0xa000, scoped, tag = 'scratch operand']
  #allocation5 [shape = 'f32[36,32]{1,0:T(8,128)}', space=vmem, size = 0x5000, scoped, tag = 'scratch operand']
  #allocation6 [shape = 'f32[36,64]{1,0:T(8,128)}', space=vmem, size = 0x5000, scoped, tag = 'scratch operand']
  #allocation7 [shape = 'f32[100,192]{1,0:T(8,128)}', space=vmem, size = 0x1a000, scoped, tag = 'scratch operand']
  #allocation8 [shape = 'f32[100,64]{1,0:T(8,128)}', space=vmem, size = 0xd000, scoped, tag = 'scratch operand']
  %s0 = inlined_call_operand.vmem [shape: f32[2,64,32], index: 0, kind: input, shape index: {}]
  %s1 = inlined_call_operand.vmem [shape: bf16[100,64], index: 1, kind: input, shape index: {}]
  %s2 = inlined_call_operand.vmem [shape: bf16[100,78], index: 2, kind: input, shape index: {}]
  %s3 = inlined_call_operand.vmem [shape: bf16[36,22], index: 3, kind: input, shape index: {}]
  %s4 = inlined_call_operand.vmem [shape: bf16[4,22,78], index: 4, kind: input, shape index: {}]
  %s5 = inlined_call_operand.vmem [shape: bf16[2,64,32], index: 5, kind: input, shape index: {}]
  %s6 = inlined_call_operand.vmem [shape: bf16[100,22], index: 6, kind: input, shape index: {}]
  %s7 = inlined_call_operand.vmem [shape: bf16[64,192], index: 7, kind: input, shape index: {}]
  %s8 = inlined_call_operand.vmem [shape: bf16[64,192], index: 8, kind: input, shape index: {}]
  %s9 = inlined_call_operand.vmem [shape: f32[2,32,78], index: 9, kind: input, shape index: {}]
  %s10 = inlined_call_operand.vmem [shape: f32[2,64,128], index: 10, kind: input, shape index: {}]
  %s11 = inlined_call_operand.vmem [shape: bf16[3,3,32,64], index: 11, kind: input, shape index: {}]
  %s12 = inlined_call_operand.vmem [shape: f32[1,64], index: 12, kind: input, shape index: {}]
  %s13 = inlined_call_operand.vmem [shape: bf16[3,3,64,64], index: 13, kind: input, shape index: {}]
  %s14 = inlined_call_operand.vmem [shape: f32[1,64], index: 14, kind: input, shape index: {}]
  %s15 = inlined_call_operand.vmem [shape: bf16[3,3,32,64], index: 15, kind: input, shape index: {}]
  %s16 = inlined_call_operand.vmem [shape: f32[1,64], index: 16, kind: input, shape index: {}]
  %s17 = inlined_call_operand.vmem [shape: bf16[3,3,64,64], index: 17, kind: input, shape index: {}]
  %s18 = inlined_call_operand.vmem [shape: f32[1,64], index: 18, kind: input, shape index: {}]
  %s19 = inlined_call_operand.vmem [shape: bf16[3,3,192,64], index: 19, kind: input, shape index: {}]
  %s20 = inlined_call_operand.vmem [shape: f32[1,64], index: 20, kind: input, shape index: {}]
  %s21 = inlined_call_operand.vmem [shape: bf16[3,3,64,64], index: 21, kind: input, shape index: {}]
  %s22 = inlined_call_operand.vmem [shape: f32[1,64], index: 22, kind: input, shape index: {}]
  %s23 = inlined_call_operand.vmem [shape: f32[2,32,128], index: 23, kind: output, shape index: {}]
  %s24 = sld [smem:[#allocation0]]
  $region125: #{unet3d_layer_forward.1} parent=0
    _
  %s26 = ssub.s32 1, %s24
  %s27 = scalar_select 0, %s26, %s24
  loop: start=0, step=1, limit=4
  $region2: #{unet3d_layer_forward.1} parent=0 // loop_pre_header
    _
  $region3: #{unet3d_layer_forward.1} parent=0 // loop_header
    %s29 = sphi 0, %s33
    %p30 = scmp.ge.s32.totalorder %s29, 4
    %s39 = sphi 0, %s41
    %s42 = sphi 0, %s39
    %s43 = sphi 0, %s42
    %s59 = sphi 0, %s43
    %s63 = sphi 0, %s63
    %s65 = sphi 0, %s63
    %s66 = sphi 0, %s65
    %s80 = sphi 0, %s66
    %s84 = sphi 0, %s84
    %s86 = sphi 0, %s84
    %s87 = sphi 0, %s86
    %s101 = sphi 0, %s87
    %s105 = sphi 0, %s105
    %s107 = sphi 0, %s105
    %s108 = sphi 0, %s107
    %s122 = sphi 0, %s108
    %s126 = sphi 0, %s126
    %s128 = sphi 0, %s126
    %s129 = sphi 0, %s128
    %s143 = sphi 0, %s129
    %s147 = sphi 0, %s147
    %s149 = sphi 0, %s147
    %s150 = sphi 0, %s149
    %s164 = sphi 0, %s150
    %s168 = sphi 0, %s168
    %s170 = sphi 0, %s168
    %s171 = sphi 0, %s170
    %s185 = sphi 0, %s171
    %s189 = sphi 0, %s189
    %s191 = sphi 0, %s189
    %s192 = sphi 0, %s191
    %s206 = sphi 0, %s192
    %s210 = sphi 0, %s210
    %s212 = sphi 0, %s210
    %s213 = sphi 0, %s212
    %s227 = sphi 0, %s213
    %s231 = sphi 0, %s231
    %s233 = sphi 0, %s231
    %s234 = sphi 0, %s233
    %s248 = sphi 0, %s234
    %s252 = sphi 0, %s252
    %s254 = sphi 0, %s252
    %s255 = sphi 0, %s254
    %s269 = sphi 0, %s255
    %s273 = sphi 0, %s273
    %s275 = sphi 0, %s273
    %s276 = sphi 0, %s275
    %s290 = sphi 0, %s276
    %s294 = sphi 0, %s294
    %s296 = sphi 0, %s294
    %s297 = sphi 0, %s296
    %s311 = sphi 0, %s297
    %s315 = sphi 0, %s315
    %s317 = sphi 0, %s315
    %s318 = sphi 0, %s317
    %s332 = sphi 0, %s318
    %s336 = sphi 0, %s336
    %s338 = sphi 0, %s336
    %s339 = sphi 0, %s338
    %s353 = sphi 0, %s339
    %s357 = sphi 0, %s357
    %s359 = sphi 0, %s357
    %s360 = sphi 0, %s359
    %s374 = sphi 0, %s360
    %s378 = sphi 0, %s378
    %s380 = sphi 0, %s378
    %s381 = sphi 0, %s380
    %s395 = sphi 0, %s381
    %s399 = sphi 0, %s399
    %s401 = sphi 0, %s399
    %s402 = sphi 0, %s401
    %s416 = sphi 0, %s402
    %s420 = sphi 0, %s420
    %s422 = sphi 0, %s420
    %s423 = sphi 0, %s422
    %s437 = sphi 0, %s423
    %s441 = sphi 0, %s441
    %s443 = sphi 0, %s441
    %s444 = sphi 0, %s443
    %s458 = sphi 0, %s444
    %s462 = sphi 0, %s462
    %s464 = sphi 0, %s462
    %s465 = sphi 0, %s464
    %s479 = sphi 0, %s465
    %s483 = sphi 0, %s483
    %s485 = sphi 0, %s483
    %s486 = sphi 0, %s485
    %s500 = sphi 0, %s486
    %s504 = sphi 0, %s504
    %s506 = sphi 0, %s504
    %s507 = sphi 0, %s506
    %s521 = sphi 0, %s507
    %s527 = sphi 0, %s529
    %s530 = sphi 0, %s527
    %s531 = sphi 0, %s530
    %s547 = sphi 0, %s531
  $region4: #{unet3d_layer_forward.1} parent=0 // loop_header_branch
    %32 = sbr.rel (%p30) target = $region8
  $region5: #{unet3d_layer_forward.1} parent=0 // loop_body
    %s34 = ssub.s32 %s29, 1
    %s35 = ssub.s32 %s29, 2
    %s36 = sadd.s32 %s29, 1
    %s37 = ssub.s32 %s29, %s36
    %p38 = scmp.eq.s32.totalorder %s37, 0
    %s40 = sadd.s32 %s39, 1
    %s41 = scalar_select %p38, %s39, %s40
    %p44 = pneg %p38
    %p45 = scmp.eq.s32.totalorder %s29, 1
    %p46 = por %p44, %p45
    %p47 = scmp.ne.s32.totalorder %s39, %s42
    %p48 = scmp.eq.s32.totalorder %s29, 0
    %p49 = por %p47, %p48
    %p50 = scmp.ne.s32.totalorder %s39, %s42
    %p51 = scmp.eq.s32.totalorder %s34, 1
    %p52 = por %p50, %p51
    %p53 = scmp.ne.s32.totalorder %s42, %s43
    %p54 = scmp.eq.s32.totalorder %s34, 0
    %p55 = por %p53, %p54
    %p56 = scmp.ne.s32.totalorder %s42, %s43
    %p57 = scmp.eq.s32.totalorder %s35, 1
    %p58 = por %p56, %p57
    %p60 = scmp.ne.s32.totalorder %s43, %s59
    %p61 = scmp.eq.s32.totalorder %s35, 0
    %p62 = por %p60, %p61
    %s64 = sadd.s32 %s63, 1
    %p67 = scmp.eq.s32.totalorder %s29, 1
    %p68 = scmp.ne.s32.totalorder %s63, %s65
    %p69 = scmp.eq.s32.totalorder %s29, 0
    %p70 = por %p68, %p69
    %p71 = scmp.ne.s32.totalorder %s63, %s65
    %p72 = scmp.eq.s32.totalorder %s34, 1
    %p73 = por %p71, %p72
    %p74 = scmp.ne.s32.totalorder %s65, %s66
    %p75 = scmp.eq.s32.totalorder %s34, 0
    %p76 = por %p74, %p75
    %p77 = scmp.ne.s32.totalorder %s65, %s66
    %p78 = scmp.eq.s32.totalorder %s35, 1
    %p79 = por %p77, %p78
    %p81 = scmp.ne.s32.totalorder %s66, %s80
    %p82 = scmp.eq.s32.totalorder %s35, 0
    %p83 = por %p81, %p82
    %s85 = sadd.s32 %s84, 1
    %p88 = scmp.eq.s32.totalorder %s29, 1
    %p89 = scmp.ne.s32.totalorder %s84, %s86
    %p90 = scmp.eq.s32.totalorder %s29, 0
    %p91 = por %p89, %p90
    %p92 = scmp.ne.s32.totalorder %s84, %s86
    %p93 = scmp.eq.s32.totalorder %s34, 1
    %p94 = por %p92, %p93
    %p95 = scmp.ne.s32.totalorder %s86, %s87
    %p96 = scmp.eq.s32.totalorder %s34, 0
    %p97 = por %p95, %p96
    %p98 = scmp.ne.s32.totalorder %s86, %s87
    %p99 = scmp.eq.s32.totalorder %s35, 1
    %p100 = por %p98, %p99
    %p102 = scmp.ne.s32.totalorder %s87, %s101
    %p103 = scmp.eq.s32.totalorder %s35, 0
    %p104 = por %p102, %p103
    %s106 = sadd.s32 %s105, 1
    %p109 = scmp.eq.s32.totalorder %s29, 1
    %p110 = scmp.ne.s32.totalorder %s105, %s107
    %p111 = scmp.eq.s32.totalorder %s29, 0
    %p112 = por %p110, %p111
    %p113 = scmp.ne.s32.totalorder %s105, %s107
    %p114 = scmp.eq.s32.totalorder %s34, 1
    %p115 = por %p113, %p114
    %p116 = scmp.ne.s32.totalorder %s107, %s108
    %p117 = scmp.eq.s32.totalorder %s34, 0
    %p118 = por %p116, %p117
    %p119 = scmp.ne.s32.totalorder %s107, %s108
    %p120 = scmp.eq.s32.totalorder %s35, 1
    %p121 = por %p119, %p120
    %p123 = scmp.ne.s32.totalorder %s108, %s122
    %p124 = scmp.eq.s32.totalorder %s35, 0
    %p125 = por %p123, %p124
    %s127 = sadd.s32 %s126, 1
    %p130 = scmp.eq.s32.totalorder %s29, 1
    %p131 = scmp.ne.s32.totalorder %s126, %s128
    %p132 = scmp.eq.s32.totalorder %s29, 0
    %p133 = por %p131, %p132
    %p134 = scmp.ne.s32.totalorder %s126, %s128
    %p135 = scmp.eq.s32.totalorder %s34, 1
    %p136 = por %p134, %p135
    %p137 = scmp.ne.s32.totalorder %s128, %s129
    %p138 = scmp.eq.s32.totalorder %s34, 0
    %p139 = por %p137, %p138
    %p140 = scmp.ne.s32.totalorder %s128, %s129
    %p141 = scmp.eq.s32.totalorder %s35, 1
    %p142 = por %p140, %p141
    %p144 = scmp.ne.s32.totalorder %s129, %s143
    %p145 = scmp.eq.s32.totalorder %s35, 0
    %p146 = por %p144, %p145
    %s148 = sadd.s32 %s147, 1
    %p151 = scmp.eq.s32.totalorder %s29, 1
    %p152 = scmp.ne.s32.totalorder %s147, %s149
    %p153 = scmp.eq.s32.totalorder %s29, 0
    %p154 = por %p152, %p153
    %p155 = scmp.ne.s32.totalorder %s147, %s149
    %p156 = scmp.eq.s32.totalorder %s34, 1
    %p157 = por %p155, %p156
    %p158 = scmp.ne.s32.totalorder %s149, %s150
    %p159 = scmp.eq.s32.totalorder %s34, 0
    %p160 = por %p158, %p159
    %p161 = scmp.ne.s32.totalorder %s149, %s150
    %p162 = scmp.eq.s32.totalorder %s35, 1
    %p163 = por %p161, %p162
    %p165 = scmp.ne.s32.totalorder %s150, %s164
    %p166 = scmp.eq.s32.totalorder %s35, 0
    %p167 = por %p165, %p166
    %s169 = sadd.s32 %s168, 1
    %p172 = scmp.eq.s32.totalorder %s29, 1
    %p173 = scmp.ne.s32.totalorder %s168, %s170
    %p174 = scmp.eq.s32.totalorder %s29, 0
    %p175 = por %p173, %p174
    %p176 = scmp.ne.s32.totalorder %s168, %s170
    %p177 = scmp.eq.s32.totalorder %s34, 1
    %p178 = por %p176, %p177
    %p179 = scmp.ne.s32.totalorder %s170, %s171
    %p180 = scmp.eq.s32.totalorder %s34, 0
    %p181 = por %p179, %p180
    %p182 = scmp.ne.s32.totalorder %s170, %s171
    %p183 = scmp.eq.s32.totalorder %s35, 1
    %p184 = por %p182, %p183
    %p186 = scmp.ne.s32.totalorder %s171, %s185
    %p187 = scmp.eq.s32.totalorder %s35, 0
    %p188 = por %p186, %p187
    %s190 = sadd.s32 %s189, 1
    %p193 = scmp.eq.s32.totalorder %s29, 1
    %p194 = scmp.ne.s32.totalorder %s189, %s191
    %p195 = scmp.eq.s32.totalorder %s29, 0
    %p196 = por %p194, %p195
    %p197 = scmp.ne.s32.totalorder %s189, %s191
    %p198 = scmp.eq.s32.totalorder %s34, 1
    %p199 = por %p197, %p198
    %p200 = scmp.ne.s32.totalorder %s191, %s192
    %p201 = scmp.eq.s32.totalorder %s34, 0
    %p202 = por %p200, %p201
    %p203 = scmp.ne.s32.totalorder %s191, %s192
    %p204 = scmp.eq.s32.totalorder %s35, 1
    %p205 = por %p203, %p204
    %p207 = scmp.ne.s32.totalorder %s192, %s206
    %p208 = scmp.eq.s32.totalorder %s35, 0
    %p209 = por %p207, %p208
    %s211 = sadd.s32 %s210, 1
    %p214 = scmp.eq.s32.totalorder %s29, 1
    %p215 = scmp.ne.s32.totalorder %s210, %s212
    %p216 = scmp.eq.s32.totalorder %s29, 0
    %p217 = por %p215, %p216
    %p218 = scmp.ne.s32.totalorder %s210, %s212
    %p219 = scmp.eq.s32.totalorder %s34, 1
    %p220 = por %p218, %p219
    %p221 = scmp.ne.s32.totalorder %s212, %s213
    %p222 = scmp.eq.s32.totalorder %s34, 0
    %p223 = por %p221, %p222
    %p224 = scmp.ne.s32.totalorder %s212, %s213
    %p225 = scmp.eq.s32.totalorder %s35, 1
    %p226 = por %p224, %p225
    %p228 = scmp.ne.s32.totalorder %s213, %s227
    %p229 = scmp.eq.s32.totalorder %s35, 0
    %p230 = por %p228, %p229
    %s232 = sadd.s32 %s231, 1
    %p235 = scmp.eq.s32.totalorder %s29, 1
    %p236 = scmp.ne.s32.totalorder %s231, %s233
    %p237 = scmp.eq.s32.totalorder %s29, 0
    %p238 = por %p236, %p237
    %p239 = scmp.ne.s32.totalorder %s231, %s233
    %p240 = scmp.eq.s32.totalorder %s34, 1
    %p241 = por %p239, %p240
    %p242 = scmp.ne.s32.totalorder %s233, %s234
    %p243 = scmp.eq.s32.totalorder %s34, 0
    %p244 = por %p242, %p243
    %p245 = scmp.ne.s32.totalorder %s233, %s234
    %p246 = scmp.eq.s32.totalorder %s35, 1
    %p247 = por %p245, %p246
    %p249 = scmp.ne.s32.totalorder %s234, %s248
    %p250 = scmp.eq.s32.totalorder %s35, 0
    %p251 = por %p249, %p250
    %s253 = sadd.s32 %s252, 1
    %p256 = scmp.eq.s32.totalorder %s29, 1
    %p257 = scmp.ne.s32.totalorder %s252, %s254
    %p258 = scmp.eq.s32.totalorder %s29, 0
    %p259 = por %p257, %p258
    %p260 = scmp.ne.s32.totalorder %s252, %s254
    %p261 = scmp.eq.s32.totalorder %s34, 1
    %p262 = por %p260, %p261
    %p263 = scmp.ne.s32.totalorder %s254, %s255
    %p264 = scmp.eq.s32.totalorder %s34, 0
    %p265 = por %p263, %p264
    %p266 = scmp.ne.s32.totalorder %s254, %s255
    %p267 = scmp.eq.s32.totalorder %s35, 1
    %p268 = por %p266, %p267
    %p270 = scmp.ne.s32.totalorder %s255, %s269
    %p271 = scmp.eq.s32.totalorder %s35, 0
    %p272 = por %p270, %p271
    %s274 = sadd.s32 %s273, 1
    %p277 = scmp.eq.s32.totalorder %s29, 1
    %p278 = scmp.ne.s32.totalorder %s273, %s275
    %p279 = scmp.eq.s32.totalorder %s29, 0
    %p280 = por %p278, %p279
    %p281 = scmp.ne.s32.totalorder %s273, %s275
    %p282 = scmp.eq.s32.totalorder %s34, 1
    %p283 = por %p281, %p282
    %p284 = scmp.ne.s32.totalorder %s275, %s276
    %p285 = scmp.eq.s32.totalorder %s34, 0
    %p286 = por %p284, %p285
    %p287 = scmp.ne.s32.totalorder %s275, %s276
    %p288 = scmp.eq.s32.totalorder %s35, 1
    %p289 = por %p287, %p288
    %p291 = scmp.ne.s32.totalorder %s276, %s290
    %p292 = scmp.eq.s32.totalorder %s35, 0
    %p293 = por %p291, %p292
    %s295 = sadd.s32 %s294, 1
    %p298 = scmp.eq.s32.totalorder %s29, 1
    %p299 = scmp.ne.s32.totalorder %s294, %s296
    %p300 = scmp.eq.s32.totalorder %s29, 0
    %p301 = por %p299, %p300
    %p302 = scmp.ne.s32.totalorder %s294, %s296
    %p303 = scmp.eq.s32.totalorder %s34, 1
    %p304 = por %p302, %p303
    %p305 = scmp.ne.s32.totalorder %s296, %s297
    %p306 = scmp.eq.s32.totalorder %s34, 0
    %p307 = por %p305, %p306
    %p308 = scmp.ne.s32.totalorder %s296, %s297
    %p309 = scmp.eq.s32.totalorder %s35, 1
    %p310 = por %p308, %p309
    %p312 = scmp.ne.s32.totalorder %s297, %s311
    %p313 = scmp.eq.s32.totalorder %s35, 0
    %p314 = por %p312, %p313
    %s316 = sadd.s32 %s315, 1
    %p319 = scmp.eq.s32.totalorder %s29, 1
    %p320 = scmp.ne.s32.totalorder %s315, %s317
    %p321 = scmp.eq.s32.totalorder %s29, 0
    %p322 = por %p320, %p321
    %p323 = scmp.ne.s32.totalorder %s315, %s317
    %p324 = scmp.eq.s32.totalorder %s34, 1
    %p325 = por %p323, %p324
    %p326 = scmp.ne.s32.totalorder %s317, %s318
    %p327 = scmp.eq.s32.totalorder %s34, 0
    %p328 = por %p326, %p327
    %p329 = scmp.ne.s32.totalorder %s317, %s318
    %p330 = scmp.eq.s32.totalorder %s35, 1
    %p331 = por %p329, %p330
    %p333 = scmp.ne.s32.totalorder %s318, %s332
    %p334 = scmp.eq.s32.totalorder %s35, 0
    %p335 = por %p333, %p334
    %s337 = sadd.s32 %s336, 1
    %p340 = scmp.eq.s32.totalorder %s29, 1
    %p341 = scmp.ne.s32.totalorder %s336, %s338
    %p342 = scmp.eq.s32.totalorder %s29, 0
    %p343 = por %p341, %p342
    %p344 = scmp.ne.s32.totalorder %s336, %s338
    %p345 = scmp.eq.s32.totalorder %s34, 1
    %p346 = por %p344, %p345
    %p347 = scmp.ne.s32.totalorder %s338, %s339
    %p348 = scmp.eq.s32.totalorder %s34, 0
    %p349 = por %p347, %p348
    %p350 = scmp.ne.s32.totalorder %s338, %s339
    %p351 = scmp.eq.s32.totalorder %s35, 1
    %p352 = por %p350, %p351
    %p354 = scmp.ne.s32.totalorder %s339, %s353
    %p355 = scmp.eq.s32.totalorder %s35, 0
    %p356 = por %p354, %p355
    %s358 = sadd.s32 %s357, 1
    %p361 = scmp.eq.s32.totalorder %s29, 1
    %p362 = scmp.ne.s32.totalorder %s357, %s359
    %p363 = scmp.eq.s32.totalorder %s29, 0
    %p364 = por %p362, %p363
    %p365 = scmp.ne.s32.totalorder %s357, %s359
    %p366 = scmp.eq.s32.totalorder %s34, 1
    %p367 = por %p365, %p366
    %p368 = scmp.ne.s32.totalorder %s359, %s360
    %p369 = scmp.eq.s32.totalorder %s34, 0
    %p370 = por %p368, %p369
    %p371 = scmp.ne.s32.totalorder %s359, %s360
    %p372 = scmp.eq.s32.totalorder %s35, 1
    %p373 = por %p371, %p372
    %p375 = scmp.ne.s32.totalorder %s360, %s374
    %p376 = scmp.eq.s32.totalorder %s35, 0
    %p377 = por %p375, %p376
    %s379 = sadd.s32 %s378, 1
    %p382 = scmp.eq.s32.totalorder %s29, 1
    %p383 = scmp.ne.s32.totalorder %s378, %s380
    %p384 = scmp.eq.s32.totalorder %s29, 0
    %p385 = por %p383, %p384
    %p386 = scmp.ne.s32.totalorder %s378, %s380
    %p387 = scmp.eq.s32.totalorder %s34, 1
    %p388 = por %p386, %p387
    %p389 = scmp.ne.s32.totalorder %s380, %s381
    %p390 = scmp.eq.s32.totalorder %s34, 0
    %p391 = por %p389, %p390
    %p392 = scmp.ne.s32.totalorder %s380, %s381
    %p393 = scmp.eq.s32.totalorder %s35, 1
    %p394 = por %p392, %p393
    %p396 = scmp.ne.s32.totalorder %s381, %s395
    %p397 = scmp.eq.s32.totalorder %s35, 0
    %p398 = por %p396, %p397
    %s400 = sadd.s32 %s399, 1
    %p403 = scmp.eq.s32.totalorder %s29, 1
    %p404 = scmp.ne.s32.totalorder %s399, %s401
    %p405 = scmp.eq.s32.totalorder %s29, 0
    %p406 = por %p404, %p405
    %p407 = scmp.ne.s32.totalorder %s399, %s401
    %p408 = scmp.eq.s32.totalorder %s34, 1
    %p409 = por %p407, %p408
    %p410 = scmp.ne.s32.totalorder %s401, %s402
    %p411 = scmp.eq.s32.totalorder %s34, 0
    %p412 = por %p410, %p411
    %p413 = scmp.ne.s32.totalorder %s401, %s402
    %p414 = scmp.eq.s32.totalorder %s35, 1
    %p415 = por %p413, %p414
    %p417 = scmp.ne.s32.totalorder %s402, %s416
    %p418 = scmp.eq.s32.totalorder %s35, 0
    %p419 = por %p417, %p418
    %s421 = sadd.s32 %s420, 1
    %p424 = scmp.eq.s32.totalorder %s29, 1
    %p425 = scmp.ne.s32.totalorder %s420, %s422
    %p426 = scmp.eq.s32.totalorder %s29, 0
    %p427 = por %p425, %p426
    %p428 = scmp.ne.s32.totalorder %s420, %s422
    %p429 = scmp.eq.s32.totalorder %s34, 1
    %p430 = por %p428, %p429
    %p431 = scmp.ne.s32.totalorder %s422, %s423
    %p432 = scmp.eq.s32.totalorder %s34, 0
    %p433 = por %p431, %p432
    %p434 = scmp.ne.s32.totalorder %s422, %s423
    %p435 = scmp.eq.s32.totalorder %s35, 1
    %p436 = por %p434, %p435
    %p438 = scmp.ne.s32.totalorder %s423, %s437
    %p439 = scmp.eq.s32.totalorder %s35, 0
    %p440 = por %p438, %p439
    %s442 = sadd.s32 %s441, 1
    %p445 = scmp.eq.s32.totalorder %s29, 1
    %p446 = scmp.ne.s32.totalorder %s441, %s443
    %p447 = scmp.eq.s32.totalorder %s29, 0
    %p448 = por %p446, %p447
    %p449 = scmp.ne.s32.totalorder %s441, %s443
    %p450 = scmp.eq.s32.totalorder %s34, 1
    %p451 = por %p449, %p450
    %p452 = scmp.ne.s32.totalorder %s443, %s444
    %p453 = scmp.eq.s32.totalorder %s34, 0
    %p454 = por %p452, %p453
    %p455 = scmp.ne.s32.totalorder %s443, %s444
    %p456 = scmp.eq.s32.totalorder %s35, 1
    %p457 = por %p455, %p456
    %p459 = scmp.ne.s32.totalorder %s444, %s458
    %p460 = scmp.eq.s32.totalorder %s35, 0
    %p461 = por %p459, %p460
    %s463 = sadd.s32 %s462, 1
    %p466 = scmp.eq.s32.totalorder %s29, 1
    %p467 = scmp.ne.s32.totalorder %s462, %s464
    %p468 = scmp.eq.s32.totalorder %s29, 0
    %p469 = por %p467, %p468
    %p470 = scmp.ne.s32.totalorder %s462, %s464
    %p471 = scmp.eq.s32.totalorder %s34, 1
    %p472 = por %p470, %p471
    %p473 = scmp.ne.s32.totalorder %s464, %s465
    %p474 = scmp.eq.s32.totalorder %s34, 0
    %p475 = por %p473, %p474
    %p476 = scmp.ne.s32.totalorder %s464, %s465
    %p477 = scmp.eq.s32.totalorder %s35, 1
    %p478 = por %p476, %p477
    %p480 = scmp.ne.s32.totalorder %s465, %s479
    %p481 = scmp.eq.s32.totalorder %s35, 0
    %p482 = por %p480, %p481
    %s484 = sadd.s32 %s483, 1
    %p487 = scmp.eq.s32.totalorder %s29, 1
    %p488 = scmp.ne.s32.totalorder %s483, %s485
    %p489 = scmp.eq.s32.totalorder %s29, 0
    %p490 = por %p488, %p489
    %p491 = scmp.ne.s32.totalorder %s483, %s485
    %p492 = scmp.eq.s32.totalorder %s34, 1
    %p493 = por %p491, %p492
    %p494 = scmp.ne.s32.totalorder %s485, %s486
    %p495 = scmp.eq.s32.totalorder %s34, 0
    %p496 = por %p494, %p495
    %p497 = scmp.ne.s32.totalorder %s485, %s486
    %p498 = scmp.eq.s32.totalorder %s35, 1
    %p499 = por %p497, %p498
    %p501 = scmp.ne.s32.totalorder %s486, %s500
    %p502 = scmp.eq.s32.totalorder %s35, 0
    %p503 = por %p501, %p502
    %s505 = sadd.s32 %s504, 1
    %p508 = scmp.eq.s32.totalorder %s29, 1
    %p509 = scmp.ne.s32.totalorder %s504, %s506
    %p510 = scmp.eq.s32.totalorder %s29, 0
    %p511 = por %p509, %p510
    %p512 = scmp.ne.s32.totalorder %s504, %s506
    %p513 = scmp.eq.s32.totalorder %s34, 1
    %p514 = por %p512, %p513
    %p515 = scmp.ne.s32.totalorder %s506, %s507
    %p516 = scmp.eq.s32.totalorder %s34, 0
    %p517 = por %p515, %p516
    %p518 = scmp.ne.s32.totalorder %s506, %s507
    %p519 = scmp.eq.s32.totalorder %s35, 1
    %p520 = por %p518, %p519
    %p522 = scmp.ne.s32.totalorder %s507, %s521
    %p523 = scmp.eq.s32.totalorder %s35, 0
    %p524 = por %p522, %p523
    %s525 = ssub.s32 %s29, %s36
    %p526 = scmp.eq.s32.totalorder %s525, 0
    %s528 = sadd.s32 %s527, 1
    %s529 = scalar_select %p526, %s527, %s528
    %p532 = pneg %p526
    %p533 = scmp.eq.s32.totalorder %s29, 1
    %p534 = por %p532, %p533
    %p535 = scmp.ne.s32.totalorder %s527, %s530
    %p536 = scmp.eq.s32.totalorder %s29, 0
    %p537 = por %p535, %p536
    %p538 = scmp.ne.s32.totalorder %s527, %s530
    %p539 = scmp.eq.s32.totalorder %s34, 1
    %p540 = por %p538, %p539
    %p541 = scmp.ne.s32.totalorder %s530, %s531
    %p542 = scmp.eq.s32.totalorder %s34, 0
    %p543 = por %p541, %p542
    %p544 = scmp.ne.s32.totalorder %s530, %s531
    %p545 = scmp.eq.s32.totalorder %s35, 1
    %p546 = por %p544, %p545
    %p548 = scmp.ne.s32.totalorder %s531, %s547
    %p549 = scmp.eq.s32.totalorder %s35, 0
    %p550 = por %p548, %p549
    %p551 = scmp.le.s32.totalorder 1, %s29
    %p552 = scmp.lt.s32.totalorder %s29, 3
    %p553 = pnand %p551, %p552
    %p554 = pneg %p553
    // Predicated region
    $region9: #{unet3d_layer_forward.1} parent=5 // pred_check
      _
    $region10: #{unet3d_layer_forward.1} parent=5 // pred_check_branch
      %556 = sbr.rel (%p553) target = $region12
    $region11: #{unet3d_layer_forward.1} parent=5 // pred_region
      %s557 = ssub.s32 %s29, 1
      // Predicated region
      $region13: #{unet3d_layer_forward.1} parent=11 // pred_check
        %p558 = pneg %p76
      $region14: #{unet3d_layer_forward.1} parent=11 // pred_check_branch
        %560 = sbr.rel (%p558) target = $region16
      $region15: #{unet3d_layer_forward.1} parent=11 // pred_region
        _
      $region16: #{unet3d_layer_forward.1} parent=11 // pred_fallthru
        _
      // Predicated region
      $region17: #{unet3d_layer_forward.1} parent=11 // pred_check
        %p561 = pneg %p97
      $region18: #{unet3d_layer_forward.1} parent=11 // pred_check_branch
        %563 = sbr.rel (%p561) target = $region20
      $region19: #{unet3d_layer_forward.1} parent=11 // pred_region
        _
      $region20: #{unet3d_layer_forward.1} parent=11 // pred_fallthru
        _
      // Predicated region
      $region21: #{unet3d_layer_forward.1} parent=11 // pred_check
        %p564 = pneg %p118
      $region22: #{unet3d_layer_forward.1} parent=11 // pred_check_branch
        %566 = sbr.rel (%p564) target = $region24
      $region23: #{unet3d_layer_forward.1} parent=11 // pred_region
        _
      $region24: #{unet3d_layer_forward.1} parent=11 // pred_fallthru
        _
      // Predicated region
      $region25: #{unet3d_layer_forward.1} parent=11 // pred_check
        %p567 = pneg %p139
      $region26: #{unet3d_layer_forward.1} parent=11 // pred_check_branch
        %569 = sbr.rel (%p567) target = $region28
      $region27: #{unet3d_layer_forward.1} parent=11 // pred_region
        _
      $region28: #{unet3d_layer_forward.1} parent=11 // pred_fallthru
        _
      // Predicated region
      $region29: #{unet3d_layer_forward.1} parent=11 // pred_check
        %p570 = pneg %p160
      $region30: #{unet3d_layer_forward.1} parent=11 // pred_check_branch
        %572 = sbr.rel (%p570) target = $region32
      $region31: #{unet3d_layer_forward.1} parent=11 // pred_region
        _
      $region32: #{unet3d_layer_forward.1} parent=11 // pred_fallthru
        _
      // Predicated region
      $region33: #{unet3d_layer_forward.1} parent=11 // pred_check
        %p573 = pneg %p181
      $region34: #{unet3d_layer_forward.1} parent=11 // pred_check_branch
        %575 = sbr.rel (%p573) target = $region36
      $region35: #{unet3d_layer_forward.1} parent=11 // pred_region
        _
      $region36: #{unet3d_layer_forward.1} parent=11 // pred_fallthru
        _
      // Predicated region
      $region37: #{unet3d_layer_forward.1} parent=11 // pred_check
        %p576 = pneg %p202
      $region38: #{unet3d_layer_forward.1} parent=11 // pred_check_branch
        %578 = sbr.rel (%p576) target = $region40
      $region39: #{unet3d_layer_forward.1} parent=11 // pred_region
        _
      $region40: #{unet3d_layer_forward.1} parent=11 // pred_fallthru
        _
      // Predicated region
      $region41: #{unet3d_layer_forward.1} parent=11 // pred_check
        %p579 = pneg %p223
      $region42: #{unet3d_layer_forward.1} parent=11 // pred_check_branch
        %581 = sbr.rel (%p579) target = $region44
      $region43: #{unet3d_layer_forward.1} parent=11 // pred_region
        _
      $region44: #{unet3d_layer_forward.1} parent=11 // pred_fallthru
        _
      // Predicated region
      $region45: #{unet3d_layer_forward.1} parent=11 // pred_check
        %p582 = pneg %p244
      $region46: #{unet3d_layer_forward.1} parent=11 // pred_check_branch
        %584 = sbr.rel (%p582) target = $region48
      $region47: #{unet3d_layer_forward.1} parent=11 // pred_region
        _
      $region48: #{unet3d_layer_forward.1} parent=11 // pred_fallthru
        _
      // Predicated region
      $region49: #{unet3d_layer_forward.1} parent=11 // pred_check
        %p585 = pneg %p265
      $region50: #{unet3d_layer_forward.1} parent=11 // pred_check_branch
        %587 = sbr.rel (%p585) target = $region52
      $region51: #{unet3d_layer_forward.1} parent=11 // pred_region
        _
      $region52: #{unet3d_layer_forward.1} parent=11 // pred_fallthru
        _
      // Predicated region
      $region53: #{unet3d_layer_forward.1} parent=11 // pred_check
        %p588 = pneg %p286
      $region54: #{unet3d_layer_forward.1} parent=11 // pred_check_branch
        %590 = sbr.rel (%p588) target = $region56
      $region55: #{unet3d_layer_forward.1} parent=11 // pred_region
        _
      $region56: #{unet3d_layer_forward.1} parent=11 // pred_fallthru
        _
      // Predicated region
      $region57: #{unet3d_layer_forward.1} parent=11 // pred_check
        %p591 = pneg %p307
      $region58: #{unet3d_layer_forward.1} parent=11 // pred_check_branch
        %593 = sbr.rel (%p591) target = $region60
      $region59: #{unet3d_layer_forward.1} parent=11 // pred_region
        _
      $region60: #{unet3d_layer_forward.1} parent=11 // pred_fallthru
        _
      // Predicated region
      $region61: #{unet3d_layer_forward.1} parent=11 // pred_check
        %p594 = pneg %p328
      $region62: #{unet3d_layer_forward.1} parent=11 // pred_check_branch
        %596 = sbr.rel (%p594) target = $region64
      $region63: #{unet3d_layer_forward.1} parent=11 // pred_region
        _
      $region64: #{unet3d_layer_forward.1} parent=11 // pred_fallthru
        _
      // Predicated region
      $region65: #{unet3d_layer_forward.1} parent=11 // pred_check
        %p597 = pneg %p349
      $region66: #{unet3d_layer_forward.1} parent=11 // pred_check_branch
        %599 = sbr.rel (%p597) target = $region68
      $region67: #{unet3d_layer_forward.1} parent=11 // pred_region
        _
      $region68: #{unet3d_layer_forward.1} parent=11 // pred_fallthru
        _
      // Predicated region
      $region69: #{unet3d_layer_forward.1} parent=11 // pred_check
        %p600 = pneg %p370
      $region70: #{unet3d_layer_forward.1} parent=11 // pred_check_branch
        %602 = sbr.rel (%p600) target = $region72
      $region71: #{unet3d_layer_forward.1} parent=11 // pred_region
        _
      $region72: #{unet3d_layer_forward.1} parent=11 // pred_fallthru
        _
      // Predicated region
      $region73: #{unet3d_layer_forward.1} parent=11 // pred_check
        %p603 = pneg %p391
      $region74: #{unet3d_layer_forward.1} parent=11 // pred_check_branch
        %605 = sbr.rel (%p603) target = $region76
      $region75: #{unet3d_layer_forward.1} parent=11 // pred_region
        _
      $region76: #{unet3d_layer_forward.1} parent=11 // pred_fallthru
        _
      // Predicated region
      $region77: #{unet3d_layer_forward.1} parent=11 // pred_check
        %p606 = pneg %p412
      $region78: #{unet3d_layer_forward.1} parent=11 // pred_check_branch
        %608 = sbr.rel (%p606) target = $region80
      $region79: #{unet3d_layer_forward.1} parent=11 // pred_region
        _
      $region80: #{unet3d_layer_forward.1} parent=11 // pred_fallthru
        _
      // Predicated region
      $region81: #{unet3d_layer_forward.1} parent=11 // pred_check
        %p609 = pneg %p433
      $region82: #{unet3d_layer_forward.1} parent=11 // pred_check_branch
        %611 = sbr.rel (%p609) target = $region84
      $region83: #{unet3d_layer_forward.1} parent=11 // pred_region
        _
      $region84: #{unet3d_layer_forward.1} parent=11 // pred_fallthru
        _
      // Predicated region
      $region85: #{unet3d_layer_forward.1} parent=11 // pred_check
        %p612 = pneg %p454
      $region86: #{unet3d_layer_forward.1} parent=11 // pred_check_branch
        %614 = sbr.rel (%p612) target = $region88
      $region87: #{unet3d_layer_forward.1} parent=11 // pred_region
        _
      $region88: #{unet3d_layer_forward.1} parent=11 // pred_fallthru
        _
      // Predicated region
      $region89: #{unet3d_layer_forward.1} parent=11 // pred_check
        %p615 = pneg %p475
      $region90: #{unet3d_layer_forward.1} parent=11 // pred_check_branch
        %617 = sbr.rel (%p615) target = $region92
      $region91: #{unet3d_layer_forward.1} parent=11 // pred_region
        _
      $region92: #{unet3d_layer_forward.1} parent=11 // pred_fallthru
        _
      // Predicated region
      $region93: #{unet3d_layer_forward.1} parent=11 // pred_check
        %p618 = pneg %p496
      $region94: #{unet3d_layer_forward.1} parent=11 // pred_check_branch
        %620 = sbr.rel (%p618) target = $region96
      $region95: #{unet3d_layer_forward.1} parent=11 // pred_region
        _
      $region96: #{unet3d_layer_forward.1} parent=11 // pred_fallthru
        _
      // Predicated region
      $region97: #{unet3d_layer_forward.1} parent=11 // pred_check
        %p621 = pneg %p517
      $region98: #{unet3d_layer_forward.1} parent=11 // pred_check_branch
        %623 = sbr.rel (%p621) target = $region100
      $region99: #{unet3d_layer_forward.1} parent=11 // pred_region
        _
      $region100: #{unet3d_layer_forward.1} parent=11 // pred_fallthru
        _
    $region12: #{unet3d_layer_forward.1} parent=5 // pred_fallthru
      _
    %p624 = scmp.lt.s32.totalorder %s29, 2
    // Predicated region
    $region101: #{unet3d_layer_forward.1} parent=5 // pred_check
      %p625 = pneg %p624
    $region102: #{unet3d_layer_forward.1} parent=5 // pred_check_branch
      %627 = sbr.rel (%p625) target = $region104
    $region103: #{unet3d_layer_forward.1} parent=5 // pred_region
      // Predicated region
      $region105: #{unet3d_layer_forward.1} parent=103 // pred_check
        %p628 = pneg %p49
      $region106: #{unet3d_layer_forward.1} parent=103 // pred_check_branch
        %630 = sbr.rel (%p628) target = $region108
      $region107: #{unet3d_layer_forward.1} parent=103 // pred_region
        %p631 = scmp.lt.s32.totalorder %s29, 1
        %s632 = scalar_select %p631, %s29, 1
        %s633 = smul.addr %s632, 8
        %s634 = smul.addr %s633, 8
        %s635 = scalar_lea.vmem %s0, %s634
      $region108: #{unet3d_layer_forward.1} parent=103 // pred_fallthru
        _
    $region104: #{unet3d_layer_forward.1} parent=5 // pred_fallthru
      _
    %p636 = scmp.le.s32.totalorder 1, %s29
    %p637 = scmp.lt.s32.totalorder %s29, 3
    %p638 = pnand %p636, %p637
    %p639 = pneg %p638
    // Predicated region
    $region109: #{unet3d_layer_forward.1} parent=5 // pred_check
      _
    $region110: #{unet3d_layer_forward.1} parent=5 // pred_check_branch
      %641 = sbr.rel (%p638) target = $region112
    $region111: #{unet3d_layer_forward.1} parent=5 // pred_region
      %s642 = ssub.s32 %s29, 1
      %p643 = scmp.lt.s32.totalorder %s34, 1
      %s644 = scalar_select %p643, %s34, 1
      %s645 = smul.addr %s644, 8
      %s646 = smul.addr %s645, 8
      %s647 = scalar_lea.vmem %s0, %s646
      %p648 = pneg %p55
      %p649 = pneg %p52
      %p650 = pneg %p76
      %p651 = pneg %p73
      %p652 = pneg %p97
      %p653 = pneg %p94
      %p654 = pneg %p118
      %p655 = pneg %p115
      %p656 = pneg %p139
      %p657 = pneg %p136
      %p658 = pneg %p160
      %p659 = pneg %p157
      %p660 = pneg %p181
      %p661 = pneg %p178
      %p662 = pneg %p202
      %p663 = pneg %p199
      %p664 = pneg %p223
      %p665 = pneg %p220
      %p666 = pneg %p244
      %p667 = pneg %p241
      %p668 = pneg %p265
      %p669 = pneg %p262
      %p670 = pneg %p286
      %p671 = pneg %p283
      %p672 = pneg %p307
      %p673 = pneg %p304
      %p674 = pneg %p328
      %p675 = pneg %p325
      %p676 = pneg %p349
      %p677 = pneg %p346
      %p678 = pneg %p370
      %p679 = pneg %p367
      %p680 = pneg %p391
      %p681 = pneg %p388
      %p682 = pneg %p412
      %p683 = pneg %p409
      %p684 = pneg %p433
      %p685 = pneg %p430
      %p686 = pneg %p454
      %p687 = pneg %p451
      %p688 = pneg %p475
      %p689 = pneg %p472
      %p690 = pneg %p496
      %p691 = pneg %p493
      %p692 = pneg %p517
      %p693 = pneg %p514
      %p694 = pneg %p543
      %p695 = pneg %p540
      %p696 = scmp.lt.s32.totalorder %s34, 1
      %s697 = scalar_select %p696, %s34, 1
      %s698 = smul.addr %s697, 4
      %s699 = smul.addr %s698, 8
      %s700 = scalar_lea.vmem %s23, %s699
      %p701 = scmp.lt.s32.totalorder %s34, 1
      %s702 = scalar_select %p701, %s34, 1
      %s703 = smul.addr %s702, 8
      %s704 = smul.addr %s703, 8
      %s705 = scalar_lea.vmem %s0, %s704
      %p706 = scmp.lt.s32.totalorder %s34, 1
      %s707 = scalar_select %p706, %s34, 1
      %s708 = smul.addr %s707, 4
      %s709 = smul.addr %s708, 8
      %s710 = scalar_lea.vmem %s23, %s709
      %v712 = vld [vmem:[%s1] sm:$0xf]
      %v713 = vld [vmem:[%s1 + $0x4] sm:$0xf]
      %v714 = vld [vmem:[%s1 + $0x8] sm:$0xf]
      %v715 = vld [vmem:[%s1 + $0xc] sm:$0xf]
      %v716 = vld [vmem:[%s1 + $0x10] sm:$0xf]
      %v717 = vld [vmem:[%s1 + $0x14] sm:$0xf]
      %v718 = vld [vmem:[%s1 + $0x18] sm:$0xf]
      %v719 = vld [vmem:[%s1 + $0x1c] sm:$0xf]
      %v720 = vld [vmem:[%s1 + $0x20] sm:$0xf]
      %v721 = vld [vmem:[%s1 + $0x24] sm:$0xf]
      %v722 = vld [vmem:[%s1 + $0x28] sm:$0xf]
      %v723 = vld [vmem:[%s1 + $0x2c] sm:$0xf]
      %v724 = vld [vmem:[%s1 + $0x30] sm:$0x3]
      %v725 = vld [vmem:[%s705] sm:$0xff]
      %v726 = vld [vmem:[%s705 + $0x8] sm:$0xff]
      %v727 = vld [vmem:[%s705 + $0x10] sm:$0xff]
      %v728 = vld [vmem:[%s705 + $0x18] sm:$0xff]
      %v729 = vld [vmem:[%s705 + $0x20] sm:$0xff]
      %v730 = vld [vmem:[%s705 + $0x28] sm:$0xff]
      %v731 = vld [vmem:[%s705 + $0x30] sm:$0xff]
      %v732 = vld [vmem:[%s705 + $0x38] sm:$0xff]
      %v733 = vpack.c.bf16 %v726, %v725
      %v734 = vpack.c.bf16 %v728, %v727
      %v735 = vpack.c.bf16 %v730, %v729
      %v736 = vpack.c.bf16 %v732, %v731
      %v750 = vunpack.c.l.b16 %v712
      %v751 = vunpack.c.l.b16 %v713
      %v752 = vunpack.c.l.b16 %v714
      %v753 = vunpack.c.l.b16 %v715
      %v754 = vunpack.c.l.b16 %v716
      %v755 = vunpack.c.l.b16 %v717
      %v756 = vunpack.c.l.b16 %v718
      %v757 = vunpack.c.l.b16 %v719
      %v758 = vunpack.c.l.b16 %v720
      %v759 = vunpack.c.l.b16 %v721
      %v760 = vunpack.c.l.b16 %v722
      %v761 = vunpack.c.l.b16 %v723
      %v762 = vunpack.c.l.b16 %v724
      %v763 = vpack.c.b16 %v751, %v750
      %v764 = vpack.c.b16 %v753, %v752
      %v765 = vpack.c.b16 %v755, %v754
      %v766 = vpack.c.b16 %v757, %v756
      %v767 = vpack.c.b16 %v759, %v758
      %v768 = vpack.c.b16 %v761, %v760
      %v769 = vpack.c.b16 %v762, %v762
      %vm770 = vcmask 523264
      %v772 = vsel %vm770, %v763, 0
      %v775 = vsel %vm770, %v764, 0
      %v778 = vsel %vm770, %v765, 0
      %v781 = vsel %vm770, %v766, 0
      %v784 = vsel %vm770, %v767, 0
      %v787 = vsel %vm770, %v768, 0
      %v790 = vsel %vm770, %v769, 0
      %792 = vmatpush.bf16.msra.mxu0 0
      %793 = vmatpush.bf16.msra.mxu0 0
      %794 = vmatpush.bf16.msra.mxu0 0
      %795 = vmatpush.bf16.msra.mxu0 0
      %796 = vmatpush.bf16.msra.mxu0 %v736
      %797 = vmatpush.bf16.msra.mxu0 %v735
      %798 = vmatpush.bf16.msra.mxu0 %v734
      %799 = vmatpush.bf16.msra.mxu0 %v733
      %800 = vmatmul.bf16.gmra.mxu0 %v772
      %v801 = vpop.f32.mrf.mxu0
      %v802 = vadd.f32 0.0, %v801
      %v803 = vpop.f32.mrf.mxu0
      %v804 = vadd.f32 0.0, %v803
      %805 = vmatmul.bf16.gmra.mxu0 %v775
      %v806 = vpop.f32.mrf.mxu0
      %v807 = vadd.f32 0.0, %v806
      %v808 = vpop.f32.mrf.mxu0
      %v809 = vadd.f32 0.0, %v808
      %810 = vmatmul.bf16.gmra.mxu0 %v778
      %v811 = vpop.f32.mrf.mxu0
      %v812 = vadd.f32 0.0, %v811
      %v813 = vpop.f32.mrf.mxu0
      %v814 = vadd.f32 0.0, %v813
      %815 = vmatmul.bf16.gmra.mxu0 %v781
      %v816 = vpop.f32.mrf.mxu0
      %v817 = vadd.f32 0.0, %v816
      %v818 = vpop.f32.mrf.mxu0
      %v819 = vadd.f32 0.0, %v818
      %820 = vmatmul.bf16.gmra.mxu0 %v784
      %v821 = vpop.f32.mrf.mxu0
      %v822 = vadd.f32 0.0, %v821
      %v823 = vpop.f32.mrf.mxu0
      %v824 = vadd.f32 0.0, %v823
      %825 = vmatmul.bf16.gmra.mxu0 %v787
      %v826 = vpop.f32.mrf.mxu0
      %v827 = vadd.f32 0.0, %v826
      %v828 = vpop.f32.mrf.mxu0
      %v829 = vadd.f32 0.0, %v828
      %830 = vmatmul.bf16.gmra.mxu0 %v790
      %v831 = vpop.f32.mrf.mxu0
      %v832 = vadd.f32 0.0, %v831
      %v833 = vpop.f32.mrf.mxu0
      %834 = vdwg.mxu0
      %vm835 = vcmask 261120
      %836 = vst.msk [vmem:[#allocation2] sm:$0xff] %vm835, %v802
      %837 = vst.msk [vmem:[#allocation2 + $0x8] sm:$0xff] %vm835, %v804
      %838 = vst.msk [vmem:[#allocation2 + $0x10] sm:$0xff] %vm835, %v807
      %839 = vst.msk [vmem:[#allocation2 + $0x18] sm:$0xff] %vm835, %v809
      %840 = vst.msk [vmem:[#allocation2 + $0x20] sm:$0xff] %vm835, %v812
      %841 = vst.msk [vmem:[#allocation2 + $0x28] sm:$0xff] %vm835, %v814
      %842 = vst.msk [vmem:[#allocation2 + $0x30] sm:$0xff] %vm835, %v817
      %843 = vst.msk [vmem:[#allocation2 + $0x38] sm:$0xff] %vm835, %v819
      %844 = vst.msk [vmem:[#allocation2 + $0x40] sm:$0xff] %vm835, %v822
      %845 = vst.msk [vmem:[#allocation2 + $0x48] sm:$0xff] %vm835, %v824
      %846 = vst.msk [vmem:[#allocation2 + $0x50] sm:$0xff] %vm835, %v827
      %847 = vst.msk [vmem:[#allocation2 + $0x58] sm:$0xff] %vm835, %v829
      %vm848 = vcmask 257024
      %849 = vst.msk [vmem:[#allocation2 + $0x60] sm:$0xf] %vm848, %v832
      %v850 = vld [vmem:[#allocation2] sm:$0xff]
      %v851 = vld [vmem:[#allocation2 + $0x8] sm:$0xff]
      %v852 = vld [vmem:[#allocation2 + $0x10] sm:$0xff]
      %v853 = vld [vmem:[#allocation2 + $0x18] sm:$0xff]
      %v854 = vld [vmem:[#allocation2 + $0x20] sm:$0xff]
      %v855 = vld [vmem:[#allocation2 + $0x28] sm:$0xff]
      %v856 = vld [vmem:[#allocation2 + $0x30] sm:$0xff]
      %v857 = vld [vmem:[#allocation2 + $0x38] sm:$0xff]
      %v858 = vld [vmem:[#allocation2 + $0x40] sm:$0xff]
      %v859 = vld [vmem:[#allocation2 + $0x48] sm:$0x3f]
      %v860 = vpack.c.bf16 %v851, %v850
      %v861 = vpack.c.bf16 %v853, %v852
      %v862 = vpack.c.bf16 %v855, %v854
      %v863 = vpack.c.bf16 %v857, %v856
      %v864 = vpack.c.bf16 %v859, %v858
      %v865 = vld [vmem:[%s11] sm:$0xf]
      %v866 = vld [vmem:[%s11 + $0x4] sm:$0xf]
      %v867 = vld [vmem:[%s11 + $0x8] sm:$0xf]
      %v868 = vld [vmem:[%s11 + $0xc] sm:$0xf]
      %v869 = vld [vmem:[#allocation2 + $0x1] sm:$0xff]
      %v870 = vld [vmem:[#allocation2 + $0x9] sm:$0xff]
      %v871 = vld [vmem:[#allocation2 + $0x11] sm:$0xff]
      %v872 = vld [vmem:[#allocation2 + $0x19] sm:$0xff]
      %v873 = vld [vmem:[#allocation2 + $0x21] sm:$0xff]
      %v874 = vld [vmem:[#allocation2 + $0x29] sm:$0xff]
      %v875 = vld [vmem:[#allocation2 + $0x31] sm:$0xff]
      %v876 = vld [vmem:[#allocation2 + $0x39] sm:$0xff]
      %v877 = vld [vmem:[#allocation2 + $0x41] sm:$0xff]
      %v878 = vld [vmem:[#allocation2 + $0x49] sm:$0x3f]
      %v879 = vpack.c.bf16 %v870, %v869
      %v880 = vpack.c.bf16 %v872, %v871
      %v881 = vpack.c.bf16 %v874, %v873
      %v882 = vpack.c.bf16 %v876, %v875
      %v883 = vpack.c.bf16 %v878, %v877
      %s884 = scalar_lea.vmem %s11, 16
      %v885 = vld [vmem:[%s884] sm:$0xf]
      %v886 = vld [vmem:[%s884 + $0x4] sm:$0xf]
      %v887 = vld [vmem:[%s884 + $0x8] sm:$0xf]
      %v888 = vld [vmem:[%s884 + $0xc] sm:$0xf]
      %v893 = vunpack.c.l.b16 %v885
      %v894 = vunpack.c.l.b16 %v886
      %v895 = vunpack.c.l.b16 %v887
      %v896 = vunpack.c.l.b16 %v888
      %v897 = vpack.c.b16 %v894, %v893
      %v898 = vpack.c.b16 %v896, %v895
      %v902 = vsel %vm835, %v879, 0
      %v905 = vsel %vm835, %v880, 0
      %v908 = vsel %vm835, %v881, 0
      %v911 = vsel %vm835, %v882, 0
      %v914 = vsel %vm835, %v883, 0
      %916 = vmatpush.bf16.msra.mxu0 0
      %917 = vmatpush.bf16.msra.mxu0 0
      %918 = vmatpush.bf16.msra.mxu0 0
      %919 = vmatpush.bf16.msra.mxu0 0
      %920 = vmatpush.bf16.msra.mxu0 0
      %921 = vmatpush.bf16.msra.mxu0 0
      %922 = vmatpush.bf16.msra.mxu0 %v898
      %923 = vmatpush.bf16.msra.mxu0 %v897
      %924 = vmatmul.bf16.gmra.mxu0 %v902
      %v925 = vpop.f32.mrf.mxu0
      %v926 = vadd.f32 0.0, %v925
      %v927 = vpop.f32.mrf.mxu0
      %v928 = vadd.f32 0.0, %v927
      %929 = vmatmul.bf16.gmra.mxu0 %v905
      %v930 = vpop.f32.mrf.mxu0
      %v931 = vadd.f32 0.0, %v930
      %v932 = vpop.f32.mrf.mxu0
      %v933 = vadd.f32 0.0, %v932
      %934 = vmatmul.bf16.gmra.mxu0 %v908
      %v935 = vpop.f32.mrf.mxu0
      %v936 = vadd.f32 0.0, %v935
      %v937 = vpop.f32.mrf.mxu0
      %v938 = vadd.f32 0.0, %v937
      %939 = vmatmul.bf16.gmra.mxu0 %v911
      %v940 = vpop.f32.mrf.mxu0
      %v941 = vadd.f32 0.0, %v940
      %v942 = vpop.f32.mrf.mxu0
      %v943 = vadd.f32 0.0, %v942
      %944 = vmatmul.bf16.gmra.mxu0 %v914
      %v945 = vpop.f32.mrf.mxu0
      %v946 = vadd.f32 0.0, %v945
      %v947 = vpop.f32.mrf.mxu0
      %v948 = vadd.f32 0.0, %v947
      %949 = vdwg.mxu0
      %v954 = vunpack.c.l.b16 %v865
      %v955 = vunpack.c.l.b16 %v866
      %v956 = vunpack.c.l.b16 %v867
      %v957 = vunpack.c.l.b16 %v868
      %v958 = vpack.c.b16 %v955, %v954
      %v959 = vpack.c.b16 %v957, %v956
      %v963 = vsel %vm835, %v860, 0
      %v966 = vsel %vm835, %v861, 0
      %v969 = vsel %vm835, %v862, 0
      %v972 = vsel %vm835, %v863, 0
      %v975 = vsel %vm835, %v864, 0
      %977 = vmatpush.bf16.msra.mxu0 0
      %978 = vmatpush.bf16.msra.mxu0 0
      %979 = vmatpush.bf16.msra.mxu0 0
      %980 = vmatpush.bf16.msra.mxu0 0
      %981 = vmatpush.bf16.msra.mxu0 0
      %982 = vmatpush.bf16.msra.mxu0 0
      %983 = vmatpush.bf16.msra.mxu0 %v959
      %984 = vmatpush.bf16.msra.mxu0 %v958
      %985 = vmatmul.bf16.gmra.mxu0 %v963
      %v986 = vpop.f32.mrf.mxu0
      %v987 = vadd.f32 %v926, %v986
      %v988 = vpop.f32.mrf.mxu0
      %v989 = vadd.f32 %v928, %v988
      %990 = vmatmul.bf16.gmra.mxu0 %v966
      %v991 = vpop.f32.mrf.mxu0
      %v992 = vadd.f32 %v931, %v991
      %v993 = vpop.f32.mrf.mxu0
      %v994 = vadd.f32 %v933, %v993
      %995 = vmatmul.bf16.gmra.mxu0 %v969
      %v996 = vpop.f32.mrf.mxu0
      %v997 = vadd.f32 %v936, %v996
      %v998 = vpop.f32.mrf.mxu0
      %v999 = vadd.f32 %v938, %v998
      %1000 = vmatmul.bf16.gmra.mxu0 %v972
      %v1001 = vpop.f32.mrf.mxu0
      %v1002 = vadd.f32 %v941, %v1001
      %v1003 = vpop.f32.mrf.mxu0
      %v1004 = vadd.f32 %v943, %v1003
      %1005 = vmatmul.bf16.gmra.mxu0 %v975
      %v1006 = vpop.f32.mrf.mxu0
      %v1007 = vadd.f32 %v946, %v1006
      %v1008 = vpop.f32.mrf.mxu0
      %v1009 = vadd.f32 %v948, %v1008
      %1010 = vdwg.mxu0
      %v1011 = vld [vmem:[#allocation2 + $0x2] sm:$0xff]
      %v1012 = vld [vmem:[#allocation2 + $0xa] sm:$0xff]
      %v1013 = vld [vmem:[#allocation2 + $0x12] sm:$0xff]
      %v1014 = vld [vmem:[#allocation2 + $0x1a] sm:$0xff]
      %v1015 = vld [vmem:[#allocation2 + $0x22] sm:$0xff]
      %v1016 = vld [vmem:[#allocation2 + $0x2a] sm:$0xff]
      %v1017 = vld [vmem:[#allocation2 + $0x32] sm:$0xff]
      %v1018 = vld [vmem:[#allocation2 + $0x3a] sm:$0xff]
      %v1019 = vld [vmem:[#allocation2 + $0x42] sm:$0xff]
      %v1020 = vld [vmem:[#allocation2 + $0x4a] sm:$0x3f]
      %v1021 = vpack.c.bf16 %v1012, %v1011
      %v1022 = vpack.c.bf16 %v1014, %v1013
      %v1023 = vpack.c.bf16 %v1016, %v1015
      %v1024 = vpack.c.bf16 %v1018, %v1017
      %v1025 = vpack.c.bf16 %v1020, %v1019
      %s1026 = scalar_lea.vmem %s11, 32
      %v1027 = vld [vmem:[%s1026] sm:$0xf]
      %v1028 = vld [vmem:[%s1026 + $0x4] sm:$0xf]
      %v1029 = vld [vmem:[%s1026 + $0x8] sm:$0xf]
      %v1030 = vld [vmem:[%s1026 + $0xc] sm:$0xf]
      %v1035 = vunpack.c.l.b16 %v1027
      %v1036 = vunpack.c.l.b16 %v1028
      %v1037 = vunpack.c.l.b16 %v1029
      %v1038 = vunpack.c.l.b16 %v1030
      %v1039 = vpack.c.b16 %v1036, %v1035
      %v1040 = vpack.c.b16 %v1038, %v1037
      %v1044 = vsel %vm835, %v1021, 0
      %v1047 = vsel %vm835, %v1022, 0
      %v1050 = vsel %vm835, %v1023, 0
      %v1053 = vsel %vm835, %v1024, 0
      %v1056 = vsel %vm835, %v1025, 0
      %1058 = vmatpush.bf16.msra.mxu0 0
      %1059 = vmatpush.bf16.msra.mxu0 0
      %1060 = vmatpush.bf16.msra.mxu0 0
      %1061 = vmatpush.bf16.msra.mxu0 0
      %1062 = vmatpush.bf16.msra.mxu0 0
      %1063 = vmatpush.bf16.msra.mxu0 0
      %1064 = vmatpush.bf16.msra.mxu0 %v1040
      %1065 = vmatpush.bf16.msra.mxu0 %v1039
      %1066 = vmatmul.bf16.gmra.mxu0 %v1044
      %v1067 = vpop.f32.mrf.mxu0
      %v1068 = vadd.f32 0.0, %v1067
      %v1069 = vpop.f32.mrf.mxu0
      %v1070 = vadd.f32 0.0, %v1069
      %1071 = vmatmul.bf16.gmra.mxu0 %v1047
      %v1072 = vpop.f32.mrf.mxu0
      %v1073 = vadd.f32 0.0, %v1072
      %v1074 = vpop.f32.mrf.mxu0
      %v1075 = vadd.f32 0.0, %v1074
      %1076 = vmatmul.bf16.gmra.mxu0 %v1050
      %v1077 = vpop.f32.mrf.mxu0
      %v1078 = vadd.f32 0.0, %v1077
      %v1079 = vpop.f32.mrf.mxu0
      %v1080 = vadd.f32 0.0, %v1079
      %1081 = vmatmul.bf16.gmra.mxu0 %v1053
      %v1082 = vpop.f32.mrf.mxu0
      %v1083 = vadd.f32 0.0, %v1082
      %v1084 = vpop.f32.mrf.mxu0
      %v1085 = vadd.f32 0.0, %v1084
      %1086 = vmatmul.bf16.gmra.mxu0 %v1056
      %v1087 = vpop.f32.mrf.mxu0
      %v1088 = vadd.f32 0.0, %v1087
      %v1089 = vpop.f32.mrf.mxu0
      %v1090 = vadd.f32 0.0, %v1089
      %1091 = vdwg.mxu0
      %v1092 = vadd.f32 %v987, %v1068
      %v1093 = vadd.f32 %v989, %v1070
      %v1094 = vadd.f32 %v992, %v1073
      %v1095 = vadd.f32 %v994, %v1075
      %v1096 = vadd.f32 %v997, %v1078
      %v1097 = vadd.f32 %v999, %v1080
      %v1098 = vadd.f32 %v1002, %v1083
      %v1099 = vadd.f32 %v1004, %v1085
      %v1100 = vadd.f32 %v1007, %v1088
      %v1101 = vadd.f32 %v1009, %v1090
      %v1102 = vld [vmem:[#allocation2 + $0xa] sm:$0xff]
      %v1103 = vld [vmem:[#allocation2 + $0x12] sm:$0xff]
      %v1104 = vld [vmem:[#allocation2 + $0x1a] sm:$0xff]
      %v1105 = vld [vmem:[#allocation2 + $0x22] sm:$0xff]
      %v1106 = vld [vmem:[#allocation2 + $0x2a] sm:$0xff]
      %v1107 = vld [vmem:[#allocation2 + $0x32] sm:$0xff]
      %v1108 = vld [vmem:[#allocation2 + $0x3a] sm:$0xff]
      %v1109 = vld [vmem:[#allocation2 + $0x42] sm:$0xff]
      %v1110 = vld [vmem:[#allocation2 + $0x4a] sm:$0xff]
      %v1111 = vld [vmem:[#allocation2 + $0x52] sm:$0x3f]
      %v1112 = vpack.c.bf16 %v1103, %v1102
      %v1113 = vpack.c.bf16 %v1105, %v1104
      %v1114 = vpack.c.bf16 %v1107, %v1106
      %v1115 = vpack.c.bf16 %v1109, %v1108
      %v1116 = vpack.c.bf16 %v1111, %v1110
      %s1117 = scalar_lea.vmem %s11, 48
      %v1118 = vld [vmem:[%s1117] sm:$0xf]
      %v1119 = vld [vmem:[%s1117 + $0x4] sm:$0xf]
      %v1120 = vld [vmem:[%s1117 + $0x8] sm:$0xf]
      %v1121 = vld [vmem:[%s1117 + $0xc] sm:$0xf]
      %v1126 = vunpack.c.l.b16 %v1118
      %v1127 = vunpack.c.l.b16 %v1119
      %v1128 = vunpack.c.l.b16 %v1120
      %v1129 = vunpack.c.l.b16 %v1121
      %v1130 = vpack.c.b16 %v1127, %v1126
      %v1131 = vpack.c.b16 %v1129, %v1128
      %v1135 = vsel %vm835, %v1112, 0
      %v1138 = vsel %vm835, %v1113, 0
      %v1141 = vsel %vm835, %v1114, 0
      %v1144 = vsel %vm835, %v1115, 0
      %v1147 = vsel %vm835, %v1116, 0
      %1149 = vmatpush.bf16.msra.mxu0 0
      %1150 = vmatpush.bf16.msra.mxu0 0
      %1151 = vmatpush.bf16.msra.mxu0 0
      %1152 = vmatpush.bf16.msra.mxu0 0
      %1153 = vmatpush.bf16.msra.mxu0 0
      %1154 = vmatpush.bf16.msra.mxu0 0
      %1155 = vmatpush.bf16.msra.mxu0 %v1131
      %1156 = vmatpush.bf16.msra.mxu0 %v1130
      %1157 = vmatmul.bf16.gmra.mxu0 %v1135
      %v1158 = vpop.f32.mrf.mxu0
      %v1159 = vadd.f32 0.0, %v1158
      %v1160 = vpop.f32.mrf.mxu0
      %v1161 = vadd.f32 0.0, %v1160
      %1162 = vmatmul.bf16.gmra.mxu0 %v1138
      %v1163 = vpop.f32.mrf.mxu0
      %v1164 = vadd.f32 0.0, %v1163
      %v1165 = vpop.f32.mrf.mxu0
      %v1166 = vadd.f32 0.0, %v1165
      %1167 = vmatmul.bf16.gmra.mxu0 %v1141
      %v1168 = vpop.f32.mrf.mxu0
      %v1169 = vadd.f32 0.0, %v1168
      %v1170 = vpop.f32.mrf.mxu0
      %v1171 = vadd.f32 0.0, %v1170
      %1172 = vmatmul.bf16.gmra.mxu0 %v1144
      %v1173 = vpop.f32.mrf.mxu0
      %v1174 = vadd.f32 0.0, %v1173
      %v1175 = vpop.f32.mrf.mxu0
      %v1176 = vadd.f32 0.0, %v1175
      %1177 = vmatmul.bf16.gmra.mxu0 %v1147
      %v1178 = vpop.f32.mrf.mxu0
      %v1179 = vadd.f32 0.0, %v1178
      %v1180 = vpop.f32.mrf.mxu0
      %v1181 = vadd.f32 0.0, %v1180
      %1182 = vdwg.mxu0
      %v1183 = vadd.f32 %v1092, %v1159
      %v1184 = vadd.f32 %v1093, %v1161
      %v1185 = vadd.f32 %v1094, %v1164
      %v1186 = vadd.f32 %v1095, %v1166
      %v1187 = vadd.f32 %v1096, %v1169
      %v1188 = vadd.f32 %v1097, %v1171
      %v1189 = vadd.f32 %v1098, %v1174
      %v1190 = vadd.f32 %v1099, %v1176
      %v1191 = vadd.f32 %v1100, %v1179
      %v1192 = vadd.f32 %v1101, %v1181
      %v1193 = vld [vmem:[#allocation2 + $0xb] sm:$0xff]
      %v1194 = vld [vmem:[#allocation2 + $0x13] sm:$0xff]
      %v1195 = vld [vmem:[#allocation2 + $0x1b] sm:$0xff]
      %v1196 = vld [vmem:[#allocation2 + $0x23] sm:$0xff]
      %v1197 = vld [vmem:[#allocation2 + $0x2b] sm:$0xff]
      %v1198 = vld [vmem:[#allocation2 + $0x33] sm:$0xff]
      %v1199 = vld [vmem:[#allocation2 + $0x3b] sm:$0xff]
      %v1200 = vld [vmem:[#allocation2 + $0x43] sm:$0xff]
      %v1201 = vld [vmem:[#allocation2 + $0x4b] sm:$0xff]
      %v1202 = vld [vmem:[#allocation2 + $0x53] sm:$0x3f]
      %v1203 = vpack.c.bf16 %v1194, %v1193
      %v1204 = vpack.c.bf16 %v1196, %v1195
      %v1205 = vpack.c.bf16 %v1198, %v1197
      %v1206 = vpack.c.bf16 %v1200, %v1199
      %v1207 = vpack.c.bf16 %v1202, %v1201
      %s1208 = scalar_lea.vmem %s11, 64
      %v1209 = vld [vmem:[%s1208] sm:$0xf]
      %v1210 = vld [vmem:[%s1208 + $0x4] sm:$0xf]
      %v1211 = vld [vmem:[%s1208 + $0x8] sm:$0xf]
      %v1212 = vld [vmem:[%s1208 + $0xc] sm:$0xf]
      %v1217 = vunpack.c.l.b16 %v1209
      %v1218 = vunpack.c.l.b16 %v1210
      %v1219 = vunpack.c.l.b16 %v1211
      %v1220 = vunpack.c.l.b16 %v1212
      %v1221 = vpack.c.b16 %v1218, %v1217
      %v1222 = vpack.c.b16 %v1220, %v1219
      %v1226 = vsel %vm835, %v1203, 0
      %v1229 = vsel %vm835, %v1204, 0
      %v1232 = vsel %vm835, %v1205, 0
      %v1235 = vsel %vm835, %v1206, 0
      %v1238 = vsel %vm835, %v1207, 0
      %1240 = vmatpush.bf16.msra.mxu0 0
      %1241 = vmatpush.bf16.msra.mxu0 0
      %1242 = vmatpush.bf16.msra.mxu0 0
      %1243 = vmatpush.bf16.msra.mxu0 0
      %1244 = vmatpush.bf16.msra.mxu0 0
      %1245 = vmatpush.bf16.msra.mxu0 0
      %1246 = vmatpush.bf16.msra.mxu0 %v1222
      %1247 = vmatpush.bf16.msra.mxu0 %v1221
      %1248 = vmatmul.bf16.gmra.mxu0 %v1226
      %v1249 = vpop.f32.mrf.mxu0
      %v1250 = vadd.f32 0.0, %v1249
      %v1251 = vpop.f32.mrf.mxu0
      %v1252 = vadd.f32 0.0, %v1251
      %1253 = vmatmul.bf16.gmra.mxu0 %v1229
      %v1254 = vpop.f32.mrf.mxu0
      %v1255 = vadd.f32 0.0, %v1254
      %v1256 = vpop.f32.mrf.mxu0
      %v1257 = vadd.f32 0.0, %v1256
      %1258 = vmatmul.bf16.gmra.mxu0 %v1232
      %v1259 = vpop.f32.mrf.mxu0
      %v1260 = vadd.f32 0.0, %v1259
      %v1261 = vpop.f32.mrf.mxu0
      %v1262 = vadd.f32 0.0, %v1261
      %1263 = vmatmul.bf16.gmra.mxu0 %v1235
      %v1264 = vpop.f32.mrf.mxu0
      %v1265 = vadd.f32 0.0, %v1264
      %v1266 = vpop.f32.mrf.mxu0
      %v1267 = vadd.f32 0.0, %v1266
      %1268 = vmatmul.bf16.gmra.mxu0 %v1238
      %v1269 = vpop.f32.mrf.mxu0
      %v1270 = vadd.f32 0.0, %v1269
      %v1271 = vpop.f32.mrf.mxu0
      %v1272 = vadd.f32 0.0, %v1271
      %1273 = vdwg.mxu0
      %v1274 = vadd.f32 %v1183, %v1250
      %v1275 = vadd.f32 %v1184, %v1252
      %v1276 = vadd.f32 %v1185, %v1255
      %v1277 = vadd.f32 %v1186, %v1257
      %v1278 = vadd.f32 %v1187, %v1260
      %v1279 = vadd.f32 %v1188, %v1262
      %v1280 = vadd.f32 %v1189, %v1265
      %v1281 = vadd.f32 %v1190, %v1267
      %v1282 = vadd.f32 %v1191, %v1270
      %v1283 = vadd.f32 %v1192, %v1272
      %v1284 = vld [vmem:[#allocation2 + $0xc] sm:$0xff]
      %v1285 = vld [vmem:[#allocation2 + $0x14] sm:$0xff]
      %v1286 = vld [vmem:[#allocation2 + $0x1c] sm:$0xff]
      %v1287 = vld [vmem:[#allocation2 + $0x24] sm:$0xff]
      %v1288 = vld [vmem:[#allocation2 + $0x2c] sm:$0xff]
      %v1289 = vld [vmem:[#allocation2 + $0x34] sm:$0xff]
      %v1290 = vld [vmem:[#allocation2 + $0x3c] sm:$0xff]
      %v1291 = vld [vmem:[#allocation2 + $0x44] sm:$0xff]
      %v1292 = vld [vmem:[#allocation2 + $0x4c] sm:$0xff]
      %v1293 = vld [vmem:[#allocation2 + $0x54] sm:$0x3f]
      %v1294 = vpack.c.bf16 %v1285, %v1284
      %v1295 = vpack.c.bf16 %v1287, %v1286
      %v1296 = vpack.c.bf16 %v1289, %v1288
      %v1297 = vpack.c.bf16 %v1291, %v1290
      %v1298 = vpack.c.bf16 %v1293, %v1292
      %s1299 = scalar_lea.vmem %s11, 80
      %v1300 = vld [vmem:[%s1299] sm:$0xf]
      %v1301 = vld [vmem:[%s1299 + $0x4] sm:$0xf]
      %v1302 = vld [vmem:[%s1299 + $0x8] sm:$0xf]
      %v1303 = vld [vmem:[%s1299 + $0xc] sm:$0xf]
      %v1308 = vunpack.c.l.b16 %v1300
      %v1309 = vunpack.c.l.b16 %v1301
      %v1310 = vunpack.c.l.b16 %v1302
      %v1311 = vunpack.c.l.b16 %v1303
      %v1312 = vpack.c.b16 %v1309, %v1308
      %v1313 = vpack.c.b16 %v1311, %v1310
      %v1317 = vsel %vm835, %v1294, 0
      %v1320 = vsel %vm835, %v1295, 0
      %v1323 = vsel %vm835, %v1296, 0
      %v1326 = vsel %vm835, %v1297, 0
      %v1329 = vsel %vm835, %v1298, 0
      %1331 = vmatpush.bf16.msra.mxu0 0
      %1332 = vmatpush.bf16.msra.mxu0 0
      %1333 = vmatpush.bf16.msra.mxu0 0
      %1334 = vmatpush.bf16.msra.mxu0 0
      %1335 = vmatpush.bf16.msra.mxu0 0
      %1336 = vmatpush.bf16.msra.mxu0 0
      %1337 = vmatpush.bf16.msra.mxu0 %v1313
      %1338 = vmatpush.bf16.msra.mxu0 %v1312
      %1339 = vmatmul.bf16.gmra.mxu0 %v1317
      %v1340 = vpop.f32.mrf.mxu0
      %v1341 = vadd.f32 0.0, %v1340
      %v1342 = vpop.f32.mrf.mxu0
      %v1343 = vadd.f32 0.0, %v1342
      %1344 = vmatmul.bf16.gmra.mxu0 %v1320
      %v1345 = vpop.f32.mrf.mxu0
      %v1346 = vadd.f32 0.0, %v1345
      %v1347 = vpop.f32.mrf.mxu0
      %v1348 = vadd.f32 0.0, %v1347
      %1349 = vmatmul.bf16.gmra.mxu0 %v1323
      %v1350 = vpop.f32.mrf.mxu0
      %v1351 = vadd.f32 0.0, %v1350
      %v1352 = vpop.f32.mrf.mxu0
      %v1353 = vadd.f32 0.0, %v1352
      %1354 = vmatmul.bf16.gmra.mxu0 %v1326
      %v1355 = vpop.f32.mrf.mxu0
      %v1356 = vadd.f32 0.0, %v1355
      %v1357 = vpop.f32.mrf.mxu0
      %v1358 = vadd.f32 0.0, %v1357
      %1359 = vmatmul.bf16.gmra.mxu0 %v1329
      %v1360 = vpop.f32.mrf.mxu0
      %v1361 = vadd.f32 0.0, %v1360
      %v1362 = vpop.f32.mrf.mxu0
      %v1363 = vadd.f32 0.0, %v1362
      %1364 = vdwg.mxu0
      %v1365 = vadd.f32 %v1274, %v1341
      %v1366 = vadd.f32 %v1275, %v1343
      %v1367 = vadd.f32 %v1276, %v1346
      %v1368 = vadd.f32 %v1277, %v1348
      %v1369 = vadd.f32 %v1278, %v1351
      %v1370 = vadd.f32 %v1279, %v1353
      %v1371 = vadd.f32 %v1280, %v1356
      %v1372 = vadd.f32 %v1281, %v1358
      %v1373 = vadd.f32 %v1282, %v1361
      %v1374 = vadd.f32 %v1283, %v1363
      %v1375 = vld [vmem:[#allocation2 + $0x14] sm:$0xff]
      %v1376 = vld [vmem:[#allocation2 + $0x1c] sm:$0xff]
      %v1377 = vld [vmem:[#allocation2 + $0x24] sm:$0xff]
      %v1378 = vld [vmem:[#allocation2 + $0x2c] sm:$0xff]
      %v1379 = vld [vmem:[#allocation2 + $0x34] sm:$0xff]
      %v1380 = vld [vmem:[#allocation2 + $0x3c] sm:$0xff]
      %v1381 = vld [vmem:[#allocation2 + $0x44] sm:$0xff]
      %v1382 = vld [vmem:[#allocation2 + $0x4c] sm:$0xff]
      %v1383 = vld [vmem:[#allocation2 + $0x54] sm:$0xff]
      %v1384 = vld [vmem:[#allocation2 + $0x5c] sm:$0x3f]
      %v1385 = vpack.c.bf16 %v1376, %v1375
      %v1386 = vpack.c.bf16 %v1378, %v1377
      %v1387 = vpack.c.bf16 %v1380, %v1379
      %v1388 = vpack.c.bf16 %v1382, %v1381
      %v1389 = vpack.c.bf16 %v1384, %v1383
      %s1390 = scalar_lea.vmem %s11, 96
      %v1391 = vld [vmem:[%s1390] sm:$0xf]
      %v1392 = vld [vmem:[%s1390 + $0x4] sm:$0xf]
      %v1393 = vld [vmem:[%s1390 + $0x8] sm:$0xf]
      %v1394 = vld [vmem:[%s1390 + $0xc] sm:$0xf]
      %v1399 = vunpack.c.l.b16 %v1391
      %v1400 = vunpack.c.l.b16 %v1392
      %v1401 = vunpack.c.l.b16 %v1393
      %v1402 = vunpack.c.l.b16 %v1394
      %v1403 = vpack.c.b16 %v1400, %v1399
      %v1404 = vpack.c.b16 %v1402, %v1401
      %v1408 = vsel %vm835, %v1385, 0
      %v1411 = vsel %vm835, %v1386, 0
      %v1414 = vsel %vm835, %v1387, 0
      %v1417 = vsel %vm835, %v1388, 0
      %v1420 = vsel %vm835, %v1389, 0
      %1422 = vmatpush.bf16.msra.mxu0 0
      %1423 = vmatpush.bf16.msra.mxu0 0
      %1424 = vmatpush.bf16.msra.mxu0 0
      %1425 = vmatpush.bf16.msra.mxu0 0
      %1426 = vmatpush.bf16.msra.mxu0 0
      %1427 = vmatpush.bf16.msra.mxu0 0
      %1428 = vmatpush.bf16.msra.mxu0 %v1404
      %1429 = vmatpush.bf16.msra.mxu0 %v1403
      %1430 = vmatmul.bf16.gmra.mxu0 %v1408
      %v1431 = vpop.f32.mrf.mxu0
      %v1432 = vadd.f32 0.0, %v1431
      %v1433 = vpop.f32.mrf.mxu0
      %v1434 = vadd.f32 0.0, %v1433
      %1435 = vmatmul.bf16.gmra.mxu0 %v1411
      %v1436 = vpop.f32.mrf.mxu0
      %v1437 = vadd.f32 0.0, %v1436
      %v1438 = vpop.f32.mrf.mxu0
      %v1439 = vadd.f32 0.0, %v1438
      %1440 = vmatmul.bf16.gmra.mxu0 %v1414
      %v1441 = vpop.f32.mrf.mxu0
      %v1442 = vadd.f32 0.0, %v1441
      %v1443 = vpop.f32.mrf.mxu0
      %v1444 = vadd.f32 0.0, %v1443
      %1445 = vmatmul.bf16.gmra.mxu0 %v1417
      %v1446 = vpop.f32.mrf.mxu0
      %v1447 = vadd.f32 0.0, %v1446
      %v1448 = vpop.f32.mrf.mxu0
      %v1449 = vadd.f32 0.0, %v1448
      %1450 = vmatmul.bf16.gmra.mxu0 %v1420
      %v1451 = vpop.f32.mrf.mxu0
      %v1452 = vadd.f32 0.0, %v1451
      %v1453 = vpop.f32.mrf.mxu0
      %v1454 = vadd.f32 0.0, %v1453
      %1455 = vdwg.mxu0
      %v1456 = vadd.f32 %v1365, %v1432
      %v1457 = vadd.f32 %v1366, %v1434
      %v1458 = vadd.f32 %v1367, %v1437
      %v1459 = vadd.f32 %v1368, %v1439
      %v1460 = vadd.f32 %v1369, %v1442
      %v1461 = vadd.f32 %v1370, %v1444
      %v1462 = vadd.f32 %v1371, %v1447
      %v1463 = vadd.f32 %v1372, %v1449
      %v1464 = vadd.f32 %v1373, %v1452
      %v1465 = vadd.f32 %v1374, %v1454
      %v1466 = vld [vmem:[#allocation2 + $0x15] sm:$0xff]
      %v1467 = vld [vmem:[#allocation2 + $0x1d] sm:$0xff]
      %v1468 = vld [vmem:[#allocation2 + $0x25] sm:$0xff]
      %v1469 = vld [vmem:[#allocation2 + $0x2d] sm:$0xff]
      %v1470 = vld [vmem:[#allocation2 + $0x35] sm:$0xff]
      %v1471 = vld [vmem:[#allocation2 + $0x3d] sm:$0xff]
      %v1472 = vld [vmem:[#allocation2 + $0x45] sm:$0xff]
      %v1473 = vld [vmem:[#allocation2 + $0x4d] sm:$0xff]
      %v1474 = vld [vmem:[#allocation2 + $0x55] sm:$0xff]
      %v1475 = vld [vmem:[#allocation2 + $0x5d] sm:$0x3f]
      %v1476 = vpack.c.bf16 %v1467, %v1466
      %v1477 = vpack.c.bf16 %v1469, %v1468
      %v1478 = vpack.c.bf16 %v1471, %v1470
      %v1479 = vpack.c.bf16 %v1473, %v1472
      %v1480 = vpack.c.bf16 %v1475, %v1474
      %s1481 = scalar_lea.vmem %s11, 112
      %v1482 = vld [vmem:[%s1481] sm:$0xf]
      %v1483 = vld [vmem:[%s1481 + $0x4] sm:$0xf]
      %v1484 = vld [vmem:[%s1481 + $0x8] sm:$0xf]
      %v1485 = vld [vmem:[%s1481 + $0xc] sm:$0xf]
      %v1490 = vunpack.c.l.b16 %v1482
      %v1491 = vunpack.c.l.b16 %v1483
      %v1492 = vunpack.c.l.b16 %v1484
      %v1493 = vunpack.c.l.b16 %v1485
      %v1494 = vpack.c.b16 %v1491, %v1490
      %v1495 = vpack.c.b16 %v1493, %v1492
      %v1499 = vsel %vm835, %v1476, 0
      %v1502 = vsel %vm835, %v1477, 0
      %v1505 = vsel %vm835, %v1478, 0
      %v1508 = vsel %vm835, %v1479, 0
      %v1511 = vsel %vm835, %v1480, 0
      %1513 = vmatpush.bf16.msra.mxu0 0
      %1514 = vmatpush.bf16.msra.mxu0 0
      %1515 = vmatpush.bf16.msra.mxu0 0
      %1516 = vmatpush.bf16.msra.mxu0 0
      %1517 = vmatpush.bf16.msra.mxu0 0
      %1518 = vmatpush.bf16.msra.mxu0 0
      %1519 = vmatpush.bf16.msra.mxu0 %v1495
      %1520 = vmatpush.bf16.msra.mxu0 %v1494
      %1521 = vmatmul.bf16.gmra.mxu0 %v1499
      %v1522 = vpop.f32.mrf.mxu0
      %v1523 = vadd.f32 0.0, %v1522
      %v1524 = vpop.f32.mrf.mxu0
      %v1525 = vadd.f32 0.0, %v1524
      %1526 = vmatmul.bf16.gmra.mxu0 %v1502
      %v1527 = vpop.f32.mrf.mxu0
      %v1528 = vadd.f32 0.0, %v1527
      %v1529 = vpop.f32.mrf.mxu0
      %v1530 = vadd.f32 0.0, %v1529
      %1531 = vmatmul.bf16.gmra.mxu0 %v1505
      %v1532 = vpop.f32.mrf.mxu0
      %v1533 = vadd.f32 0.0, %v1532
      %v1534 = vpop.f32.mrf.mxu0
      %v1535 = vadd.f32 0.0, %v1534
      %1536 = vmatmul.bf16.gmra.mxu0 %v1508
      %v1537 = vpop.f32.mrf.mxu0
      %v1538 = vadd.f32 0.0, %v1537
      %v1539 = vpop.f32.mrf.mxu0
      %v1540 = vadd.f32 0.0, %v1539
      %1541 = vmatmul.bf16.gmra.mxu0 %v1511
      %v1542 = vpop.f32.mrf.mxu0
      %v1543 = vadd.f32 0.0, %v1542
      %v1544 = vpop.f32.mrf.mxu0
      %v1545 = vadd.f32 0.0, %v1544
      %1546 = vdwg.mxu0
      %v1547 = vadd.f32 %v1456, %v1523
      %v1548 = vadd.f32 %v1457, %v1525
      %v1549 = vadd.f32 %v1458, %v1528
      %v1550 = vadd.f32 %v1459, %v1530
      %v1551 = vadd.f32 %v1460, %v1533
      %v1552 = vadd.f32 %v1461, %v1535
      %v1553 = vadd.f32 %v1462, %v1538
      %v1554 = vadd.f32 %v1463, %v1540
      %v1555 = vadd.f32 %v1464, %v1543
      %v1556 = vadd.f32 %v1465, %v1545
      %v1557 = vld [vmem:[#allocation2 + $0x16] sm:$0xff]
      %v1558 = vld [vmem:[#allocation2 + $0x1e] sm:$0xff]
      %v1559 = vld [vmem:[#allocation2 + $0x26] sm:$0xff]
      %v1560 = vld [vmem:[#allocation2 + $0x2e] sm:$0xff]
      %v1561 = vld [vmem:[#allocation2 + $0x36] sm:$0xff]
      %v1562 = vld [vmem:[#allocation2 + $0x3e] sm:$0xff]
      %v1563 = vld [vmem:[#allocation2 + $0x46] sm:$0xff]
      %v1564 = vld [vmem:[#allocation2 + $0x4e] sm:$0xff]
      %v1565 = vld [vmem:[#allocation2 + $0x56] sm:$0xff]
      %v1566 = vld [vmem:[#allocation2 + $0x5e] sm:$0x3f]
      %v1567 = vpack.c.bf16 %v1558, %v1557
      %v1568 = vpack.c.bf16 %v1560, %v1559
      %v1569 = vpack.c.bf16 %v1562, %v1561
      %v1570 = vpack.c.bf16 %v1564, %v1563
      %v1571 = vpack.c.bf16 %v1566, %v1565
      %s1572 = scalar_lea.vmem %s11, 128
      %v1573 = vld [vmem:[%s1572] sm:$0xf]
      %v1574 = vld [vmem:[%s1572 + $0x4] sm:$0xf]
      %v1575 = vld [vmem:[%s1572 + $0x8] sm:$0xf]
      %v1576 = vld [vmem:[%s1572 + $0xc] sm:$0xf]
      %v1581 = vunpack.c.l.b16 %v1573
      %v1582 = vunpack.c.l.b16 %v1574
      %v1583 = vunpack.c.l.b16 %v1575
      %v1584 = vunpack.c.l.b16 %v1576
      %v1585 = vpack.c.b16 %v1582, %v1581
      %v1586 = vpack.c.b16 %v1584, %v1583
      %v1590 = vsel %vm835, %v1567, 0
      %v1593 = vsel %vm835, %v1568, 0
      %v1596 = vsel %vm835, %v1569, 0
      %v1599 = vsel %vm835, %v1570, 0
      %v1602 = vsel %vm835, %v1571, 0
      %1604 = vmatpush.bf16.msra.mxu0 0
      %1605 = vmatpush.bf16.msra.mxu0 0
      %1606 = vmatpush.bf16.msra.mxu0 0
      %1607 = vmatpush.bf16.msra.mxu0 0
      %1608 = vmatpush.bf16.msra.mxu0 0
      %1609 = vmatpush.bf16.msra.mxu0 0
      %1610 = vmatpush.bf16.msra.mxu0 %v1586
      %1611 = vmatpush.bf16.msra.mxu0 %v1585
      %1612 = vmatmul.bf16.gmra.mxu0 %v1590
      %v1613 = vpop.f32.mrf.mxu0
      %v1614 = vadd.f32 0.0, %v1613
      %v1615 = vpop.f32.mrf.mxu0
      %v1616 = vadd.f32 0.0, %v1615
      %1617 = vmatmul.bf16.gmra.mxu0 %v1593
      %v1618 = vpop.f32.mrf.mxu0
      %v1619 = vadd.f32 0.0, %v1618
      %v1620 = vpop.f32.mrf.mxu0
      %v1621 = vadd.f32 0.0, %v1620
      %1622 = vmatmul.bf16.gmra.mxu0 %v1596
      %v1623 = vpop.f32.mrf.mxu0
      %v1624 = vadd.f32 0.0, %v1623
      %v1625 = vpop.f32.mrf.mxu0
      %v1626 = vadd.f32 0.0, %v1625
      %1627 = vmatmul.bf16.gmra.mxu0 %v1599
      %v1628 = vpop.f32.mrf.mxu0
      %v1629 = vadd.f32 0.0, %v1628
      %v1630 = vpop.f32.mrf.mxu0
      %v1631 = vadd.f32 0.0, %v1630
      %1632 = vmatmul.bf16.gmra.mxu0 %v1602
      %v1633 = vpop.f32.mrf.mxu0
      %v1634 = vadd.f32 0.0, %v1633
      %v1635 = vpop.f32.mrf.mxu0
      %v1636 = vadd.f32 0.0, %v1635
      %1637 = vdwg.mxu0
      %v1638 = vadd.f32 %v1547, %v1614
      %v1639 = vadd.f32 %v1548, %v1616
      %v1640 = vadd.f32 %v1549, %v1619
      %v1641 = vadd.f32 %v1550, %v1621
      %v1642 = vadd.f32 %v1551, %v1624
      %v1643 = vadd.f32 %v1552, %v1626
      %v1644 = vadd.f32 %v1553, %v1629
      %v1645 = vadd.f32 %v1554, %v1631
      %v1646 = vadd.f32 %v1555, %v1634
      %v1647 = vadd.f32 %v1556, %v1636
      %v1648 = vld [vmem:[%s12] sm:$0x1]
      %v1650 = vperm.slane %v1648, 0
      %v1652 = vadd.f32 %v1638, %v1650
      %v1653 = vadd.f32 %v1639, %v1650
      %v1654 = vadd.f32 %v1640, %v1650
      %v1655 = vadd.f32 %v1641, %v1650
      %v1656 = vadd.f32 %v1642, %v1650
      %v1657 = vadd.f32 %v1643, %v1650
      %v1658 = vadd.f32 %v1644, %v1650
      %v1659 = vadd.f32 %v1645, %v1650
      %v1660 = vadd.f32 %v1646, %v1650
      %v1661 = vadd.f32 %v1647, %v1650
      %v1662 = vld [vmem:[%s2] sm:$0xf]
      %v1663 = vld [vmem:[%s2 + $0x4] sm:$0xf]
      %v1664 = vld [vmem:[%s2 + $0x8] sm:$0xf]
      %v1665 = vld [vmem:[%s2 + $0xc] sm:$0xf]
      %v1666 = vld [vmem:[%s2 + $0x10] sm:$0xf]
      %v1667 = vld [vmem:[%s2 + $0x14] sm:$0xf]
      %v1668 = vld [vmem:[%s2 + $0x18] sm:$0xf]
      %v1669 = vld [vmem:[%s2 + $0x1c] sm:$0xf]
      %v1670 = vld [vmem:[%s2 + $0x20] sm:$0xf]
      %v1671 = vld [vmem:[%s2 + $0x24] sm:$0xf]
      %v1672 = vld [vmem:[%s2 + $0x28] sm:$0xf]
      %v1673 = vld [vmem:[%s2 + $0x2c] sm:$0xf]
      %v1674 = vld [vmem:[%s2 + $0x30] sm:$0x3]
      %v1675 = vpack.c.bf16 %v1653, %v1652
      %v1676 = vpack.c.bf16 %v1655, %v1654
      %v1677 = vpack.c.bf16 %v1657, %v1656
      %v1678 = vpack.c.bf16 %v1659, %v1658
      %v1679 = vpack.c.bf16 %v1661, %v1660
      %v1693 = vunpack.c.l.b16 %v1662
      %v1694 = vunpack.c.l.b16 %v1663
      %v1695 = vunpack.c.l.b16 %v1664
      %v1696 = vunpack.c.l.b16 %v1665
      %v1697 = vunpack.c.l.b16 %v1666
      %v1698 = vunpack.c.l.b16 %v1667
      %v1699 = vunpack.c.l.b16 %v1668
      %v1700 = vunpack.c.l.b16 %v1669
      %v1701 = vunpack.c.l.b16 %v1670
      %v1702 = vunpack.c.l.b16 %v1671
      %v1703 = vunpack.c.l.b16 %v1672
      %v1704 = vunpack.c.l.b16 %v1673
      %v1705 = vunpack.c.l.b16 %v1674
      %v1706 = vpack.c.b16 %v1694, %v1693
      %v1707 = vpack.c.b16 %v1696, %v1695
      %v1708 = vpack.c.b16 %v1698, %v1697
      %v1709 = vpack.c.b16 %v1700, %v1699
      %v1710 = vpack.c.b16 %v1702, %v1701
      %v1711 = vpack.c.b16 %v1704, %v1703
      %v1712 = vpack.c.b16 %v1705, %v1705
      %vm1713 = vcmask 637952
      %v1715 = vsel %vm1713, %v1706, 0
      %v1718 = vsel %vm1713, %v1707, 0
      %v1721 = vsel %vm1713, %v1708, 0
      %v1724 = vsel %vm1713, %v1709, 0
      %v1727 = vsel %vm1713, %v1710, 0
      %v1730 = vsel %vm1713, %v1711, 0
      %v1733 = vsel %vm1713, %v1712, 0
      %vm1735 = vcmask 1046528
      %v1737 = vsel %vm1735, %v1679, 0
      %1739 = vmatpush.bf16.msra.mxu0 0
      %1740 = vmatpush.bf16.msra.mxu0 0
      %1741 = vmatpush.bf16.msra.mxu0 0
      %1742 = vmatpush.bf16.msra.mxu0 %v1737
      %1743 = vmatpush.bf16.msra.mxu0 %v1678
      %1744 = vmatpush.bf16.msra.mxu0 %v1677
      %1745 = vmatpush.bf16.msra.mxu0 %v1676
      %1746 = vmatpush.bf16.msra.mxu0 %v1675
      %1747 = vmatmul.bf16.gmra.mxu0 %v1715
      %v1748 = vpop.f32.mrf.mxu0
      %v1749 = vadd.f32 0.0, %v1748
      %v1750 = vpop.f32.mrf.mxu0
      %v1751 = vadd.f32 0.0, %v1750
      %1752 = vmatmul.bf16.gmra.mxu0 %v1718
      %v1753 = vpop.f32.mrf.mxu0
      %v1754 = vadd.f32 0.0, %v1753
      %v1755 = vpop.f32.mrf.mxu0
      %v1756 = vadd.f32 0.0, %v1755
      %1757 = vmatmul.bf16.gmra.mxu0 %v1721
      %v1758 = vpop.f32.mrf.mxu0
      %v1759 = vadd.f32 0.0, %v1758
      %v1760 = vpop.f32.mrf.mxu0
      %v1761 = vadd.f32 0.0, %v1760
      %1762 = vmatmul.bf16.gmra.mxu0 %v1724
      %v1763 = vpop.f32.mrf.mxu0
      %v1764 = vadd.f32 0.0, %v1763
      %v1765 = vpop.f32.mrf.mxu0
      %v1766 = vadd.f32 0.0, %v1765
      %1767 = vmatmul.bf16.gmra.mxu0 %v1727
      %v1768 = vpop.f32.mrf.mxu0
      %v1769 = vadd.f32 0.0, %v1768
      %v1770 = vpop.f32.mrf.mxu0
      %v1771 = vadd.f32 0.0, %v1770
      %1772 = vmatmul.bf16.gmra.mxu0 %v1730
      %v1773 = vpop.f32.mrf.mxu0
      %v1774 = vadd.f32 0.0, %v1773
      %v1775 = vpop.f32.mrf.mxu0
      %v1776 = vadd.f32 0.0, %v1775
      %1777 = vmatmul.bf16.gmra.mxu0 %v1733
      %v1778 = vpop.f32.mrf.mxu0
      %v1779 = vadd.f32 0.0, %v1778
      %v1780 = vpop.f32.mrf.mxu0
      %1781 = vdwg.mxu0
      %1782 = vst.msk [vmem:[#allocation3] sm:$0xff] %vm770, %v1749
      %1783 = vst.msk [vmem:[#allocation3 + $0x8] sm:$0xff] %vm770, %v1751
      %1784 = vst.msk [vmem:[#allocation3 + $0x10] sm:$0xff] %vm770, %v1754
      %1785 = vst.msk [vmem:[#allocation3 + $0x18] sm:$0xff] %vm770, %v1756
      %1786 = vst.msk [vmem:[#allocation3 + $0x20] sm:$0xff] %vm770, %v1759
      %1787 = vst.msk [vmem:[#allocation3 + $0x28] sm:$0xff] %vm770, %v1761
      %1788 = vst.msk [vmem:[#allocation3 + $0x30] sm:$0xff] %vm770, %v1764
      %1789 = vst.msk [vmem:[#allocation3 + $0x38] sm:$0xff] %vm770, %v1766
      %1790 = vst.msk [vmem:[#allocation3 + $0x40] sm:$0xff] %vm770, %v1769
      %1791 = vst.msk [vmem:[#allocation3 + $0x48] sm:$0xff] %vm770, %v1771
      %1792 = vst.msk [vmem:[#allocation3 + $0x50] sm:$0xff] %vm770, %v1774
      %1793 = vst.msk [vmem:[#allocation3 + $0x58] sm:$0xff] %vm770, %v1776
      %vm1794 = vcmask 519168
      %1795 = vst.msk [vmem:[#allocation3 + $0x60] sm:$0xf] %vm1794, %v1779
      %v1796 = vld [vmem:[#allocation3] sm:$0xff]
      %v1797 = vld [vmem:[#allocation3 + $0x8] sm:$0xff]
      %v1798 = vld [vmem:[#allocation3 + $0x10] sm:$0xff]
      %v1799 = vld [vmem:[#allocation3 + $0x18] sm:$0xff]
      %v1800 = vld [vmem:[#allocation3 + $0x20] sm:$0xff]
      %v1801 = vld [vmem:[#allocation3 + $0x28] sm:$0xff]
      %v1802 = vld [vmem:[#allocation3 + $0x30] sm:$0xff]
      %v1803 = vld [vmem:[#allocation3 + $0x38] sm:$0xff]
      %v1804 = vld [vmem:[#allocation3 + $0x40] sm:$0xff]
      %v1805 = vld [vmem:[#allocation3 + $0x48] sm:$0x3f]
      %v1806 = vpack.c.bf16 %v1797, %v1796
      %v1807 = vpack.c.bf16 %v1799, %v1798
      %v1808 = vpack.c.bf16 %v1801, %v1800
      %v1809 = vpack.c.bf16 %v1803, %v1802
      %v1810 = vpack.c.bf16 %v1805, %v1804
      %v1811 = vld [vmem:[%s13] sm:$0xf]
      %v1812 = vld [vmem:[%s13 + $0x4] sm:$0xf]
      %v1813 = vld [vmem:[%s13 + $0x8] sm:$0xf]
      %v1814 = vld [vmem:[%s13 + $0xc] sm:$0xf]
      %v1815 = vld [vmem:[%s13 + $0x10] sm:$0xf]
      %v1816 = vld [vmem:[%s13 + $0x14] sm:$0xf]
      %v1817 = vld [vmem:[%s13 + $0x18] sm:$0xf]
      %v1818 = vld [vmem:[%s13 + $0x1c] sm:$0xf]
      %v1819 = vld [vmem:[#allocation3 + $0x1] sm:$0xff]
      %v1820 = vld [vmem:[#allocation3 + $0x9] sm:$0xff]
      %v1821 = vld [vmem:[#allocation3 + $0x11] sm:$0xff]
      %v1822 = vld [vmem:[#allocation3 + $0x19] sm:$0xff]
      %v1823 = vld [vmem:[#allocation3 + $0x21] sm:$0xff]
      %v1824 = vld [vmem:[#allocation3 + $0x29] sm:$0xff]
      %v1825 = vld [vmem:[#allocation3 + $0x31] sm:$0xff]
      %v1826 = vld [vmem:[#allocation3 + $0x39] sm:$0xff]
      %v1827 = vld [vmem:[#allocation3 + $0x41] sm:$0xff]
      %v1828 = vld [vmem:[#allocation3 + $0x49] sm:$0x3f]
      %v1829 = vpack.c.bf16 %v1820, %v1819
      %v1830 = vpack.c.bf16 %v1822, %v1821
      %v1831 = vpack.c.bf16 %v1824, %v1823
      %v1832 = vpack.c.bf16 %v1826, %v1825
      %v1833 = vpack.c.bf16 %v1828, %v1827
      %s1834 = scalar_lea.vmem %s13, 32
      %v1835 = vld [vmem:[%s1834] sm:$0xf]
      %v1836 = vld [vmem:[%s1834 + $0x4] sm:$0xf]
      %v1837 = vld [vmem:[%s1834 + $0x8] sm:$0xf]
      %v1838 = vld [vmem:[%s1834 + $0xc] sm:$0xf]
      %v1839 = vld [vmem:[%s1834 + $0x10] sm:$0xf]
      %v1840 = vld [vmem:[%s1834 + $0x14] sm:$0xf]
      %v1841 = vld [vmem:[%s1834 + $0x18] sm:$0xf]
      %v1842 = vld [vmem:[%s1834 + $0x1c] sm:$0xf]
      %v1851 = vunpack.c.l.b16 %v1835
      %v1852 = vunpack.c.l.b16 %v1836
      %v1853 = vunpack.c.l.b16 %v1837
      %v1854 = vunpack.c.l.b16 %v1838
      %v1855 = vunpack.c.l.b16 %v1839
      %v1856 = vunpack.c.l.b16 %v1840
      %v1857 = vunpack.c.l.b16 %v1841
      %v1858 = vunpack.c.l.b16 %v1842
      %v1859 = vpack.c.b16 %v1852, %v1851
      %v1860 = vpack.c.b16 %v1854, %v1853
      %v1861 = vpack.c.b16 %v1856, %v1855
      %v1862 = vpack.c.b16 %v1858, %v1857
      %v1868 = vsel %vm770, %v1829, 0
      %v1871 = vsel %vm770, %v1830, 0
      %v1874 = vsel %vm770, %v1831, 0
      %v1877 = vsel %vm770, %v1832, 0
      %v1880 = vsel %vm770, %v1833, 0
      %1882 = vmatpush.bf16.msra.mxu0 0
      %1883 = vmatpush.bf16.msra.mxu0 0
      %1884 = vmatpush.bf16.msra.mxu0 0
      %1885 = vmatpush.bf16.msra.mxu0 0
      %1886 = vmatpush.bf16.msra.mxu0 %v1862
      %1887 = vmatpush.bf16.msra.mxu0 %v1861
      %1888 = vmatpush.bf16.msra.mxu0 %v1860
      %1889 = vmatpush.bf16.msra.mxu0 %v1859
      %1890 = vmatmul.bf16.gmra.mxu0 %v1868
      %v1891 = vpop.f32.mrf.mxu0
      %v1892 = vadd.f32 0.0, %v1891
      %v1893 = vpop.f32.mrf.mxu0
      %v1894 = vadd.f32 0.0, %v1893
      %1895 = vmatmul.bf16.gmra.mxu0 %v1871
      %v1896 = vpop.f32.mrf.mxu0
      %v1897 = vadd.f32 0.0, %v1896
      %v1898 = vpop.f32.mrf.mxu0
      %v1899 = vadd.f32 0.0, %v1898
      %1900 = vmatmul.bf16.gmra.mxu0 %v1874
      %v1901 = vpop.f32.mrf.mxu0
      %v1902 = vadd.f32 0.0, %v1901
      %v1903 = vpop.f32.mrf.mxu0
      %v1904 = vadd.f32 0.0, %v1903
      %1905 = vmatmul.bf16.gmra.mxu0 %v1877
      %v1906 = vpop.f32.mrf.mxu0
      %v1907 = vadd.f32 0.0, %v1906
      %v1908 = vpop.f32.mrf.mxu0
      %v1909 = vadd.f32 0.0, %v1908
      %1910 = vmatmul.bf16.gmra.mxu0 %v1880
      %v1911 = vpop.f32.mrf.mxu0
      %v1912 = vadd.f32 0.0, %v1911
      %v1913 = vpop.f32.mrf.mxu0
      %v1914 = vadd.f32 0.0, %v1913
      %1915 = vdwg.mxu0
      %v1924 = vunpack.c.l.b16 %v1811
      %v1925 = vunpack.c.l.b16 %v1812
      %v1926 = vunpack.c.l.b16 %v1813
      %v1927 = vunpack.c.l.b16 %v1814
      %v1928 = vunpack.c.l.b16 %v1815
      %v1929 = vunpack.c.l.b16 %v1816
      %v1930 = vunpack.c.l.b16 %v1817
      %v1931 = vunpack.c.l.b16 %v1818
      %v1932 = vpack.c.b16 %v1925, %v1924
      %v1933 = vpack.c.b16 %v1927, %v1926
      %v1934 = vpack.c.b16 %v1929, %v1928
      %v1935 = vpack.c.b16 %v1931, %v1930
      %v1941 = vsel %vm770, %v1806, 0
      %v1944 = vsel %vm770, %v1807, 0
      %v1947 = vsel %vm770, %v1808, 0
      %v1950 = vsel %vm770, %v1809, 0
      %v1953 = vsel %vm770, %v1810, 0
      %1955 = vmatpush.bf16.msra.mxu0 0
      %1956 = vmatpush.bf16.msra.mxu0 0
      %1957 = vmatpush.bf16.msra.mxu0 0
      %1958 = vmatpush.bf16.msra.mxu0 0
      %1959 = vmatpush.bf16.msra.mxu0 %v1935
      %1960 = vmatpush.bf16.msra.mxu0 %v1934
      %1961 = vmatpush.bf16.msra.mxu0 %v1933
      %1962 = vmatpush.bf16.msra.mxu0 %v1932
      %1963 = vmatmul.bf16.gmra.mxu0 %v1941
      %v1964 = vpop.f32.mrf.mxu0
      %v1965 = vadd.f32 %v1892, %v1964
      %v1966 = vpop.f32.mrf.mxu0
      %v1967 = vadd.f32 %v1894, %v1966
      %1968 = vmatmul.bf16.gmra.mxu0 %v1944
      %v1969 = vpop.f32.mrf.mxu0
      %v1970 = vadd.f32 %v1897, %v1969
      %v1971 = vpop.f32.mrf.mxu0
      %v1972 = vadd.f32 %v1899, %v1971
      %1973 = vmatmul.bf16.gmra.mxu0 %v1947
      %v1974 = vpop.f32.mrf.mxu0
      %v1975 = vadd.f32 %v1902, %v1974
      %v1976 = vpop.f32.mrf.mxu0
      %v1977 = vadd.f32 %v1904, %v1976
      %1978 = vmatmul.bf16.gmra.mxu0 %v1950
      %v1979 = vpop.f32.mrf.mxu0
      %v1980 = vadd.f32 %v1907, %v1979
      %v1981 = vpop.f32.mrf.mxu0
      %v1982 = vadd.f32 %v1909, %v1981
      %1983 = vmatmul.bf16.gmra.mxu0 %v1953
      %v1984 = vpop.f32.mrf.mxu0
      %v1985 = vadd.f32 %v1912, %v1984
      %v1986 = vpop.f32.mrf.mxu0
      %v1987 = vadd.f32 %v1914, %v1986
      %1988 = vdwg.mxu0
      %v1989 = vld [vmem:[#allocation3 + $0x2] sm:$0xff]
      %v1990 = vld [vmem:[#allocation3 + $0xa] sm:$0xff]
      %v1991 = vld [vmem:[#allocation3 + $0x12] sm:$0xff]
      %v1992 = vld [vmem:[#allocation3 + $0x1a] sm:$0xff]
      %v1993 = vld [vmem:[#allocation3 + $0x22] sm:$0xff]
      %v1994 = vld [vmem:[#allocation3 + $0x2a] sm:$0xff]
      %v1995 = vld [vmem:[#allocation3 + $0x32] sm:$0xff]
      %v1996 = vld [vmem:[#allocation3 + $0x3a] sm:$0xff]
      %v1997 = vld [vmem:[#allocation3 + $0x42] sm:$0xff]
      %v1998 = vld [vmem:[#allocation3 + $0x4a] sm:$0x3f]
      %v1999 = vpack.c.bf16 %v1990, %v1989
      %v2000 = vpack.c.bf16 %v1992, %v1991
      %v2001 = vpack.c.bf16 %v1994, %v1993
      %v2002 = vpack.c.bf16 %v1996, %v1995
      %v2003 = vpack.c.bf16 %v1998, %v1997
      %s2004 = scalar_lea.vmem %s13, 64
      %v2005 = vld [vmem:[%s2004] sm:$0xf]
      %v2006 = vld [vmem:[%s2004 + $0x4] sm:$0xf]
      %v2007 = vld [vmem:[%s2004 + $0x8] sm:$0xf]
      %v2008 = vld [vmem:[%s2004 + $0xc] sm:$0xf]
      %v2009 = vld [vmem:[%s2004 + $0x10] sm:$0xf]
      %v2010 = vld [vmem:[%s2004 + $0x14] sm:$0xf]
      %v2011 = vld [vmem:[%s2004 + $0x18] sm:$0xf]
      %v2012 = vld [vmem:[%s2004 + $0x1c] sm:$0xf]
      %v2021 = vunpack.c.l.b16 %v2005
      %v2022 = vunpack.c.l.b16 %v2006
      %v2023 = vunpack.c.l.b16 %v2007
      %v2024 = vunpack.c.l.b16 %v2008
      %v2025 = vunpack.c.l.b16 %v2009
      %v2026 = vunpack.c.l.b16 %v2010
      %v2027 = vunpack.c.l.b16 %v2011
      %v2028 = vunpack.c.l.b16 %v2012
      %v2029 = vpack.c.b16 %v2022, %v2021
      %v2030 = vpack.c.b16 %v2024, %v2023
      %v2031 = vpack.c.b16 %v2026, %v2025
      %v2032 = vpack.c.b16 %v2028, %v2027
      %v2038 = vsel %vm770, %v1999, 0
      %v2041 = vsel %vm770, %v2000, 0
      %v2044 = vsel %vm770, %v2001, 0
      %v2047 = vsel %vm770, %v2002, 0
      %v2050 = vsel %vm770, %v2003, 0
      %2052 = vmatpush.bf16.msra.mxu0 0
      %2053 = vmatpush.bf16.msra.mxu0 0
      %2054 = vmatpush.bf16.msra.mxu0 0
      %2055 = vmatpush.bf16.msra.mxu0 0
      %2056 = vmatpush.bf16.msra.mxu0 %v2032
      %2057 = vmatpush.bf16.msra.mxu0 %v2031
      %2058 = vmatpush.bf16.msra.mxu0 %v2030
      %2059 = vmatpush.bf16.msra.mxu0 %v2029
      %2060 = vmatmul.bf16.gmra.mxu0 %v2038
      %v2061 = vpop.f32.mrf.mxu0
      %v2062 = vadd.f32 0.0, %v2061
      %v2063 = vpop.f32.mrf.mxu0
      %v2064 = vadd.f32 0.0, %v2063
      %2065 = vmatmul.bf16.gmra.mxu0 %v2041
      %v2066 = vpop.f32.mrf.mxu0
      %v2067 = vadd.f32 0.0, %v2066
      %v2068 = vpop.f32.mrf.mxu0
      %v2069 = vadd.f32 0.0, %v2068
      %2070 = vmatmul.bf16.gmra.mxu0 %v2044
      %v2071 = vpop.f32.mrf.mxu0
      %v2072 = vadd.f32 0.0, %v2071
      %v2073 = vpop.f32.mrf.mxu0
      %v2074 = vadd.f32 0.0, %v2073
      %2075 = vmatmul.bf16.gmra.mxu0 %v2047
      %v2076 = vpop.f32.mrf.mxu0
      %v2077 = vadd.f32 0.0, %v2076
      %v2078 = vpop.f32.mrf.mxu0
      %v2079 = vadd.f32 0.0, %v2078
      %2080 = vmatmul.bf16.gmra.mxu0 %v2050
      %v2081 = vpop.f32.mrf.mxu0
      %v2082 = vadd.f32 0.0, %v2081
      %v2083 = vpop.f32.mrf.mxu0
      %v2084 = vadd.f32 0.0, %v2083
      %2085 = vdwg.mxu0
      %v2086 = vadd.f32 %v1965, %v2062
      %v2087 = vadd.f32 %v1967, %v2064
      %v2088 = vadd.f32 %v1970, %v2067
      %v2089 = vadd.f32 %v1972, %v2069
      %v2090 = vadd.f32 %v1975, %v2072
      %v2091 = vadd.f32 %v1977, %v2074
      %v2092 = vadd.f32 %v1980, %v2077
      %v2093 = vadd.f32 %v1982, %v2079
      %v2094 = vadd.f32 %v1985, %v2082
      %v2095 = vadd.f32 %v1987, %v2084
      %v2096 = vld [vmem:[#allocation3 + $0xa] sm:$0xff]
      %v2097 = vld [vmem:[#allocation3 + $0x12] sm:$0xff]
      %v2098 = vld [vmem:[#allocation3 + $0x1a] sm:$0xff]
      %v2099 = vld [vmem:[#allocation3 + $0x22] sm:$0xff]
      %v2100 = vld [vmem:[#allocation3 + $0x2a] sm:$0xff]
      %v2101 = vld [vmem:[#allocation3 + $0x32] sm:$0xff]
      %v2102 = vld [vmem:[#allocation3 + $0x3a] sm:$0xff]
      %v2103 = vld [vmem:[#allocation3 + $0x42] sm:$0xff]
      %v2104 = vld [vmem:[#allocation3 + $0x4a] sm:$0xff]
      %v2105 = vld [vmem:[#allocation3 + $0x52] sm:$0x3f]
      %v2106 = vpack.c.bf16 %v2097, %v2096
      %v2107 = vpack.c.bf16 %v2099, %v2098
      %v2108 = vpack.c.bf16 %v2101, %v2100
      %v2109 = vpack.c.bf16 %v2103, %v2102
      %v2110 = vpack.c.bf16 %v2105, %v2104
      %s2111 = scalar_lea.vmem %s13, 96
      %v2112 = vld [vmem:[%s2111] sm:$0xf]
      %v2113 = vld [vmem:[%s2111 + $0x4] sm:$0xf]
      %v2114 = vld [vmem:[%s2111 + $0x8] sm:$0xf]
      %v2115 = vld [vmem:[%s2111 + $0xc] sm:$0xf]
      %v2116 = vld [vmem:[%s2111 + $0x10] sm:$0xf]
      %v2117 = vld [vmem:[%s2111 + $0x14] sm:$0xf]
      %v2118 = vld [vmem:[%s2111 + $0x18] sm:$0xf]
      %v2119 = vld [vmem:[%s2111 + $0x1c] sm:$0xf]
      %v2128 = vunpack.c.l.b16 %v2112
      %v2129 = vunpack.c.l.b16 %v2113
      %v2130 = vunpack.c.l.b16 %v2114
      %v2131 = vunpack.c.l.b16 %v2115
      %v2132 = vunpack.c.l.b16 %v2116
      %v2133 = vunpack.c.l.b16 %v2117
      %v2134 = vunpack.c.l.b16 %v2118
      %v2135 = vunpack.c.l.b16 %v2119
      %v2136 = vpack.c.b16 %v2129, %v2128
      %v2137 = vpack.c.b16 %v2131, %v2130
      %v2138 = vpack.c.b16 %v2133, %v2132
      %v2139 = vpack.c.b16 %v2135, %v2134
      %v2145 = vsel %vm770, %v2106, 0
      %v2148 = vsel %vm770, %v2107, 0
      %v2151 = vsel %vm770, %v2108, 0
      %v2154 = vsel %vm770, %v2109, 0
      %v2157 = vsel %vm770, %v2110, 0
      %2159 = vmatpush.bf16.msra.mxu0 0
      %2160 = vmatpush.bf16.msra.mxu0 0
      %2161 = vmatpush.bf16.msra.mxu0 0
      %2162 = vmatpush.bf16.msra.mxu0 0
      %2163 = vmatpush.bf16.msra.mxu0 %v2139
      %2164 = vmatpush.bf16.msra.mxu0 %v2138
      %2165 = vmatpush.bf16.msra.mxu0 %v2137
      %2166 = vmatpush.bf16.msra.mxu0 %v2136
      %2167 = vmatmul.bf16.gmra.mxu0 %v2145
      %v2168 = vpop.f32.mrf.mxu0
      %v2169 = vadd.f32 0.0, %v2168
      %v2170 = vpop.f32.mrf.mxu0
      %v2171 = vadd.f32 0.0, %v2170
      %2172 = vmatmul.bf16.gmra.mxu0 %v2148
      %v2173 = vpop.f32.mrf.mxu0
      %v2174 = vadd.f32 0.0, %v2173
      %v2175 = vpop.f32.mrf.mxu0
      %v2176 = vadd.f32 0.0, %v2175
      %2177 = vmatmul.bf16.gmra.mxu0 %v2151
      %v2178 = vpop.f32.mrf.mxu0
      %v2179 = vadd.f32 0.0, %v2178
      %v2180 = vpop.f32.mrf.mxu0
      %v2181 = vadd.f32 0.0, %v2180
      %2182 = vmatmul.bf16.gmra.mxu0 %v2154
      %v2183 = vpop.f32.mrf.mxu0
      %v2184 = vadd.f32 0.0, %v2183
      %v2185 = vpop.f32.mrf.mxu0
      %v2186 = vadd.f32 0.0, %v2185
      %2187 = vmatmul.bf16.gmra.mxu0 %v2157
      %v2188 = vpop.f32.mrf.mxu0
      %v2189 = vadd.f32 0.0, %v2188
      %v2190 = vpop.f32.mrf.mxu0
      %v2191 = vadd.f32 0.0, %v2190
      %2192 = vdwg.mxu0
      %v2193 = vadd.f32 %v2086, %v2169
      %v2194 = vadd.f32 %v2087, %v2171
      %v2195 = vadd.f32 %v2088, %v2174
      %v2196 = vadd.f32 %v2089, %v2176
      %v2197 = vadd.f32 %v2090, %v2179
      %v2198 = vadd.f32 %v2091, %v2181
      %v2199 = vadd.f32 %v2092, %v2184
      %v2200 = vadd.f32 %v2093, %v2186
      %v2201 = vadd.f32 %v2094, %v2189
      %v2202 = vadd.f32 %v2095, %v2191
      %v2203 = vld [vmem:[#allocation3 + $0xb] sm:$0xff]
      %v2204 = vld [vmem:[#allocation3 + $0x13] sm:$0xff]
      %v2205 = vld [vmem:[#allocation3 + $0x1b] sm:$0xff]
      %v2206 = vld [vmem:[#allocation3 + $0x23] sm:$0xff]
      %v2207 = vld [vmem:[#allocation3 + $0x2b] sm:$0xff]
      %v2208 = vld [vmem:[#allocation3 + $0x33] sm:$0xff]
      %v2209 = vld [vmem:[#allocation3 + $0x3b] sm:$0xff]
      %v2210 = vld [vmem:[#allocation3 + $0x43] sm:$0xff]
      %v2211 = vld [vmem:[#allocation3 + $0x4b] sm:$0xff]
      %v2212 = vld [vmem:[#allocation3 + $0x53] sm:$0x3f]
      %v2213 = vpack.c.bf16 %v2204, %v2203
      %v2214 = vpack.c.bf16 %v2206, %v2205
      %v2215 = vpack.c.bf16 %v2208, %v2207
      %v2216 = vpack.c.bf16 %v2210, %v2209
      %v2217 = vpack.c.bf16 %v2212, %v2211
      %s2218 = scalar_lea.vmem %s13, 128
      %v2219 = vld [vmem:[%s2218] sm:$0xf]
      %v2220 = vld [vmem:[%s2218 + $0x4] sm:$0xf]
      %v2221 = vld [vmem:[%s2218 + $0x8] sm:$0xf]
      %v2222 = vld [vmem:[%s2218 + $0xc] sm:$0xf]
      %v2223 = vld [vmem:[%s2218 + $0x10] sm:$0xf]
      %v2224 = vld [vmem:[%s2218 + $0x14] sm:$0xf]
      %v2225 = vld [vmem:[%s2218 + $0x18] sm:$0xf]
      %v2226 = vld [vmem:[%s2218 + $0x1c] sm:$0xf]
      %v2235 = vunpack.c.l.b16 %v2219
      %v2236 = vunpack.c.l.b16 %v2220
      %v2237 = vunpack.c.l.b16 %v2221
      %v2238 = vunpack.c.l.b16 %v2222
      %v2239 = vunpack.c.l.b16 %v2223
      %v2240 = vunpack.c.l.b16 %v2224
      %v2241 = vunpack.c.l.b16 %v2225
      %v2242 = vunpack.c.l.b16 %v2226
      %v2243 = vpack.c.b16 %v2236, %v2235
      %v2244 = vpack.c.b16 %v2238, %v2237
      %v2245 = vpack.c.b16 %v2240, %v2239
      %v2246 = vpack.c.b16 %v2242, %v2241
      %v2252 = vsel %vm770, %v2213, 0
      %v2255 = vsel %vm770, %v2214, 0
      %v2258 = vsel %vm770, %v2215, 0
      %v2261 = vsel %vm770, %v2216, 0
      %v2264 = vsel %vm770, %v2217, 0
      %2266 = vmatpush.bf16.msra.mxu0 0
      %2267 = vmatpush.bf16.msra.mxu0 0
      %2268 = vmatpush.bf16.msra.mxu0 0
      %2269 = vmatpush.bf16.msra.mxu0 0
      %2270 = vmatpush.bf16.msra.mxu0 %v2246
      %2271 = vmatpush.bf16.msra.mxu0 %v2245
      %2272 = vmatpush.bf16.msra.mxu0 %v2244
      %2273 = vmatpush.bf16.msra.mxu0 %v2243
      %2274 = vmatmul.bf16.gmra.mxu0 %v2252
      %v2275 = vpop.f32.mrf.mxu0
      %v2276 = vadd.f32 0.0, %v2275
      %v2277 = vpop.f32.mrf.mxu0
      %v2278 = vadd.f32 0.0, %v2277
      %2279 = vmatmul.bf16.gmra.mxu0 %v2255
      %v2280 = vpop.f32.mrf.mxu0
      %v2281 = vadd.f32 0.0, %v2280
      %v2282 = vpop.f32.mrf.mxu0
      %v2283 = vadd.f32 0.0, %v2282
      %2284 = vmatmul.bf16.gmra.mxu0 %v2258
      %v2285 = vpop.f32.mrf.mxu0
      %v2286 = vadd.f32 0.0, %v2285
      %v2287 = vpop.f32.mrf.mxu0
      %v2288 = vadd.f32 0.0, %v2287
      %2289 = vmatmul.bf16.gmra.mxu0 %v2261
      %v2290 = vpop.f32.mrf.mxu0
      %v2291 = vadd.f32 0.0, %v2290
      %v2292 = vpop.f32.mrf.mxu0
      %v2293 = vadd.f32 0.0, %v2292
      %2294 = vmatmul.bf16.gmra.mxu0 %v2264
      %v2295 = vpop.f32.mrf.mxu0
      %v2296 = vadd.f32 0.0, %v2295
      %v2297 = vpop.f32.mrf.mxu0
      %v2298 = vadd.f32 0.0, %v2297
      %2299 = vdwg.mxu0
      %v2300 = vadd.f32 %v2193, %v2276
      %v2301 = vadd.f32 %v2194, %v2278
      %v2302 = vadd.f32 %v2195, %v2281
      %v2303 = vadd.f32 %v2196, %v2283
      %v2304 = vadd.f32 %v2197, %v2286
      %v2305 = vadd.f32 %v2198, %v2288
      %v2306 = vadd.f32 %v2199, %v2291
      %v2307 = vadd.f32 %v2200, %v2293
      %v2308 = vadd.f32 %v2201, %v2296
      %v2309 = vadd.f32 %v2202, %v2298
      %v2310 = vld [vmem:[#allocation3 + $0xc] sm:$0xff]
      %v2311 = vld [vmem:[#allocation3 + $0x14] sm:$0xff]
      %v2312 = vld [vmem:[#allocation3 + $0x1c] sm:$0xff]
      %v2313 = vld [vmem:[#allocation3 + $0x24] sm:$0xff]
      %v2314 = vld [vmem:[#allocation3 + $0x2c] sm:$0xff]
      %v2315 = vld [vmem:[#allocation3 + $0x34] sm:$0xff]
      %v2316 = vld [vmem:[#allocation3 + $0x3c] sm:$0xff]
      %v2317 = vld [vmem:[#allocation3 + $0x44] sm:$0xff]
      %v2318 = vld [vmem:[#allocation3 + $0x4c] sm:$0xff]
      %v2319 = vld [vmem:[#allocation3 + $0x54] sm:$0x3f]
      %v2320 = vpack.c.bf16 %v2311, %v2310
      %v2321 = vpack.c.bf16 %v2313, %v2312
      %v2322 = vpack.c.bf16 %v2315, %v2314
      %v2323 = vpack.c.bf16 %v2317, %v2316
      %v2324 = vpack.c.bf16 %v2319, %v2318
      %s2325 = scalar_lea.vmem %s13, 160
      %v2326 = vld [vmem:[%s2325] sm:$0xf]
      %v2327 = vld [vmem:[%s2325 + $0x4] sm:$0xf]
      %v2328 = vld [vmem:[%s2325 + $0x8] sm:$0xf]
      %v2329 = vld [vmem:[%s2325 + $0xc] sm:$0xf]
      %v2330 = vld [vmem:[%s2325 + $0x10] sm:$0xf]
      %v2331 = vld [vmem:[%s2325 + $0x14] sm:$0xf]
      %v2332 = vld [vmem:[%s2325 + $0x18] sm:$0xf]
      %v2333 = vld [vmem:[%s2325 + $0x1c] sm:$0xf]
      %v2342 = vunpack.c.l.b16 %v2326
      %v2343 = vunpack.c.l.b16 %v2327
      %v2344 = vunpack.c.l.b16 %v2328
      %v2345 = vunpack.c.l.b16 %v2329
      %v2346 = vunpack.c.l.b16 %v2330
      %v2347 = vunpack.c.l.b16 %v2331
      %v2348 = vunpack.c.l.b16 %v2332
      %v2349 = vunpack.c.l.b16 %v2333
      %v2350 = vpack.c.b16 %v2343, %v2342
      %v2351 = vpack.c.b16 %v2345, %v2344
      %v2352 = vpack.c.b16 %v2347, %v2346
      %v2353 = vpack.c.b16 %v2349, %v2348
      %v2359 = vsel %vm770, %v2320, 0
      %v2362 = vsel %vm770, %v2321, 0
      %v2365 = vsel %vm770, %v2322, 0
      %v2368 = vsel %vm770, %v2323, 0
      %v2371 = vsel %vm770, %v2324, 0
      %2373 = vmatpush.bf16.msra.mxu0 0
      %2374 = vmatpush.bf16.msra.mxu0 0
      %2375 = vmatpush.bf16.msra.mxu0 0
      %2376 = vmatpush.bf16.msra.mxu0 0
      %2377 = vmatpush.bf16.msra.mxu0 %v2353
      %2378 = vmatpush.bf16.msra.mxu0 %v2352
      %2379 = vmatpush.bf16.msra.mxu0 %v2351
      %2380 = vmatpush.bf16.msra.mxu0 %v2350
      %2381 = vmatmul.bf16.gmra.mxu0 %v2359
      %v2382 = vpop.f32.mrf.mxu0
      %v2383 = vadd.f32 0.0, %v2382
      %v2384 = vpop.f32.mrf.mxu0
      %v2385 = vadd.f32 0.0, %v2384
      %2386 = vmatmul.bf16.gmra.mxu0 %v2362
      %v2387 = vpop.f32.mrf.mxu0
      %v2388 = vadd.f32 0.0, %v2387
      %v2389 = vpop.f32.mrf.mxu0
      %v2390 = vadd.f32 0.0, %v2389
      %2391 = vmatmul.bf16.gmra.mxu0 %v2365
      %v2392 = vpop.f32.mrf.mxu0
      %v2393 = vadd.f32 0.0, %v2392
      %v2394 = vpop.f32.mrf.mxu0
      %v2395 = vadd.f32 0.0, %v2394
      %2396 = vmatmul.bf16.gmra.mxu0 %v2368
      %v2397 = vpop.f32.mrf.mxu0
      %v2398 = vadd.f32 0.0, %v2397
      %v2399 = vpop.f32.mrf.mxu0
      %v2400 = vadd.f32 0.0, %v2399
      %2401 = vmatmul.bf16.gmra.mxu0 %v2371
      %v2402 = vpop.f32.mrf.mxu0
      %v2403 = vadd.f32 0.0, %v2402
      %v2404 = vpop.f32.mrf.mxu0
      %v2405 = vadd.f32 0.0, %v2404
      %2406 = vdwg.mxu0
      %v2407 = vadd.f32 %v2300, %v2383
      %v2408 = vadd.f32 %v2301, %v2385
      %v2409 = vadd.f32 %v2302, %v2388
      %v2410 = vadd.f32 %v2303, %v2390
      %v2411 = vadd.f32 %v2304, %v2393
      %v2412 = vadd.f32 %v2305, %v2395
      %v2413 = vadd.f32 %v2306, %v2398
      %v2414 = vadd.f32 %v2307, %v2400
      %v2415 = vadd.f32 %v2308, %v2403
      %v2416 = vadd.f32 %v2309, %v2405
      %v2417 = vld [vmem:[#allocation3 + $0x14] sm:$0xff]
      %v2418 = vld [vmem:[#allocation3 + $0x1c] sm:$0xff]
      %v2419 = vld [vmem:[#allocation3 + $0x24] sm:$0xff]
      %v2420 = vld [vmem:[#allocation3 + $0x2c] sm:$0xff]
      %v2421 = vld [vmem:[#allocation3 + $0x34] sm:$0xff]
      %v2422 = vld [vmem:[#allocation3 + $0x3c] sm:$0xff]
      %v2423 = vld [vmem:[#allocation3 + $0x44] sm:$0xff]
      %v2424 = vld [vmem:[#allocation3 + $0x4c] sm:$0xff]
      %v2425 = vld [vmem:[#allocation3 + $0x54] sm:$0xff]
      %v2426 = vld [vmem:[#allocation3 + $0x5c] sm:$0x3f]
      %v2427 = vpack.c.bf16 %v2418, %v2417
      %v2428 = vpack.c.bf16 %v2420, %v2419
      %v2429 = vpack.c.bf16 %v2422, %v2421
      %v2430 = vpack.c.bf16 %v2424, %v2423
      %v2431 = vpack.c.bf16 %v2426, %v2425
      %s2432 = scalar_lea.vmem %s13, 192
      %v2433 = vld [vmem:[%s2432] sm:$0xf]
      %v2434 = vld [vmem:[%s2432 + $0x4] sm:$0xf]
      %v2435 = vld [vmem:[%s2432 + $0x8] sm:$0xf]
      %v2436 = vld [vmem:[%s2432 + $0xc] sm:$0xf]
      %v2437 = vld [vmem:[%s2432 + $0x10] sm:$0xf]
      %v2438 = vld [vmem:[%s2432 + $0x14] sm:$0xf]
      %v2439 = vld [vmem:[%s2432 + $0x18] sm:$0xf]
      %v2440 = vld [vmem:[%s2432 + $0x1c] sm:$0xf]
      %v2449 = vunpack.c.l.b16 %v2433
      %v2450 = vunpack.c.l.b16 %v2434
      %v2451 = vunpack.c.l.b16 %v2435
      %v2452 = vunpack.c.l.b16 %v2436
      %v2453 = vunpack.c.l.b16 %v2437
      %v2454 = vunpack.c.l.b16 %v2438
      %v2455 = vunpack.c.l.b16 %v2439
      %v2456 = vunpack.c.l.b16 %v2440
      %v2457 = vpack.c.b16 %v2450, %v2449
      %v2458 = vpack.c.b16 %v2452, %v2451
      %v2459 = vpack.c.b16 %v2454, %v2453
      %v2460 = vpack.c.b16 %v2456, %v2455
      %v2466 = vsel %vm770, %v2427, 0
      %v2469 = vsel %vm770, %v2428, 0
      %v2472 = vsel %vm770, %v2429, 0
      %v2475 = vsel %vm770, %v2430, 0
      %v2478 = vsel %vm770, %v2431, 0
      %2480 = vmatpush.bf16.msra.mxu0 0
      %2481 = vmatpush.bf16.msra.mxu0 0
      %2482 = vmatpush.bf16.msra.mxu0 0
      %2483 = vmatpush.bf16.msra.mxu0 0
      %2484 = vmatpush.bf16.msra.mxu0 %v2460
      %2485 = vmatpush.bf16.msra.mxu0 %v2459
      %2486 = vmatpush.bf16.msra.mxu0 %v2458
      %2487 = vmatpush.bf16.msra.mxu0 %v2457
      %2488 = vmatmul.bf16.gmra.mxu0 %v2466
      %v2489 = vpop.f32.mrf.mxu0
      %v2490 = vadd.f32 0.0, %v2489
      %v2491 = vpop.f32.mrf.mxu0
      %v2492 = vadd.f32 0.0, %v2491
      %2493 = vmatmul.bf16.gmra.mxu0 %v2469
      %v2494 = vpop.f32.mrf.mxu0
      %v2495 = vadd.f32 0.0, %v2494
      %v2496 = vpop.f32.mrf.mxu0
      %v2497 = vadd.f32 0.0, %v2496
      %2498 = vmatmul.bf16.gmra.mxu0 %v2472
      %v2499 = vpop.f32.mrf.mxu0
      %v2500 = vadd.f32 0.0, %v2499
      %v2501 = vpop.f32.mrf.mxu0
      %v2502 = vadd.f32 0.0, %v2501
      %2503 = vmatmul.bf16.gmra.mxu0 %v2475
      %v2504 = vpop.f32.mrf.mxu0
      %v2505 = vadd.f32 0.0, %v2504
      %v2506 = vpop.f32.mrf.mxu0
      %v2507 = vadd.f32 0.0, %v2506
      %2508 = vmatmul.bf16.gmra.mxu0 %v2478
      %v2509 = vpop.f32.mrf.mxu0
      %v2510 = vadd.f32 0.0, %v2509
      %v2511 = vpop.f32.mrf.mxu0
      %v2512 = vadd.f32 0.0, %v2511
      %2513 = vdwg.mxu0
      %v2514 = vadd.f32 %v2407, %v2490
      %v2515 = vadd.f32 %v2408, %v2492
      %v2516 = vadd.f32 %v2409, %v2495
      %v2517 = vadd.f32 %v2410, %v2497
      %v2518 = vadd.f32 %v2411, %v2500
      %v2519 = vadd.f32 %v2412, %v2502
      %v2520 = vadd.f32 %v2413, %v2505
      %v2521 = vadd.f32 %v2414, %v2507
      %v2522 = vadd.f32 %v2415, %v2510
      %v2523 = vadd.f32 %v2416, %v2512
      %v2524 = vld [vmem:[#allocation3 + $0x15] sm:$0xff]
      %v2525 = vld [vmem:[#allocation3 + $0x1d] sm:$0xff]
      %v2526 = vld [vmem:[#allocation3 + $0x25] sm:$0xff]
      %v2527 = vld [vmem:[#allocation3 + $0x2d] sm:$0xff]
      %v2528 = vld [vmem:[#allocation3 + $0x35] sm:$0xff]
      %v2529 = vld [vmem:[#allocation3 + $0x3d] sm:$0xff]
      %v2530 = vld [vmem:[#allocation3 + $0x45] sm:$0xff]
      %v2531 = vld [vmem:[#allocation3 + $0x4d] sm:$0xff]
      %v2532 = vld [vmem:[#allocation3 + $0x55] sm:$0xff]
      %v2533 = vld [vmem:[#allocation3 + $0x5d] sm:$0x3f]
      %v2534 = vpack.c.bf16 %v2525, %v2524
      %v2535 = vpack.c.bf16 %v2527, %v2526
      %v2536 = vpack.c.bf16 %v2529, %v2528
      %v2537 = vpack.c.bf16 %v2531, %v2530
      %v2538 = vpack.c.bf16 %v2533, %v2532
      %s2539 = scalar_lea.vmem %s13, 224
      %v2540 = vld [vmem:[%s2539] sm:$0xf]
      %v2541 = vld [vmem:[%s2539 + $0x4] sm:$0xf]
      %v2542 = vld [vmem:[%s2539 + $0x8] sm:$0xf]
      %v2543 = vld [vmem:[%s2539 + $0xc] sm:$0xf]
      %v2544 = vld [vmem:[%s2539 + $0x10] sm:$0xf]
      %v2545 = vld [vmem:[%s2539 + $0x14] sm:$0xf]
      %v2546 = vld [vmem:[%s2539 + $0x18] sm:$0xf]
      %v2547 = vld [vmem:[%s2539 + $0x1c] sm:$0xf]
      %v2556 = vunpack.c.l.b16 %v2540
      %v2557 = vunpack.c.l.b16 %v2541
      %v2558 = vunpack.c.l.b16 %v2542
      %v2559 = vunpack.c.l.b16 %v2543
      %v2560 = vunpack.c.l.b16 %v2544
      %v2561 = vunpack.c.l.b16 %v2545
      %v2562 = vunpack.c.l.b16 %v2546
      %v2563 = vunpack.c.l.b16 %v2547
      %v2564 = vpack.c.b16 %v2557, %v2556
      %v2565 = vpack.c.b16 %v2559, %v2558
      %v2566 = vpack.c.b16 %v2561, %v2560
      %v2567 = vpack.c.b16 %v2563, %v2562
      %v2573 = vsel %vm770, %v2534, 0
      %v2576 = vsel %vm770, %v2535, 0
      %v2579 = vsel %vm770, %v2536, 0
      %v2582 = vsel %vm770, %v2537, 0
      %v2585 = vsel %vm770, %v2538, 0
      %2587 = vmatpush.bf16.msra.mxu0 0
      %2588 = vmatpush.bf16.msra.mxu0 0
      %2589 = vmatpush.bf16.msra.mxu0 0
      %2590 = vmatpush.bf16.msra.mxu0 0
      %2591 = vmatpush.bf16.msra.mxu0 %v2567
      %2592 = vmatpush.bf16.msra.mxu0 %v2566
      %2593 = vmatpush.bf16.msra.mxu0 %v2565
      %2594 = vmatpush.bf16.msra.mxu0 %v2564
      %2595 = vmatmul.bf16.gmra.mxu0 %v2573
      %v2596 = vpop.f32.mrf.mxu0
      %v2597 = vadd.f32 0.0, %v2596
      %v2598 = vpop.f32.mrf.mxu0
      %v2599 = vadd.f32 0.0, %v2598
      %2600 = vmatmul.bf16.gmra.mxu0 %v2576
      %v2601 = vpop.f32.mrf.mxu0
      %v2602 = vadd.f32 0.0, %v2601
      %v2603 = vpop.f32.mrf.mxu0
      %v2604 = vadd.f32 0.0, %v2603
      %2605 = vmatmul.bf16.gmra.mxu0 %v2579
      %v2606 = vpop.f32.mrf.mxu0
      %v2607 = vadd.f32 0.0, %v2606
      %v2608 = vpop.f32.mrf.mxu0
      %v2609 = vadd.f32 0.0, %v2608
      %2610 = vmatmul.bf16.gmra.mxu0 %v2582
      %v2611 = vpop.f32.mrf.mxu0
      %v2612 = vadd.f32 0.0, %v2611
      %v2613 = vpop.f32.mrf.mxu0
      %v2614 = vadd.f32 0.0, %v2613
      %2615 = vmatmul.bf16.gmra.mxu0 %v2585
      %v2616 = vpop.f32.mrf.mxu0
      %v2617 = vadd.f32 0.0, %v2616
      %v2618 = vpop.f32.mrf.mxu0
      %v2619 = vadd.f32 0.0, %v2618
      %2620 = vdwg.mxu0
      %v2621 = vadd.f32 %v2514, %v2597
      %v2622 = vadd.f32 %v2515, %v2599
      %v2623 = vadd.f32 %v2516, %v2602
      %v2624 = vadd.f32 %v2517, %v2604
      %v2625 = vadd.f32 %v2518, %v2607
      %v2626 = vadd.f32 %v2519, %v2609
      %v2627 = vadd.f32 %v2520, %v2612
      %v2628 = vadd.f32 %v2521, %v2614
      %v2629 = vadd.f32 %v2522, %v2617
      %v2630 = vadd.f32 %v2523, %v2619
      %v2631 = vld [vmem:[#allocation3 + $0x16] sm:$0xff]
      %v2632 = vld [vmem:[#allocation3 + $0x1e] sm:$0xff]
      %v2633 = vld [vmem:[#allocation3 + $0x26] sm:$0xff]
      %v2634 = vld [vmem:[#allocation3 + $0x2e] sm:$0xff]
      %v2635 = vld [vmem:[#allocation3 + $0x36] sm:$0xff]
      %v2636 = vld [vmem:[#allocation3 + $0x3e] sm:$0xff]
      %v2637 = vld [vmem:[#allocation3 + $0x46] sm:$0xff]
      %v2638 = vld [vmem:[#allocation3 + $0x4e] sm:$0xff]
      %v2639 = vld [vmem:[#allocation3 + $0x56] sm:$0xff]
      %v2640 = vld [vmem:[#allocation3 + $0x5e] sm:$0x3f]
      %v2641 = vpack.c.bf16 %v2632, %v2631
      %v2642 = vpack.c.bf16 %v2634, %v2633
      %v2643 = vpack.c.bf16 %v2636, %v2635
      %v2644 = vpack.c.bf16 %v2638, %v2637
      %v2645 = vpack.c.bf16 %v2640, %v2639
      %s2646 = scalar_lea.vmem %s13, 256
      %v2647 = vld [vmem:[%s2646] sm:$0xf]
      %v2648 = vld [vmem:[%s2646 + $0x4] sm:$0xf]
      %v2649 = vld [vmem:[%s2646 + $0x8] sm:$0xf]
      %v2650 = vld [vmem:[%s2646 + $0xc] sm:$0xf]
      %v2651 = vld [vmem:[%s2646 + $0x10] sm:$0xf]
      %v2652 = vld [vmem:[%s2646 + $0x14] sm:$0xf]
      %v2653 = vld [vmem:[%s2646 + $0x18] sm:$0xf]
      %v2654 = vld [vmem:[%s2646 + $0x1c] sm:$0xf]
      %v2663 = vunpack.c.l.b16 %v2647
      %v2664 = vunpack.c.l.b16 %v2648
      %v2665 = vunpack.c.l.b16 %v2649
      %v2666 = vunpack.c.l.b16 %v2650
      %v2667 = vunpack.c.l.b16 %v2651
      %v2668 = vunpack.c.l.b16 %v2652
      %v2669 = vunpack.c.l.b16 %v2653
      %v2670 = vunpack.c.l.b16 %v2654
      %v2671 = vpack.c.b16 %v2664, %v2663
      %v2672 = vpack.c.b16 %v2666, %v2665
      %v2673 = vpack.c.b16 %v2668, %v2667
      %v2674 = vpack.c.b16 %v2670, %v2669
      %v2680 = vsel %vm770, %v2641, 0
      %v2683 = vsel %vm770, %v2642, 0
      %v2686 = vsel %vm770, %v2643, 0
      %v2689 = vsel %vm770, %v2644, 0
      %v2692 = vsel %vm770, %v2645, 0
      %2694 = vmatpush.bf16.msra.mxu0 0
      %2695 = vmatpush.bf16.msra.mxu0 0
      %2696 = vmatpush.bf16.msra.mxu0 0
      %2697 = vmatpush.bf16.msra.mxu0 0
      %2698 = vmatpush.bf16.msra.mxu0 %v2674
      %2699 = vmatpush.bf16.msra.mxu0 %v2673
      %2700 = vmatpush.bf16.msra.mxu0 %v2672
      %2701 = vmatpush.bf16.msra.mxu0 %v2671
      %2702 = vmatmul.bf16.gmra.mxu0 %v2680
      %v2703 = vpop.f32.mrf.mxu0
      %v2704 = vadd.f32 0.0, %v2703
      %v2705 = vpop.f32.mrf.mxu0
      %v2706 = vadd.f32 0.0, %v2705
      %2707 = vmatmul.bf16.gmra.mxu0 %v2683
      %v2708 = vpop.f32.mrf.mxu0
      %v2709 = vadd.f32 0.0, %v2708
      %v2710 = vpop.f32.mrf.mxu0
      %v2711 = vadd.f32 0.0, %v2710
      %2712 = vmatmul.bf16.gmra.mxu0 %v2686
      %v2713 = vpop.f32.mrf.mxu0
      %v2714 = vadd.f32 0.0, %v2713
      %v2715 = vpop.f32.mrf.mxu0
      %v2716 = vadd.f32 0.0, %v2715
      %2717 = vmatmul.bf16.gmra.mxu0 %v2689
      %v2718 = vpop.f32.mrf.mxu0
      %v2719 = vadd.f32 0.0, %v2718
      %v2720 = vpop.f32.mrf.mxu0
      %v2721 = vadd.f32 0.0, %v2720
      %2722 = vmatmul.bf16.gmra.mxu0 %v2692
      %v2723 = vpop.f32.mrf.mxu0
      %v2724 = vadd.f32 0.0, %v2723
      %v2725 = vpop.f32.mrf.mxu0
      %v2726 = vadd.f32 0.0, %v2725
      %2727 = vdwg.mxu0
      %v2728 = vadd.f32 %v2621, %v2704
      %v2729 = vadd.f32 %v2622, %v2706
      %v2730 = vadd.f32 %v2623, %v2709
      %v2731 = vadd.f32 %v2624, %v2711
      %v2732 = vadd.f32 %v2625, %v2714
      %v2733 = vadd.f32 %v2626, %v2716
      %v2734 = vadd.f32 %v2627, %v2719
      %v2735 = vadd.f32 %v2628, %v2721
      %v2736 = vadd.f32 %v2629, %v2724
      %v2737 = vadd.f32 %v2630, %v2726
      %v2738 = vld [vmem:[%s14] sm:$0x1]
      %v2740 = vperm.slane %v2738, 0
      %v2742 = vadd.f32 %v2728, %v2740
      %v2743 = vadd.f32 %v2729, %v2740
      %v2744 = vadd.f32 %v2730, %v2740
      %v2745 = vadd.f32 %v2731, %v2740
      %v2746 = vadd.f32 %v2732, %v2740
      %v2747 = vadd.f32 %v2733, %v2740
      %v2748 = vadd.f32 %v2734, %v2740
      %v2749 = vadd.f32 %v2735, %v2740
      %v2750 = vadd.f32 %v2736, %v2740
      %v2751 = vadd.f32 %v2737, %v2740
      %2752 = vst.msk [vmem:[#allocation4] sm:$0xff] %vm770, %v2742
      %2753 = vst.msk [vmem:[#allocation4 + $0x8] sm:$0xff] %vm770, %v2743
      %2754 = vst.msk [vmem:[#allocation4 + $0x10] sm:$0xff] %vm770, %v2744
      %2755 = vst.msk [vmem:[#allocation4 + $0x18] sm:$0xff] %vm770, %v2745
      %2756 = vst.msk [vmem:[#allocation4 + $0x20] sm:$0xff] %vm770, %v2746
      %2757 = vst.msk [vmem:[#allocation4 + $0x28] sm:$0xff] %vm770, %v2747
      %2758 = vst.msk [vmem:[#allocation4 + $0x30] sm:$0xff] %vm770, %v2748
      %2759 = vst.msk [vmem:[#allocation4 + $0x38] sm:$0xff] %vm770, %v2749
      %2760 = vst.msk [vmem:[#allocation4 + $0x40] sm:$0xff] %vm770, %v2750
      %vm2761 = vcmask 521216
      %2762 = vst.msk [vmem:[#allocation4 + $0x48] sm:$0x3f] %vm2761, %v2751
      %v2763 = vld [vmem:[#allocation4] sm:$0xff]
      %v2764 = vld [vmem:[#allocation4 + $0x8] sm:$0xff]
      %v2765 = vld [vmem:[#allocation4 + $0x10] sm:$0xff]
      %v2766 = vld [vmem:[#allocation4 + $0x18] sm:$0xff]
      %v2767 = vld [vmem:[#allocation4 + $0x20] sm:$0xff]
      %v2768 = vld [vmem:[#allocation4 + $0x28] sm:$0xff]
      %v2769 = vld [vmem:[#allocation4 + $0x30] sm:$0xff]
      %v2770 = vld [vmem:[#allocation4 + $0x38] sm:$0xff]
      %v2771 = vld [vmem:[#allocation4 + $0x40] sm:$0xff]
      %v2772 = vld [vmem:[#allocation4 + $0x48] sm:$0x3f]
      %v2773 = vpack.c.bf16 %v2764, %v2763
      %v2774 = vpack.c.bf16 %v2766, %v2765
      %v2775 = vpack.c.bf16 %v2768, %v2767
      %v2776 = vpack.c.bf16 %v2770, %v2769
      %v2777 = vpack.c.bf16 %v2772, %v2771
      %v2778 = vld [vmem:[%s4] sm:$0xf]
      %v2779 = vld [vmem:[%s4 + $0x4] sm:$0xf]
      %v2780 = vld [vmem:[%s4 + $0x8] sm:$0x7]
      %v2784 = vunpack.c.l.b16 %v2778
      %v2785 = vunpack.c.l.b16 %v2779
      %v2786 = vunpack.c.l.b16 %v2780
      %v2787 = vpack.c.b16 %v2785, %v2784
      %v2788 = vpack.c.b16 %v2786, %v2786
      %v2790 = vsel %vm1713, %v2787, 0
      %v2793 = vsel %vm1713, %v2788, 0
      %v2796 = vsel %vm1735, %v2777, 0
      %2798 = vmatpush.bf16.msra.mxu0 0
      %2799 = vmatpush.bf16.msra.mxu0 0
      %2800 = vmatpush.bf16.msra.mxu0 0
      %2801 = vmatpush.bf16.msra.mxu0 %v2796
      %2802 = vmatpush.bf16.msra.mxu0 %v2776
      %2803 = vmatpush.bf16.msra.mxu0 %v2775
      %2804 = vmatpush.bf16.msra.mxu0 %v2774
      %2805 = vmatpush.bf16.msra.mxu0 %v2773
      %2806 = vmatmul.bf16.gmra.mxu0 %v2790
      %v2807 = vpop.f32.mrf.mxu0
      %v2808 = vadd.f32 0.0, %v2807
      %v2809 = vpop.f32.mrf.mxu0
      %v2810 = vadd.f32 0.0, %v2809
      %2811 = vmatmul.bf16.gmra.mxu0 %v2793
      %v2812 = vpop.f32.mrf.mxu0
      %v2813 = vadd.f32 0.0, %v2812
      %v2814 = vpop.f32.mrf.mxu0
      %2815 = vdwg.mxu0
      %s2816 = scalar_lea.vmem %s4, 12
      %v2817 = vld [vmem:[%s2816] sm:$0xf]
      %v2818 = vld [vmem:[%s2816 + $0x4] sm:$0xf]
      %v2819 = vld [vmem:[%s2816 + $0x8] sm:$0x7]
      %v2823 = vunpack.c.l.b16 %v2817
      %v2824 = vunpack.c.l.b16 %v2818
      %v2825 = vunpack.c.l.b16 %v2819
      %v2826 = vpack.c.b16 %v2824, %v2823
      %v2827 = vpack.c.b16 %v2825, %v2825
      %v2829 = vsel %vm1713, %v2826, 0
      %v2832 = vsel %vm1713, %v2827, 0
      %2834 = vmatpush.bf16.msra.mxu0 0
      %2835 = vmatpush.bf16.msra.mxu0 0
      %2836 = vmatpush.bf16.msra.mxu0 0
      %2837 = vmatpush.bf16.msra.mxu0 %v2796
      %2838 = vmatpush.bf16.msra.mxu0 %v2776
      %2839 = vmatpush.bf16.msra.mxu0 %v2775
      %2840 = vmatpush.bf16.msra.mxu0 %v2774
      %2841 = vmatpush.bf16.msra.mxu0 %v2773
      %2842 = vmatmul.bf16.gmra.mxu0 %v2829
      %v2843 = vpop.f32.mrf.mxu0
      %v2844 = vadd.f32 0.0, %v2843
      %v2845 = vpop.f32.mrf.mxu0
      %v2846 = vadd.f32 0.0, %v2845
      %2847 = vmatmul.bf16.gmra.mxu0 %v2832
      %v2848 = vpop.f32.mrf.mxu0
      %v2849 = vadd.f32 0.0, %v2848
      %v2850 = vpop.f32.mrf.mxu0
      %2851 = vdwg.mxu0
      %v2852 = vmax.f32 %v2808, %v2844
      %v2853 = vmax.f32 %v2810, %v2846
      %v2854 = vmax.f32 %v2813, %v2849
      %s2855 = scalar_lea.vmem %s4, 24
      %v2856 = vld [vmem:[%s2855] sm:$0xf]
      %v2857 = vld [vmem:[%s2855 + $0x4] sm:$0xf]
      %v2858 = vld [vmem:[%s2855 + $0x8] sm:$0x7]
      %v2862 = vunpack.c.l.b16 %v2856
      %v2863 = vunpack.c.l.b16 %v2857
      %v2864 = vunpack.c.l.b16 %v2858
      %v2865 = vpack.c.b16 %v2863, %v2862
      %v2866 = vpack.c.b16 %v2864, %v2864
      %v2868 = vsel %vm1713, %v2865, 0
      %v2871 = vsel %vm1713, %v2866, 0
      %2873 = vmatpush.bf16.msra.mxu0 0
      %2874 = vmatpush.bf16.msra.mxu0 0
      %2875 = vmatpush.bf16.msra.mxu0 0
      %2876 = vmatpush.bf16.msra.mxu0 %v2796
      %2877 = vmatpush.bf16.msra.mxu0 %v2776
      %2878 = vmatpush.bf16.msra.mxu0 %v2775
      %2879 = vmatpush.bf16.msra.mxu0 %v2774
      %2880 = vmatpush.bf16.msra.mxu0 %v2773
      %2881 = vmatmul.bf16.gmra.mxu0 %v2868
      %v2882 = vpop.f32.mrf.mxu0
      %v2883 = vadd.f32 0.0, %v2882
      %v2884 = vpop.f32.mrf.mxu0
      %v2885 = vadd.f32 0.0, %v2884
      %2886 = vmatmul.bf16.gmra.mxu0 %v2871
      %v2887 = vpop.f32.mrf.mxu0
      %v2888 = vadd.f32 0.0, %v2887
      %v2889 = vpop.f32.mrf.mxu0
      %2890 = vdwg.mxu0
      %v2891 = vmax.f32 %v2852, %v2883
      %v2892 = vmax.f32 %v2853, %v2885
      %v2893 = vmax.f32 %v2854, %v2888
      %s2894 = scalar_lea.vmem %s4, 36
      %v2895 = vld [vmem:[%s2894] sm:$0xf]
      %v2896 = vld [vmem:[%s2894 + $0x4] sm:$0xf]
      %v2897 = vld [vmem:[%s2894 + $0x8] sm:$0x7]
      %v2901 = vunpack.c.l.b16 %v2895
      %v2902 = vunpack.c.l.b16 %v2896
      %v2903 = vunpack.c.l.b16 %v2897
      %v2904 = vpack.c.b16 %v2902, %v2901
      %v2905 = vpack.c.b16 %v2903, %v2903
      %v2907 = vsel %vm1713, %v2904, 0
      %v2910 = vsel %vm1713, %v2905, 0
      %2912 = vmatpush.bf16.msra.mxu0 0
      %2913 = vmatpush.bf16.msra.mxu0 0
      %2914 = vmatpush.bf16.msra.mxu0 0
      %2915 = vmatpush.bf16.msra.mxu0 %v2796
      %2916 = vmatpush.bf16.msra.mxu0 %v2776
      %2917 = vmatpush.bf16.msra.mxu0 %v2775
      %2918 = vmatpush.bf16.msra.mxu0 %v2774
      %2919 = vmatpush.bf16.msra.mxu0 %v2773
      %2920 = vmatmul.bf16.gmra.mxu0 %v2907
      %v2921 = vpop.f32.mrf.mxu0
      %v2922 = vadd.f32 0.0, %v2921
      %v2923 = vpop.f32.mrf.mxu0
      %v2924 = vadd.f32 0.0, %v2923
      %2925 = vmatmul.bf16.gmra.mxu0 %v2910
      %v2926 = vpop.f32.mrf.mxu0
      %v2927 = vadd.f32 0.0, %v2926
      %v2928 = vpop.f32.mrf.mxu0
      %2929 = vdwg.mxu0
      %v2930 = vmax.f32 %v2891, %v2922
      %v2931 = vmax.f32 %v2892, %v2924
      %v2932 = vmax.f32 %v2893, %v2927
      %v2933 = vpack.c.bf16 %v2931, %v2930
      %v2934 = vpack.c.bf16 %v2932, %v2932
      %v2935 = vld [vmem:[%s5] sm:$0xf]
      %v2936 = vld [vmem:[%s5 + $0x4] sm:$0xf]
      %v2937 = vld [vmem:[%s5 + $0x8] sm:$0xf]
      %v2938 = vld [vmem:[%s5 + $0xc] sm:$0xf]
      %v2939 = vld [vmem:[%s5 + $0x10] sm:$0xf]
      %v2940 = vld [vmem:[%s5 + $0x14] sm:$0xf]
      %v2941 = vld [vmem:[%s5 + $0x18] sm:$0xf]
      %v2942 = vld [vmem:[%s5 + $0x1c] sm:$0xf]
      %v2951 = vunpack.c.l.b16 %v2935
      %v2952 = vunpack.c.l.b16 %v2936
      %v2953 = vunpack.c.l.b16 %v2937
      %v2954 = vunpack.c.l.b16 %v2938
      %v2955 = vunpack.c.l.b16 %v2939
      %v2956 = vunpack.c.l.b16 %v2940
      %v2957 = vunpack.c.l.b16 %v2941
      %v2958 = vunpack.c.l.b16 %v2942
      %v2959 = vpack.c.b16 %v2952, %v2951
      %v2960 = vpack.c.b16 %v2954, %v2953
      %v2961 = vpack.c.b16 %v2956, %v2955
      %v2962 = vpack.c.b16 %v2958, %v2957
      %v2968 = vsel %vm770, %v2933, 0
      %v2971 = vsel %vm770, %v2934, 0
      %2973 = vmatpush.bf16.msra.mxu0 0
      %2974 = vmatpush.bf16.msra.mxu0 0
      %2975 = vmatpush.bf16.msra.mxu0 0
      %2976 = vmatpush.bf16.msra.mxu0 0
      %2977 = vmatpush.bf16.msra.mxu0 %v2962
      %2978 = vmatpush.bf16.msra.mxu0 %v2961
      %2979 = vmatpush.bf16.msra.mxu0 %v2960
      %2980 = vmatpush.bf16.msra.mxu0 %v2959
      %2981 = vmatmul.bf16.gmra.mxu0 %v2968
      %v2982 = vpop.f32.mrf.mxu0
      %v2983 = vadd.f32 0.0, %v2982
      %v2984 = vpop.f32.mrf.mxu0
      %v2985 = vadd.f32 0.0, %v2984
      %2986 = vmatmul.bf16.gmra.mxu0 %v2971
      %v2987 = vpop.f32.mrf.mxu0
      %v2988 = vadd.f32 0.0, %v2987
      %v2989 = vpop.f32.mrf.mxu0
      %2990 = vdwg.mxu0
      %s2991 = scalar_lea.vmem %s5, 32
      %v2992 = vld [vmem:[%s2991] sm:$0xf]
      %v2993 = vld [vmem:[%s2991 + $0x4] sm:$0xf]
      %v2994 = vld [vmem:[%s2991 + $0x8] sm:$0xf]
      %v2995 = vld [vmem:[%s2991 + $0xc] sm:$0xf]
      %v2996 = vld [vmem:[%s2991 + $0x10] sm:$0xf]
      %v2997 = vld [vmem:[%s2991 + $0x14] sm:$0xf]
      %v2998 = vld [vmem:[%s2991 + $0x18] sm:$0xf]
      %v2999 = vld [vmem:[%s2991 + $0x1c] sm:$0xf]
      %v3008 = vunpack.c.l.b16 %v2992
      %v3009 = vunpack.c.l.b16 %v2993
      %v3010 = vunpack.c.l.b16 %v2994
      %v3011 = vunpack.c.l.b16 %v2995
      %v3012 = vunpack.c.l.b16 %v2996
      %v3013 = vunpack.c.l.b16 %v2997
      %v3014 = vunpack.c.l.b16 %v2998
      %v3015 = vunpack.c.l.b16 %v2999
      %v3016 = vpack.c.b16 %v3009, %v3008
      %v3017 = vpack.c.b16 %v3011, %v3010
      %v3018 = vpack.c.b16 %v3013, %v3012
      %v3019 = vpack.c.b16 %v3015, %v3014
      %3024 = vmatpush.bf16.msra.mxu0 0
      %3025 = vmatpush.bf16.msra.mxu0 0
      %3026 = vmatpush.bf16.msra.mxu0 0
      %3027 = vmatpush.bf16.msra.mxu0 0
      %3028 = vmatpush.bf16.msra.mxu0 %v3019
      %3029 = vmatpush.bf16.msra.mxu0 %v3018
      %3030 = vmatpush.bf16.msra.mxu0 %v3017
      %3031 = vmatpush.bf16.msra.mxu0 %v3016
      %3032 = vmatmul.bf16.gmra.mxu0 %v2968
      %v3033 = vpop.f32.mrf.mxu0
      %v3034 = vadd.f32 0.0, %v3033
      %v3035 = vpop.f32.mrf.mxu0
      %v3036 = vadd.f32 0.0, %v3035
      %3037 = vmatmul.bf16.gmra.mxu0 %v2971
      %v3038 = vpop.f32.mrf.mxu0
      %v3039 = vadd.f32 0.0, %v3038
      %v3040 = vpop.f32.mrf.mxu0
      %3041 = vdwg.mxu0
      %v3042 = vmax.f32 %v2983, %v3034
      %v3043 = vmax.f32 %v2985, %v3036
      %v3044 = vmax.f32 %v2988, %v3039
      %v3045 = vld [vmem:[%s3] sm:$0xf]
      %v3046 = vld [vmem:[%s3 + $0x4] sm:$0xf]
      %v3047 = vld [vmem:[%s3 + $0x8] sm:$0xf]
      %v3048 = vld [vmem:[%s3 + $0xc] sm:$0xf]
      %v3049 = vld [vmem:[%s3 + $0x10] sm:$0x3]
      %v3050 = vpack.c.bf16 %v3043, %v3042
      %v3051 = vpack.c.bf16 %v3044, %v3044
      %v3057 = vunpack.c.l.b16 %v3045
      %v3058 = vunpack.c.l.b16 %v3046
      %v3059 = vunpack.c.l.b16 %v3047
      %v3060 = vunpack.c.l.b16 %v3048
      %v3061 = vunpack.c.l.b16 %v3049
      %v3062 = vpack.c.b16 %v3058, %v3057
      %v3063 = vpack.c.b16 %v3060, %v3059
      %v3064 = vpack.c.b16 %v3061, %v3061
      %vm3065 = vcmask 179200
      %v3067 = vsel %vm3065, %v3062, 0
      %v3070 = vsel %vm3065, %v3063, 0
      %v3073 = vsel %vm3065, %v3064, 0
      %vm3075 = vcmask 1042432
      %v3077 = vsel %vm3075, %v3051, 0
      %3079 = vmatpush.bf16.msra.mxu0 0
      %3080 = vmatpush.bf16.msra.mxu0 0
      %3081 = vmatpush.bf16.msra.mxu0 0
      %3082 = vmatpush.bf16.msra.mxu0 0
      %3083 = vmatpush.bf16.msra.mxu0 0
      %3084 = vmatpush.bf16.msra.mxu0 0
      %3085 = vmatpush.bf16.msra.mxu0 %v3077
      %3086 = vmatpush.bf16.msra.mxu0 %v3050
      %3087 = vmatmul.bf16.gmra.mxu0 %v3067
      %v3088 = vpop.f32.mrf.mxu0
      %v3089 = vadd.f32 0.0, %v3088
      %v3090 = vpop.f32.mrf.mxu0
      %v3091 = vadd.f32 0.0, %v3090
      %3092 = vmatmul.bf16.gmra.mxu0 %v3070
      %v3093 = vpop.f32.mrf.mxu0
      %v3094 = vadd.f32 0.0, %v3093
      %v3095 = vpop.f32.mrf.mxu0
      %v3096 = vadd.f32 0.0, %v3095
      %3097 = vmatmul.bf16.gmra.mxu0 %v3073
      %v3098 = vpop.f32.mrf.mxu0
      %v3099 = vadd.f32 0.0, %v3098
      %v3100 = vpop.f32.mrf.mxu0
      %3101 = vdwg.mxu0
      %3102 = vst.msk [vmem:[#allocation5] sm:$0xff] %vm835, %v3089
      %3103 = vst.msk [vmem:[#allocation5 + $0x8] sm:$0xff] %vm835, %v3091
      %3104 = vst.msk [vmem:[#allocation5 + $0x10] sm:$0xff] %vm835, %v3094
      %3105 = vst.msk [vmem:[#allocation5 + $0x18] sm:$0xff] %vm835, %v3096
      %3106 = vst.msk [vmem:[#allocation5 + $0x20] sm:$0xf] %vm848, %v3099
      %v3107 = vld [vmem:[#allocation5] sm:$0xff]
      %v3108 = vld [vmem:[#allocation5 + $0x8] sm:$0xff]
      %v3109 = vld [vmem:[#allocation5 + $0x10] sm:$0x3f]
      %v3110 = vpack.c.bf16 %v3108, %v3107
      %v3111 = vpack.c.bf16 %v3109, %v3109
      %v3112 = vld [vmem:[%s15] sm:$0xf]
      %v3113 = vld [vmem:[%s15 + $0x4] sm:$0xf]
      %v3114 = vld [vmem:[%s15 + $0x8] sm:$0xf]
      %v3115 = vld [vmem:[%s15 + $0xc] sm:$0xf]
      %v3116 = vld [vmem:[#allocation5 + $0x1] sm:$0xff]
      %v3117 = vld [vmem:[#allocation5 + $0x9] sm:$0xff]
      %v3118 = vld [vmem:[#allocation5 + $0x11] sm:$0x3f]
      %v3119 = vpack.c.bf16 %v3117, %v3116
      %v3120 = vpack.c.bf16 %v3118, %v3118
      %s3121 = scalar_lea.vmem %s15, 16
      %v3122 = vld [vmem:[%s3121] sm:$0xf]
      %v3123 = vld [vmem:[%s3121 + $0x4] sm:$0xf]
      %v3124 = vld [vmem:[%s3121 + $0x8] sm:$0xf]
      %v3125 = vld [vmem:[%s3121 + $0xc] sm:$0xf]
      %v3130 = vunpack.c.l.b16 %v3122
      %v3131 = vunpack.c.l.b16 %v3123
      %v3132 = vunpack.c.l.b16 %v3124
      %v3133 = vunpack.c.l.b16 %v3125
      %v3134 = vpack.c.b16 %v3131, %v3130
      %v3135 = vpack.c.b16 %v3133, %v3132
      %v3139 = vsel %vm835, %v3119, 0
      %v3142 = vsel %vm835, %v3120, 0
      %3144 = vmatpush.bf16.msra.mxu0 0
      %3145 = vmatpush.bf16.msra.mxu0 0
      %3146 = vmatpush.bf16.msra.mxu0 0
      %3147 = vmatpush.bf16.msra.mxu0 0
      %3148 = vmatpush.bf16.msra.mxu0 0
      %3149 = vmatpush.bf16.msra.mxu0 0
      %3150 = vmatpush.bf16.msra.mxu0 %v3135
      %3151 = vmatpush.bf16.msra.mxu0 %v3134
      %3152 = vmatmul.bf16.gmra.mxu0 %v3139
      %v3153 = vpop.f32.mrf.mxu0
      %v3154 = vadd.f32 0.0, %v3153
      %v3155 = vpop.f32.mrf.mxu0
      %v3156 = vadd.f32 0.0, %v3155
      %3157 = vmatmul.bf16.gmra.mxu0 %v3142
      %v3158 = vpop.f32.mrf.mxu0
      %v3159 = vadd.f32 0.0, %v3158
      %v3160 = vpop.f32.mrf.mxu0
      %3161 = vdwg.mxu0
      %v3166 = vunpack.c.l.b16 %v3112
      %v3167 = vunpack.c.l.b16 %v3113
      %v3168 = vunpack.c.l.b16 %v3114
      %v3169 = vunpack.c.l.b16 %v3115
      %v3170 = vpack.c.b16 %v3167, %v3166
      %v3171 = vpack.c.b16 %v3169, %v3168
      %v3175 = vsel %vm835, %v3110, 0
      %v3178 = vsel %vm835, %v3111, 0
      %3180 = vmatpush.bf16.msra.mxu0 0
      %3181 = vmatpush.bf16.msra.mxu0 0
      %3182 = vmatpush.bf16.msra.mxu0 0
      %3183 = vmatpush.bf16.msra.mxu0 0
      %3184 = vmatpush.bf16.msra.mxu0 0
      %3185 = vmatpush.bf16.msra.mxu0 0
      %3186 = vmatpush.bf16.msra.mxu0 %v3171
      %3187 = vmatpush.bf16.msra.mxu0 %v3170
      %3188 = vmatmul.bf16.gmra.mxu0 %v3175
      %v3189 = vpop.f32.mrf.mxu0
      %v3190 = vadd.f32 %v3154, %v3189
      %v3191 = vpop.f32.mrf.mxu0
      %v3192 = vadd.f32 %v3156, %v3191
      %3193 = vmatmul.bf16.gmra.mxu0 %v3178
      %v3194 = vpop.f32.mrf.mxu0
      %v3195 = vadd.f32 %v3159, %v3194
      %v3196 = vpop.f32.mrf.mxu0
      %3197 = vdwg.mxu0
      %v3198 = vld [vmem:[#allocation5 + $0x2] sm:$0xff]
      %v3199 = vld [vmem:[#allocation5 + $0xa] sm:$0xff]
      %v3200 = vld [vmem:[#allocation5 + $0x12] sm:$0x3f]
      %v3201 = vpack.c.bf16 %v3199, %v3198
      %v3202 = vpack.c.bf16 %v3200, %v3200
      %s3203 = scalar_lea.vmem %s15, 32
      %v3204 = vld [vmem:[%s3203] sm:$0xf]
      %v3205 = vld [vmem:[%s3203 + $0x4] sm:$0xf]
      %v3206 = vld [vmem:[%s3203 + $0x8] sm:$0xf]
      %v3207 = vld [vmem:[%s3203 + $0xc] sm:$0xf]
      %v3212 = vunpack.c.l.b16 %v3204
      %v3213 = vunpack.c.l.b16 %v3205
      %v3214 = vunpack.c.l.b16 %v3206
      %v3215 = vunpack.c.l.b16 %v3207
      %v3216 = vpack.c.b16 %v3213, %v3212
      %v3217 = vpack.c.b16 %v3215, %v3214
      %v3221 = vsel %vm835, %v3201, 0
      %v3224 = vsel %vm835, %v3202, 0
      %3226 = vmatpush.bf16.msra.mxu0 0
      %3227 = vmatpush.bf16.msra.mxu0 0
      %3228 = vmatpush.bf16.msra.mxu0 0
      %3229 = vmatpush.bf16.msra.mxu0 0
      %3230 = vmatpush.bf16.msra.mxu0 0
      %3231 = vmatpush.bf16.msra.mxu0 0
      %3232 = vmatpush.bf16.msra.mxu0 %v3217
      %3233 = vmatpush.bf16.msra.mxu0 %v3216
      %3234 = vmatmul.bf16.gmra.mxu0 %v3221
      %v3235 = vpop.f32.mrf.mxu0
      %v3236 = vadd.f32 0.0, %v3235
      %v3237 = vpop.f32.mrf.mxu0
      %v3238 = vadd.f32 0.0, %v3237
      %3239 = vmatmul.bf16.gmra.mxu0 %v3224
      %v3240 = vpop.f32.mrf.mxu0
      %v3241 = vadd.f32 0.0, %v3240
      %v3242 = vpop.f32.mrf.mxu0
      %3243 = vdwg.mxu0
      %v3244 = vadd.f32 %v3190, %v3236
      %v3245 = vadd.f32 %v3192, %v3238
      %v3246 = vadd.f32 %v3195, %v3241
      %v3247 = vld [vmem:[#allocation5 + $0x6] sm:$0xff]
      %v3248 = vld [vmem:[#allocation5 + $0xe] sm:$0xff]
      %v3249 = vld [vmem:[#allocation5 + $0x16] sm:$0x3f]
      %v3250 = vpack.c.bf16 %v3248, %v3247
      %v3251 = vpack.c.bf16 %v3249, %v3249
      %s3252 = scalar_lea.vmem %s15, 48
      %v3253 = vld [vmem:[%s3252] sm:$0xf]
      %v3254 = vld [vmem:[%s3252 + $0x4] sm:$0xf]
      %v3255 = vld [vmem:[%s3252 + $0x8] sm:$0xf]
      %v3256 = vld [vmem:[%s3252 + $0xc] sm:$0xf]
      %v3261 = vunpack.c.l.b16 %v3253
      %v3262 = vunpack.c.l.b16 %v3254
      %v3263 = vunpack.c.l.b16 %v3255
      %v3264 = vunpack.c.l.b16 %v3256
      %v3265 = vpack.c.b16 %v3262, %v3261
      %v3266 = vpack.c.b16 %v3264, %v3263
      %v3270 = vsel %vm835, %v3250, 0
      %v3273 = vsel %vm835, %v3251, 0
      %3275 = vmatpush.bf16.msra.mxu0 0
      %3276 = vmatpush.bf16.msra.mxu0 0
      %3277 = vmatpush.bf16.msra.mxu0 0
      %3278 = vmatpush.bf16.msra.mxu0 0
      %3279 = vmatpush.bf16.msra.mxu0 0
      %3280 = vmatpush.bf16.msra.mxu0 0
      %3281 = vmatpush.bf16.msra.mxu0 %v3266
      %3282 = vmatpush.bf16.msra.mxu0 %v3265
      %3283 = vmatmul.bf16.gmra.mxu0 %v3270
      %v3284 = vpop.f32.mrf.mxu0
      %v3285 = vadd.f32 0.0, %v3284
      %v3286 = vpop.f32.mrf.mxu0
      %v3287 = vadd.f32 0.0, %v3286
      %3288 = vmatmul.bf16.gmra.mxu0 %v3273
      %v3289 = vpop.f32.mrf.mxu0
      %v3290 = vadd.f32 0.0, %v3289
      %v3291 = vpop.f32.mrf.mxu0
      %3292 = vdwg.mxu0
      %v3293 = vadd.f32 %v3244, %v3285
      %v3294 = vadd.f32 %v3245, %v3287
      %v3295 = vadd.f32 %v3246, %v3290
      %v3296 = vld [vmem:[#allocation5 + $0x7] sm:$0xff]
      %v3297 = vld [vmem:[#allocation5 + $0xf] sm:$0xff]
      %v3298 = vld [vmem:[#allocation5 + $0x17] sm:$0x3f]
      %v3299 = vpack.c.bf16 %v3297, %v3296
      %v3300 = vpack.c.bf16 %v3298, %v3298
      %s3301 = scalar_lea.vmem %s15, 64
      %v3302 = vld [vmem:[%s3301] sm:$0xf]
      %v3303 = vld [vmem:[%s3301 + $0x4] sm:$0xf]
      %v3304 = vld [vmem:[%s3301 + $0x8] sm:$0xf]
      %v3305 = vld [vmem:[%s3301 + $0xc] sm:$0xf]
      %v3310 = vunpack.c.l.b16 %v3302
      %v3311 = vunpack.c.l.b16 %v3303
      %v3312 = vunpack.c.l.b16 %v3304
      %v3313 = vunpack.c.l.b16 %v3305
      %v3314 = vpack.c.b16 %v3311, %v3310
      %v3315 = vpack.c.b16 %v3313, %v3312
      %v3319 = vsel %vm835, %v3299, 0
      %v3322 = vsel %vm835, %v3300, 0
      %3324 = vmatpush.bf16.msra.mxu0 0
      %3325 = vmatpush.bf16.msra.mxu0 0
      %3326 = vmatpush.bf16.msra.mxu0 0
      %3327 = vmatpush.bf16.msra.mxu0 0
      %3328 = vmatpush.bf16.msra.mxu0 0
      %3329 = vmatpush.bf16.msra.mxu0 0
      %3330 = vmatpush.bf16.msra.mxu0 %v3315
      %3331 = vmatpush.bf16.msra.mxu0 %v3314
      %3332 = vmatmul.bf16.gmra.mxu0 %v3319
      %v3333 = vpop.f32.mrf.mxu0
      %v3334 = vadd.f32 0.0, %v3333
      %v3335 = vpop.f32.mrf.mxu0
      %v3336 = vadd.f32 0.0, %v3335
      %3337 = vmatmul.bf16.gmra.mxu0 %v3322
      %v3338 = vpop.f32.mrf.mxu0
      %v3339 = vadd.f32 0.0, %v3338
      %v3340 = vpop.f32.mrf.mxu0
      %3341 = vdwg.mxu0
      %v3342 = vadd.f32 %v3293, %v3334
      %v3343 = vadd.f32 %v3294, %v3336
      %v3344 = vadd.f32 %v3295, %v3339
      %v3345 = vld [vmem:[#allocation5 + $0x8] sm:$0xff]
      %v3346 = vld [vmem:[#allocation5 + $0x10] sm:$0xff]
      %v3347 = vld [vmem:[#allocation5 + $0x18] sm:$0x3f]
      %v3348 = vpack.c.bf16 %v3346, %v3345
      %v3349 = vpack.c.bf16 %v3347, %v3347
      %s3350 = scalar_lea.vmem %s15, 80
      %v3351 = vld [vmem:[%s3350] sm:$0xf]
      %v3352 = vld [vmem:[%s3350 + $0x4] sm:$0xf]
      %v3353 = vld [vmem:[%s3350 + $0x8] sm:$0xf]
      %v3354 = vld [vmem:[%s3350 + $0xc] sm:$0xf]
      %v3359 = vunpack.c.l.b16 %v3351
      %v3360 = vunpack.c.l.b16 %v3352
      %v3361 = vunpack.c.l.b16 %v3353
      %v3362 = vunpack.c.l.b16 %v3354
      %v3363 = vpack.c.b16 %v3360, %v3359
      %v3364 = vpack.c.b16 %v3362, %v3361
      %v3368 = vsel %vm835, %v3348, 0
      %v3371 = vsel %vm835, %v3349, 0
      %3373 = vmatpush.bf16.msra.mxu0 0
      %3374 = vmatpush.bf16.msra.mxu0 0
      %3375 = vmatpush.bf16.msra.mxu0 0
      %3376 = vmatpush.bf16.msra.mxu0 0
      %3377 = vmatpush.bf16.msra.mxu0 0
      %3378 = vmatpush.bf16.msra.mxu0 0
      %3379 = vmatpush.bf16.msra.mxu0 %v3364
      %3380 = vmatpush.bf16.msra.mxu0 %v3363
      %3381 = vmatmul.bf16.gmra.mxu0 %v3368
      %v3382 = vpop.f32.mrf.mxu0
      %v3383 = vadd.f32 0.0, %v3382
      %v3384 = vpop.f32.mrf.mxu0
      %v3385 = vadd.f32 0.0, %v3384
      %3386 = vmatmul.bf16.gmra.mxu0 %v3371
      %v3387 = vpop.f32.mrf.mxu0
      %v3388 = vadd.f32 0.0, %v3387
      %v3389 = vpop.f32.mrf.mxu0
      %3390 = vdwg.mxu0
      %v3391 = vadd.f32 %v3342, %v3383
      %v3392 = vadd.f32 %v3343, %v3385
      %v3393 = vadd.f32 %v3344, %v3388
      %v3394 = vld [vmem:[#allocation5 + $0xc] sm:$0xff]
      %v3395 = vld [vmem:[#allocation5 + $0x14] sm:$0xff]
      %v3396 = vld [vmem:[#allocation5 + $0x1c] sm:$0x3f]
      %v3397 = vpack.c.bf16 %v3395, %v3394
      %v3398 = vpack.c.bf16 %v3396, %v3396
      %s3399 = scalar_lea.vmem %s15, 96
      %v3400 = vld [vmem:[%s3399] sm:$0xf]
      %v3401 = vld [vmem:[%s3399 + $0x4] sm:$0xf]
      %v3402 = vld [vmem:[%s3399 + $0x8] sm:$0xf]
      %v3403 = vld [vmem:[%s3399 + $0xc] sm:$0xf]
      %v3408 = vunpack.c.l.b16 %v3400
      %v3409 = vunpack.c.l.b16 %v3401
      %v3410 = vunpack.c.l.b16 %v3402
      %v3411 = vunpack.c.l.b16 %v3403
      %v3412 = vpack.c.b16 %v3409, %v3408
      %v3413 = vpack.c.b16 %v3411, %v3410
      %v3417 = vsel %vm835, %v3397, 0
      %v3420 = vsel %vm835, %v3398, 0
      %3422 = vmatpush.bf16.msra.mxu0 0
      %3423 = vmatpush.bf16.msra.mxu0 0
      %3424 = vmatpush.bf16.msra.mxu0 0
      %3425 = vmatpush.bf16.msra.mxu0 0
      %3426 = vmatpush.bf16.msra.mxu0 0
      %3427 = vmatpush.bf16.msra.mxu0 0
      %3428 = vmatpush.bf16.msra.mxu0 %v3413
      %3429 = vmatpush.bf16.msra.mxu0 %v3412
      %3430 = vmatmul.bf16.gmra.mxu0 %v3417
      %v3431 = vpop.f32.mrf.mxu0
      %v3432 = vadd.f32 0.0, %v3431
      %v3433 = vpop.f32.mrf.mxu0
      %v3434 = vadd.f32 0.0, %v3433
      %3435 = vmatmul.bf16.gmra.mxu0 %v3420
      %v3436 = vpop.f32.mrf.mxu0
      %v3437 = vadd.f32 0.0, %v3436
      %v3438 = vpop.f32.mrf.mxu0
      %3439 = vdwg.mxu0
      %v3440 = vadd.f32 %v3391, %v3432
      %v3441 = vadd.f32 %v3392, %v3434
      %v3442 = vadd.f32 %v3393, %v3437
      %v3443 = vld [vmem:[#allocation5 + $0xd] sm:$0xff]
      %v3444 = vld [vmem:[#allocation5 + $0x15] sm:$0xff]
      %v3445 = vld [vmem:[#allocation5 + $0x1d] sm:$0x3f]
      %v3446 = vpack.c.bf16 %v3444, %v3443
      %v3447 = vpack.c.bf16 %v3445, %v3445
      %s3448 = scalar_lea.vmem %s15, 112
      %v3449 = vld [vmem:[%s3448] sm:$0xf]
      %v3450 = vld [vmem:[%s3448 + $0x4] sm:$0xf]
      %v3451 = vld [vmem:[%s3448 + $0x8] sm:$0xf]
      %v3452 = vld [vmem:[%s3448 + $0xc] sm:$0xf]
      %v3457 = vunpack.c.l.b16 %v3449
      %v3458 = vunpack.c.l.b16 %v3450
      %v3459 = vunpack.c.l.b16 %v3451
      %v3460 = vunpack.c.l.b16 %v3452
      %v3461 = vpack.c.b16 %v3458, %v3457
      %v3462 = vpack.c.b16 %v3460, %v3459
      %v3466 = vsel %vm835, %v3446, 0
      %v3469 = vsel %vm835, %v3447, 0
      %3471 = vmatpush.bf16.msra.mxu0 0
      %3472 = vmatpush.bf16.msra.mxu0 0
      %3473 = vmatpush.bf16.msra.mxu0 0
      %3474 = vmatpush.bf16.msra.mxu0 0
      %3475 = vmatpush.bf16.msra.mxu0 0
      %3476 = vmatpush.bf16.msra.mxu0 0
      %3477 = vmatpush.bf16.msra.mxu0 %v3462
      %3478 = vmatpush.bf16.msra.mxu0 %v3461
      %3479 = vmatmul.bf16.gmra.mxu0 %v3466
      %v3480 = vpop.f32.mrf.mxu0
      %v3481 = vadd.f32 0.0, %v3480
      %v3482 = vpop.f32.mrf.mxu0
      %v3483 = vadd.f32 0.0, %v3482
      %3484 = vmatmul.bf16.gmra.mxu0 %v3469
      %v3485 = vpop.f32.mrf.mxu0
      %v3486 = vadd.f32 0.0, %v3485
      %v3487 = vpop.f32.mrf.mxu0
      %3488 = vdwg.mxu0
      %v3489 = vadd.f32 %v3440, %v3481
      %v3490 = vadd.f32 %v3441, %v3483
      %v3491 = vadd.f32 %v3442, %v3486
      %v3492 = vld [vmem:[#allocation5 + $0xe] sm:$0xff]
      %v3493 = vld [vmem:[#allocation5 + $0x16] sm:$0xff]
      %v3494 = vld [vmem:[#allocation5 + $0x1e] sm:$0x3f]
      %v3495 = vpack.c.bf16 %v3493, %v3492
      %v3496 = vpack.c.bf16 %v3494, %v3494
      %s3497 = scalar_lea.vmem %s15, 128
      %v3498 = vld [vmem:[%s3497] sm:$0xf]
      %v3499 = vld [vmem:[%s3497 + $0x4] sm:$0xf]
      %v3500 = vld [vmem:[%s3497 + $0x8] sm:$0xf]
      %v3501 = vld [vmem:[%s3497 + $0xc] sm:$0xf]
      %v3506 = vunpack.c.l.b16 %v3498
      %v3507 = vunpack.c.l.b16 %v3499
      %v3508 = vunpack.c.l.b16 %v3500
      %v3509 = vunpack.c.l.b16 %v3501
      %v3510 = vpack.c.b16 %v3507, %v3506
      %v3511 = vpack.c.b16 %v3509, %v3508
      %v3515 = vsel %vm835, %v3495, 0
      %v3518 = vsel %vm835, %v3496, 0
      %3520 = vmatpush.bf16.msra.mxu0 0
      %3521 = vmatpush.bf16.msra.mxu0 0
      %3522 = vmatpush.bf16.msra.mxu0 0
      %3523 = vmatpush.bf16.msra.mxu0 0
      %3524 = vmatpush.bf16.msra.mxu0 0
      %3525 = vmatpush.bf16.msra.mxu0 0
      %3526 = vmatpush.bf16.msra.mxu0 %v3511
      %3527 = vmatpush.bf16.msra.mxu0 %v3510
      %3528 = vmatmul.bf16.gmra.mxu0 %v3515
      %v3529 = vpop.f32.mrf.mxu0
      %v3530 = vadd.f32 0.0, %v3529
      %v3531 = vpop.f32.mrf.mxu0
      %v3532 = vadd.f32 0.0, %v3531
      %3533 = vmatmul.bf16.gmra.mxu0 %v3518
      %v3534 = vpop.f32.mrf.mxu0
      %v3535 = vadd.f32 0.0, %v3534
      %v3536 = vpop.f32.mrf.mxu0
      %3537 = vdwg.mxu0
      %v3538 = vadd.f32 %v3489, %v3530
      %v3539 = vadd.f32 %v3490, %v3532
      %v3540 = vadd.f32 %v3491, %v3535
      %v3541 = vld [vmem:[%s16] sm:$0x1]
      %v3543 = vperm.slane %v3541, 0
      %v3545 = vadd.f32 %v3538, %v3543
      %v3546 = vadd.f32 %v3539, %v3543
      %v3547 = vadd.f32 %v3540, %v3543
      %v3548 = vmax.f32 %v3545, 0.0
      %v3549 = vmax.f32 %v3546, 0.0
      %v3550 = vmax.f32 %v3547, 0.0
      %v3551 = vld [vmem:[%s3] sm:$0xf]
      %v3552 = vld [vmem:[%s3 + $0x4] sm:$0xf]
      %v3553 = vld [vmem:[%s3 + $0x8] sm:$0xf]
      %v3554 = vld [vmem:[%s3 + $0xc] sm:$0xf]
      %v3555 = vld [vmem:[%s3 + $0x10] sm:$0x3]
      %v3556 = vpack.c.bf16 %v3549, %v3548
      %v3557 = vpack.c.bf16 %v3550, %v3550
      %v3563 = vunpack.c.l.b16 %v3551
      %v3564 = vunpack.c.l.b16 %v3552
      %v3565 = vunpack.c.l.b16 %v3553
      %v3566 = vunpack.c.l.b16 %v3554
      %v3567 = vunpack.c.l.b16 %v3555
      %v3568 = vpack.c.b16 %v3564, %v3563
      %v3569 = vpack.c.b16 %v3566, %v3565
      %v3570 = vpack.c.b16 %v3567, %v3567
      %v3572 = vsel %vm3065, %v3568, 0
      %v3575 = vsel %vm3065, %v3569, 0
      %v3578 = vsel %vm3065, %v3570, 0
      %v3581 = vsel %vm3075, %v3557, 0
      %3583 = vmatpush.bf16.msra.mxu0 0
      %3584 = vmatpush.bf16.msra.mxu0 0
      %3585 = vmatpush.bf16.msra.mxu0 0
      %3586 = vmatpush.bf16.msra.mxu0 0
      %3587 = vmatpush.bf16.msra.mxu0 0
      %3588 = vmatpush.bf16.msra.mxu0 0
      %3589 = vmatpush.bf16.msra.mxu0 %v3581
      %3590 = vmatpush.bf16.msra.mxu0 %v3556
      %3591 = vmatmul.bf16.gmra.mxu0 %v3572
      %v3592 = vpop.f32.mrf.mxu0
      %v3593 = vadd.f32 0.0, %v3592
      %v3594 = vpop.f32.mrf.mxu0
      %v3595 = vadd.f32 0.0, %v3594
      %3596 = vmatmul.bf16.gmra.mxu0 %v3575
      %v3597 = vpop.f32.mrf.mxu0
      %v3598 = vadd.f32 0.0, %v3597
      %v3599 = vpop.f32.mrf.mxu0
      %v3600 = vadd.f32 0.0, %v3599
      %3601 = vmatmul.bf16.gmra.mxu0 %v3578
      %v3602 = vpop.f32.mrf.mxu0
      %v3603 = vadd.f32 0.0, %v3602
      %v3604 = vpop.f32.mrf.mxu0
      %3605 = vdwg.mxu0
      %3606 = vst.msk [vmem:[#allocation6] sm:$0xff] %vm770, %v3593
      %3607 = vst.msk [vmem:[#allocation6 + $0x8] sm:$0xff] %vm770, %v3595
      %3608 = vst.msk [vmem:[#allocation6 + $0x10] sm:$0xff] %vm770, %v3598
      %3609 = vst.msk [vmem:[#allocation6 + $0x18] sm:$0xff] %vm770, %v3600
      %3610 = vst.msk [vmem:[#allocation6 + $0x20] sm:$0xf] %vm1794, %v3603
      %v3611 = vld [vmem:[#allocation6] sm:$0xff]
      %v3612 = vld [vmem:[#allocation6 + $0x8] sm:$0xff]
      %v3613 = vld [vmem:[#allocation6 + $0x10] sm:$0x3f]
      %v3614 = vpack.c.bf16 %v3612, %v3611
      %v3615 = vpack.c.bf16 %v3613, %v3613
      %v3616 = vld [vmem:[%s17] sm:$0xf]
      %v3617 = vld [vmem:[%s17 + $0x4] sm:$0xf]
      %v3618 = vld [vmem:[%s17 + $0x8] sm:$0xf]
      %v3619 = vld [vmem:[%s17 + $0xc] sm:$0xf]
      %v3620 = vld [vmem:[%s17 + $0x10] sm:$0xf]
      %v3621 = vld [vmem:[%s17 + $0x14] sm:$0xf]
      %v3622 = vld [vmem:[%s17 + $0x18] sm:$0xf]
      %v3623 = vld [vmem:[%s17 + $0x1c] sm:$0xf]
      %v3624 = vld [vmem:[#allocation6 + $0x1] sm:$0xff]
      %v3625 = vld [vmem:[#allocation6 + $0x9] sm:$0xff]
      %v3626 = vld [vmem:[#allocation6 + $0x11] sm:$0x3f]
      %v3627 = vpack.c.bf16 %v3625, %v3624
      %v3628 = vpack.c.bf16 %v3626, %v3626
      %s3629 = scalar_lea.vmem %s17, 32
      %v3630 = vld [vmem:[%s3629] sm:$0xf]
      %v3631 = vld [vmem:[%s3629 + $0x4] sm:$0xf]
      %v3632 = vld [vmem:[%s3629 + $0x8] sm:$0xf]
      %v3633 = vld [vmem:[%s3629 + $0xc] sm:$0xf]
      %v3634 = vld [vmem:[%s3629 + $0x10] sm:$0xf]
      %v3635 = vld [vmem:[%s3629 + $0x14] sm:$0xf]
      %v3636 = vld [vmem:[%s3629 + $0x18] sm:$0xf]
      %v3637 = vld [vmem:[%s3629 + $0x1c] sm:$0xf]
      %v3646 = vunpack.c.l.b16 %v3630
      %v3647 = vunpack.c.l.b16 %v3631
      %v3648 = vunpack.c.l.b16 %v3632
      %v3649 = vunpack.c.l.b16 %v3633
      %v3650 = vunpack.c.l.b16 %v3634
      %v3651 = vunpack.c.l.b16 %v3635
      %v3652 = vunpack.c.l.b16 %v3636
      %v3653 = vunpack.c.l.b16 %v3637
      %v3654 = vpack.c.b16 %v3647, %v3646
      %v3655 = vpack.c.b16 %v3649, %v3648
      %v3656 = vpack.c.b16 %v3651, %v3650
      %v3657 = vpack.c.b16 %v3653, %v3652
      %v3663 = vsel %vm770, %v3627, 0
      %v3666 = vsel %vm770, %v3628, 0
      %3668 = vmatpush.bf16.msra.mxu0 0
      %3669 = vmatpush.bf16.msra.mxu0 0
      %3670 = vmatpush.bf16.msra.mxu0 0
      %3671 = vmatpush.bf16.msra.mxu0 0
      %3672 = vmatpush.bf16.msra.mxu0 %v3657
      %3673 = vmatpush.bf16.msra.mxu0 %v3656
      %3674 = vmatpush.bf16.msra.mxu0 %v3655
      %3675 = vmatpush.bf16.msra.mxu0 %v3654
      %3676 = vmatmul.bf16.gmra.mxu0 %v3663
      %v3677 = vpop.f32.mrf.mxu0
      %v3678 = vadd.f32 0.0, %v3677
      %v3679 = vpop.f32.mrf.mxu0
      %v3680 = vadd.f32 0.0, %v3679
      %3681 = vmatmul.bf16.gmra.mxu0 %v3666
      %v3682 = vpop.f32.mrf.mxu0
      %v3683 = vadd.f32 0.0, %v3682
      %v3684 = vpop.f32.mrf.mxu0
      %3685 = vdwg.mxu0
      %v3694 = vunpack.c.l.b16 %v3616
      %v3695 = vunpack.c.l.b16 %v3617
      %v3696 = vunpack.c.l.b16 %v3618
      %v3697 = vunpack.c.l.b16 %v3619
      %v3698 = vunpack.c.l.b16 %v3620
      %v3699 = vunpack.c.l.b16 %v3621
      %v3700 = vunpack.c.l.b16 %v3622
      %v3701 = vunpack.c.l.b16 %v3623
      %v3702 = vpack.c.b16 %v3695, %v3694
      %v3703 = vpack.c.b16 %v3697, %v3696
      %v3704 = vpack.c.b16 %v3699, %v3698
      %v3705 = vpack.c.b16 %v3701, %v3700
      %v3711 = vsel %vm770, %v3614, 0
      %v3714 = vsel %vm770, %v3615, 0
      %3716 = vmatpush.bf16.msra.mxu0 0
      %3717 = vmatpush.bf16.msra.mxu0 0
      %3718 = vmatpush.bf16.msra.mxu0 0
      %3719 = vmatpush.bf16.msra.mxu0 0
      %3720 = vmatpush.bf16.msra.mxu0 %v3705
      %3721 = vmatpush.bf16.msra.mxu0 %v3704
      %3722 = vmatpush.bf16.msra.mxu0 %v3703
      %3723 = vmatpush.bf16.msra.mxu0 %v3702
      %3724 = vmatmul.bf16.gmra.mxu0 %v3711
      %v3725 = vpop.f32.mrf.mxu0
      %v3726 = vadd.f32 %v3678, %v3725
      %v3727 = vpop.f32.mrf.mxu0
      %v3728 = vadd.f32 %v3680, %v3727
      %3729 = vmatmul.bf16.gmra.mxu0 %v3714
      %v3730 = vpop.f32.mrf.mxu0
      %v3731 = vadd.f32 %v3683, %v3730
      %v3732 = vpop.f32.mrf.mxu0
      %3733 = vdwg.mxu0
      %v3734 = vld [vmem:[#allocation6 + $0x2] sm:$0xff]
      %v3735 = vld [vmem:[#allocation6 + $0xa] sm:$0xff]
      %v3736 = vld [vmem:[#allocation6 + $0x12] sm:$0x3f]
      %v3737 = vpack.c.bf16 %v3735, %v3734
      %v3738 = vpack.c.bf16 %v3736, %v3736
      %s3739 = scalar_lea.vmem %s17, 64
      %v3740 = vld [vmem:[%s3739] sm:$0xf]
      %v3741 = vld [vmem:[%s3739 + $0x4] sm:$0xf]
      %v3742 = vld [vmem:[%s3739 + $0x8] sm:$0xf]
      %v3743 = vld [vmem:[%s3739 + $0xc] sm:$0xf]
      %v3744 = vld [vmem:[%s3739 + $0x10] sm:$0xf]
      %v3745 = vld [vmem:[%s3739 + $0x14] sm:$0xf]
      %v3746 = vld [vmem:[%s3739 + $0x18] sm:$0xf]
      %v3747 = vld [vmem:[%s3739 + $0x1c] sm:$0xf]
      %v3756 = vunpack.c.l.b16 %v3740
      %v3757 = vunpack.c.l.b16 %v3741
      %v3758 = vunpack.c.l.b16 %v3742
      %v3759 = vunpack.c.l.b16 %v3743
      %v3760 = vunpack.c.l.b16 %v3744
      %v3761 = vunpack.c.l.b16 %v3745
      %v3762 = vunpack.c.l.b16 %v3746
      %v3763 = vunpack.c.l.b16 %v3747
      %v3764 = vpack.c.b16 %v3757, %v3756
      %v3765 = vpack.c.b16 %v3759, %v3758
      %v3766 = vpack.c.b16 %v3761, %v3760
      %v3767 = vpack.c.b16 %v3763, %v3762
      %v3773 = vsel %vm770, %v3737, 0
      %v3776 = vsel %vm770, %v3738, 0
      %3778 = vmatpush.bf16.msra.mxu0 0
      %3779 = vmatpush.bf16.msra.mxu0 0
      %3780 = vmatpush.bf16.msra.mxu0 0
      %3781 = vmatpush.bf16.msra.mxu0 0
      %3782 = vmatpush.bf16.msra.mxu0 %v3767
      %3783 = vmatpush.bf16.msra.mxu0 %v3766
      %3784 = vmatpush.bf16.msra.mxu0 %v3765
      %3785 = vmatpush.bf16.msra.mxu0 %v3764
      %3786 = vmatmul.bf16.gmra.mxu0 %v3773
      %v3787 = vpop.f32.mrf.mxu0
      %v3788 = vadd.f32 0.0, %v3787
      %v3789 = vpop.f32.mrf.mxu0
      %v3790 = vadd.f32 0.0, %v3789
      %3791 = vmatmul.bf16.gmra.mxu0 %v3776
      %v3792 = vpop.f32.mrf.mxu0
      %v3793 = vadd.f32 0.0, %v3792
      %v3794 = vpop.f32.mrf.mxu0
      %3795 = vdwg.mxu0
      %v3796 = vadd.f32 %v3726, %v3788
      %v3797 = vadd.f32 %v3728, %v3790
      %v3798 = vadd.f32 %v3731, %v3793
      %v3799 = vld [vmem:[#allocation6 + $0x6] sm:$0xff]
      %v3800 = vld [vmem:[#allocation6 + $0xe] sm:$0xff]
      %v3801 = vld [vmem:[#allocation6 + $0x16] sm:$0x3f]
      %v3802 = vpack.c.bf16 %v3800, %v3799
      %v3803 = vpack.c.bf16 %v3801, %v3801
      %s3804 = scalar_lea.vmem %s17, 96
      %v3805 = vld [vmem:[%s3804] sm:$0xf]
      %v3806 = vld [vmem:[%s3804 + $0x4] sm:$0xf]
      %v3807 = vld [vmem:[%s3804 + $0x8] sm:$0xf]
      %v3808 = vld [vmem:[%s3804 + $0xc] sm:$0xf]
      %v3809 = vld [vmem:[%s3804 + $0x10] sm:$0xf]
      %v3810 = vld [vmem:[%s3804 + $0x14] sm:$0xf]
      %v3811 = vld [vmem:[%s3804 + $0x18] sm:$0xf]
      %v3812 = vld [vmem:[%s3804 + $0x1c] sm:$0xf]
      %v3821 = vunpack.c.l.b16 %v3805
      %v3822 = vunpack.c.l.b16 %v3806
      %v3823 = vunpack.c.l.b16 %v3807
      %v3824 = vunpack.c.l.b16 %v3808
      %v3825 = vunpack.c.l.b16 %v3809
      %v3826 = vunpack.c.l.b16 %v3810
      %v3827 = vunpack.c.l.b16 %v3811
      %v3828 = vunpack.c.l.b16 %v3812
      %v3829 = vpack.c.b16 %v3822, %v3821
      %v3830 = vpack.c.b16 %v3824, %v3823
      %v3831 = vpack.c.b16 %v3826, %v3825
      %v3832 = vpack.c.b16 %v3828, %v3827
      %v3838 = vsel %vm770, %v3802, 0
      %v3841 = vsel %vm770, %v3803, 0
      %3843 = vmatpush.bf16.msra.mxu0 0
      %3844 = vmatpush.bf16.msra.mxu0 0
      %3845 = vmatpush.bf16.msra.mxu0 0
      %3846 = vmatpush.bf16.msra.mxu0 0
      %3847 = vmatpush.bf16.msra.mxu0 %v3832
      %3848 = vmatpush.bf16.msra.mxu0 %v3831
      %3849 = vmatpush.bf16.msra.mxu0 %v3830
      %3850 = vmatpush.bf16.msra.mxu0 %v3829
      %3851 = vmatmul.bf16.gmra.mxu0 %v3838
      %v3852 = vpop.f32.mrf.mxu0
      %v3853 = vadd.f32 0.0, %v3852
      %v3854 = vpop.f32.mrf.mxu0
      %v3855 = vadd.f32 0.0, %v3854
      %3856 = vmatmul.bf16.gmra.mxu0 %v3841
      %v3857 = vpop.f32.mrf.mxu0
      %v3858 = vadd.f32 0.0, %v3857
      %v3859 = vpop.f32.mrf.mxu0
      %3860 = vdwg.mxu0
      %v3861 = vadd.f32 %v3796, %v3853
      %v3862 = vadd.f32 %v3797, %v3855
      %v3863 = vadd.f32 %v3798, %v3858
      %v3864 = vld [vmem:[#allocation6 + $0x7] sm:$0xff]
      %v3865 = vld [vmem:[#allocation6 + $0xf] sm:$0xff]
      %v3866 = vld [vmem:[#allocation6 + $0x17] sm:$0x3f]
      %v3867 = vpack.c.bf16 %v3865, %v3864
      %v3868 = vpack.c.bf16 %v3866, %v3866
      %s3869 = scalar_lea.vmem %s17, 128
      %v3870 = vld [vmem:[%s3869] sm:$0xf]
      %v3871 = vld [vmem:[%s3869 + $0x4] sm:$0xf]
      %v3872 = vld [vmem:[%s3869 + $0x8] sm:$0xf]
      %v3873 = vld [vmem:[%s3869 + $0xc] sm:$0xf]
      %v3874 = vld [vmem:[%s3869 + $0x10] sm:$0xf]
      %v3875 = vld [vmem:[%s3869 + $0x14] sm:$0xf]
      %v3876 = vld [vmem:[%s3869 + $0x18] sm:$0xf]
      %v3877 = vld [vmem:[%s3869 + $0x1c] sm:$0xf]
      %v3886 = vunpack.c.l.b16 %v3870
      %v3887 = vunpack.c.l.b16 %v3871
      %v3888 = vunpack.c.l.b16 %v3872
      %v3889 = vunpack.c.l.b16 %v3873
      %v3890 = vunpack.c.l.b16 %v3874
      %v3891 = vunpack.c.l.b16 %v3875
      %v3892 = vunpack.c.l.b16 %v3876
      %v3893 = vunpack.c.l.b16 %v3877
      %v3894 = vpack.c.b16 %v3887, %v3886
      %v3895 = vpack.c.b16 %v3889, %v3888
      %v3896 = vpack.c.b16 %v3891, %v3890
      %v3897 = vpack.c.b16 %v3893, %v3892
      %v3903 = vsel %vm770, %v3867, 0
      %v3906 = vsel %vm770, %v3868, 0
      %3908 = vmatpush.bf16.msra.mxu0 0
      %3909 = vmatpush.bf16.msra.mxu0 0
      %3910 = vmatpush.bf16.msra.mxu0 0
      %3911 = vmatpush.bf16.msra.mxu0 0
      %3912 = vmatpush.bf16.msra.mxu0 %v3897
      %3913 = vmatpush.bf16.msra.mxu0 %v3896
      %3914 = vmatpush.bf16.msra.mxu0 %v3895
      %3915 = vmatpush.bf16.msra.mxu0 %v3894
      %3916 = vmatmul.bf16.gmra.mxu0 %v3903
      %v3917 = vpop.f32.mrf.mxu0
      %v3918 = vadd.f32 0.0, %v3917
      %v3919 = vpop.f32.mrf.mxu0
      %v3920 = vadd.f32 0.0, %v3919
      %3921 = vmatmul.bf16.gmra.mxu0 %v3906
      %v3922 = vpop.f32.mrf.mxu0
      %v3923 = vadd.f32 0.0, %v3922
      %v3924 = vpop.f32.mrf.mxu0
      %3925 = vdwg.mxu0
      %v3926 = vadd.f32 %v3861, %v3918
      %v3927 = vadd.f32 %v3862, %v3920
      %v3928 = vadd.f32 %v3863, %v3923
      %v3929 = vld [vmem:[#allocation6 + $0x8] sm:$0xff]
      %v3930 = vld [vmem:[#allocation6 + $0x10] sm:$0xff]
      %v3931 = vld [vmem:[#allocation6 + $0x18] sm:$0x3f]
      %v3932 = vpack.c.bf16 %v3930, %v3929
      %v3933 = vpack.c.bf16 %v3931, %v3931
      %s3934 = scalar_lea.vmem %s17, 160
      %v3935 = vld [vmem:[%s3934] sm:$0xf]
      %v3936 = vld [vmem:[%s3934 + $0x4] sm:$0xf]
      %v3937 = vld [vmem:[%s3934 + $0x8] sm:$0xf]
      %v3938 = vld [vmem:[%s3934 + $0xc] sm:$0xf]
      %v3939 = vld [vmem:[%s3934 + $0x10] sm:$0xf]
      %v3940 = vld [vmem:[%s3934 + $0x14] sm:$0xf]
      %v3941 = vld [vmem:[%s3934 + $0x18] sm:$0xf]
      %v3942 = vld [vmem:[%s3934 + $0x1c] sm:$0xf]
      %v3951 = vunpack.c.l.b16 %v3935
      %v3952 = vunpack.c.l.b16 %v3936
      %v3953 = vunpack.c.l.b16 %v3937
      %v3954 = vunpack.c.l.b16 %v3938
      %v3955 = vunpack.c.l.b16 %v3939
      %v3956 = vunpack.c.l.b16 %v3940
      %v3957 = vunpack.c.l.b16 %v3941
      %v3958 = vunpack.c.l.b16 %v3942
      %v3959 = vpack.c.b16 %v3952, %v3951
      %v3960 = vpack.c.b16 %v3954, %v3953
      %v3961 = vpack.c.b16 %v3956, %v3955
      %v3962 = vpack.c.b16 %v3958, %v3957
      %v3968 = vsel %vm770, %v3932, 0
      %v3971 = vsel %vm770, %v3933, 0
      %3973 = vmatpush.bf16.msra.mxu0 0
      %3974 = vmatpush.bf16.msra.mxu0 0
      %3975 = vmatpush.bf16.msra.mxu0 0
      %3976 = vmatpush.bf16.msra.mxu0 0
      %3977 = vmatpush.bf16.msra.mxu0 %v3962
      %3978 = vmatpush.bf16.msra.mxu0 %v3961
      %3979 = vmatpush.bf16.msra.mxu0 %v3960
      %3980 = vmatpush.bf16.msra.mxu0 %v3959
      %3981 = vmatmul.bf16.gmra.mxu0 %v3968
      %v3982 = vpop.f32.mrf.mxu0
      %v3983 = vadd.f32 0.0, %v3982
      %v3984 = vpop.f32.mrf.mxu0
      %v3985 = vadd.f32 0.0, %v3984
      %3986 = vmatmul.bf16.gmra.mxu0 %v3971
      %v3987 = vpop.f32.mrf.mxu0
      %v3988 = vadd.f32 0.0, %v3987
      %v3989 = vpop.f32.mrf.mxu0
      %3990 = vdwg.mxu0
      %v3991 = vadd.f32 %v3926, %v3983
      %v3992 = vadd.f32 %v3927, %v3985
      %v3993 = vadd.f32 %v3928, %v3988
      %v3994 = vld [vmem:[#allocation6 + $0xc] sm:$0xff]
      %v3995 = vld [vmem:[#allocation6 + $0x14] sm:$0xff]
      %v3996 = vld [vmem:[#allocation6 + $0x1c] sm:$0x3f]
      %v3997 = vpack.c.bf16 %v3995, %v3994
      %v3998 = vpack.c.bf16 %v3996, %v3996
      %s3999 = scalar_lea.vmem %s17, 192
      %v4000 = vld [vmem:[%s3999] sm:$0xf]
      %v4001 = vld [vmem:[%s3999 + $0x4] sm:$0xf]
      %v4002 = vld [vmem:[%s3999 + $0x8] sm:$0xf]
      %v4003 = vld [vmem:[%s3999 + $0xc] sm:$0xf]
      %v4004 = vld [vmem:[%s3999 + $0x10] sm:$0xf]
      %v4005 = vld [vmem:[%s3999 + $0x14] sm:$0xf]
      %v4006 = vld [vmem:[%s3999 + $0x18] sm:$0xf]
      %v4007 = vld [vmem:[%s3999 + $0x1c] sm:$0xf]
      %v4016 = vunpack.c.l.b16 %v4000
      %v4017 = vunpack.c.l.b16 %v4001
      %v4018 = vunpack.c.l.b16 %v4002
      %v4019 = vunpack.c.l.b16 %v4003
      %v4020 = vunpack.c.l.b16 %v4004
      %v4021 = vunpack.c.l.b16 %v4005
      %v4022 = vunpack.c.l.b16 %v4006
      %v4023 = vunpack.c.l.b16 %v4007
      %v4024 = vpack.c.b16 %v4017, %v4016
      %v4025 = vpack.c.b16 %v4019, %v4018
      %v4026 = vpack.c.b16 %v4021, %v4020
      %v4027 = vpack.c.b16 %v4023, %v4022
      %v4033 = vsel %vm770, %v3997, 0
      %v4036 = vsel %vm770, %v3998, 0
      %4038 = vmatpush.bf16.msra.mxu0 0
      %4039 = vmatpush.bf16.msra.mxu0 0
      %4040 = vmatpush.bf16.msra.mxu0 0
      %4041 = vmatpush.bf16.msra.mxu0 0
      %4042 = vmatpush.bf16.msra.mxu0 %v4027
      %4043 = vmatpush.bf16.msra.mxu0 %v4026
      %4044 = vmatpush.bf16.msra.mxu0 %v4025
      %4045 = vmatpush.bf16.msra.mxu0 %v4024
      %4046 = vmatmul.bf16.gmra.mxu0 %v4033
      %v4047 = vpop.f32.mrf.mxu0
      %v4048 = vadd.f32 0.0, %v4047
      %v4049 = vpop.f32.mrf.mxu0
      %v4050 = vadd.f32 0.0, %v4049
      %4051 = vmatmul.bf16.gmra.mxu0 %v4036
      %v4052 = vpop.f32.mrf.mxu0
      %v4053 = vadd.f32 0.0, %v4052
      %v4054 = vpop.f32.mrf.mxu0
      %4055 = vdwg.mxu0
      %v4056 = vadd.f32 %v3991, %v4048
      %v4057 = vadd.f32 %v3992, %v4050
      %v4058 = vadd.f32 %v3993, %v4053
      %v4059 = vld [vmem:[#allocation6 + $0xd] sm:$0xff]
      %v4060 = vld [vmem:[#allocation6 + $0x15] sm:$0xff]
      %v4061 = vld [vmem:[#allocation6 + $0x1d] sm:$0x3f]
      %v4062 = vpack.c.bf16 %v4060, %v4059
      %v4063 = vpack.c.bf16 %v4061, %v4061
      %s4064 = scalar_lea.vmem %s17, 224
      %v4065 = vld [vmem:[%s4064] sm:$0xf]
      %v4066 = vld [vmem:[%s4064 + $0x4] sm:$0xf]
      %v4067 = vld [vmem:[%s4064 + $0x8] sm:$0xf]
      %v4068 = vld [vmem:[%s4064 + $0xc] sm:$0xf]
      %v4069 = vld [vmem:[%s4064 + $0x10] sm:$0xf]
      %v4070 = vld [vmem:[%s4064 + $0x14] sm:$0xf]
      %v4071 = vld [vmem:[%s4064 + $0x18] sm:$0xf]
      %v4072 = vld [vmem:[%s4064 + $0x1c] sm:$0xf]
      %v4081 = vunpack.c.l.b16 %v4065
      %v4082 = vunpack.c.l.b16 %v4066
      %v4083 = vunpack.c.l.b16 %v4067
      %v4084 = vunpack.c.l.b16 %v4068
      %v4085 = vunpack.c.l.b16 %v4069
      %v4086 = vunpack.c.l.b16 %v4070
      %v4087 = vunpack.c.l.b16 %v4071
      %v4088 = vunpack.c.l.b16 %v4072
      %v4089 = vpack.c.b16 %v4082, %v4081
      %v4090 = vpack.c.b16 %v4084, %v4083
      %v4091 = vpack.c.b16 %v4086, %v4085
      %v4092 = vpack.c.b16 %v4088, %v4087
      %v4098 = vsel %vm770, %v4062, 0
      %v4101 = vsel %vm770, %v4063, 0
      %4103 = vmatpush.bf16.msra.mxu0 0
      %4104 = vmatpush.bf16.msra.mxu0 0
      %4105 = vmatpush.bf16.msra.mxu0 0
      %4106 = vmatpush.bf16.msra.mxu0 0
      %4107 = vmatpush.bf16.msra.mxu0 %v4092
      %4108 = vmatpush.bf16.msra.mxu0 %v4091
      %4109 = vmatpush.bf16.msra.mxu0 %v4090
      %4110 = vmatpush.bf16.msra.mxu0 %v4089
      %4111 = vmatmul.bf16.gmra.mxu0 %v4098
      %v4112 = vpop.f32.mrf.mxu0
      %v4113 = vadd.f32 0.0, %v4112
      %v4114 = vpop.f32.mrf.mxu0
      %v4115 = vadd.f32 0.0, %v4114
      %4116 = vmatmul.bf16.gmra.mxu0 %v4101
      %v4117 = vpop.f32.mrf.mxu0
      %v4118 = vadd.f32 0.0, %v4117
      %v4119 = vpop.f32.mrf.mxu0
      %4120 = vdwg.mxu0
      %v4121 = vadd.f32 %v4056, %v4113
      %v4122 = vadd.f32 %v4057, %v4115
      %v4123 = vadd.f32 %v4058, %v4118
      %v4124 = vld [vmem:[#allocation6 + $0xe] sm:$0xff]
      %v4125 = vld [vmem:[#allocation6 + $0x16] sm:$0xff]
      %v4126 = vld [vmem:[#allocation6 + $0x1e] sm:$0x3f]
      %v4127 = vpack.c.bf16 %v4125, %v4124
      %v4128 = vpack.c.bf16 %v4126, %v4126
      %s4129 = scalar_lea.vmem %s17, 256
      %v4130 = vld [vmem:[%s4129] sm:$0xf]
      %v4131 = vld [vmem:[%s4129 + $0x4] sm:$0xf]
      %v4132 = vld [vmem:[%s4129 + $0x8] sm:$0xf]
      %v4133 = vld [vmem:[%s4129 + $0xc] sm:$0xf]
      %v4134 = vld [vmem:[%s4129 + $0x10] sm:$0xf]
      %v4135 = vld [vmem:[%s4129 + $0x14] sm:$0xf]
      %v4136 = vld [vmem:[%s4129 + $0x18] sm:$0xf]
      %v4137 = vld [vmem:[%s4129 + $0x1c] sm:$0xf]
      %v4146 = vunpack.c.l.b16 %v4130
      %v4147 = vunpack.c.l.b16 %v4131
      %v4148 = vunpack.c.l.b16 %v4132
      %v4149 = vunpack.c.l.b16 %v4133
      %v4150 = vunpack.c.l.b16 %v4134
      %v4151 = vunpack.c.l.b16 %v4135
      %v4152 = vunpack.c.l.b16 %v4136
      %v4153 = vunpack.c.l.b16 %v4137
      %v4154 = vpack.c.b16 %v4147, %v4146
      %v4155 = vpack.c.b16 %v4149, %v4148
      %v4156 = vpack.c.b16 %v4151, %v4150
      %v4157 = vpack.c.b16 %v4153, %v4152
      %v4163 = vsel %vm770, %v4127, 0
      %v4166 = vsel %vm770, %v4128, 0
      %4168 = vmatpush.bf16.msra.mxu0 0
      %4169 = vmatpush.bf16.msra.mxu0 0
      %4170 = vmatpush.bf16.msra.mxu0 0
      %4171 = vmatpush.bf16.msra.mxu0 0
      %4172 = vmatpush.bf16.msra.mxu0 %v4157
      %4173 = vmatpush.bf16.msra.mxu0 %v4156
      %4174 = vmatpush.bf16.msra.mxu0 %v4155
      %4175 = vmatpush.bf16.msra.mxu0 %v4154
      %4176 = vmatmul.bf16.gmra.mxu0 %v4163
      %v4177 = vpop.f32.mrf.mxu0
      %v4178 = vadd.f32 0.0, %v4177
      %v4179 = vpop.f32.mrf.mxu0
      %v4180 = vadd.f32 0.0, %v4179
      %4181 = vmatmul.bf16.gmra.mxu0 %v4166
      %v4182 = vpop.f32.mrf.mxu0
      %v4183 = vadd.f32 0.0, %v4182
      %v4184 = vpop.f32.mrf.mxu0
      %4185 = vdwg.mxu0
      %v4186 = vadd.f32 %v4121, %v4178
      %v4187 = vadd.f32 %v4122, %v4180
      %v4188 = vadd.f32 %v4123, %v4183
      %v4189 = vld [vmem:[%s18] sm:$0x1]
      %v4191 = vperm.slane %v4189, 0
      %v4193 = vadd.f32 %v4186, %v4191
      %v4194 = vadd.f32 %v4187, %v4191
      %v4195 = vadd.f32 %v4188, %v4191
      %v4196 = vmul.f32 %v4193, 0.999995
      %v4197 = vmul.f32 %v4194, 0.999995
      %v4198 = vmul.f32 %v4195, 0.999995
      %v4199 = vld [vmem:[%s2] sm:$0xf]
      %v4200 = vld [vmem:[%s2 + $0x4] sm:$0xf]
      %v4201 = vld [vmem:[%s2 + $0x8] sm:$0xf]
      %v4202 = vld [vmem:[%s2 + $0xc] sm:$0xf]
      %v4203 = vld [vmem:[%s2 + $0x10] sm:$0xf]
      %v4204 = vld [vmem:[%s2 + $0x14] sm:$0xf]
      %v4205 = vld [vmem:[%s2 + $0x18] sm:$0xf]
      %v4206 = vld [vmem:[%s2 + $0x1c] sm:$0xf]
      %v4207 = vld [vmem:[%s2 + $0x20] sm:$0xf]
      %v4208 = vld [vmem:[%s2 + $0x24] sm:$0xf]
      %v4209 = vld [vmem:[%s2 + $0x28] sm:$0xf]
      %v4210 = vld [vmem:[%s2 + $0x2c] sm:$0xf]
      %v4211 = vld [vmem:[%s2 + $0x30] sm:$0x3]
      %v4212 = vld [vmem:[#allocation4] sm:$0xff]
      %v4213 = vld [vmem:[#allocation4 + $0x8] sm:$0xff]
      %v4214 = vld [vmem:[#allocation4 + $0x10] sm:$0xff]
      %v4215 = vld [vmem:[#allocation4 + $0x18] sm:$0xff]
      %v4216 = vld [vmem:[#allocation4 + $0x20] sm:$0xff]
      %v4217 = vld [vmem:[#allocation4 + $0x28] sm:$0xff]
      %v4218 = vld [vmem:[#allocation4 + $0x30] sm:$0xff]
      %v4219 = vld [vmem:[#allocation4 + $0x38] sm:$0xff]
      %v4220 = vld [vmem:[#allocation4 + $0x40] sm:$0xff]
      %v4221 = vld [vmem:[#allocation4 + $0x48] sm:$0x3f]
      %v4222 = vpack.c.bf16 %v4213, %v4212
      %v4223 = vpack.c.bf16 %v4215, %v4214
      %v4224 = vpack.c.bf16 %v4217, %v4216
      %v4225 = vpack.c.bf16 %v4219, %v4218
      %v4226 = vpack.c.bf16 %v4221, %v4220
      %v4240 = vunpack.c.l.b16 %v4199
      %v4241 = vunpack.c.l.b16 %v4200
      %v4242 = vunpack.c.l.b16 %v4201
      %v4243 = vunpack.c.l.b16 %v4202
      %v4244 = vunpack.c.l.b16 %v4203
      %v4245 = vunpack.c.l.b16 %v4204
      %v4246 = vunpack.c.l.b16 %v4205
      %v4247 = vunpack.c.l.b16 %v4206
      %v4248 = vunpack.c.l.b16 %v4207
      %v4249 = vunpack.c.l.b16 %v4208
      %v4250 = vunpack.c.l.b16 %v4209
      %v4251 = vunpack.c.l.b16 %v4210
      %v4252 = vunpack.c.l.b16 %v4211
      %v4253 = vpack.c.b16 %v4241, %v4240
      %v4254 = vpack.c.b16 %v4243, %v4242
      %v4255 = vpack.c.b16 %v4245, %v4244
      %v4256 = vpack.c.b16 %v4247, %v4246
      %v4257 = vpack.c.b16 %v4249, %v4248
      %v4258 = vpack.c.b16 %v4251, %v4250
      %v4259 = vpack.c.b16 %v4252, %v4252
      %v4261 = vsel %vm1713, %v4253, 0
      %v4264 = vsel %vm1713, %v4254, 0
      %v4267 = vsel %vm1713, %v4255, 0
      %v4270 = vsel %vm1713, %v4256, 0
      %v4273 = vsel %vm1713, %v4257, 0
      %v4276 = vsel %vm1713, %v4258, 0
      %v4279 = vsel %vm1713, %v4259, 0
      %v4282 = vsel %vm1735, %v4226, 0
      %4284 = vmatpush.bf16.msra.mxu0 0
      %4285 = vmatpush.bf16.msra.mxu0 0
      %4286 = vmatpush.bf16.msra.mxu0 0
      %4287 = vmatpush.bf16.msra.mxu0 %v4282
      %4288 = vmatpush.bf16.msra.mxu0 %v4225
      %4289 = vmatpush.bf16.msra.mxu0 %v4224
      %4290 = vmatpush.bf16.msra.mxu0 %v4223
      %4291 = vmatpush.bf16.msra.mxu0 %v4222
      %4292 = vmatmul.bf16.gmra.mxu0 %v4261
      %v4293 = vpop.f32.mrf.mxu0
      %v4294 = vadd.f32 0.0, %v4293
      %v4295 = vpop.f32.mrf.mxu0
      %v4296 = vadd.f32 0.0, %v4295
      %4297 = vmatmul.bf16.gmra.mxu0 %v4264
      %v4298 = vpop.f32.mrf.mxu0
      %v4299 = vadd.f32 0.0, %v4298
      %v4300 = vpop.f32.mrf.mxu0
      %v4301 = vadd.f32 0.0, %v4300
      %4302 = vmatmul.bf16.gmra.mxu0 %v4267
      %v4303 = vpop.f32.mrf.mxu0
      %v4304 = vadd.f32 0.0, %v4303
      %v4305 = vpop.f32.mrf.mxu0
      %v4306 = vadd.f32 0.0, %v4305
      %4307 = vmatmul.bf16.gmra.mxu0 %v4270
      %v4308 = vpop.f32.mrf.mxu0
      %v4309 = vadd.f32 0.0, %v4308
      %v4310 = vpop.f32.mrf.mxu0
      %v4311 = vadd.f32 0.0, %v4310
      %4312 = vmatmul.bf16.gmra.mxu0 %v4273
      %v4313 = vpop.f32.mrf.mxu0
      %v4314 = vadd.f32 0.0, %v4313
      %v4315 = vpop.f32.mrf.mxu0
      %v4316 = vadd.f32 0.0, %v4315
      %4317 = vmatmul.bf16.gmra.mxu0 %v4276
      %v4318 = vpop.f32.mrf.mxu0
      %v4319 = vadd.f32 0.0, %v4318
      %v4320 = vpop.f32.mrf.mxu0
      %v4321 = vadd.f32 0.0, %v4320
      %4322 = vmatmul.bf16.gmra.mxu0 %v4279
      %v4323 = vpop.f32.mrf.mxu0
      %v4324 = vadd.f32 0.0, %v4323
      %v4325 = vpop.f32.mrf.mxu0
      %4326 = vdwg.mxu0
      %v4327 = vpack.c.bf16 %v4296, %v4294
      %v4328 = vpack.c.bf16 %v4301, %v4299
      %v4329 = vpack.c.bf16 %v4306, %v4304
      %v4330 = vpack.c.bf16 %v4311, %v4309
      %v4331 = vpack.c.bf16 %v4316, %v4314
      %v4332 = vpack.c.bf16 %v4321, %v4319
      %v4333 = vpack.c.bf16 %v4324, %v4324
      %v4334 = vld [vmem:[%s7] sm:$0xff]
      %v4335 = vld [vmem:[%s7 + $0x8] sm:$0xff]
      %v4336 = vld [vmem:[%s7 + $0x10] sm:$0xff]
      %v4337 = vld [vmem:[%s7 + $0x18] sm:$0xff]
      %v4338 = vld [vmem:[%s7 + $0x20] sm:$0xff]
      %v4339 = vld [vmem:[%s7 + $0x28] sm:$0xff]
      %v4340 = vld [vmem:[%s7 + $0x30] sm:$0xff]
      %v4341 = vld [vmem:[%s7 + $0x38] sm:$0xff]
      %v4342 = vld [vmem:[%s6] sm:$0xf]
      %v4343 = vld [vmem:[%s6 + $0x4] sm:$0xf]
      %v4344 = vld [vmem:[%s6 + $0x8] sm:$0xf]
      %v4345 = vld [vmem:[%s6 + $0xc] sm:$0xf]
      %v4346 = vld [vmem:[%s6 + $0x10] sm:$0xf]
      %v4347 = vld [vmem:[%s6 + $0x14] sm:$0xf]
      %v4348 = vld [vmem:[%s6 + $0x18] sm:$0xf]
      %v4349 = vld [vmem:[%s6 + $0x1c] sm:$0xf]
      %v4350 = vld [vmem:[%s6 + $0x20] sm:$0xf]
      %v4351 = vld [vmem:[%s6 + $0x24] sm:$0xf]
      %v4352 = vld [vmem:[%s6 + $0x28] sm:$0xf]
      %v4353 = vld [vmem:[%s6 + $0x2c] sm:$0xf]
      %v4354 = vld [vmem:[%s6 + $0x30] sm:$0x3]
      %v4355 = vpack.c.bf16 %v4197, %v4196
      %v4356 = vpack.c.bf16 %v4198, %v4198
      %v4370 = vunpack.c.l.b16 %v4342
      %v4371 = vunpack.c.l.b16 %v4343
      %v4372 = vunpack.c.l.b16 %v4344
      %v4373 = vunpack.c.l.b16 %v4345
      %v4374 = vunpack.c.l.b16 %v4346
      %v4375 = vunpack.c.l.b16 %v4347
      %v4376 = vunpack.c.l.b16 %v4348
      %v4377 = vunpack.c.l.b16 %v4349
      %v4378 = vunpack.c.l.b16 %v4350
      %v4379 = vunpack.c.l.b16 %v4351
      %v4380 = vunpack.c.l.b16 %v4352
      %v4381 = vunpack.c.l.b16 %v4353
      %v4382 = vunpack.c.l.b16 %v4354
      %v4383 = vpack.c.b16 %v4371, %v4370
      %v4384 = vpack.c.b16 %v4373, %v4372
      %v4385 = vpack.c.b16 %v4375, %v4374
      %v4386 = vpack.c.b16 %v4377, %v4376
      %v4387 = vpack.c.b16 %v4379, %v4378
      %v4388 = vpack.c.b16 %v4381, %v4380
      %v4389 = vpack.c.b16 %v4382, %v4382
      %v4391 = vsel %vm3065, %v4383, 0
      %v4394 = vsel %vm3065, %v4384, 0
      %v4397 = vsel %vm3065, %v4385, 0
      %v4400 = vsel %vm3065, %v4386, 0
      %v4403 = vsel %vm3065, %v4387, 0
      %v4406 = vsel %vm3065, %v4388, 0
      %v4409 = vsel %vm3065, %v4389, 0
      %v4412 = vsel %vm3075, %v4356, 0
      %4414 = vmatpush.bf16.msra.mxu0 0
      %4415 = vmatpush.bf16.msra.mxu0 0
      %4416 = vmatpush.bf16.msra.mxu0 0
      %4417 = vmatpush.bf16.msra.mxu0 0
      %4418 = vmatpush.bf16.msra.mxu0 0
      %4419 = vmatpush.bf16.msra.mxu0 0
      %4420 = vmatpush.bf16.msra.mxu0 %v4412
      %4421 = vmatpush.bf16.msra.mxu0 %v4355
      %4422 = vmatmul.bf16.gmra.mxu0 %v4391
      %v4423 = vpop.f32.mrf.mxu0
      %v4424 = vadd.f32 0.0, %v4423
      %v4425 = vpop.f32.mrf.mxu0
      %v4426 = vadd.f32 0.0, %v4425
      %4427 = vmatmul.bf16.gmra.mxu0 %v4394
      %v4428 = vpop.f32.mrf.mxu0
      %v4429 = vadd.f32 0.0, %v4428
      %v4430 = vpop.f32.mrf.mxu0
      %v4431 = vadd.f32 0.0, %v4430
      %4432 = vmatmul.bf16.gmra.mxu0 %v4397
      %v4433 = vpop.f32.mrf.mxu0
      %v4434 = vadd.f32 0.0, %v4433
      %v4435 = vpop.f32.mrf.mxu0
      %v4436 = vadd.f32 0.0, %v4435
      %4437 = vmatmul.bf16.gmra.mxu0 %v4400
      %v4438 = vpop.f32.mrf.mxu0
      %v4439 = vadd.f32 0.0, %v4438
      %v4440 = vpop.f32.mrf.mxu0
      %v4441 = vadd.f32 0.0, %v4440
      %4442 = vmatmul.bf16.gmra.mxu0 %v4403
      %v4443 = vpop.f32.mrf.mxu0
      %v4444 = vadd.f32 0.0, %v4443
      %v4445 = vpop.f32.mrf.mxu0
      %v4446 = vadd.f32 0.0, %v4445
      %4447 = vmatmul.bf16.gmra.mxu0 %v4406
      %v4448 = vpop.f32.mrf.mxu0
      %v4449 = vadd.f32 0.0, %v4448
      %v4450 = vpop.f32.mrf.mxu0
      %v4451 = vadd.f32 0.0, %v4450
      %4452 = vmatmul.bf16.gmra.mxu0 %v4409
      %v4453 = vpop.f32.mrf.mxu0
      %v4454 = vadd.f32 0.0, %v4453
      %v4455 = vpop.f32.mrf.mxu0
      %4456 = vdwg.mxu0
      %v4457 = vpack.c.bf16 %v4426, %v4424
      %v4458 = vpack.c.bf16 %v4431, %v4429
      %v4459 = vpack.c.bf16 %v4436, %v4434
      %v4460 = vpack.c.bf16 %v4441, %v4439
      %v4461 = vpack.c.bf16 %v4446, %v4444
      %v4462 = vpack.c.bf16 %v4451, %v4449
      %v4463 = vpack.c.bf16 %v4454, %v4454
      %v4464 = vld [vmem:[%s8] sm:$0xff]
      %v4465 = vld [vmem:[%s8 + $0x8] sm:$0xff]
      %v4466 = vld [vmem:[%s8 + $0x10] sm:$0xff]
      %v4467 = vld [vmem:[%s8 + $0x18] sm:$0xff]
      %v4468 = vld [vmem:[%s8 + $0x20] sm:$0xff]
      %v4469 = vld [vmem:[%s8 + $0x28] sm:$0xff]
      %v4470 = vld [vmem:[%s8 + $0x30] sm:$0xff]
      %v4471 = vld [vmem:[%s8 + $0x38] sm:$0xff]
      %v4480 = vunpack.c.l.b16 %v4464
      %v4481 = vunpack.c.h.b16 %v4464
      %v4482 = vunpack.c.l.b16 %v4465
      %v4483 = vunpack.c.h.b16 %v4465
      %v4484 = vunpack.c.l.b16 %v4466
      %v4485 = vunpack.c.h.b16 %v4466
      %v4486 = vunpack.c.l.b16 %v4467
      %v4487 = vunpack.c.h.b16 %v4467
      %v4488 = vunpack.c.l.b16 %v4468
      %v4489 = vunpack.c.h.b16 %v4468
      %v4490 = vunpack.c.l.b16 %v4469
      %v4491 = vunpack.c.h.b16 %v4469
      %v4492 = vunpack.c.l.b16 %v4470
      %v4493 = vunpack.c.h.b16 %v4470
      %v4494 = vunpack.c.l.b16 %v4471
      %v4495 = vunpack.c.h.b16 %v4471
      %v4496 = vpack.c.b16 %v4482, %v4480
      %v4497 = vpack.c.b16 %v4483, %v4481
      %v4498 = vpack.c.b16 %v4486, %v4484
      %v4499 = vpack.c.b16 %v4487, %v4485
      %v4500 = vpack.c.b16 %v4490, %v4488
      %v4501 = vpack.c.b16 %v4491, %v4489
      %v4502 = vpack.c.b16 %v4494, %v4492
      %v4503 = vpack.c.b16 %v4495, %v4493
      %v4513 = vsel %vm770, %v4457, 0
      %v4516 = vsel %vm770, %v4458, 0
      %v4519 = vsel %vm770, %v4459, 0
      %v4522 = vsel %vm770, %v4460, 0
      %v4525 = vsel %vm770, %v4461, 0
      %v4528 = vsel %vm770, %v4462, 0
      %v4531 = vsel %vm770, %v4463, 0
      %4533 = vmatpush.bf16.msra.mxu0 0
      %4534 = vmatpush.bf16.msra.mxu0 0
      %4535 = vmatpush.bf16.msra.mxu0 0
      %4536 = vmatpush.bf16.msra.mxu0 0
      %4537 = vmatpush.bf16.msra.mxu0 %v4502
      %4538 = vmatpush.bf16.msra.mxu0 %v4500
      %4539 = vmatpush.bf16.msra.mxu0 %v4498
      %4540 = vmatpush.bf16.msra.mxu0 %v4496
      %4541 = vmatmul.bf16.gmra.mxu0 %v4513
      %v4542 = vpop.f32.mrf.mxu0
      %v4543 = vadd.f32 0.0, %v4542
      %v4544 = vpop.f32.mrf.mxu0
      %v4545 = vadd.f32 0.0, %v4544
      %4546 = vmatmul.bf16.gmra.mxu0 %v4516
      %v4547 = vpop.f32.mrf.mxu0
      %v4548 = vadd.f32 0.0, %v4547
      %v4549 = vpop.f32.mrf.mxu0
      %v4550 = vadd.f32 0.0, %v4549
      %4551 = vmatmul.bf16.gmra.mxu0 %v4519
      %v4552 = vpop.f32.mrf.mxu0
      %v4553 = vadd.f32 0.0, %v4552
      %v4554 = vpop.f32.mrf.mxu0
      %v4555 = vadd.f32 0.0, %v4554
      %4556 = vmatmul.bf16.gmra.mxu0 %v4522
      %v4557 = vpop.f32.mrf.mxu0
      %v4558 = vadd.f32 0.0, %v4557
      %v4559 = vpop.f32.mrf.mxu0
      %v4560 = vadd.f32 0.0, %v4559
      %4561 = vmatmul.bf16.gmra.mxu0 %v4525
      %v4562 = vpop.f32.mrf.mxu0
      %v4563 = vadd.f32 0.0, %v4562
      %v4564 = vpop.f32.mrf.mxu0
      %v4565 = vadd.f32 0.0, %v4564
      %4566 = vmatmul.bf16.gmra.mxu0 %v4528
      %v4567 = vpop.f32.mrf.mxu0
      %v4568 = vadd.f32 0.0, %v4567
      %v4569 = vpop.f32.mrf.mxu0
      %v4570 = vadd.f32 0.0, %v4569
      %4571 = vmatmul.bf16.gmra.mxu0 %v4531
      %v4572 = vpop.f32.mrf.mxu0
      %v4573 = vadd.f32 0.0, %v4572
      %v4574 = vpop.f32.mrf.mxu0
      %4575 = vdwg.mxu0
      %4576 = vmatpush.bf16.msra.mxu0 0
      %4577 = vmatpush.bf16.msra.mxu0 0
      %4578 = vmatpush.bf16.msra.mxu0 0
      %4579 = vmatpush.bf16.msra.mxu0 0
      %4580 = vmatpush.bf16.msra.mxu0 %v4503
      %4581 = vmatpush.bf16.msra.mxu0 %v4501
      %4582 = vmatpush.bf16.msra.mxu0 %v4499
      %4583 = vmatpush.bf16.msra.mxu0 %v4497
      %4584 = vmatmul.bf16.gmra.mxu0 %v4513
      %v4585 = vpop.f32.mrf.mxu0
      %v4586 = vadd.f32 0.0, %v4585
      %v4587 = vpop.f32.mrf.mxu0
      %v4588 = vadd.f32 0.0, %v4587
      %4589 = vmatmul.bf16.gmra.mxu0 %v4516
      %v4590 = vpop.f32.mrf.mxu0
      %v4591 = vadd.f32 0.0, %v4590
      %v4592 = vpop.f32.mrf.mxu0
      %v4593 = vadd.f32 0.0, %v4592
      %4594 = vmatmul.bf16.gmra.mxu0 %v4519
      %v4595 = vpop.f32.mrf.mxu0
      %v4596 = vadd.f32 0.0, %v4595
      %v4597 = vpop.f32.mrf.mxu0
      %v4598 = vadd.f32 0.0, %v4597
      %4599 = vmatmul.bf16.gmra.mxu0 %v4522
      %v4600 = vpop.f32.mrf.mxu0
      %v4601 = vadd.f32 0.0, %v4600
      %v4602 = vpop.f32.mrf.mxu0
      %v4603 = vadd.f32 0.0, %v4602
      %4604 = vmatmul.bf16.gmra.mxu0 %v4525
      %v4605 = vpop.f32.mrf.mxu0
      %v4606 = vadd.f32 0.0, %v4605
      %v4607 = vpop.f32.mrf.mxu0
      %v4608 = vadd.f32 0.0, %v4607
      %4609 = vmatmul.bf16.gmra.mxu0 %v4528
      %v4610 = vpop.f32.mrf.mxu0
      %v4611 = vadd.f32 0.0, %v4610
      %v4612 = vpop.f32.mrf.mxu0
      %v4613 = vadd.f32 0.0, %v4612
      %4614 = vmatmul.bf16.gmra.mxu0 %v4531
      %v4615 = vpop.f32.mrf.mxu0
      %v4616 = vadd.f32 0.0, %v4615
      %v4617 = vpop.f32.mrf.mxu0
      %4618 = vdwg.mxu0
      %v4627 = vunpack.c.l.b16 %v4334
      %v4628 = vunpack.c.h.b16 %v4334
      %v4629 = vunpack.c.l.b16 %v4335
      %v4630 = vunpack.c.h.b16 %v4335
      %v4631 = vunpack.c.l.b16 %v4336
      %v4632 = vunpack.c.h.b16 %v4336
      %v4633 = vunpack.c.l.b16 %v4337
      %v4634 = vunpack.c.h.b16 %v4337
      %v4635 = vunpack.c.l.b16 %v4338
      %v4636 = vunpack.c.h.b16 %v4338
      %v4637 = vunpack.c.l.b16 %v4339
      %v4638 = vunpack.c.h.b16 %v4339
      %v4639 = vunpack.c.l.b16 %v4340
      %v4640 = vunpack.c.h.b16 %v4340
      %v4641 = vunpack.c.l.b16 %v4341
      %v4642 = vunpack.c.h.b16 %v4341
      %v4643 = vpack.c.b16 %v4629, %v4627
      %v4644 = vpack.c.b16 %v4630, %v4628
      %v4645 = vpack.c.b16 %v4633, %v4631
      %v4646 = vpack.c.b16 %v4634, %v4632
      %v4647 = vpack.c.b16 %v4637, %v4635
      %v4648 = vpack.c.b16 %v4638, %v4636
      %v4649 = vpack.c.b16 %v4641, %v4639
      %v4650 = vpack.c.b16 %v4642, %v4640
      %v4660 = vsel %vm770, %v4327, 0
      %v4663 = vsel %vm770, %v4328, 0
      %v4666 = vsel %vm770, %v4329, 0
      %v4669 = vsel %vm770, %v4330, 0
      %v4672 = vsel %vm770, %v4331, 0
      %v4675 = vsel %vm770, %v4332, 0
      %v4678 = vsel %vm770, %v4333, 0
      %4680 = vmatpush.bf16.msra.mxu0 0
      %4681 = vmatpush.bf16.msra.mxu0 0
      %4682 = vmatpush.bf16.msra.mxu0 0
      %4683 = vmatpush.bf16.msra.mxu0 0
      %4684 = vmatpush.bf16.msra.mxu0 %v4649
      %4685 = vmatpush.bf16.msra.mxu0 %v4647
      %4686 = vmatpush.bf16.msra.mxu0 %v4645
      %4687 = vmatpush.bf16.msra.mxu0 %v4643
      %4688 = vmatmul.bf16.gmra.mxu0 %v4660
      %v4689 = vpop.f32.mrf.mxu0
      %v4690 = vadd.f32 %v4543, %v4689
      %v4691 = vpop.f32.mrf.mxu0
      %v4692 = vadd.f32 %v4545, %v4691
      %4693 = vmatmul.bf16.gmra.mxu0 %v4663
      %v4694 = vpop.f32.mrf.mxu0
      %v4695 = vadd.f32 %v4548, %v4694
      %v4696 = vpop.f32.mrf.mxu0
      %v4697 = vadd.f32 %v4550, %v4696
      %4698 = vmatmul.bf16.gmra.mxu0 %v4666
      %v4699 = vpop.f32.mrf.mxu0
      %v4700 = vadd.f32 %v4553, %v4699
      %v4701 = vpop.f32.mrf.mxu0
      %v4702 = vadd.f32 %v4555, %v4701
      %4703 = vmatmul.bf16.gmra.mxu0 %v4669
      %v4704 = vpop.f32.mrf.mxu0
      %v4705 = vadd.f32 %v4558, %v4704
      %v4706 = vpop.f32.mrf.mxu0
      %v4707 = vadd.f32 %v4560, %v4706
      %4708 = vmatmul.bf16.gmra.mxu0 %v4672
      %v4709 = vpop.f32.mrf.mxu0
      %v4710 = vadd.f32 %v4563, %v4709
      %v4711 = vpop.f32.mrf.mxu0
      %v4712 = vadd.f32 %v4565, %v4711
      %4713 = vmatmul.bf16.gmra.mxu0 %v4675
      %v4714 = vpop.f32.mrf.mxu0
      %v4715 = vadd.f32 %v4568, %v4714
      %v4716 = vpop.f32.mrf.mxu0
      %v4717 = vadd.f32 %v4570, %v4716
      %4718 = vmatmul.bf16.gmra.mxu0 %v4678
      %v4719 = vpop.f32.mrf.mxu0
      %v4720 = vadd.f32 %v4573, %v4719
      %v4721 = vpop.f32.mrf.mxu0
      %4722 = vdwg.mxu0
      %4723 = vmatpush.bf16.msra.mxu0 0
      %4724 = vmatpush.bf16.msra.mxu0 0
      %4725 = vmatpush.bf16.msra.mxu0 0
      %4726 = vmatpush.bf16.msra.mxu0 0
      %4727 = vmatpush.bf16.msra.mxu0 %v4650
      %4728 = vmatpush.bf16.msra.mxu0 %v4648
      %4729 = vmatpush.bf16.msra.mxu0 %v4646
      %4730 = vmatpush.bf16.msra.mxu0 %v4644
      %4731 = vmatmul.bf16.gmra.mxu0 %v4660
      %v4732 = vpop.f32.mrf.mxu0
      %v4733 = vadd.f32 %v4586, %v4732
      %v4734 = vpop.f32.mrf.mxu0
      %v4735 = vadd.f32 %v4588, %v4734
      %4736 = vmatmul.bf16.gmra.mxu0 %v4663
      %v4737 = vpop.f32.mrf.mxu0
      %v4738 = vadd.f32 %v4591, %v4737
      %v4739 = vpop.f32.mrf.mxu0
      %v4740 = vadd.f32 %v4593, %v4739
      %4741 = vmatmul.bf16.gmra.mxu0 %v4666
      %v4742 = vpop.f32.mrf.mxu0
      %v4743 = vadd.f32 %v4596, %v4742
      %v4744 = vpop.f32.mrf.mxu0
      %v4745 = vadd.f32 %v4598, %v4744
      %4746 = vmatmul.bf16.gmra.mxu0 %v4669
      %v4747 = vpop.f32.mrf.mxu0
      %v4748 = vadd.f32 %v4601, %v4747
      %v4749 = vpop.f32.mrf.mxu0
      %v4750 = vadd.f32 %v4603, %v4749
      %4751 = vmatmul.bf16.gmra.mxu0 %v4672
      %v4752 = vpop.f32.mrf.mxu0
      %v4753 = vadd.f32 %v4606, %v4752
      %v4754 = vpop.f32.mrf.mxu0
      %v4755 = vadd.f32 %v4608, %v4754
      %4756 = vmatmul.bf16.gmra.mxu0 %v4675
      %v4757 = vpop.f32.mrf.mxu0
      %v4758 = vadd.f32 %v4611, %v4757
      %v4759 = vpop.f32.mrf.mxu0
      %v4760 = vadd.f32 %v4613, %v4759
      %4761 = vmatmul.bf16.gmra.mxu0 %v4678
      %v4762 = vpop.f32.mrf.mxu0
      %v4763 = vadd.f32 %v4616, %v4762
      %v4764 = vpop.f32.mrf.mxu0
      %4765 = vdwg.mxu0
      %4766 = vst [vmem:[#allocation7] sm:$0xff] %v4690
      %4767 = vst.msk [vmem:[#allocation7 + $0x8] sm:$0xff] %vm770, %v4733
      %4768 = vst [vmem:[#allocation7 + $0x10] sm:$0xff] %v4692
      %4769 = vst.msk [vmem:[#allocation7 + $0x18] sm:$0xff] %vm770, %v4735
      %4770 = vst [vmem:[#allocation7 + $0x20] sm:$0xff] %v4695
      %4771 = vst.msk [vmem:[#allocation7 + $0x28] sm:$0xff] %vm770, %v4738
      %4772 = vst [vmem:[#allocation7 + $0x30] sm:$0xff] %v4697
      %4773 = vst.msk [vmem:[#allocation7 + $0x38] sm:$0xff] %vm770, %v4740
      %4774 = vst [vmem:[#allocation7 + $0x40] sm:$0xff] %v4700
      %4775 = vst.msk [vmem:[#allocation7 + $0x48] sm:$0xff] %vm770, %v4743
      %4776 = vst [vmem:[#allocation7 + $0x50] sm:$0xff] %v4702
      %4777 = vst.msk [vmem:[#allocation7 + $0x58] sm:$0xff] %vm770, %v4745
      %4778 = vst [vmem:[#allocation7 + $0x60] sm:$0xff] %v4705
      %4779 = vst.msk [vmem:[#allocation7 + $0x68] sm:$0xff] %vm770, %v4748
      %4780 = vst [vmem:[#allocation7 + $0x70] sm:$0xff] %v4707
      %4781 = vst.msk [vmem:[#allocation7 + $0x78] sm:$0xff] %vm770, %v4750
      %4782 = vst [vmem:[#allocation7 + $0x80] sm:$0xff] %v4710
      %4783 = vst.msk [vmem:[#allocation7 + $0x88] sm:$0xff] %vm770, %v4753
      %4784 = vst [vmem:[#allocation7 + $0x90] sm:$0xff] %v4712
      %4785 = vst.msk [vmem:[#allocation7 + $0x98] sm:$0xff] %vm770, %v4755
      %4786 = vst [vmem:[#allocation7 + $0xa0] sm:$0xff] %v4715
      %4787 = vst.msk [vmem:[#allocation7 + $0xa8] sm:$0xff] %vm770, %v4758
      %4788 = vst [vmem:[#allocation7 + $0xb0] sm:$0xff] %v4717
      %4789 = vst.msk [vmem:[#allocation7 + $0xb8] sm:$0xff] %vm770, %v4760
      %4790 = vst [vmem:[#allocation7 + $0xc0] sm:$0xf] %v4720
      %4791 = vst.msk [vmem:[#allocation7 + $0xc8] sm:$0xf] %vm1794, %v4763
      %v4792 = vld [vmem:[#allocation7] sm:$0xff]
      %v4793 = vld [vmem:[#allocation7 + $0x8] sm:$0xff]
      %v4794 = vld [vmem:[#allocation7 + $0x10] sm:$0xff]
      %v4795 = vld [vmem:[#allocation7 + $0x18] sm:$0xff]
      %v4796 = vld [vmem:[#allocation7 + $0x20] sm:$0xff]
      %v4797 = vld [vmem:[#allocation7 + $0x28] sm:$0xff]
      %v4798 = vld [vmem:[#allocation7 + $0x30] sm:$0xff]
      %v4799 = vld [vmem:[#allocation7 + $0x38] sm:$0xff]
      %v4800 = vld [vmem:[#allocation7 + $0x40] sm:$0xff]
      %v4801 = vld [vmem:[#allocation7 + $0x48] sm:$0xff]
      %v4802 = vld [vmem:[#allocation7 + $0x50] sm:$0xff]
      %v4803 = vld [vmem:[#allocation7 + $0x58] sm:$0xff]
      %v4804 = vld [vmem:[#allocation7 + $0x60] sm:$0xff]
      %v4805 = vld [vmem:[#allocation7 + $0x68] sm:$0xff]
      %v4806 = vld [vmem:[#allocation7 + $0x70] sm:$0xff]
      %v4807 = vld [vmem:[#allocation7 + $0x78] sm:$0xff]
      %v4808 = vld [vmem:[#allocation7 + $0x80] sm:$0xff]
      %v4809 = vld [vmem:[#allocation7 + $0x88] sm:$0xff]
      %v4810 = vld [vmem:[#allocation7 + $0x90] sm:$0x3f]
      %v4811 = vld [vmem:[#allocation7 + $0x98] sm:$0x3f]
      %v4812 = vpack.c.bf16 %v4794, %v4792
      %v4813 = vpack.c.bf16 %v4795, %v4793
      %v4814 = vpack.c.bf16 %v4798, %v4796
      %v4815 = vpack.c.bf16 %v4799, %v4797
      %v4816 = vpack.c.bf16 %v4802, %v4800
      %v4817 = vpack.c.bf16 %v4803, %v4801
      %v4818 = vpack.c.bf16 %v4806, %v4804
      %v4819 = vpack.c.bf16 %v4807, %v4805
      %v4820 = vpack.c.bf16 %v4810, %v4808
      %v4821 = vpack.c.bf16 %v4811, %v4809
      %v4822 = vld [vmem:[%s19] sm:$0xf]
      %v4823 = vld [vmem:[%s19 + $0x4] sm:$0xf]
      %v4824 = vld [vmem:[%s19 + $0x8] sm:$0xf]
      %v4825 = vld [vmem:[%s19 + $0xc] sm:$0xf]
      %v4826 = vld [vmem:[%s19 + $0x10] sm:$0xf]
      %v4827 = vld [vmem:[%s19 + $0x14] sm:$0xf]
      %v4828 = vld [vmem:[%s19 + $0x18] sm:$0xf]
      %v4829 = vld [vmem:[%s19 + $0x1c] sm:$0xf]
      %v4830 = vld [vmem:[%s19 + $0x20] sm:$0xf]
      %v4831 = vld [vmem:[%s19 + $0x24] sm:$0xf]
      %v4832 = vld [vmem:[%s19 + $0x28] sm:$0xf]
      %v4833 = vld [vmem:[%s19 + $0x2c] sm:$0xf]
      %v4834 = vld [vmem:[%s19 + $0x30] sm:$0xf]
      %v4835 = vld [vmem:[%s19 + $0x34] sm:$0xf]
      %v4836 = vld [vmem:[%s19 + $0x38] sm:$0xf]
      %v4837 = vld [vmem:[%s19 + $0x3c] sm:$0xf]
      %v4838 = vld [vmem:[%s19 + $0x40] sm:$0xf]
      %v4839 = vld [vmem:[%s19 + $0x44] sm:$0xf]
      %v4840 = vld [vmem:[%s19 + $0x48] sm:$0xf]
      %v4841 = vld [vmem:[%s19 + $0x4c] sm:$0xf]
      %v4842 = vld [vmem:[%s19 + $0x50] sm:$0xf]
      %v4843 = vld [vmem:[%s19 + $0x54] sm:$0xf]
      %v4844 = vld [vmem:[%s19 + $0x58] sm:$0xf]
      %v4845 = vld [vmem:[%s19 + $0x5c] sm:$0xf]
      %v4846 = vld [vmem:[#allocation7] sm:$0xfe]
      %v4847 = vld [vmem:[#allocation7 + $0x8] sm:$0xfe]
      %v4848 = vld [vmem:[#allocation7 + $0x90] sm:$0x7f]
      %v4849 = vld [vmem:[#allocation7 + $0x98] sm:$0x7f]
      %v4850 = vpack.c.bf16 %v4794, %v4846
      %v4851 = vpack.c.bf16 %v4795, %v4847
      %v4852 = vpack.c.bf16 %v4848, %v4808
      %v4853 = vpack.c.bf16 %v4849, %v4809
      %s4854 = scalar_lea.vmem %s19, 96
      %v4855 = vld [vmem:[%s4854] sm:$0xf]
      %v4856 = vld [vmem:[%s4854 + $0x4] sm:$0xf]
      %v4857 = vld [vmem:[%s4854 + $0x8] sm:$0xf]
      %v4858 = vld [vmem:[%s4854 + $0xc] sm:$0xf]
      %v4859 = vld [vmem:[%s4854 + $0x10] sm:$0xf]
      %v4860 = vld [vmem:[%s4854 + $0x14] sm:$0xf]
      %v4861 = vld [vmem:[%s4854 + $0x18] sm:$0xf]
      %v4862 = vld [vmem:[%s4854 + $0x1c] sm:$0xf]
      %v4863 = vld [vmem:[%s4854 + $0x20] sm:$0xf]
      %v4864 = vld [vmem:[%s4854 + $0x24] sm:$0xf]
      %v4865 = vld [vmem:[%s4854 + $0x28] sm:$0xf]
      %v4866 = vld [vmem:[%s4854 + $0x2c] sm:$0xf]
      %v4867 = vld [vmem:[%s4854 + $0x30] sm:$0xf]
      %v4868 = vld [vmem:[%s4854 + $0x34] sm:$0xf]
      %v4869 = vld [vmem:[%s4854 + $0x38] sm:$0xf]
      %v4870 = vld [vmem:[%s4854 + $0x3c] sm:$0xf]
      %v4871 = vld [vmem:[%s4854 + $0x40] sm:$0xf]
      %v4872 = vld [vmem:[%s4854 + $0x44] sm:$0xf]
      %v4873 = vld [vmem:[%s4854 + $0x48] sm:$0xf]
      %v4874 = vld [vmem:[%s4854 + $0x4c] sm:$0xf]
      %v4875 = vld [vmem:[%s4854 + $0x50] sm:$0xf]
      %v4876 = vld [vmem:[%s4854 + $0x54] sm:$0xf]
      %v4877 = vld [vmem:[%s4854 + $0x58] sm:$0xf]
      %v4878 = vld [vmem:[%s4854 + $0x5c] sm:$0xf]
      %vm4879 = vsmask.f32 7424
      %v4881 = vshrl.u32 %v4850, 16
      %v4883 = vshll.u32 %v4850, 16
      %v4885 = vrot.slane %v4883, 1
      %v4886 = vor.u32 %v4881, %v4885
      %v4888 = vshll.u32 %v4814, 16
      %v4890 = vrot.slane %v4888, 1
      %v4891 = vsel %vm4879, %v4886, %v4890
      %v4893 = vshrl.u32 %v4851, 16
      %v4895 = vshll.u32 %v4851, 16
      %v4897 = vrot.slane %v4895, 1
      %v4898 = vor.u32 %v4893, %v4897
      %v4900 = vshll.u32 %v4815, 16
      %v4902 = vrot.slane %v4900, 1
      %v4903 = vsel %vm4879, %v4898, %v4902
      %v4904 = vshrl.u32 %v4814, 16
      %v4906 = vor.u32 %v4904, %v4890
      %v4908 = vshll.u32 %v4816, 16
      %v4910 = vrot.slane %v4908, 1
      %v4911 = vsel %vm4879, %v4906, %v4910
      %v4912 = vshrl.u32 %v4815, 16
      %v4914 = vor.u32 %v4912, %v4902
      %v4916 = vshll.u32 %v4817, 16
      %v4918 = vrot.slane %v4916, 1
      %v4919 = vsel %vm4879, %v4914, %v4918
      %v4920 = vshrl.u32 %v4816, 16
      %v4922 = vor.u32 %v4920, %v4910
      %v4924 = vshll.u32 %v4818, 16
      %v4926 = vrot.slane %v4924, 1
      %v4927 = vsel %vm4879, %v4922, %v4926
      %v4928 = vshrl.u32 %v4817, 16
      %v4930 = vor.u32 %v4928, %v4918
      %v4932 = vshll.u32 %v4819, 16
      %v4934 = vrot.slane %v4932, 1
      %v4935 = vsel %vm4879, %v4930, %v4934
      %v4936 = vshrl.u32 %v4818, 16
      %v4938 = vor.u32 %v4936, %v4926
      %v4940 = vshll.u32 %v4852, 16
      %v4942 = vrot.slane %v4940, 1
      %v4943 = vsel %vm4879, %v4938, %v4942
      %v4944 = vshrl.u32 %v4819, 16
      %v4946 = vor.u32 %v4944, %v4934
      %v4948 = vshll.u32 %v4853, 16
      %v4950 = vrot.slane %v4948, 1
      %v4951 = vsel %vm4879, %v4946, %v4950
      %v4952 = vshrl.u32 %v4852, 16
      %v4954 = vor.u32 %v4952, %v4942
      %v4955 = vshrl.u32 %v4853, 16
      %v4957 = vor.u32 %v4955, %v4950
      %v4987 = vunpack.c.l.b16 %v4855
      %v4988 = vunpack.c.l.b16 %v4856
      %v4989 = vunpack.c.l.b16 %v4857
      %v4990 = vunpack.c.l.b16 %v4858
      %v4991 = vunpack.c.l.b16 %v4859
      %v4992 = vunpack.c.l.b16 %v4860
      %v4993 = vunpack.c.l.b16 %v4861
      %v4994 = vunpack.c.l.b16 %v4862
      %v4995 = vunpack.c.l.b16 %v4863
      %v4996 = vunpack.c.l.b16 %v4864
      %v4997 = vunpack.c.l.b16 %v4865
      %v4998 = vunpack.c.l.b16 %v4866
      %v4999 = vunpack.c.l.b16 %v4867
      %v5000 = vunpack.c.l.b16 %v4868
      %v5001 = vunpack.c.l.b16 %v4869
      %v5002 = vunpack.c.l.b16 %v4870
      %v5003 = vunpack.c.l.b16 %v4871
      %v5004 = vunpack.c.l.b16 %v4872
      %v5005 = vunpack.c.l.b16 %v4873
      %v5006 = vunpack.c.l.b16 %v4874
      %v5007 = vunpack.c.l.b16 %v4875
      %v5008 = vunpack.c.l.b16 %v4876
      %v5009 = vunpack.c.l.b16 %v4877
      %v5010 = vunpack.c.l.b16 %v4878
      %v5011 = vpack.c.b16 %v4988, %v4987
      %v5012 = vpack.c.b16 %v4990, %v4989
      %v5013 = vpack.c.b16 %v4992, %v4991
      %v5014 = vpack.c.b16 %v4994, %v4993
      %v5015 = vpack.c.b16 %v4996, %v4995
      %v5016 = vpack.c.b16 %v4998, %v4997
      %v5017 = vpack.c.b16 %v5000, %v4999
      %v5018 = vpack.c.b16 %v5002, %v5001
      %v5019 = vpack.c.b16 %v5004, %v5003
      %v5020 = vpack.c.b16 %v5006, %v5005
      %v5021 = vpack.c.b16 %v5008, %v5007
      %v5022 = vpack.c.b16 %v5010, %v5009
      %v5036 = vsel %vm770, %v4903, 0
      %v5039 = vsel %vm770, %v4919, 0
      %v5042 = vsel %vm770, %v4935, 0
      %v5045 = vsel %vm770, %v4951, 0
      %v5048 = vsel %vm770, %v4957, 0
      %5050 = vmatpush.bf16.msra.mxu0 %v5018
      %5051 = vmatpush.bf16.msra.mxu0 %v5017
      %5052 = vmatpush.bf16.msra.mxu0 %v5016
      %5053 = vmatpush.bf16.msra.mxu0 %v5015
      %5054 = vmatpush.bf16.msra.mxu0 %v5014
      %5055 = vmatpush.bf16.msra.mxu0 %v5013
      %5056 = vmatpush.bf16.msra.mxu0 %v5012
      %5057 = vmatpush.bf16.msra.mxu0 %v5011
      %5058 = vmatmul.bf16.gmra.mxu0 %v4891
      %v5059 = vpop.f32.mrf.mxu0
      %v5060 = vadd.f32 0.0, %v5059
      %v5061 = vpop.f32.mrf.mxu0
      %v5062 = vadd.f32 0.0, %v5061
      %5063 = vmatmul.bf16.gmra.mxu0 %v4911
      %v5064 = vpop.f32.mrf.mxu0
      %v5065 = vadd.f32 0.0, %v5064
      %v5066 = vpop.f32.mrf.mxu0
      %v5067 = vadd.f32 0.0, %v5066
      %5068 = vmatmul.bf16.gmra.mxu0 %v4927
      %v5069 = vpop.f32.mrf.mxu0
      %v5070 = vadd.f32 0.0, %v5069
      %v5071 = vpop.f32.mrf.mxu0
      %v5072 = vadd.f32 0.0, %v5071
      %5073 = vmatmul.bf16.gmra.mxu0 %v4943
      %v5074 = vpop.f32.mrf.mxu0
      %v5075 = vadd.f32 0.0, %v5074
      %v5076 = vpop.f32.mrf.mxu0
      %v5077 = vadd.f32 0.0, %v5076
      %5078 = vmatmul.bf16.gmra.mxu0 %v4954
      %v5079 = vpop.f32.mrf.mxu0
      %v5080 = vadd.f32 0.0, %v5079
      %v5081 = vpop.f32.mrf.mxu0
      %v5082 = vadd.f32 0.0, %v5081
      %5083 = vdwg.mxu0
      %5084 = vmatpush.bf16.msra.mxu0 0
      %5085 = vmatpush.bf16.msra.mxu0 0
      %5086 = vmatpush.bf16.msra.mxu0 0
      %5087 = vmatpush.bf16.msra.mxu0 0
      %5088 = vmatpush.bf16.msra.mxu0 %v5022
      %5089 = vmatpush.bf16.msra.mxu0 %v5021
      %5090 = vmatpush.bf16.msra.mxu0 %v5020
      %5091 = vmatpush.bf16.msra.mxu0 %v5019
      %5092 = vmatmul.bf16.gmra.mxu0 %v5036
      %v5093 = vpop.f32.mrf.mxu0
      %v5094 = vadd.f32 %v5060, %v5093
      %v5095 = vpop.f32.mrf.mxu0
      %v5096 = vadd.f32 %v5062, %v5095
      %5097 = vmatmul.bf16.gmra.mxu0 %v5039
      %v5098 = vpop.f32.mrf.mxu0
      %v5099 = vadd.f32 %v5065, %v5098
      %v5100 = vpop.f32.mrf.mxu0
      %v5101 = vadd.f32 %v5067, %v5100
      %5102 = vmatmul.bf16.gmra.mxu0 %v5042
      %v5103 = vpop.f32.mrf.mxu0
      %v5104 = vadd.f32 %v5070, %v5103
      %v5105 = vpop.f32.mrf.mxu0
      %v5106 = vadd.f32 %v5072, %v5105
      %5107 = vmatmul.bf16.gmra.mxu0 %v5045
      %v5108 = vpop.f32.mrf.mxu0
      %v5109 = vadd.f32 %v5075, %v5108
      %v5110 = vpop.f32.mrf.mxu0
      %v5111 = vadd.f32 %v5077, %v5110
      %5112 = vmatmul.bf16.gmra.mxu0 %v5048
      %v5113 = vpop.f32.mrf.mxu0
      %v5114 = vadd.f32 %v5080, %v5113
      %v5115 = vpop.f32.mrf.mxu0
      %v5116 = vadd.f32 %v5082, %v5115
      %5117 = vdwg.mxu0
      %v5142 = vunpack.c.l.b16 %v4822
      %v5143 = vunpack.c.l.b16 %v4823
      %v5144 = vunpack.c.l.b16 %v4824
      %v5145 = vunpack.c.l.b16 %v4825
      %v5146 = vunpack.c.l.b16 %v4826
      %v5147 = vunpack.c.l.b16 %v4827
      %v5148 = vunpack.c.l.b16 %v4828
      %v5149 = vunpack.c.l.b16 %v4829
      %v5150 = vunpack.c.l.b16 %v4830
      %v5151 = vunpack.c.l.b16 %v4831
      %v5152 = vunpack.c.l.b16 %v4832
      %v5153 = vunpack.c.l.b16 %v4833
      %v5154 = vunpack.c.l.b16 %v4834
      %v5155 = vunpack.c.l.b16 %v4835
      %v5156 = vunpack.c.l.b16 %v4836
      %v5157 = vunpack.c.l.b16 %v4837
      %v5158 = vunpack.c.l.b16 %v4838
      %v5159 = vunpack.c.l.b16 %v4839
      %v5160 = vunpack.c.l.b16 %v4840
      %v5161 = vunpack.c.l.b16 %v4841
      %v5162 = vunpack.c.l.b16 %v4842
      %v5163 = vunpack.c.l.b16 %v4843
      %v5164 = vunpack.c.l.b16 %v4844
      %v5165 = vunpack.c.l.b16 %v4845
      %v5166 = vpack.c.b16 %v5143, %v5142
      %v5167 = vpack.c.b16 %v5145, %v5144
      %v5168 = vpack.c.b16 %v5147, %v5146
      %v5169 = vpack.c.b16 %v5149, %v5148
      %v5170 = vpack.c.b16 %v5151, %v5150
      %v5171 = vpack.c.b16 %v5153, %v5152
      %v5172 = vpack.c.b16 %v5155, %v5154
      %v5173 = vpack.c.b16 %v5157, %v5156
      %v5174 = vpack.c.b16 %v5159, %v5158
      %v5175 = vpack.c.b16 %v5161, %v5160
      %v5176 = vpack.c.b16 %v5163, %v5162
      %v5177 = vpack.c.b16 %v5165, %v5164
      %v5191 = vsel %vm770, %v4813, 0
      %v5193 = vsel %vm770, %v4815, 0
      %v5195 = vsel %vm770, %v4817, 0
      %v5197 = vsel %vm770, %v4819, 0
      %v5200 = vsel %vm770, %v4821, 0
      %5202 = vmatpush.bf16.msra.mxu0 %v5173
      %5203 = vmatpush.bf16.msra.mxu0 %v5172
      %5204 = vmatpush.bf16.msra.mxu0 %v5171
      %5205 = vmatpush.bf16.msra.mxu0 %v5170
      %5206 = vmatpush.bf16.msra.mxu0 %v5169
      %5207 = vmatpush.bf16.msra.mxu0 %v5168
      %5208 = vmatpush.bf16.msra.mxu0 %v5167
      %5209 = vmatpush.bf16.msra.mxu0 %v5166
      %5210 = vmatmul.bf16.gmra.mxu0 %v4812
      %v5211 = vpop.f32.mrf.mxu0
      %v5212 = vadd.f32 %v5094, %v5211
      %v5213 = vpop.f32.mrf.mxu0
      %v5214 = vadd.f32 %v5096, %v5213
      %5215 = vmatmul.bf16.gmra.mxu0 %v4814
      %v5216 = vpop.f32.mrf.mxu0
      %v5217 = vadd.f32 %v5099, %v5216
      %v5218 = vpop.f32.mrf.mxu0
      %v5219 = vadd.f32 %v5101, %v5218
      %5220 = vmatmul.bf16.gmra.mxu0 %v4816
      %v5221 = vpop.f32.mrf.mxu0
      %v5222 = vadd.f32 %v5104, %v5221
      %v5223 = vpop.f32.mrf.mxu0
      %v5224 = vadd.f32 %v5106, %v5223
      %5225 = vmatmul.bf16.gmra.mxu0 %v4818
      %v5226 = vpop.f32.mrf.mxu0
      %v5227 = vadd.f32 %v5109, %v5226
      %v5228 = vpop.f32.mrf.mxu0
      %v5229 = vadd.f32 %v5111, %v5228
      %5230 = vmatmul.bf16.gmra.mxu0 %v4820
      %v5231 = vpop.f32.mrf.mxu0
      %v5232 = vadd.f32 %v5114, %v5231
      %v5233 = vpop.f32.mrf.mxu0
      %v5234 = vadd.f32 %v5116, %v5233
      %5235 = vdwg.mxu0
      %5236 = vmatpush.bf16.msra.mxu0 0
      %5237 = vmatpush.bf16.msra.mxu0 0
      %5238 = vmatpush.bf16.msra.mxu0 0
      %5239 = vmatpush.bf16.msra.mxu0 0
      %5240 = vmatpush.bf16.msra.mxu0 %v5177
      %5241 = vmatpush.bf16.msra.mxu0 %v5176
      %5242 = vmatpush.bf16.msra.mxu0 %v5175
      %5243 = vmatpush.bf16.msra.mxu0 %v5174
      %5244 = vmatmul.bf16.gmra.mxu0 %v5191
      %v5245 = vpop.f32.mrf.mxu0
      %v5246 = vadd.f32 %v5212, %v5245
      %v5247 = vpop.f32.mrf.mxu0
      %v5248 = vadd.f32 %v5214, %v5247
      %5249 = vmatmul.bf16.gmra.mxu0 %v5193
      %v5250 = vpop.f32.mrf.mxu0
      %v5251 = vadd.f32 %v5217, %v5250
      %v5252 = vpop.f32.mrf.mxu0
      %v5253 = vadd.f32 %v5219, %v5252
      %5254 = vmatmul.bf16.gmra.mxu0 %v5195
      %v5255 = vpop.f32.mrf.mxu0
      %v5256 = vadd.f32 %v5222, %v5255
      %v5257 = vpop.f32.mrf.mxu0
      %v5258 = vadd.f32 %v5224, %v5257
      %5259 = vmatmul.bf16.gmra.mxu0 %v5197
      %v5260 = vpop.f32.mrf.mxu0
      %v5261 = vadd.f32 %v5227, %v5260
      %v5262 = vpop.f32.mrf.mxu0
      %v5263 = vadd.f32 %v5229, %v5262
      %5264 = vmatmul.bf16.gmra.mxu0 %v5200
      %v5265 = vpop.f32.mrf.mxu0
      %v5266 = vadd.f32 %v5232, %v5265
      %v5267 = vpop.f32.mrf.mxu0
      %v5268 = vadd.f32 %v5234, %v5267
      %5269 = vdwg.mxu0
      %v5270 = vld [vmem:[#allocation7] sm:$0xfc]
      %v5271 = vld [vmem:[#allocation7 + $0x8] sm:$0xfc]
      %v5272 = vld [vmem:[#allocation7 + $0x90] sm:$0xff]
      %v5273 = vld [vmem:[#allocation7 + $0x98] sm:$0xff]
      %v5274 = vpack.c.bf16 %v4794, %v5270
      %v5275 = vpack.c.bf16 %v4795, %v5271
      %v5276 = vpack.c.bf16 %v5272, %v4808
      %v5277 = vpack.c.bf16 %v5273, %v4809
      %s5278 = scalar_lea.vmem %s19, 192
      %v5279 = vld [vmem:[%s5278] sm:$0xf]
      %v5280 = vld [vmem:[%s5278 + $0x4] sm:$0xf]
      %v5281 = vld [vmem:[%s5278 + $0x8] sm:$0xf]
      %v5282 = vld [vmem:[%s5278 + $0xc] sm:$0xf]
      %v5283 = vld [vmem:[%s5278 + $0x10] sm:$0xf]
      %v5284 = vld [vmem:[%s5278 + $0x14] sm:$0xf]
      %v5285 = vld [vmem:[%s5278 + $0x18] sm:$0xf]
      %v5286 = vld [vmem:[%s5278 + $0x1c] sm:$0xf]
      %v5287 = vld [vmem:[%s5278 + $0x20] sm:$0xf]
      %v5288 = vld [vmem:[%s5278 + $0x24] sm:$0xf]
      %v5289 = vld [vmem:[%s5278 + $0x28] sm:$0xf]
      %v5290 = vld [vmem:[%s5278 + $0x2c] sm:$0xf]
      %v5291 = vld [vmem:[%s5278 + $0x30] sm:$0xf]
      %v5292 = vld [vmem:[%s5278 + $0x34] sm:$0xf]
      %v5293 = vld [vmem:[%s5278 + $0x38] sm:$0xf]
      %v5294 = vld [vmem:[%s5278 + $0x3c] sm:$0xf]
      %v5295 = vld [vmem:[%s5278 + $0x40] sm:$0xf]
      %v5296 = vld [vmem:[%s5278 + $0x44] sm:$0xf]
      %v5297 = vld [vmem:[%s5278 + $0x48] sm:$0xf]
      %v5298 = vld [vmem:[%s5278 + $0x4c] sm:$0xf]
      %v5299 = vld [vmem:[%s5278 + $0x50] sm:$0xf]
      %v5300 = vld [vmem:[%s5278 + $0x54] sm:$0xf]
      %v5301 = vld [vmem:[%s5278 + $0x58] sm:$0xf]
      %v5302 = vld [vmem:[%s5278 + $0x5c] sm:$0xf]
      %vm5313 = vcmask 1046528
      %v5314 = vrot.slane %v5274, 1
      %v5315 = vrot.slane %v4814, 1
      %v5316 = vsel %vm5313, %v5314, %v5315
      %v5317 = vrot.slane %v5275, 1
      %v5318 = vrot.slane %v4815, 1
      %v5319 = vsel %vm5313, %v5317, %v5318
      %v5320 = vrot.slane %v4816, 1
      %v5321 = vsel %vm5313, %v5315, %v5320
      %v5322 = vrot.slane %v4817, 1
      %v5323 = vsel %vm5313, %v5318, %v5322
      %v5324 = vrot.slane %v4818, 1
      %v5325 = vsel %vm5313, %v5320, %v5324
      %v5326 = vrot.slane %v4819, 1
      %v5327 = vsel %vm5313, %v5322, %v5326
      %v5328 = vrot.slane %v5276, 1
      %v5329 = vsel %vm5313, %v5324, %v5328
      %v5330 = vrot.slane %v5277, 1
      %v5331 = vsel %vm5313, %v5326, %v5330
      %v5361 = vunpack.c.l.b16 %v5279
      %v5362 = vunpack.c.l.b16 %v5280
      %v5363 = vunpack.c.l.b16 %v5281
      %v5364 = vunpack.c.l.b16 %v5282
      %v5365 = vunpack.c.l.b16 %v5283
      %v5366 = vunpack.c.l.b16 %v5284
      %v5367 = vunpack.c.l.b16 %v5285
      %v5368 = vunpack.c.l.b16 %v5286
      %v5369 = vunpack.c.l.b16 %v5287
      %v5370 = vunpack.c.l.b16 %v5288
      %v5371 = vunpack.c.l.b16 %v5289
      %v5372 = vunpack.c.l.b16 %v5290
      %v5373 = vunpack.c.l.b16 %v5291
      %v5374 = vunpack.c.l.b16 %v5292
      %v5375 = vunpack.c.l.b16 %v5293
      %v5376 = vunpack.c.l.b16 %v5294
      %v5377 = vunpack.c.l.b16 %v5295
      %v5378 = vunpack.c.l.b16 %v5296
      %v5379 = vunpack.c.l.b16 %v5297
      %v5380 = vunpack.c.l.b16 %v5298
      %v5381 = vunpack.c.l.b16 %v5299
      %v5382 = vunpack.c.l.b16 %v5300
      %v5383 = vunpack.c.l.b16 %v5301
      %v5384 = vunpack.c.l.b16 %v5302
      %v5385 = vpack.c.b16 %v5362, %v5361
      %v5386 = vpack.c.b16 %v5364, %v5363
      %v5387 = vpack.c.b16 %v5366, %v5365
      %v5388 = vpack.c.b16 %v5368, %v5367
      %v5389 = vpack.c.b16 %v5370, %v5369
      %v5390 = vpack.c.b16 %v5372, %v5371
      %v5391 = vpack.c.b16 %v5374, %v5373
      %v5392 = vpack.c.b16 %v5376, %v5375
      %v5393 = vpack.c.b16 %v5378, %v5377
      %v5394 = vpack.c.b16 %v5380, %v5379
      %v5395 = vpack.c.b16 %v5382, %v5381
      %v5396 = vpack.c.b16 %v5384, %v5383
      %v5410 = vsel %vm770, %v5319, 0
      %v5413 = vsel %vm770, %v5323, 0
      %v5416 = vsel %vm770, %v5327, 0
      %v5419 = vsel %vm770, %v5331, 0
      %v5422 = vsel %vm770, %v5330, 0
      %5424 = vmatpush.bf16.msra.mxu0 %v5392
      %5425 = vmatpush.bf16.msra.mxu0 %v5391
      %5426 = vmatpush.bf16.msra.mxu0 %v5390
      %5427 = vmatpush.bf16.msra.mxu0 %v5389
      %5428 = vmatpush.bf16.msra.mxu0 %v5388
      %5429 = vmatpush.bf16.msra.mxu0 %v5387
      %5430 = vmatpush.bf16.msra.mxu0 %v5386
      %5431 = vmatpush.bf16.msra.mxu0 %v5385
      %5432 = vmatmul.bf16.gmra.mxu0 %v5316
      %v5433 = vpop.f32.mrf.mxu0
      %v5434 = vadd.f32 0.0, %v5433
      %v5435 = vpop.f32.mrf.mxu0
      %v5436 = vadd.f32 0.0, %v5435
      %5437 = vmatmul.bf16.gmra.mxu0 %v5321
      %v5438 = vpop.f32.mrf.mxu0
      %v5439 = vadd.f32 0.0, %v5438
      %v5440 = vpop.f32.mrf.mxu0
      %v5441 = vadd.f32 0.0, %v5440
      %5442 = vmatmul.bf16.gmra.mxu0 %v5325
      %v5443 = vpop.f32.mrf.mxu0
      %v5444 = vadd.f32 0.0, %v5443
      %v5445 = vpop.f32.mrf.mxu0
      %v5446 = vadd.f32 0.0, %v5445
      %5447 = vmatmul.bf16.gmra.mxu0 %v5329
      %v5448 = vpop.f32.mrf.mxu0
      %v5449 = vadd.f32 0.0, %v5448
      %v5450 = vpop.f32.mrf.mxu0
      %v5451 = vadd.f32 0.0, %v5450
      %5452 = vmatmul.bf16.gmra.mxu0 %v5328
      %v5453 = vpop.f32.mrf.mxu0
      %v5454 = vadd.f32 0.0, %v5453
      %v5455 = vpop.f32.mrf.mxu0
      %v5456 = vadd.f32 0.0, %v5455
      %5457 = vdwg.mxu0
      %5458 = vmatpush.bf16.msra.mxu0 0
      %5459 = vmatpush.bf16.msra.mxu0 0
      %5460 = vmatpush.bf16.msra.mxu0 0
      %5461 = vmatpush.bf16.msra.mxu0 0
      %5462 = vmatpush.bf16.msra.mxu0 %v5396
      %5463 = vmatpush.bf16.msra.mxu0 %v5395
      %5464 = vmatpush.bf16.msra.mxu0 %v5394
      %5465 = vmatpush.bf16.msra.mxu0 %v5393
      %5466 = vmatmul.bf16.gmra.mxu0 %v5410
      %v5467 = vpop.f32.mrf.mxu0
      %v5468 = vadd.f32 %v5434, %v5467
      %v5469 = vpop.f32.mrf.mxu0
      %v5470 = vadd.f32 %v5436, %v5469
      %5471 = vmatmul.bf16.gmra.mxu0 %v5413
      %v5472 = vpop.f32.mrf.mxu0
      %v5473 = vadd.f32 %v5439, %v5472
      %v5474 = vpop.f32.mrf.mxu0
      %v5475 = vadd.f32 %v5441, %v5474
      %5476 = vmatmul.bf16.gmra.mxu0 %v5416
      %v5477 = vpop.f32.mrf.mxu0
      %v5478 = vadd.f32 %v5444, %v5477
      %v5479 = vpop.f32.mrf.mxu0
      %v5480 = vadd.f32 %v5446, %v5479
      %5481 = vmatmul.bf16.gmra.mxu0 %v5419
      %v5482 = vpop.f32.mrf.mxu0
      %v5483 = vadd.f32 %v5449, %v5482
      %v5484 = vpop.f32.mrf.mxu0
      %v5485 = vadd.f32 %v5451, %v5484
      %5486 = vmatmul.bf16.gmra.mxu0 %v5422
      %v5487 = vpop.f32.mrf.mxu0
      %v5488 = vadd.f32 %v5454, %v5487
      %v5489 = vpop.f32.mrf.mxu0
      %v5490 = vadd.f32 %v5456, %v5489
      %5491 = vdwg.mxu0
      %v5492 = vadd.f32 %v5246, %v5468
      %v5493 = vadd.f32 %v5248, %v5470
      %v5494 = vadd.f32 %v5251, %v5473
      %v5495 = vadd.f32 %v5253, %v5475
      %v5496 = vadd.f32 %v5256, %v5478
      %v5497 = vadd.f32 %v5258, %v5480
      %v5498 = vadd.f32 %v5261, %v5483
      %v5499 = vadd.f32 %v5263, %v5485
      %v5500 = vadd.f32 %v5266, %v5488
      %v5501 = vadd.f32 %v5268, %v5490
      %v5502 = vld [vmem:[#allocation7 + $0x10] sm:$0xfc]
      %v5503 = vld [vmem:[#allocation7 + $0x18] sm:$0xfc]
      %v5504 = vld [vmem:[#allocation7 + $0x20] sm:$0xff]
      %v5505 = vld [vmem:[#allocation7 + $0x28] sm:$0xff]
      %v5506 = vld [vmem:[#allocation7 + $0x30] sm:$0xff]
      %v5507 = vld [vmem:[#allocation7 + $0x38] sm:$0xff]
      %v5508 = vld [vmem:[#allocation7 + $0x40] sm:$0xff]
      %v5509 = vld [vmem:[#allocation7 + $0x48] sm:$0xff]
      %v5510 = vld [vmem:[#allocation7 + $0x50] sm:$0xff]
      %v5511 = vld [vmem:[#allocation7 + $0x58] sm:$0xff]
      %v5512 = vld [vmem:[#allocation7 + $0x60] sm:$0xff]
      %v5513 = vld [vmem:[#allocation7 + $0x68] sm:$0xff]
      %v5514 = vld [vmem:[#allocation7 + $0x70] sm:$0xff]
      %v5515 = vld [vmem:[#allocation7 + $0x78] sm:$0xff]
      %v5516 = vld [vmem:[#allocation7 + $0x80] sm:$0xff]
      %v5517 = vld [vmem:[#allocation7 + $0x88] sm:$0xff]
      %v5518 = vld [vmem:[#allocation7 + $0x90] sm:$0xff]
      %v5519 = vld [vmem:[#allocation7 + $0x98] sm:$0xff]
      %v5520 = vld [vmem:[#allocation7 + $0xa0] sm:$0xff]
      %v5521 = vld [vmem:[#allocation7 + $0xa8] sm:$0xff]
      %v5522 = vpack.c.bf16 %v5504, %v5502
      %v5523 = vpack.c.bf16 %v5505, %v5503
      %v5524 = vpack.c.bf16 %v5508, %v5506
      %v5525 = vpack.c.bf16 %v5509, %v5507
      %v5526 = vpack.c.bf16 %v5512, %v5510
      %v5527 = vpack.c.bf16 %v5513, %v5511
      %v5528 = vpack.c.bf16 %v5516, %v5514
      %v5529 = vpack.c.bf16 %v5517, %v5515
      %v5530 = vpack.c.bf16 %v5520, %v5518
      %v5531 = vpack.c.bf16 %v5521, %v5519
      %s5532 = scalar_lea.vmem %s19, 288
      %v5533 = vld [vmem:[%s5532] sm:$0xf]
      %v5534 = vld [vmem:[%s5532 + $0x4] sm:$0xf]
      %v5535 = vld [vmem:[%s5532 + $0x8] sm:$0xf]
      %v5536 = vld [vmem:[%s5532 + $0xc] sm:$0xf]
      %v5537 = vld [vmem:[%s5532 + $0x10] sm:$0xf]
      %v5538 = vld [vmem:[%s5532 + $0x14] sm:$0xf]
      %v5539 = vld [vmem:[%s5532 + $0x18] sm:$0xf]
      %v5540 = vld [vmem:[%s5532 + $0x1c] sm:$0xf]
      %v5541 = vld [vmem:[%s5532 + $0x20] sm:$0xf]
      %v5542 = vld [vmem:[%s5532 + $0x24] sm:$0xf]
      %v5543 = vld [vmem:[%s5532 + $0x28] sm:$0xf]
      %v5544 = vld [vmem:[%s5532 + $0x2c] sm:$0xf]
      %v5545 = vld [vmem:[%s5532 + $0x30] sm:$0xf]
      %v5546 = vld [vmem:[%s5532 + $0x34] sm:$0xf]
      %v5547 = vld [vmem:[%s5532 + $0x38] sm:$0xf]
      %v5548 = vld [vmem:[%s5532 + $0x3c] sm:$0xf]
      %v5549 = vld [vmem:[%s5532 + $0x40] sm:$0xf]
      %v5550 = vld [vmem:[%s5532 + $0x44] sm:$0xf]
      %v5551 = vld [vmem:[%s5532 + $0x48] sm:$0xf]
      %v5552 = vld [vmem:[%s5532 + $0x4c] sm:$0xf]
      %v5553 = vld [vmem:[%s5532 + $0x50] sm:$0xf]
      %v5554 = vld [vmem:[%s5532 + $0x54] sm:$0xf]
      %v5555 = vld [vmem:[%s5532 + $0x58] sm:$0xf]
      %v5556 = vld [vmem:[%s5532 + $0x5c] sm:$0xf]
      %v5567 = vrot.slane %v5522, 1
      %v5568 = vrot.slane %v5524, 1
      %v5569 = vsel %vm5313, %v5567, %v5568
      %v5570 = vrot.slane %v5523, 1
      %v5571 = vrot.slane %v5525, 1
      %v5572 = vsel %vm5313, %v5570, %v5571
      %v5573 = vrot.slane %v5526, 1
      %v5574 = vsel %vm5313, %v5568, %v5573
      %v5575 = vrot.slane %v5527, 1
      %v5576 = vsel %vm5313, %v5571, %v5575
      %v5577 = vrot.slane %v5528, 1
      %v5578 = vsel %vm5313, %v5573, %v5577
      %v5579 = vrot.slane %v5529, 1
      %v5580 = vsel %vm5313, %v5575, %v5579
      %v5581 = vrot.slane %v5530, 1
      %v5582 = vsel %vm5313, %v5577, %v5581
      %v5583 = vrot.slane %v5531, 1
      %v5584 = vsel %vm5313, %v5579, %v5583
      %v5614 = vunpack.c.l.b16 %v5533
      %v5615 = vunpack.c.l.b16 %v5534
      %v5616 = vunpack.c.l.b16 %v5535
      %v5617 = vunpack.c.l.b16 %v5536
      %v5618 = vunpack.c.l.b16 %v5537
      %v5619 = vunpack.c.l.b16 %v5538
      %v5620 = vunpack.c.l.b16 %v5539
      %v5621 = vunpack.c.l.b16 %v5540
      %v5622 = vunpack.c.l.b16 %v5541
      %v5623 = vunpack.c.l.b16 %v5542
      %v5624 = vunpack.c.l.b16 %v5543
      %v5625 = vunpack.c.l.b16 %v5544
      %v5626 = vunpack.c.l.b16 %v5545
      %v5627 = vunpack.c.l.b16 %v5546
      %v5628 = vunpack.c.l.b16 %v5547
      %v5629 = vunpack.c.l.b16 %v5548
      %v5630 = vunpack.c.l.b16 %v5549
      %v5631 = vunpack.c.l.b16 %v5550
      %v5632 = vunpack.c.l.b16 %v5551
      %v5633 = vunpack.c.l.b16 %v5552
      %v5634 = vunpack.c.l.b16 %v5553
      %v5635 = vunpack.c.l.b16 %v5554
      %v5636 = vunpack.c.l.b16 %v5555
      %v5637 = vunpack.c.l.b16 %v5556
      %v5638 = vpack.c.b16 %v5615, %v5614
      %v5639 = vpack.c.b16 %v5617, %v5616
      %v5640 = vpack.c.b16 %v5619, %v5618
      %v5641 = vpack.c.b16 %v5621, %v5620
      %v5642 = vpack.c.b16 %v5623, %v5622
      %v5643 = vpack.c.b16 %v5625, %v5624
      %v5644 = vpack.c.b16 %v5627, %v5626
      %v5645 = vpack.c.b16 %v5629, %v5628
      %v5646 = vpack.c.b16 %v5631, %v5630
      %v5647 = vpack.c.b16 %v5633, %v5632
      %v5648 = vpack.c.b16 %v5635, %v5634
      %v5649 = vpack.c.b16 %v5637, %v5636
      %v5663 = vsel %vm770, %v5572, 0
      %v5666 = vsel %vm770, %v5576, 0
      %v5669 = vsel %vm770, %v5580, 0
      %v5672 = vsel %vm770, %v5584, 0
      %v5675 = vsel %vm770, %v5583, 0
      %5677 = vmatpush.bf16.msra.mxu0 %v5645
      %5678 = vmatpush.bf16.msra.mxu0 %v5644
      %5679 = vmatpush.bf16.msra.mxu0 %v5643
      %5680 = vmatpush.bf16.msra.mxu0 %v5642
      %5681 = vmatpush.bf16.msra.mxu0 %v5641
      %5682 = vmatpush.bf16.msra.mxu0 %v5640
      %5683 = vmatpush.bf16.msra.mxu0 %v5639
      %5684 = vmatpush.bf16.msra.mxu0 %v5638
      %5685 = vmatmul.bf16.gmra.mxu0 %v5569
      %v5686 = vpop.f32.mrf.mxu0
      %v5687 = vadd.f32 0.0, %v5686
      %v5688 = vpop.f32.mrf.mxu0
      %v5689 = vadd.f32 0.0, %v5688
      %5690 = vmatmul.bf16.gmra.mxu0 %v5574
      %v5691 = vpop.f32.mrf.mxu0
      %v5692 = vadd.f32 0.0, %v5691
      %v5693 = vpop.f32.mrf.mxu0
      %v5694 = vadd.f32 0.0, %v5693
      %5695 = vmatmul.bf16.gmra.mxu0 %v5578
      %v5696 = vpop.f32.mrf.mxu0
      %v5697 = vadd.f32 0.0, %v5696
      %v5698 = vpop.f32.mrf.mxu0
      %v5699 = vadd.f32 0.0, %v5698
      %5700 = vmatmul.bf16.gmra.mxu0 %v5582
      %v5701 = vpop.f32.mrf.mxu0
      %v5702 = vadd.f32 0.0, %v5701
      %v5703 = vpop.f32.mrf.mxu0
      %v5704 = vadd.f32 0.0, %v5703
      %5705 = vmatmul.bf16.gmra.mxu0 %v5581
      %v5706 = vpop.f32.mrf.mxu0
      %v5707 = vadd.f32 0.0, %v5706
      %v5708 = vpop.f32.mrf.mxu0
      %v5709 = vadd.f32 0.0, %v5708
      %5710 = vdwg.mxu0
      %5711 = vmatpush.bf16.msra.mxu0 0
      %5712 = vmatpush.bf16.msra.mxu0 0
      %5713 = vmatpush.bf16.msra.mxu0 0
      %5714 = vmatpush.bf16.msra.mxu0 0
      %5715 = vmatpush.bf16.msra.mxu0 %v5649
      %5716 = vmatpush.bf16.msra.mxu0 %v5648
      %5717 = vmatpush.bf16.msra.mxu0 %v5647
      %5718 = vmatpush.bf16.msra.mxu0 %v5646
      %5719 = vmatmul.bf16.gmra.mxu0 %v5663
      %v5720 = vpop.f32.mrf.mxu0
      %v5721 = vadd.f32 %v5687, %v5720
      %v5722 = vpop.f32.mrf.mxu0
      %v5723 = vadd.f32 %v5689, %v5722
      %5724 = vmatmul.bf16.gmra.mxu0 %v5666
      %v5725 = vpop.f32.mrf.mxu0
      %v5726 = vadd.f32 %v5692, %v5725
      %v5727 = vpop.f32.mrf.mxu0
      %v5728 = vadd.f32 %v5694, %v5727
      %5729 = vmatmul.bf16.gmra.mxu0 %v5669
      %v5730 = vpop.f32.mrf.mxu0
      %v5731 = vadd.f32 %v5697, %v5730
      %v5732 = vpop.f32.mrf.mxu0
      %v5733 = vadd.f32 %v5699, %v5732
      %5734 = vmatmul.bf16.gmra.mxu0 %v5672
      %v5735 = vpop.f32.mrf.mxu0
      %v5736 = vadd.f32 %v5702, %v5735
      %v5737 = vpop.f32.mrf.mxu0
      %v5738 = vadd.f32 %v5704, %v5737
      %5739 = vmatmul.bf16.gmra.mxu0 %v5675
      %v5740 = vpop.f32.mrf.mxu0
      %v5741 = vadd.f32 %v5707, %v5740
      %v5742 = vpop.f32.mrf.mxu0
      %v5743 = vadd.f32 %v5709, %v5742
      %5744 = vdwg.mxu0
      %v5745 = vadd.f32 %v5492, %v5721
      %v5746 = vadd.f32 %v5493, %v5723
      %v5747 = vadd.f32 %v5494, %v5726
      %v5748 = vadd.f32 %v5495, %v5728
      %v5749 = vadd.f32 %v5496, %v5731
      %v5750 = vadd.f32 %v5497, %v5733
      %v5751 = vadd.f32 %v5498, %v5736
      %v5752 = vadd.f32 %v5499, %v5738
      %v5753 = vadd.f32 %v5500, %v5741
      %v5754 = vadd.f32 %v5501, %v5743
      %v5755 = vld [vmem:[#allocation7 + $0x10] sm:$0xf8]
      %v5756 = vld [vmem:[#allocation7 + $0x18] sm:$0xf8]
      %v5757 = vld [vmem:[#allocation7 + $0x20] sm:$0xff]
      %v5758 = vld [vmem:[#allocation7 + $0x28] sm:$0xff]
      %v5759 = vld [vmem:[#allocation7 + $0x30] sm:$0xff]
      %v5760 = vld [vmem:[#allocation7 + $0x38] sm:$0xff]
      %v5761 = vld [vmem:[#allocation7 + $0x40] sm:$0xff]
      %v5762 = vld [vmem:[#allocation7 + $0x48] sm:$0xff]
      %v5763 = vld [vmem:[#allocation7 + $0x50] sm:$0xff]
      %v5764 = vld [vmem:[#allocation7 + $0x58] sm:$0xff]
      %v5765 = vld [vmem:[#allocation7 + $0x60] sm:$0xff]
      %v5766 = vld [vmem:[#allocation7 + $0x68] sm:$0xff]
      %v5767 = vld [vmem:[#allocation7 + $0x70] sm:$0xff]
      %v5768 = vld [vmem:[#allocation7 + $0x78] sm:$0xff]
      %v5769 = vld [vmem:[#allocation7 + $0x80] sm:$0xff]
      %v5770 = vld [vmem:[#allocation7 + $0x88] sm:$0xff]
      %v5771 = vld [vmem:[#allocation7 + $0x90] sm:$0xff]
      %v5772 = vld [vmem:[#allocation7 + $0x98] sm:$0xff]
      %v5773 = vld [vmem:[#allocation7 + $0xa0] sm:$0xff]
      %v5774 = vld [vmem:[#allocation7 + $0xa8] sm:$0xff]
      %v5775 = vld [vmem:[#allocation7 + $0xb0] sm:$0x1]
      %v5776 = vld [vmem:[#allocation7 + $0xb8] sm:$0x1]
      %v5777 = vpack.c.bf16 %v5757, %v5755
      %v5778 = vpack.c.bf16 %v5758, %v5756
      %v5779 = vpack.c.bf16 %v5761, %v5759
      %v5780 = vpack.c.bf16 %v5762, %v5760
      %v5781 = vpack.c.bf16 %v5765, %v5763
      %v5782 = vpack.c.bf16 %v5766, %v5764
      %v5783 = vpack.c.bf16 %v5769, %v5767
      %v5784 = vpack.c.bf16 %v5770, %v5768
      %v5785 = vpack.c.bf16 %v5773, %v5771
      %v5786 = vpack.c.bf16 %v5774, %v5772
      %v5787 = vpack.c.bf16 %v5775, %v5775
      %v5788 = vpack.c.bf16 %v5776, %v5776
      %s5789 = scalar_lea.vmem %s19, 384
      %v5790 = vld [vmem:[%s5789] sm:$0xf]
      %v5791 = vld [vmem:[%s5789 + $0x4] sm:$0xf]
      %v5792 = vld [vmem:[%s5789 + $0x8] sm:$0xf]
      %v5793 = vld [vmem:[%s5789 + $0xc] sm:$0xf]
      %v5794 = vld [vmem:[%s5789 + $0x10] sm:$0xf]
      %v5795 = vld [vmem:[%s5789 + $0x14] sm:$0xf]
      %v5796 = vld [vmem:[%s5789 + $0x18] sm:$0xf]
      %v5797 = vld [vmem:[%s5789 + $0x1c] sm:$0xf]
      %v5798 = vld [vmem:[%s5789 + $0x20] sm:$0xf]
      %v5799 = vld [vmem:[%s5789 + $0x24] sm:$0xf]
      %v5800 = vld [vmem:[%s5789 + $0x28] sm:$0xf]
      %v5801 = vld [vmem:[%s5789 + $0x2c] sm:$0xf]
      %v5802 = vld [vmem:[%s5789 + $0x30] sm:$0xf]
      %v5803 = vld [vmem:[%s5789 + $0x34] sm:$0xf]
      %v5804 = vld [vmem:[%s5789 + $0x38] sm:$0xf]
      %v5805 = vld [vmem:[%s5789 + $0x3c] sm:$0xf]
      %v5806 = vld [vmem:[%s5789 + $0x40] sm:$0xf]
      %v5807 = vld [vmem:[%s5789 + $0x44] sm:$0xf]
      %v5808 = vld [vmem:[%s5789 + $0x48] sm:$0xf]
      %v5809 = vld [vmem:[%s5789 + $0x4c] sm:$0xf]
      %v5810 = vld [vmem:[%s5789 + $0x50] sm:$0xf]
      %v5811 = vld [vmem:[%s5789 + $0x54] sm:$0xf]
      %v5812 = vld [vmem:[%s5789 + $0x58] sm:$0xf]
      %v5813 = vld [vmem:[%s5789 + $0x5c] sm:$0xf]
      %vm5814 = vsmask.f32 6400
      %v5816 = vshrl.u32 %v5777, 16
      %v5818 = vrot.slane %v5816, 1
      %v5819 = vshll.u32 %v5777, 16
      %v5821 = vrot.slane %v5819, 2
      %v5822 = vor.u32 %v5818, %v5821
      %v5824 = vshrl.u32 %v5779, 16
      %v5826 = vrot.slane %v5824, 1
      %v5827 = vshll.u32 %v5779, 16
      %v5829 = vrot.slane %v5827, 2
      %v5830 = vor.u32 %v5826, %v5829
      %v5831 = vsel %vm5814, %v5822, %v5830
      %v5833 = vshrl.u32 %v5778, 16
      %v5835 = vrot.slane %v5833, 1
      %v5836 = vshll.u32 %v5778, 16
      %v5838 = vrot.slane %v5836, 2
      %v5839 = vor.u32 %v5835, %v5838
      %v5841 = vshrl.u32 %v5780, 16
      %v5843 = vrot.slane %v5841, 1
      %v5844 = vshll.u32 %v5780, 16
      %v5846 = vrot.slane %v5844, 2
      %v5847 = vor.u32 %v5843, %v5846
      %v5848 = vsel %vm5814, %v5839, %v5847
      %v5850 = vshrl.u32 %v5781, 16
      %v5852 = vrot.slane %v5850, 1
      %v5853 = vshll.u32 %v5781, 16
      %v5855 = vrot.slane %v5853, 2
      %v5856 = vor.u32 %v5852, %v5855
      %v5857 = vsel %vm5814, %v5830, %v5856
      %v5859 = vshrl.u32 %v5782, 16
      %v5861 = vrot.slane %v5859, 1
      %v5862 = vshll.u32 %v5782, 16
      %v5864 = vrot.slane %v5862, 2
      %v5865 = vor.u32 %v5861, %v5864
      %v5866 = vsel %vm5814, %v5847, %v5865
      %v5868 = vshrl.u32 %v5783, 16
      %v5870 = vrot.slane %v5868, 1
      %v5871 = vshll.u32 %v5783, 16
      %v5873 = vrot.slane %v5871, 2
      %v5874 = vor.u32 %v5870, %v5873
      %v5875 = vsel %vm5814, %v5856, %v5874
      %v5877 = vshrl.u32 %v5784, 16
      %v5879 = vrot.slane %v5877, 1
      %v5880 = vshll.u32 %v5784, 16
      %v5882 = vrot.slane %v5880, 2
      %v5883 = vor.u32 %v5879, %v5882
      %v5884 = vsel %vm5814, %v5865, %v5883
      %v5886 = vshrl.u32 %v5785, 16
      %v5888 = vrot.slane %v5886, 1
      %v5889 = vshll.u32 %v5785, 16
      %v5891 = vrot.slane %v5889, 2
      %v5892 = vor.u32 %v5888, %v5891
      %v5893 = vsel %vm5814, %v5874, %v5892
      %v5895 = vshrl.u32 %v5786, 16
      %v5897 = vrot.slane %v5895, 1
      %v5898 = vshll.u32 %v5786, 16
      %v5900 = vrot.slane %v5898, 2
      %v5901 = vor.u32 %v5897, %v5900
      %v5902 = vsel %vm5814, %v5883, %v5901
      %v5904 = vshll.u32 %v5787, 16
      %v5906 = vrot.slane %v5904, 2
      %v5907 = vsel %vm5814, %v5892, %v5906
      %v5909 = vshll.u32 %v5788, 16
      %v5911 = vrot.slane %v5909, 2
      %v5912 = vsel %vm5814, %v5901, %v5911
      %v5942 = vunpack.c.l.b16 %v5790
      %v5943 = vunpack.c.l.b16 %v5791
      %v5944 = vunpack.c.l.b16 %v5792
      %v5945 = vunpack.c.l.b16 %v5793
      %v5946 = vunpack.c.l.b16 %v5794
      %v5947 = vunpack.c.l.b16 %v5795
      %v5948 = vunpack.c.l.b16 %v5796
      %v5949 = vunpack.c.l.b16 %v5797
      %v5950 = vunpack.c.l.b16 %v5798
      %v5951 = vunpack.c.l.b16 %v5799
      %v5952 = vunpack.c.l.b16 %v5800
      %v5953 = vunpack.c.l.b16 %v5801
      %v5954 = vunpack.c.l.b16 %v5802
      %v5955 = vunpack.c.l.b16 %v5803
      %v5956 = vunpack.c.l.b16 %v5804
      %v5957 = vunpack.c.l.b16 %v5805
      %v5958 = vunpack.c.l.b16 %v5806
      %v5959 = vunpack.c.l.b16 %v5807
      %v5960 = vunpack.c.l.b16 %v5808
      %v5961 = vunpack.c.l.b16 %v5809
      %v5962 = vunpack.c.l.b16 %v5810
      %v5963 = vunpack.c.l.b16 %v5811
      %v5964 = vunpack.c.l.b16 %v5812
      %v5965 = vunpack.c.l.b16 %v5813
      %v5966 = vpack.c.b16 %v5943, %v5942
      %v5967 = vpack.c.b16 %v5945, %v5944
      %v5968 = vpack.c.b16 %v5947, %v5946
      %v5969 = vpack.c.b16 %v5949, %v5948
      %v5970 = vpack.c.b16 %v5951, %v5950
      %v5971 = vpack.c.b16 %v5953, %v5952
      %v5972 = vpack.c.b16 %v5955, %v5954
      %v5973 = vpack.c.b16 %v5957, %v5956
      %v5974 = vpack.c.b16 %v5959, %v5958
      %v5975 = vpack.c.b16 %v5961, %v5960
      %v5976 = vpack.c.b16 %v5963, %v5962
      %v5977 = vpack.c.b16 %v5965, %v5964
      %v5991 = vsel %vm770, %v5848, 0
      %v5994 = vsel %vm770, %v5866, 0
      %v5997 = vsel %vm770, %v5884, 0
      %v6000 = vsel %vm770, %v5902, 0
      %v6003 = vsel %vm770, %v5912, 0
      %6005 = vmatpush.bf16.msra.mxu0 %v5973
      %6006 = vmatpush.bf16.msra.mxu0 %v5972
      %6007 = vmatpush.bf16.msra.mxu0 %v5971
      %6008 = vmatpush.bf16.msra.mxu0 %v5970
      %6009 = vmatpush.bf16.msra.mxu0 %v5969
      %6010 = vmatpush.bf16.msra.mxu0 %v5968
      %6011 = vmatpush.bf16.msra.mxu0 %v5967
      %6012 = vmatpush.bf16.msra.mxu0 %v5966
      %6013 = vmatmul.bf16.gmra.mxu0 %v5831
      %v6014 = vpop.f32.mrf.mxu0
      %v6015 = vadd.f32 0.0, %v6014
      %v6016 = vpop.f32.mrf.mxu0
      %v6017 = vadd.f32 0.0, %v6016
      %6018 = vmatmul.bf16.gmra.mxu0 %v5857
      %v6019 = vpop.f32.mrf.mxu0
      %v6020 = vadd.f32 0.0, %v6019
      %v6021 = vpop.f32.mrf.mxu0
      %v6022 = vadd.f32 0.0, %v6021
      %6023 = vmatmul.bf16.gmra.mxu0 %v5875
      %v6024 = vpop.f32.mrf.mxu0
      %v6025 = vadd.f32 0.0, %v6024
      %v6026 = vpop.f32.mrf.mxu0
      %v6027 = vadd.f32 0.0, %v6026
      %6028 = vmatmul.bf16.gmra.mxu0 %v5893
      %v6029 = vpop.f32.mrf.mxu0
      %v6030 = vadd.f32 0.0, %v6029
      %v6031 = vpop.f32.mrf.mxu0
      %v6032 = vadd.f32 0.0, %v6031
      %6033 = vmatmul.bf16.gmra.mxu0 %v5907
      %v6034 = vpop.f32.mrf.mxu0
      %v6035 = vadd.f32 0.0, %v6034
      %v6036 = vpop.f32.mrf.mxu0
      %v6037 = vadd.f32 0.0, %v6036
      %6038 = vdwg.mxu0
      %6039 = vmatpush.bf16.msra.mxu0 0
      %6040 = vmatpush.bf16.msra.mxu0 0
      %6041 = vmatpush.bf16.msra.mxu0 0
      %6042 = vmatpush.bf16.msra.mxu0 0
      %6043 = vmatpush.bf16.msra.mxu0 %v5977
      %6044 = vmatpush.bf16.msra.mxu0 %v5976
      %6045 = vmatpush.bf16.msra.mxu0 %v5975
      %6046 = vmatpush.bf16.msra.mxu0 %v5974
      %6047 = vmatmul.bf16.gmra.mxu0 %v5991
      %v6048 = vpop.f32.mrf.mxu0
      %v6049 = vadd.f32 %v6015, %v6048
      %v6050 = vpop.f32.mrf.mxu0
      %v6051 = vadd.f32 %v6017, %v6050
      %6052 = vmatmul.bf16.gmra.mxu0 %v5994
      %v6053 = vpop.f32.mrf.mxu0
      %v6054 = vadd.f32 %v6020, %v6053
      %v6055 = vpop.f32.mrf.mxu0
      %v6056 = vadd.f32 %v6022, %v6055
      %6057 = vmatmul.bf16.gmra.mxu0 %v5997
      %v6058 = vpop.f32.mrf.mxu0
      %v6059 = vadd.f32 %v6025, %v6058
      %v6060 = vpop.f32.mrf.mxu0
      %v6061 = vadd.f32 %v6027, %v6060
      %6062 = vmatmul.bf16.gmra.mxu0 %v6000
      %v6063 = vpop.f32.mrf.mxu0
      %v6064 = vadd.f32 %v6030, %v6063
      %v6065 = vpop.f32.mrf.mxu0
      %v6066 = vadd.f32 %v6032, %v6065
      %6067 = vmatmul.bf16.gmra.mxu0 %v6003
      %v6068 = vpop.f32.mrf.mxu0
      %v6069 = vadd.f32 %v6035, %v6068
      %v6070 = vpop.f32.mrf.mxu0
      %v6071 = vadd.f32 %v6037, %v6070
      %6072 = vdwg.mxu0
      %v6073 = vadd.f32 %v5745, %v6049
      %v6074 = vadd.f32 %v5746, %v6051
      %v6075 = vadd.f32 %v5747, %v6054
      %v6076 = vadd.f32 %v5748, %v6056
      %v6077 = vadd.f32 %v5749, %v6059
      %v6078 = vadd.f32 %v5750, %v6061
      %v6079 = vadd.f32 %v5751, %v6064
      %v6080 = vadd.f32 %v5752, %v6066
      %v6081 = vadd.f32 %v5753, %v6069
      %v6082 = vadd.f32 %v5754, %v6071
      %v6083 = vld [vmem:[#allocation7 + $0x10] sm:$0xf0]
      %v6084 = vld [vmem:[#allocation7 + $0x18] sm:$0xf0]
      %v6085 = vld [vmem:[#allocation7 + $0xb0] sm:$0x3]
      %v6086 = vld [vmem:[#allocation7 + $0xb8] sm:$0x3]
      %v6087 = vpack.c.bf16 %v5757, %v6083
      %v6088 = vpack.c.bf16 %v5758, %v6084
      %v6089 = vpack.c.bf16 %v6085, %v6085
      %v6090 = vpack.c.bf16 %v6086, %v6086
      %s6091 = scalar_lea.vmem %s19, 480
      %v6092 = vld [vmem:[%s6091] sm:$0xf]
      %v6093 = vld [vmem:[%s6091 + $0x4] sm:$0xf]
      %v6094 = vld [vmem:[%s6091 + $0x8] sm:$0xf]
      %v6095 = vld [vmem:[%s6091 + $0xc] sm:$0xf]
      %v6096 = vld [vmem:[%s6091 + $0x10] sm:$0xf]
      %v6097 = vld [vmem:[%s6091 + $0x14] sm:$0xf]
      %v6098 = vld [vmem:[%s6091 + $0x18] sm:$0xf]
      %v6099 = vld [vmem:[%s6091 + $0x1c] sm:$0xf]
      %v6100 = vld [vmem:[%s6091 + $0x20] sm:$0xf]
      %v6101 = vld [vmem:[%s6091 + $0x24] sm:$0xf]
      %v6102 = vld [vmem:[%s6091 + $0x28] sm:$0xf]
      %v6103 = vld [vmem:[%s6091 + $0x2c] sm:$0xf]
      %v6104 = vld [vmem:[%s6091 + $0x30] sm:$0xf]
      %v6105 = vld [vmem:[%s6091 + $0x34] sm:$0xf]
      %v6106 = vld [vmem:[%s6091 + $0x38] sm:$0xf]
      %v6107 = vld [vmem:[%s6091 + $0x3c] sm:$0xf]
      %v6108 = vld [vmem:[%s6091 + $0x40] sm:$0xf]
      %v6109 = vld [vmem:[%s6091 + $0x44] sm:$0xf]
      %v6110 = vld [vmem:[%s6091 + $0x48] sm:$0xf]
      %v6111 = vld [vmem:[%s6091 + $0x4c] sm:$0xf]
      %v6112 = vld [vmem:[%s6091 + $0x50] sm:$0xf]
      %v6113 = vld [vmem:[%s6091 + $0x54] sm:$0xf]
      %v6114 = vld [vmem:[%s6091 + $0x58] sm:$0xf]
      %v6115 = vld [vmem:[%s6091 + $0x5c] sm:$0xf]
      %vm6128 = vcmask 1045504
      %v6129 = vrot.slane %v6087, 2
      %v6130 = vrot.slane %v5779, 2
      %v6131 = vsel %vm6128, %v6129, %v6130
      %v6132 = vrot.slane %v6088, 2
      %v6133 = vrot.slane %v5780, 2
      %v6134 = vsel %vm6128, %v6132, %v6133
      %v6135 = vrot.slane %v5781, 2
      %v6136 = vsel %vm6128, %v6130, %v6135
      %v6137 = vrot.slane %v5782, 2
      %v6138 = vsel %vm6128, %v6133, %v6137
      %v6139 = vrot.slane %v5783, 2
      %v6140 = vsel %vm6128, %v6135, %v6139
      %v6141 = vrot.slane %v5784, 2
      %v6142 = vsel %vm6128, %v6137, %v6141
      %v6143 = vrot.slane %v5785, 2
      %v6144 = vsel %vm6128, %v6139, %v6143
      %v6145 = vrot.slane %v5786, 2
      %v6146 = vsel %vm6128, %v6141, %v6145
      %v6147 = vrot.slane %v6089, 2
      %v6148 = vsel %vm6128, %v6143, %v6147
      %v6149 = vrot.slane %v6090, 2
      %v6150 = vsel %vm6128, %v6145, %v6149
      %v6180 = vunpack.c.l.b16 %v6092
      %v6181 = vunpack.c.l.b16 %v6093
      %v6182 = vunpack.c.l.b16 %v6094
      %v6183 = vunpack.c.l.b16 %v6095
      %v6184 = vunpack.c.l.b16 %v6096
      %v6185 = vunpack.c.l.b16 %v6097
      %v6186 = vunpack.c.l.b16 %v6098
      %v6187 = vunpack.c.l.b16 %v6099
      %v6188 = vunpack.c.l.b16 %v6100
      %v6189 = vunpack.c.l.b16 %v6101
      %v6190 = vunpack.c.l.b16 %v6102
      %v6191 = vunpack.c.l.b16 %v6103
      %v6192 = vunpack.c.l.b16 %v6104
      %v6193 = vunpack.c.l.b16 %v6105
      %v6194 = vunpack.c.l.b16 %v6106
      %v6195 = vunpack.c.l.b16 %v6107
      %v6196 = vunpack.c.l.b16 %v6108
      %v6197 = vunpack.c.l.b16 %v6109
      %v6198 = vunpack.c.l.b16 %v6110
      %v6199 = vunpack.c.l.b16 %v6111
      %v6200 = vunpack.c.l.b16 %v6112
      %v6201 = vunpack.c.l.b16 %v6113
      %v6202 = vunpack.c.l.b16 %v6114
      %v6203 = vunpack.c.l.b16 %v6115
      %v6204 = vpack.c.b16 %v6181, %v6180
      %v6205 = vpack.c.b16 %v6183, %v6182
      %v6206 = vpack.c.b16 %v6185, %v6184
      %v6207 = vpack.c.b16 %v6187, %v6186
      %v6208 = vpack.c.b16 %v6189, %v6188
      %v6209 = vpack.c.b16 %v6191, %v6190
      %v6210 = vpack.c.b16 %v6193, %v6192
      %v6211 = vpack.c.b16 %v6195, %v6194
      %v6212 = vpack.c.b16 %v6197, %v6196
      %v6213 = vpack.c.b16 %v6199, %v6198
      %v6214 = vpack.c.b16 %v6201, %v6200
      %v6215 = vpack.c.b16 %v6203, %v6202
      %v6229 = vsel %vm770, %v6134, 0
      %v6232 = vsel %vm770, %v6138, 0
      %v6235 = vsel %vm770, %v6142, 0
      %v6238 = vsel %vm770, %v6146, 0
      %v6241 = vsel %vm770, %v6150, 0
      %6243 = vmatpush.bf16.msra.mxu0 %v6211
      %6244 = vmatpush.bf16.msra.mxu0 %v6210
      %6245 = vmatpush.bf16.msra.mxu0 %v6209
      %6246 = vmatpush.bf16.msra.mxu0 %v6208
      %6247 = vmatpush.bf16.msra.mxu0 %v6207
      %6248 = vmatpush.bf16.msra.mxu0 %v6206
      %6249 = vmatpush.bf16.msra.mxu0 %v6205
      %6250 = vmatpush.bf16.msra.mxu0 %v6204
      %6251 = vmatmul.bf16.gmra.mxu0 %v6131
      %v6252 = vpop.f32.mrf.mxu0
      %v6253 = vadd.f32 0.0, %v6252
      %v6254 = vpop.f32.mrf.mxu0
      %v6255 = vadd.f32 0.0, %v6254
      %6256 = vmatmul.bf16.gmra.mxu0 %v6136
      %v6257 = vpop.f32.mrf.mxu0
      %v6258 = vadd.f32 0.0, %v6257
      %v6259 = vpop.f32.mrf.mxu0
      %v6260 = vadd.f32 0.0, %v6259
      %6261 = vmatmul.bf16.gmra.mxu0 %v6140
      %v6262 = vpop.f32.mrf.mxu0
      %v6263 = vadd.f32 0.0, %v6262
      %v6264 = vpop.f32.mrf.mxu0
      %v6265 = vadd.f32 0.0, %v6264
      %6266 = vmatmul.bf16.gmra.mxu0 %v6144
      %v6267 = vpop.f32.mrf.mxu0
      %v6268 = vadd.f32 0.0, %v6267
      %v6269 = vpop.f32.mrf.mxu0
      %v6270 = vadd.f32 0.0, %v6269
      %6271 = vmatmul.bf16.gmra.mxu0 %v6148
      %v6272 = vpop.f32.mrf.mxu0
      %v6273 = vadd.f32 0.0, %v6272
      %v6274 = vpop.f32.mrf.mxu0
      %v6275 = vadd.f32 0.0, %v6274
      %6276 = vdwg.mxu0
      %6277 = vmatpush.bf16.msra.mxu0 0
      %6278 = vmatpush.bf16.msra.mxu0 0
      %6279 = vmatpush.bf16.msra.mxu0 0
      %6280 = vmatpush.bf16.msra.mxu0 0
      %6281 = vmatpush.bf16.msra.mxu0 %v6215
      %6282 = vmatpush.bf16.msra.mxu0 %v6214
      %6283 = vmatpush.bf16.msra.mxu0 %v6213
      %6284 = vmatpush.bf16.msra.mxu0 %v6212
      %6285 = vmatmul.bf16.gmra.mxu0 %v6229
      %v6286 = vpop.f32.mrf.mxu0
      %v6287 = vadd.f32 %v6253, %v6286
      %v6288 = vpop.f32.mrf.mxu0
      %v6289 = vadd.f32 %v6255, %v6288
      %6290 = vmatmul.bf16.gmra.mxu0 %v6232
      %v6291 = vpop.f32.mrf.mxu0
      %v6292 = vadd.f32 %v6258, %v6291
      %v6293 = vpop.f32.mrf.mxu0
      %v6294 = vadd.f32 %v6260, %v6293
      %6295 = vmatmul.bf16.gmra.mxu0 %v6235
      %v6296 = vpop.f32.mrf.mxu0
      %v6297 = vadd.f32 %v6263, %v6296
      %v6298 = vpop.f32.mrf.mxu0
      %v6299 = vadd.f32 %v6265, %v6298
      %6300 = vmatmul.bf16.gmra.mxu0 %v6238
      %v6301 = vpop.f32.mrf.mxu0
      %v6302 = vadd.f32 %v6268, %v6301
      %v6303 = vpop.f32.mrf.mxu0
      %v6304 = vadd.f32 %v6270, %v6303
      %6305 = vmatmul.bf16.gmra.mxu0 %v6241
      %v6306 = vpop.f32.mrf.mxu0
      %v6307 = vadd.f32 %v6273, %v6306
      %v6308 = vpop.f32.mrf.mxu0
      %v6309 = vadd.f32 %v6275, %v6308
      %6310 = vdwg.mxu0
      %v6311 = vadd.f32 %v6073, %v6287
      %v6312 = vadd.f32 %v6074, %v6289
      %v6313 = vadd.f32 %v6075, %v6292
      %v6314 = vadd.f32 %v6076, %v6294
      %v6315 = vadd.f32 %v6077, %v6297
      %v6316 = vadd.f32 %v6078, %v6299
      %v6317 = vadd.f32 %v6079, %v6302
      %v6318 = vadd.f32 %v6080, %v6304
      %v6319 = vadd.f32 %v6081, %v6307
      %v6320 = vadd.f32 %v6082, %v6309
      %v6321 = vld [vmem:[#allocation7 + $0x20] sm:$0xf0]
      %v6322 = vld [vmem:[#allocation7 + $0x28] sm:$0xf0]
      %v6323 = vld [vmem:[#allocation7 + $0x30] sm:$0xff]
      %v6324 = vld [vmem:[#allocation7 + $0x38] sm:$0xff]
      %v6325 = vld [vmem:[#allocation7 + $0x40] sm:$0xff]
      %v6326 = vld [vmem:[#allocation7 + $0x48] sm:$0xff]
      %v6327 = vld [vmem:[#allocation7 + $0x50] sm:$0xff]
      %v6328 = vld [vmem:[#allocation7 + $0x58] sm:$0xff]
      %v6329 = vld [vmem:[#allocation7 + $0x60] sm:$0xff]
      %v6330 = vld [vmem:[#allocation7 + $0x68] sm:$0xff]
      %v6331 = vld [vmem:[#allocation7 + $0x70] sm:$0xff]
      %v6332 = vld [vmem:[#allocation7 + $0x78] sm:$0xff]
      %v6333 = vld [vmem:[#allocation7 + $0x80] sm:$0xff]
      %v6334 = vld [vmem:[#allocation7 + $0x88] sm:$0xff]
      %v6335 = vld [vmem:[#allocation7 + $0x90] sm:$0xff]
      %v6336 = vld [vmem:[#allocation7 + $0x98] sm:$0xff]
      %v6337 = vld [vmem:[#allocation7 + $0xa0] sm:$0xff]
      %v6338 = vld [vmem:[#allocation7 + $0xa8] sm:$0xff]
      %v6339 = vld [vmem:[#allocation7 + $0xb0] sm:$0xff]
      %v6340 = vld [vmem:[#allocation7 + $0xb8] sm:$0xff]
      %v6341 = vld [vmem:[#allocation7 + $0xc0] sm:$0x3]
      %v6342 = vld [vmem:[#allocation7 + $0xc8] sm:$0x3]
      %v6343 = vpack.c.bf16 %v6323, %v6321
      %v6344 = vpack.c.bf16 %v6324, %v6322
      %v6345 = vpack.c.bf16 %v6327, %v6325
      %v6346 = vpack.c.bf16 %v6328, %v6326
      %v6347 = vpack.c.bf16 %v6331, %v6329
      %v6348 = vpack.c.bf16 %v6332, %v6330
      %v6349 = vpack.c.bf16 %v6335, %v6333
      %v6350 = vpack.c.bf16 %v6336, %v6334
      %v6351 = vpack.c.bf16 %v6339, %v6337
      %v6352 = vpack.c.bf16 %v6340, %v6338
      %v6353 = vpack.c.bf16 %v6341, %v6341
      %v6354 = vpack.c.bf16 %v6342, %v6342
      %s6355 = scalar_lea.vmem %s19, 576
      %v6356 = vld [vmem:[%s6355] sm:$0xf]
      %v6357 = vld [vmem:[%s6355 + $0x4] sm:$0xf]
      %v6358 = vld [vmem:[%s6355 + $0x8] sm:$0xf]
      %v6359 = vld [vmem:[%s6355 + $0xc] sm:$0xf]
      %v6360 = vld [vmem:[%s6355 + $0x10] sm:$0xf]
      %v6361 = vld [vmem:[%s6355 + $0x14] sm:$0xf]
      %v6362 = vld [vmem:[%s6355 + $0x18] sm:$0xf]
      %v6363 = vld [vmem:[%s6355 + $0x1c] sm:$0xf]
      %v6364 = vld [vmem:[%s6355 + $0x20] sm:$0xf]
      %v6365 = vld [vmem:[%s6355 + $0x24] sm:$0xf]
      %v6366 = vld [vmem:[%s6355 + $0x28] sm:$0xf]
      %v6367 = vld [vmem:[%s6355 + $0x2c] sm:$0xf]
      %v6368 = vld [vmem:[%s6355 + $0x30] sm:$0xf]
      %v6369 = vld [vmem:[%s6355 + $0x34] sm:$0xf]
      %v6370 = vld [vmem:[%s6355 + $0x38] sm:$0xf]
      %v6371 = vld [vmem:[%s6355 + $0x3c] sm:$0xf]
      %v6372 = vld [vmem:[%s6355 + $0x40] sm:$0xf]
      %v6373 = vld [vmem:[%s6355 + $0x44] sm:$0xf]
      %v6374 = vld [vmem:[%s6355 + $0x48] sm:$0xf]
      %v6375 = vld [vmem:[%s6355 + $0x4c] sm:$0xf]
      %v6376 = vld [vmem:[%s6355 + $0x50] sm:$0xf]
      %v6377 = vld [vmem:[%s6355 + $0x54] sm:$0xf]
      %v6378 = vld [vmem:[%s6355 + $0x58] sm:$0xf]
      %v6379 = vld [vmem:[%s6355 + $0x5c] sm:$0xf]
      %v6392 = vrot.slane %v6343, 2
      %v6393 = vrot.slane %v6345, 2
      %v6394 = vsel %vm6128, %v6392, %v6393
      %v6395 = vrot.slane %v6344, 2
      %v6396 = vrot.slane %v6346, 2
      %v6397 = vsel %vm6128, %v6395, %v6396
      %v6398 = vrot.slane %v6347, 2
      %v6399 = vsel %vm6128, %v6393, %v6398
      %v6400 = vrot.slane %v6348, 2
      %v6401 = vsel %vm6128, %v6396, %v6400
      %v6402 = vrot.slane %v6349, 2
      %v6403 = vsel %vm6128, %v6398, %v6402
      %v6404 = vrot.slane %v6350, 2
      %v6405 = vsel %vm6128, %v6400, %v6404
      %v6406 = vrot.slane %v6351, 2
      %v6407 = vsel %vm6128, %v6402, %v6406
      %v6408 = vrot.slane %v6352, 2
      %v6409 = vsel %vm6128, %v6404, %v6408
      %v6410 = vrot.slane %v6353, 2
      %v6411 = vsel %vm6128, %v6406, %v6410
      %v6412 = vrot.slane %v6354, 2
      %v6413 = vsel %vm6128, %v6408, %v6412
      %v6443 = vunpack.c.l.b16 %v6356
      %v6444 = vunpack.c.l.b16 %v6357
      %v6445 = vunpack.c.l.b16 %v6358
      %v6446 = vunpack.c.l.b16 %v6359
      %v6447 = vunpack.c.l.b16 %v6360
      %v6448 = vunpack.c.l.b16 %v6361
      %v6449 = vunpack.c.l.b16 %v6362
      %v6450 = vunpack.c.l.b16 %v6363
      %v6451 = vunpack.c.l.b16 %v6364
      %v6452 = vunpack.c.l.b16 %v6365
      %v6453 = vunpack.c.l.b16 %v6366
      %v6454 = vunpack.c.l.b16 %v6367
      %v6455 = vunpack.c.l.b16 %v6368
      %v6456 = vunpack.c.l.b16 %v6369
      %v6457 = vunpack.c.l.b16 %v6370
      %v6458 = vunpack.c.l.b16 %v6371
      %v6459 = vunpack.c.l.b16 %v6372
      %v6460 = vunpack.c.l.b16 %v6373
      %v6461 = vunpack.c.l.b16 %v6374
      %v6462 = vunpack.c.l.b16 %v6375
      %v6463 = vunpack.c.l.b16 %v6376
      %v6464 = vunpack.c.l.b16 %v6377
      %v6465 = vunpack.c.l.b16 %v6378
      %v6466 = vunpack.c.l.b16 %v6379
      %v6467 = vpack.c.b16 %v6444, %v6443
      %v6468 = vpack.c.b16 %v6446, %v6445
      %v6469 = vpack.c.b16 %v6448, %v6447
      %v6470 = vpack.c.b16 %v6450, %v6449
      %v6471 = vpack.c.b16 %v6452, %v6451
      %v6472 = vpack.c.b16 %v6454, %v6453
      %v6473 = vpack.c.b16 %v6456, %v6455
      %v6474 = vpack.c.b16 %v6458, %v6457
      %v6475 = vpack.c.b16 %v6460, %v6459
      %v6476 = vpack.c.b16 %v6462, %v6461
      %v6477 = vpack.c.b16 %v6464, %v6463
      %v6478 = vpack.c.b16 %v6466, %v6465
      %v6492 = vsel %vm770, %v6397, 0
      %v6495 = vsel %vm770, %v6401, 0
      %v6498 = vsel %vm770, %v6405, 0
      %v6501 = vsel %vm770, %v6409, 0
      %v6504 = vsel %vm770, %v6413, 0
      %6506 = vmatpush.bf16.msra.mxu0 %v6474
      %6507 = vmatpush.bf16.msra.mxu0 %v6473
      %6508 = vmatpush.bf16.msra.mxu0 %v6472
      %6509 = vmatpush.bf16.msra.mxu0 %v6471
      %6510 = vmatpush.bf16.msra.mxu0 %v6470
      %6511 = vmatpush.bf16.msra.mxu0 %v6469
      %6512 = vmatpush.bf16.msra.mxu0 %v6468
      %6513 = vmatpush.bf16.msra.mxu0 %v6467
      %6514 = vmatmul.bf16.gmra.mxu0 %v6394
      %v6515 = vpop.f32.mrf.mxu0
      %v6516 = vadd.f32 0.0, %v6515
      %v6517 = vpop.f32.mrf.mxu0
      %v6518 = vadd.f32 0.0, %v6517
      %6519 = vmatmul.bf16.gmra.mxu0 %v6399
      %v6520 = vpop.f32.mrf.mxu0
      %v6521 = vadd.f32 0.0, %v6520
      %v6522 = vpop.f32.mrf.mxu0
      %v6523 = vadd.f32 0.0, %v6522
      %6524 = vmatmul.bf16.gmra.mxu0 %v6403
      %v6525 = vpop.f32.mrf.mxu0
      %v6526 = vadd.f32 0.0, %v6525
      %v6527 = vpop.f32.mrf.mxu0
      %v6528 = vadd.f32 0.0, %v6527
      %6529 = vmatmul.bf16.gmra.mxu0 %v6407
      %v6530 = vpop.f32.mrf.mxu0
      %v6531 = vadd.f32 0.0, %v6530
      %v6532 = vpop.f32.mrf.mxu0
      %v6533 = vadd.f32 0.0, %v6532
      %6534 = vmatmul.bf16.gmra.mxu0 %v6411
      %v6535 = vpop.f32.mrf.mxu0
      %v6536 = vadd.f32 0.0, %v6535
      %v6537 = vpop.f32.mrf.mxu0
      %v6538 = vadd.f32 0.0, %v6537
      %6539 = vdwg.mxu0
      %6540 = vmatpush.bf16.msra.mxu0 0
      %6541 = vmatpush.bf16.msra.mxu0 0
      %6542 = vmatpush.bf16.msra.mxu0 0
      %6543 = vmatpush.bf16.msra.mxu0 0
      %6544 = vmatpush.bf16.msra.mxu0 %v6478
      %6545 = vmatpush.bf16.msra.mxu0 %v6477
      %6546 = vmatpush.bf16.msra.mxu0 %v6476
      %6547 = vmatpush.bf16.msra.mxu0 %v6475
      %6548 = vmatmul.bf16.gmra.mxu0 %v6492
      %v6549 = vpop.f32.mrf.mxu0
      %v6550 = vadd.f32 %v6516, %v6549
      %v6551 = vpop.f32.mrf.mxu0
      %v6552 = vadd.f32 %v6518, %v6551
      %6553 = vmatmul.bf16.gmra.mxu0 %v6495
      %v6554 = vpop.f32.mrf.mxu0
      %v6555 = vadd.f32 %v6521, %v6554
      %v6556 = vpop.f32.mrf.mxu0
      %v6557 = vadd.f32 %v6523, %v6556
      %6558 = vmatmul.bf16.gmra.mxu0 %v6498
      %v6559 = vpop.f32.mrf.mxu0
      %v6560 = vadd.f32 %v6526, %v6559
      %v6561 = vpop.f32.mrf.mxu0
      %v6562 = vadd.f32 %v6528, %v6561
      %6563 = vmatmul.bf16.gmra.mxu0 %v6501
      %v6564 = vpop.f32.mrf.mxu0
      %v6565 = vadd.f32 %v6531, %v6564
      %v6566 = vpop.f32.mrf.mxu0
      %v6567 = vadd.f32 %v6533, %v6566
      %6568 = vmatmul.bf16.gmra.mxu0 %v6504
      %v6569 = vpop.f32.mrf.mxu0
      %v6570 = vadd.f32 %v6536, %v6569
      %v6571 = vpop.f32.mrf.mxu0
      %v6572 = vadd.f32 %v6538, %v6571
      %6573 = vdwg.mxu0
      %v6574 = vadd.f32 %v6311, %v6550
      %v6575 = vadd.f32 %v6312, %v6552
      %v6576 = vadd.f32 %v6313, %v6555
      %v6577 = vadd.f32 %v6314, %v6557
      %v6578 = vadd.f32 %v6315, %v6560
      %v6579 = vadd.f32 %v6316, %v6562
      %v6580 = vadd.f32 %v6317, %v6565
      %v6581 = vadd.f32 %v6318, %v6567
      %v6582 = vadd.f32 %v6319, %v6570
      %v6583 = vadd.f32 %v6320, %v6572
      %v6584 = vld [vmem:[#allocation7 + $0x20] sm:$0xe0]
      %v6585 = vld [vmem:[#allocation7 + $0x28] sm:$0xe0]
      %v6586 = vld [vmem:[#allocation7 + $0xc0] sm:$0x7]
      %v6587 = vld [vmem:[#allocation7 + $0xc8] sm:$0x7]
      %v6588 = vpack.c.bf16 %v6323, %v6584
      %v6589 = vpack.c.bf16 %v6324, %v6585
      %v6590 = vpack.c.bf16 %v6586, %v6586
      %v6591 = vpack.c.bf16 %v6587, %v6587
      %s6592 = scalar_lea.vmem %s19, 672
      %v6593 = vld [vmem:[%s6592] sm:$0xf]
      %v6594 = vld [vmem:[%s6592 + $0x4] sm:$0xf]
      %v6595 = vld [vmem:[%s6592 + $0x8] sm:$0xf]
      %v6596 = vld [vmem:[%s6592 + $0xc] sm:$0xf]
      %v6597 = vld [vmem:[%s6592 + $0x10] sm:$0xf]
      %v6598 = vld [vmem:[%s6592 + $0x14] sm:$0xf]
      %v6599 = vld [vmem:[%s6592 + $0x18] sm:$0xf]
      %v6600 = vld [vmem:[%s6592 + $0x1c] sm:$0xf]
      %v6601 = vld [vmem:[%s6592 + $0x20] sm:$0xf]
      %v6602 = vld [vmem:[%s6592 + $0x24] sm:$0xf]
      %v6603 = vld [vmem:[%s6592 + $0x28] sm:$0xf]
      %v6604 = vld [vmem:[%s6592 + $0x2c] sm:$0xf]
      %v6605 = vld [vmem:[%s6592 + $0x30] sm:$0xf]
      %v6606 = vld [vmem:[%s6592 + $0x34] sm:$0xf]
      %v6607 = vld [vmem:[%s6592 + $0x38] sm:$0xf]
      %v6608 = vld [vmem:[%s6592 + $0x3c] sm:$0xf]
      %v6609 = vld [vmem:[%s6592 + $0x40] sm:$0xf]
      %v6610 = vld [vmem:[%s6592 + $0x44] sm:$0xf]
      %v6611 = vld [vmem:[%s6592 + $0x48] sm:$0xf]
      %v6612 = vld [vmem:[%s6592 + $0x4c] sm:$0xf]
      %v6613 = vld [vmem:[%s6592 + $0x50] sm:$0xf]
      %v6614 = vld [vmem:[%s6592 + $0x54] sm:$0xf]
      %v6615 = vld [vmem:[%s6592 + $0x58] sm:$0xf]
      %v6616 = vld [vmem:[%s6592 + $0x5c] sm:$0xf]
      %vm6617 = vsmask.f32 5376
      %v6619 = vshrl.u32 %v6588, 16
      %v6621 = vrot.slane %v6619, 2
      %v6622 = vshll.u32 %v6588, 16
      %v6624 = vrot.slane %v6622, 3
      %v6625 = vor.u32 %v6621, %v6624
      %v6627 = vshrl.u32 %v6345, 16
      %v6629 = vrot.slane %v6627, 2
      %v6630 = vshll.u32 %v6345, 16
      %v6632 = vrot.slane %v6630, 3
      %v6633 = vor.u32 %v6629, %v6632
      %v6634 = vsel %vm6617, %v6625, %v6633
      %v6636 = vshrl.u32 %v6589, 16
      %v6638 = vrot.slane %v6636, 2
      %v6639 = vshll.u32 %v6589, 16
      %v6641 = vrot.slane %v6639, 3
      %v6642 = vor.u32 %v6638, %v6641
      %v6644 = vshrl.u32 %v6346, 16
      %v6646 = vrot.slane %v6644, 2
      %v6647 = vshll.u32 %v6346, 16
      %v6649 = vrot.slane %v6647, 3
      %v6650 = vor.u32 %v6646, %v6649
      %v6651 = vsel %vm6617, %v6642, %v6650
      %v6653 = vshrl.u32 %v6347, 16
      %v6655 = vrot.slane %v6653, 2
      %v6656 = vshll.u32 %v6347, 16
      %v6658 = vrot.slane %v6656, 3
      %v6659 = vor.u32 %v6655, %v6658
      %v6660 = vsel %vm6617, %v6633, %v6659
      %v6662 = vshrl.u32 %v6348, 16
      %v6664 = vrot.slane %v6662, 2
      %v6665 = vshll.u32 %v6348, 16
      %v6667 = vrot.slane %v6665, 3
      %v6668 = vor.u32 %v6664, %v6667
      %v6669 = vsel %vm6617, %v6650, %v6668
      %v6671 = vshrl.u32 %v6349, 16
      %v6673 = vrot.slane %v6671, 2
      %v6674 = vshll.u32 %v6349, 16
      %v6676 = vrot.slane %v6674, 3
      %v6677 = vor.u32 %v6673, %v6676
      %v6678 = vsel %vm6617, %v6659, %v6677
      %v6680 = vshrl.u32 %v6350, 16
      %v6682 = vrot.slane %v6680, 2
      %v6683 = vshll.u32 %v6350, 16
      %v6685 = vrot.slane %v6683, 3
      %v6686 = vor.u32 %v6682, %v6685
      %v6687 = vsel %vm6617, %v6668, %v6686
      %v6689 = vshrl.u32 %v6351, 16
      %v6691 = vrot.slane %v6689, 2
      %v6692 = vshll.u32 %v6351, 16
      %v6694 = vrot.slane %v6692, 3
      %v6695 = vor.u32 %v6691, %v6694
      %v6696 = vsel %vm6617, %v6677, %v6695
      %v6698 = vshrl.u32 %v6352, 16
      %v6700 = vrot.slane %v6698, 2
      %v6701 = vshll.u32 %v6352, 16
      %v6703 = vrot.slane %v6701, 3
      %v6704 = vor.u32 %v6700, %v6703
      %v6705 = vsel %vm6617, %v6686, %v6704
      %v6707 = vshrl.u32 %v6590, 16
      %v6709 = vrot.slane %v6707, 2
      %v6710 = vshll.u32 %v6590, 16
      %v6712 = vrot.slane %v6710, 3
      %v6713 = vor.u32 %v6709, %v6712
      %v6714 = vsel %vm6617, %v6695, %v6713
      %v6716 = vshrl.u32 %v6591, 16
      %v6718 = vrot.slane %v6716, 2
      %v6719 = vshll.u32 %v6591, 16
      %v6721 = vrot.slane %v6719, 3
      %v6722 = vor.u32 %v6718, %v6721
      %v6723 = vsel %vm6617, %v6704, %v6722
      %v6753 = vunpack.c.l.b16 %v6593
      %v6754 = vunpack.c.l.b16 %v6594
      %v6755 = vunpack.c.l.b16 %v6595
      %v6756 = vunpack.c.l.b16 %v6596
      %v6757 = vunpack.c.l.b16 %v6597
      %v6758 = vunpack.c.l.b16 %v6598
      %v6759 = vunpack.c.l.b16 %v6599
      %v6760 = vunpack.c.l.b16 %v6600
      %v6761 = vunpack.c.l.b16 %v6601
      %v6762 = vunpack.c.l.b16 %v6602
      %v6763 = vunpack.c.l.b16 %v6603
      %v6764 = vunpack.c.l.b16 %v6604
      %v6765 = vunpack.c.l.b16 %v6605
      %v6766 = vunpack.c.l.b16 %v6606
      %v6767 = vunpack.c.l.b16 %v6607
      %v6768 = vunpack.c.l.b16 %v6608
      %v6769 = vunpack.c.l.b16 %v6609
      %v6770 = vunpack.c.l.b16 %v6610
      %v6771 = vunpack.c.l.b16 %v6611
      %v6772 = vunpack.c.l.b16 %v6612
      %v6773 = vunpack.c.l.b16 %v6613
      %v6774 = vunpack.c.l.b16 %v6614
      %v6775 = vunpack.c.l.b16 %v6615
      %v6776 = vunpack.c.l.b16 %v6616
      %v6777 = vpack.c.b16 %v6754, %v6753
      %v6778 = vpack.c.b16 %v6756, %v6755
      %v6779 = vpack.c.b16 %v6758, %v6757
      %v6780 = vpack.c.b16 %v6760, %v6759
      %v6781 = vpack.c.b16 %v6762, %v6761
      %v6782 = vpack.c.b16 %v6764, %v6763
      %v6783 = vpack.c.b16 %v6766, %v6765
      %v6784 = vpack.c.b16 %v6768, %v6767
      %v6785 = vpack.c.b16 %v6770, %v6769
      %v6786 = vpack.c.b16 %v6772, %v6771
      %v6787 = vpack.c.b16 %v6774, %v6773
      %v6788 = vpack.c.b16 %v6776, %v6775
      %v6802 = vsel %vm770, %v6651, 0
      %v6805 = vsel %vm770, %v6669, 0
      %v6808 = vsel %vm770, %v6687, 0
      %v6811 = vsel %vm770, %v6705, 0
      %v6814 = vsel %vm770, %v6723, 0
      %6816 = vmatpush.bf16.msra.mxu0 %v6784
      %6817 = vmatpush.bf16.msra.mxu0 %v6783
      %6818 = vmatpush.bf16.msra.mxu0 %v6782
      %6819 = vmatpush.bf16.msra.mxu0 %v6781
      %6820 = vmatpush.bf16.msra.mxu0 %v6780
      %6821 = vmatpush.bf16.msra.mxu0 %v6779
      %6822 = vmatpush.bf16.msra.mxu0 %v6778
      %6823 = vmatpush.bf16.msra.mxu0 %v6777
      %6824 = vmatmul.bf16.gmra.mxu0 %v6634
      %v6825 = vpop.f32.mrf.mxu0
      %v6826 = vadd.f32 0.0, %v6825
      %v6827 = vpop.f32.mrf.mxu0
      %v6828 = vadd.f32 0.0, %v6827
      %6829 = vmatmul.bf16.gmra.mxu0 %v6660
      %v6830 = vpop.f32.mrf.mxu0
      %v6831 = vadd.f32 0.0, %v6830
      %v6832 = vpop.f32.mrf.mxu0
      %v6833 = vadd.f32 0.0, %v6832
      %6834 = vmatmul.bf16.gmra.mxu0 %v6678
      %v6835 = vpop.f32.mrf.mxu0
      %v6836 = vadd.f32 0.0, %v6835
      %v6837 = vpop.f32.mrf.mxu0
      %v6838 = vadd.f32 0.0, %v6837
      %6839 = vmatmul.bf16.gmra.mxu0 %v6696
      %v6840 = vpop.f32.mrf.mxu0
      %v6841 = vadd.f32 0.0, %v6840
      %v6842 = vpop.f32.mrf.mxu0
      %v6843 = vadd.f32 0.0, %v6842
      %6844 = vmatmul.bf16.gmra.mxu0 %v6714
      %v6845 = vpop.f32.mrf.mxu0
      %v6846 = vadd.f32 0.0, %v6845
      %v6847 = vpop.f32.mrf.mxu0
      %v6848 = vadd.f32 0.0, %v6847
      %6849 = vdwg.mxu0
      %6850 = vmatpush.bf16.msra.mxu0 0
      %6851 = vmatpush.bf16.msra.mxu0 0
      %6852 = vmatpush.bf16.msra.mxu0 0
      %6853 = vmatpush.bf16.msra.mxu0 0
      %6854 = vmatpush.bf16.msra.mxu0 %v6788
      %6855 = vmatpush.bf16.msra.mxu0 %v6787
      %6856 = vmatpush.bf16.msra.mxu0 %v6786
      %6857 = vmatpush.bf16.msra.mxu0 %v6785
      %6858 = vmatmul.bf16.gmra.mxu0 %v6802
      %v6859 = vpop.f32.mrf.mxu0
      %v6860 = vadd.f32 %v6826, %v6859
      %v6861 = vpop.f32.mrf.mxu0
      %v6862 = vadd.f32 %v6828, %v6861
      %6863 = vmatmul.bf16.gmra.mxu0 %v6805
      %v6864 = vpop.f32.mrf.mxu0
      %v6865 = vadd.f32 %v6831, %v6864
      %v6866 = vpop.f32.mrf.mxu0
      %v6867 = vadd.f32 %v6833, %v6866
      %6868 = vmatmul.bf16.gmra.mxu0 %v6808
      %v6869 = vpop.f32.mrf.mxu0
      %v6870 = vadd.f32 %v6836, %v6869
      %v6871 = vpop.f32.mrf.mxu0
      %v6872 = vadd.f32 %v6838, %v6871
      %6873 = vmatmul.bf16.gmra.mxu0 %v6811
      %v6874 = vpop.f32.mrf.mxu0
      %v6875 = vadd.f32 %v6841, %v6874
      %v6876 = vpop.f32.mrf.mxu0
      %v6877 = vadd.f32 %v6843, %v6876
      %6878 = vmatmul.bf16.gmra.mxu0 %v6814
      %v6879 = vpop.f32.mrf.mxu0
      %v6880 = vadd.f32 %v6846, %v6879
      %v6881 = vpop.f32.mrf.mxu0
      %v6882 = vadd.f32 %v6848, %v6881
      %6883 = vdwg.mxu0
      %v6884 = vadd.f32 %v6574, %v6860
      %v6885 = vadd.f32 %v6575, %v6862
      %v6886 = vadd.f32 %v6576, %v6865
      %v6887 = vadd.f32 %v6577, %v6867
      %v6888 = vadd.f32 %v6578, %v6870
      %v6889 = vadd.f32 %v6579, %v6872
      %v6890 = vadd.f32 %v6580, %v6875
      %v6891 = vadd.f32 %v6581, %v6877
      %v6892 = vadd.f32 %v6582, %v6880
      %v6893 = vadd.f32 %v6583, %v6882
      %v6894 = vld [vmem:[#allocation7 + $0x20] sm:$0xc0]
      %v6895 = vld [vmem:[#allocation7 + $0x28] sm:$0xc0]
      %v6896 = vld [vmem:[#allocation7 + $0xc0] sm:$0xf]
      %v6897 = vld [vmem:[#allocation7 + $0xc8] sm:$0xf]
      %v6898 = vpack.c.bf16 %v6323, %v6894
      %v6899 = vpack.c.bf16 %v6324, %v6895
      %v6900 = vpack.c.bf16 %v6896, %v6896
      %v6901 = vpack.c.bf16 %v6897, %v6897
      %s6902 = scalar_lea.vmem %s19, 768
      %v6903 = vld [vmem:[%s6902] sm:$0xf]
      %v6904 = vld [vmem:[%s6902 + $0x4] sm:$0xf]
      %v6905 = vld [vmem:[%s6902 + $0x8] sm:$0xf]
      %v6906 = vld [vmem:[%s6902 + $0xc] sm:$0xf]
      %v6907 = vld [vmem:[%s6902 + $0x10] sm:$0xf]
      %v6908 = vld [vmem:[%s6902 + $0x14] sm:$0xf]
      %v6909 = vld [vmem:[%s6902 + $0x18] sm:$0xf]
      %v6910 = vld [vmem:[%s6902 + $0x1c] sm:$0xf]
      %v6911 = vld [vmem:[%s6902 + $0x20] sm:$0xf]
      %v6912 = vld [vmem:[%s6902 + $0x24] sm:$0xf]
      %v6913 = vld [vmem:[%s6902 + $0x28] sm:$0xf]
      %v6914 = vld [vmem:[%s6902 + $0x2c] sm:$0xf]
      %v6915 = vld [vmem:[%s6902 + $0x30] sm:$0xf]
      %v6916 = vld [vmem:[%s6902 + $0x34] sm:$0xf]
      %v6917 = vld [vmem:[%s6902 + $0x38] sm:$0xf]
      %v6918 = vld [vmem:[%s6902 + $0x3c] sm:$0xf]
      %v6919 = vld [vmem:[%s6902 + $0x40] sm:$0xf]
      %v6920 = vld [vmem:[%s6902 + $0x44] sm:$0xf]
      %v6921 = vld [vmem:[%s6902 + $0x48] sm:$0xf]
      %v6922 = vld [vmem:[%s6902 + $0x4c] sm:$0xf]
      %v6923 = vld [vmem:[%s6902 + $0x50] sm:$0xf]
      %v6924 = vld [vmem:[%s6902 + $0x54] sm:$0xf]
      %v6925 = vld [vmem:[%s6902 + $0x58] sm:$0xf]
      %v6926 = vld [vmem:[%s6902 + $0x5c] sm:$0xf]
      %vm6931 = vcmask 1044480
      %v6932 = vrot.slane %v6898, 3
      %v6933 = vrot.slane %v6345, 3
      %v6934 = vsel %vm6931, %v6932, %v6933
      %v6935 = vrot.slane %v6899, 3
      %v6936 = vrot.slane %v6346, 3
      %v6937 = vsel %vm6931, %v6935, %v6936
      %v6938 = vrot.slane %v6347, 3
      %v6939 = vsel %vm6931, %v6933, %v6938
      %v6940 = vrot.slane %v6348, 3
      %v6941 = vsel %vm6931, %v6936, %v6940
      %v6942 = vrot.slane %v6349, 3
      %v6943 = vsel %vm6931, %v6938, %v6942
      %v6944 = vrot.slane %v6350, 3
      %v6945 = vsel %vm6931, %v6940, %v6944
      %v6946 = vrot.slane %v6351, 3
      %v6947 = vsel %vm6931, %v6942, %v6946
      %v6948 = vrot.slane %v6352, 3
      %v6949 = vsel %vm6931, %v6944, %v6948
      %v6950 = vrot.slane %v6900, 3
      %v6951 = vsel %vm6931, %v6946, %v6950
      %v6952 = vrot.slane %v6901, 3
      %v6953 = vsel %vm6931, %v6948, %v6952
      %v6983 = vunpack.c.l.b16 %v6903
      %v6984 = vunpack.c.l.b16 %v6904
      %v6985 = vunpack.c.l.b16 %v6905
      %v6986 = vunpack.c.l.b16 %v6906
      %v6987 = vunpack.c.l.b16 %v6907
      %v6988 = vunpack.c.l.b16 %v6908
      %v6989 = vunpack.c.l.b16 %v6909
      %v6990 = vunpack.c.l.b16 %v6910
      %v6991 = vunpack.c.l.b16 %v6911
      %v6992 = vunpack.c.l.b16 %v6912
      %v6993 = vunpack.c.l.b16 %v6913
      %v6994 = vunpack.c.l.b16 %v6914
      %v6995 = vunpack.c.l.b16 %v6915
      %v6996 = vunpack.c.l.b16 %v6916
      %v6997 = vunpack.c.l.b16 %v6917
      %v6998 = vunpack.c.l.b16 %v6918
      %v6999 = vunpack.c.l.b16 %v6919
      %v7000 = vunpack.c.l.b16 %v6920
      %v7001 = vunpack.c.l.b16 %v6921
      %v7002 = vunpack.c.l.b16 %v6922
      %v7003 = vunpack.c.l.b16 %v6923
      %v7004 = vunpack.c.l.b16 %v6924
      %v7005 = vunpack.c.l.b16 %v6925
      %v7006 = vunpack.c.l.b16 %v6926
      %v7007 = vpack.c.b16 %v6984, %v6983
      %v7008 = vpack.c.b16 %v6986, %v6985
      %v7009 = vpack.c.b16 %v6988, %v6987
      %v7010 = vpack.c.b16 %v6990, %v6989
      %v7011 = vpack.c.b16 %v6992, %v6991
      %v7012 = vpack.c.b16 %v6994, %v6993
      %v7013 = vpack.c.b16 %v6996, %v6995
      %v7014 = vpack.c.b16 %v6998, %v6997
      %v7015 = vpack.c.b16 %v7000, %v6999
      %v7016 = vpack.c.b16 %v7002, %v7001
      %v7017 = vpack.c.b16 %v7004, %v7003
      %v7018 = vpack.c.b16 %v7006, %v7005
      %v7032 = vsel %vm770, %v6937, 0
      %v7035 = vsel %vm770, %v6941, 0
      %v7038 = vsel %vm770, %v6945, 0
      %v7041 = vsel %vm770, %v6949, 0
      %v7044 = vsel %vm770, %v6953, 0
      %7046 = vmatpush.bf16.msra.mxu0 %v7014
      %7047 = vmatpush.bf16.msra.mxu0 %v7013
      %7048 = vmatpush.bf16.msra.mxu0 %v7012
      %7049 = vmatpush.bf16.msra.mxu0 %v7011
      %7050 = vmatpush.bf16.msra.mxu0 %v7010
      %7051 = vmatpush.bf16.msra.mxu0 %v7009
      %7052 = vmatpush.bf16.msra.mxu0 %v7008
      %7053 = vmatpush.bf16.msra.mxu0 %v7007
      %7054 = vmatmul.bf16.gmra.mxu0 %v6934
      %v7055 = vpop.f32.mrf.mxu0
      %v7056 = vadd.f32 0.0, %v7055
      %v7057 = vpop.f32.mrf.mxu0
      %v7058 = vadd.f32 0.0, %v7057
      %7059 = vmatmul.bf16.gmra.mxu0 %v6939
      %v7060 = vpop.f32.mrf.mxu0
      %v7061 = vadd.f32 0.0, %v7060
      %v7062 = vpop.f32.mrf.mxu0
      %v7063 = vadd.f32 0.0, %v7062
      %7064 = vmatmul.bf16.gmra.mxu0 %v6943
      %v7065 = vpop.f32.mrf.mxu0
      %v7066 = vadd.f32 0.0, %v7065
      %v7067 = vpop.f32.mrf.mxu0
      %v7068 = vadd.f32 0.0, %v7067
      %7069 = vmatmul.bf16.gmra.mxu0 %v6947
      %v7070 = vpop.f32.mrf.mxu0
      %v7071 = vadd.f32 0.0, %v7070
      %v7072 = vpop.f32.mrf.mxu0
      %v7073 = vadd.f32 0.0, %v7072
      %7074 = vmatmul.bf16.gmra.mxu0 %v6951
      %v7075 = vpop.f32.mrf.mxu0
      %v7076 = vadd.f32 0.0, %v7075
      %v7077 = vpop.f32.mrf.mxu0
      %v7078 = vadd.f32 0.0, %v7077
      %7079 = vdwg.mxu0
      %7080 = vmatpush.bf16.msra.mxu0 0
      %7081 = vmatpush.bf16.msra.mxu0 0
      %7082 = vmatpush.bf16.msra.mxu0 0
      %7083 = vmatpush.bf16.msra.mxu0 0
      %7084 = vmatpush.bf16.msra.mxu0 %v7018
      %7085 = vmatpush.bf16.msra.mxu0 %v7017
      %7086 = vmatpush.bf16.msra.mxu0 %v7016
      %7087 = vmatpush.bf16.msra.mxu0 %v7015
      %7088 = vmatmul.bf16.gmra.mxu0 %v7032
      %v7089 = vpop.f32.mrf.mxu0
      %v7090 = vadd.f32 %v7056, %v7089
      %v7091 = vpop.f32.mrf.mxu0
      %v7092 = vadd.f32 %v7058, %v7091
      %7093 = vmatmul.bf16.gmra.mxu0 %v7035
      %v7094 = vpop.f32.mrf.mxu0
      %v7095 = vadd.f32 %v7061, %v7094
      %v7096 = vpop.f32.mrf.mxu0
      %v7097 = vadd.f32 %v7063, %v7096
      %7098 = vmatmul.bf16.gmra.mxu0 %v7038
      %v7099 = vpop.f32.mrf.mxu0
      %v7100 = vadd.f32 %v7066, %v7099
      %v7101 = vpop.f32.mrf.mxu0
      %v7102 = vadd.f32 %v7068, %v7101
      %7103 = vmatmul.bf16.gmra.mxu0 %v7041
      %v7104 = vpop.f32.mrf.mxu0
      %v7105 = vadd.f32 %v7071, %v7104
      %v7106 = vpop.f32.mrf.mxu0
      %v7107 = vadd.f32 %v7073, %v7106
      %7108 = vmatmul.bf16.gmra.mxu0 %v7044
      %v7109 = vpop.f32.mrf.mxu0
      %v7110 = vadd.f32 %v7076, %v7109
      %v7111 = vpop.f32.mrf.mxu0
      %v7112 = vadd.f32 %v7078, %v7111
      %7113 = vdwg.mxu0
      %v7114 = vadd.f32 %v6884, %v7090
      %v7115 = vadd.f32 %v6885, %v7092
      %v7116 = vadd.f32 %v6886, %v7095
      %v7117 = vadd.f32 %v6887, %v7097
      %v7118 = vadd.f32 %v6888, %v7100
      %v7119 = vadd.f32 %v6889, %v7102
      %v7120 = vadd.f32 %v6890, %v7105
      %v7121 = vadd.f32 %v6891, %v7107
      %v7122 = vadd.f32 %v6892, %v7110
      %v7123 = vadd.f32 %v6893, %v7112
      %v7124 = vld [vmem:[%s20] sm:$0x1]
      %v7126 = vperm.slane %v7124, 0
      %v7128 = vadd.f32 %v7114, %v7126
      %v7129 = vadd.f32 %v7115, %v7126
      %v7130 = vadd.f32 %v7116, %v7126
      %v7131 = vadd.f32 %v7117, %v7126
      %v7132 = vadd.f32 %v7118, %v7126
      %v7133 = vadd.f32 %v7119, %v7126
      %v7134 = vadd.f32 %v7120, %v7126
      %v7135 = vadd.f32 %v7121, %v7126
      %v7136 = vadd.f32 %v7122, %v7126
      %v7137 = vadd.f32 %v7123, %v7126
      %v7138 = vmax.f32 %v7128, 0.0
      %v7139 = vmax.f32 %v7129, 0.0
      %v7140 = vmax.f32 %v7130, 0.0
      %v7141 = vmax.f32 %v7131, 0.0
      %v7142 = vmax.f32 %v7132, 0.0
      %v7143 = vmax.f32 %v7133, 0.0
      %v7144 = vmax.f32 %v7134, 0.0
      %v7145 = vmax.f32 %v7135, 0.0
      %v7146 = vmax.f32 %v7136, 0.0
      %v7147 = vmax.f32 %v7137, 0.0
      %v7148 = vld [vmem:[%s2] sm:$0xf]
      %v7149 = vld [vmem:[%s2 + $0x4] sm:$0xf]
      %v7150 = vld [vmem:[%s2 + $0x8] sm:$0xf]
      %v7151 = vld [vmem:[%s2 + $0xc] sm:$0xf]
      %v7152 = vld [vmem:[%s2 + $0x10] sm:$0xf]
      %v7153 = vld [vmem:[%s2 + $0x14] sm:$0xf]
      %v7154 = vld [vmem:[%s2 + $0x18] sm:$0xf]
      %v7155 = vld [vmem:[%s2 + $0x1c] sm:$0xf]
      %v7156 = vld [vmem:[%s2 + $0x20] sm:$0xf]
      %v7157 = vld [vmem:[%s2 + $0x24] sm:$0xf]
      %v7158 = vld [vmem:[%s2 + $0x28] sm:$0xf]
      %v7159 = vld [vmem:[%s2 + $0x2c] sm:$0xf]
      %v7160 = vld [vmem:[%s2 + $0x30] sm:$0x3]
      %v7161 = vpack.c.bf16 %v7139, %v7138
      %v7162 = vpack.c.bf16 %v7141, %v7140
      %v7163 = vpack.c.bf16 %v7143, %v7142
      %v7164 = vpack.c.bf16 %v7145, %v7144
      %v7165 = vpack.c.bf16 %v7147, %v7146
      %v7179 = vunpack.c.l.b16 %v7148
      %v7180 = vunpack.c.l.b16 %v7149
      %v7181 = vunpack.c.l.b16 %v7150
      %v7182 = vunpack.c.l.b16 %v7151
      %v7183 = vunpack.c.l.b16 %v7152
      %v7184 = vunpack.c.l.b16 %v7153
      %v7185 = vunpack.c.l.b16 %v7154
      %v7186 = vunpack.c.l.b16 %v7155
      %v7187 = vunpack.c.l.b16 %v7156
      %v7188 = vunpack.c.l.b16 %v7157
      %v7189 = vunpack.c.l.b16 %v7158
      %v7190 = vunpack.c.l.b16 %v7159
      %v7191 = vunpack.c.l.b16 %v7160
      %v7192 = vpack.c.b16 %v7180, %v7179
      %v7193 = vpack.c.b16 %v7182, %v7181
      %v7194 = vpack.c.b16 %v7184, %v7183
      %v7195 = vpack.c.b16 %v7186, %v7185
      %v7196 = vpack.c.b16 %v7188, %v7187
      %v7197 = vpack.c.b16 %v7190, %v7189
      %v7198 = vpack.c.b16 %v7191, %v7191
      %v7200 = vsel %vm1713, %v7192, 0
      %v7203 = vsel %vm1713, %v7193, 0
      %v7206 = vsel %vm1713, %v7194, 0
      %v7209 = vsel %vm1713, %v7195, 0
      %v7212 = vsel %vm1713, %v7196, 0
      %v7215 = vsel %vm1713, %v7197, 0
      %v7218 = vsel %vm1713, %v7198, 0
      %v7221 = vsel %vm1735, %v7165, 0
      %7223 = vmatpush.bf16.msra.mxu0 0
      %7224 = vmatpush.bf16.msra.mxu0 0
      %7225 = vmatpush.bf16.msra.mxu0 0
      %7226 = vmatpush.bf16.msra.mxu0 %v7221
      %7227 = vmatpush.bf16.msra.mxu0 %v7164
      %7228 = vmatpush.bf16.msra.mxu0 %v7163
      %7229 = vmatpush.bf16.msra.mxu0 %v7162
      %7230 = vmatpush.bf16.msra.mxu0 %v7161
      %7231 = vmatmul.bf16.gmra.mxu0 %v7200
      %v7232 = vpop.f32.mrf.mxu0
      %v7233 = vadd.f32 0.0, %v7232
      %v7234 = vpop.f32.mrf.mxu0
      %v7235 = vadd.f32 0.0, %v7234
      %7236 = vmatmul.bf16.gmra.mxu0 %v7203
      %v7237 = vpop.f32.mrf.mxu0
      %v7238 = vadd.f32 0.0, %v7237
      %v7239 = vpop.f32.mrf.mxu0
      %v7240 = vadd.f32 0.0, %v7239
      %7241 = vmatmul.bf16.gmra.mxu0 %v7206
      %v7242 = vpop.f32.mrf.mxu0
      %v7243 = vadd.f32 0.0, %v7242
      %v7244 = vpop.f32.mrf.mxu0
      %v7245 = vadd.f32 0.0, %v7244
      %7246 = vmatmul.bf16.gmra.mxu0 %v7209
      %v7247 = vpop.f32.mrf.mxu0
      %v7248 = vadd.f32 0.0, %v7247
      %v7249 = vpop.f32.mrf.mxu0
      %v7250 = vadd.f32 0.0, %v7249
      %7251 = vmatmul.bf16.gmra.mxu0 %v7212
      %v7252 = vpop.f32.mrf.mxu0
      %v7253 = vadd.f32 0.0, %v7252
      %v7254 = vpop.f32.mrf.mxu0
      %v7255 = vadd.f32 0.0, %v7254
      %7256 = vmatmul.bf16.gmra.mxu0 %v7215
      %v7257 = vpop.f32.mrf.mxu0
      %v7258 = vadd.f32 0.0, %v7257
      %v7259 = vpop.f32.mrf.mxu0
      %v7260 = vadd.f32 0.0, %v7259
      %7261 = vmatmul.bf16.gmra.mxu0 %v7218
      %v7262 = vpop.f32.mrf.mxu0
      %v7263 = vadd.f32 0.0, %v7262
      %v7264 = vpop.f32.mrf.mxu0
      %7265 = vdwg.mxu0
      %7266 = vst.msk [vmem:[#allocation8] sm:$0xff] %vm770, %v7233
      %7267 = vst.msk [vmem:[#allocation8 + $0x8] sm:$0xff] %vm770, %v7235
      %7268 = vst.msk [vmem:[#allocation8 + $0x10] sm:$0xff] %vm770, %v7238
      %7269 = vst.msk [vmem:[#allocation8 + $0x18] sm:$0xff] %vm770, %v7240
      %7270 = vst.msk [vmem:[#allocation8 + $0x20] sm:$0xff] %vm770, %v7243
      %7271 = vst.msk [vmem:[#allocation8 + $0x28] sm:$0xff] %vm770, %v7245
      %7272 = vst.msk [vmem:[#allocation8 + $0x30] sm:$0xff] %vm770, %v7248
      %7273 = vst.msk [vmem:[#allocation8 + $0x38] sm:$0xff] %vm770, %v7250
      %7274 = vst.msk [vmem:[#allocation8 + $0x40] sm:$0xff] %vm770, %v7253
      %7275 = vst.msk [vmem:[#allocation8 + $0x48] sm:$0xff] %vm770, %v7255
      %7276 = vst.msk [vmem:[#allocation8 + $0x50] sm:$0xff] %vm770, %v7258
      %7277 = vst.msk [vmem:[#allocation8 + $0x58] sm:$0xff] %vm770, %v7260
      %7278 = vst.msk [vmem:[#allocation8 + $0x60] sm:$0xf] %vm1794, %v7263
      %v7279 = vld [vmem:[#allocation8] sm:$0xff]
      %v7280 = vld [vmem:[#allocation8 + $0x8] sm:$0xff]
      %v7281 = vld [vmem:[#allocation8 + $0x10] sm:$0xff]
      %v7282 = vld [vmem:[#allocation8 + $0x18] sm:$0xff]
      %v7283 = vld [vmem:[#allocation8 + $0x20] sm:$0xff]
      %v7284 = vld [vmem:[#allocation8 + $0x28] sm:$0xff]
      %v7285 = vld [vmem:[#allocation8 + $0x30] sm:$0xff]
      %v7286 = vld [vmem:[#allocation8 + $0x38] sm:$0xff]
      %v7287 = vld [vmem:[#allocation8 + $0x40] sm:$0xff]
      %v7288 = vld [vmem:[#allocation8 + $0x48] sm:$0x3f]
      %v7289 = vpack.c.bf16 %v7280, %v7279
      %v7290 = vpack.c.bf16 %v7282, %v7281
      %v7291 = vpack.c.bf16 %v7284, %v7283
      %v7292 = vpack.c.bf16 %v7286, %v7285
      %v7293 = vpack.c.bf16 %v7288, %v7287
      %v7294 = vld [vmem:[%s21] sm:$0xf]
      %v7295 = vld [vmem:[%s21 + $0x4] sm:$0xf]
      %v7296 = vld [vmem:[%s21 + $0x8] sm:$0xf]
      %v7297 = vld [vmem:[%s21 + $0xc] sm:$0xf]
      %v7298 = vld [vmem:[%s21 + $0x10] sm:$0xf]
      %v7299 = vld [vmem:[%s21 + $0x14] sm:$0xf]
      %v7300 = vld [vmem:[%s21 + $0x18] sm:$0xf]
      %v7301 = vld [vmem:[%s21 + $0x1c] sm:$0xf]
      %v7302 = vld [vmem:[#allocation8 + $0x1] sm:$0xff]
      %v7303 = vld [vmem:[#allocation8 + $0x9] sm:$0xff]
      %v7304 = vld [vmem:[#allocation8 + $0x11] sm:$0xff]
      %v7305 = vld [vmem:[#allocation8 + $0x19] sm:$0xff]
      %v7306 = vld [vmem:[#allocation8 + $0x21] sm:$0xff]
      %v7307 = vld [vmem:[#allocation8 + $0x29] sm:$0xff]
      %v7308 = vld [vmem:[#allocation8 + $0x31] sm:$0xff]
      %v7309 = vld [vmem:[#allocation8 + $0x39] sm:$0xff]
      %v7310 = vld [vmem:[#allocation8 + $0x41] sm:$0xff]
      %v7311 = vld [vmem:[#allocation8 + $0x49] sm:$0x3f]
      %v7312 = vpack.c.bf16 %v7303, %v7302
      %v7313 = vpack.c.bf16 %v7305, %v7304
      %v7314 = vpack.c.bf16 %v7307, %v7306
      %v7315 = vpack.c.bf16 %v7309, %v7308
      %v7316 = vpack.c.bf16 %v7311, %v7310
      %s7317 = scalar_lea.vmem %s21, 32
      %v7318 = vld [vmem:[%s7317] sm:$0xf]
      %v7319 = vld [vmem:[%s7317 + $0x4] sm:$0xf]
      %v7320 = vld [vmem:[%s7317 + $0x8] sm:$0xf]
      %v7321 = vld [vmem:[%s7317 + $0xc] sm:$0xf]
      %v7322 = vld [vmem:[%s7317 + $0x10] sm:$0xf]
      %v7323 = vld [vmem:[%s7317 + $0x14] sm:$0xf]
      %v7324 = vld [vmem:[%s7317 + $0x18] sm:$0xf]
      %v7325 = vld [vmem:[%s7317 + $0x1c] sm:$0xf]
      %v7334 = vunpack.c.l.b16 %v7318
      %v7335 = vunpack.c.l.b16 %v7319
      %v7336 = vunpack.c.l.b16 %v7320
      %v7337 = vunpack.c.l.b16 %v7321
      %v7338 = vunpack.c.l.b16 %v7322
      %v7339 = vunpack.c.l.b16 %v7323
      %v7340 = vunpack.c.l.b16 %v7324
      %v7341 = vunpack.c.l.b16 %v7325
      %v7342 = vpack.c.b16 %v7335, %v7334
      %v7343 = vpack.c.b16 %v7337, %v7336
      %v7344 = vpack.c.b16 %v7339, %v7338
      %v7345 = vpack.c.b16 %v7341, %v7340
      %v7351 = vsel %vm770, %v7312, 0
      %v7354 = vsel %vm770, %v7313, 0
      %v7357 = vsel %vm770, %v7314, 0
      %v7360 = vsel %vm770, %v7315, 0
      %v7363 = vsel %vm770, %v7316, 0
      %7365 = vmatpush.bf16.msra.mxu0 0
      %7366 = vmatpush.bf16.msra.mxu0 0
      %7367 = vmatpush.bf16.msra.mxu0 0
      %7368 = vmatpush.bf16.msra.mxu0 0
      %7369 = vmatpush.bf16.msra.mxu0 %v7345
      %7370 = vmatpush.bf16.msra.mxu0 %v7344
      %7371 = vmatpush.bf16.msra.mxu0 %v7343
      %7372 = vmatpush.bf16.msra.mxu0 %v7342
      %7373 = vmatmul.bf16.gmra.mxu0 %v7351
      %v7374 = vpop.f32.mrf.mxu0
      %v7375 = vadd.f32 0.0, %v7374
      %v7376 = vpop.f32.mrf.mxu0
      %v7377 = vadd.f32 0.0, %v7376
      %7378 = vmatmul.bf16.gmra.mxu0 %v7354
      %v7379 = vpop.f32.mrf.mxu0
      %v7380 = vadd.f32 0.0, %v7379
      %v7381 = vpop.f32.mrf.mxu0
      %v7382 = vadd.f32 0.0, %v7381
      %7383 = vmatmul.bf16.gmra.mxu0 %v7357
      %v7384 = vpop.f32.mrf.mxu0
      %v7385 = vadd.f32 0.0, %v7384
      %v7386 = vpop.f32.mrf.mxu0
      %v7387 = vadd.f32 0.0, %v7386
      %7388 = vmatmul.bf16.gmra.mxu0 %v7360
      %v7389 = vpop.f32.mrf.mxu0
      %v7390 = vadd.f32 0.0, %v7389
      %v7391 = vpop.f32.mrf.mxu0
      %v7392 = vadd.f32 0.0, %v7391
      %7393 = vmatmul.bf16.gmra.mxu0 %v7363
      %v7394 = vpop.f32.mrf.mxu0
      %v7395 = vadd.f32 0.0, %v7394
      %v7396 = vpop.f32.mrf.mxu0
      %v7397 = vadd.f32 0.0, %v7396
      %7398 = vdwg.mxu0
      %v7407 = vunpack.c.l.b16 %v7294
      %v7408 = vunpack.c.l.b16 %v7295
      %v7409 = vunpack.c.l.b16 %v7296
      %v7410 = vunpack.c.l.b16 %v7297
      %v7411 = vunpack.c.l.b16 %v7298
      %v7412 = vunpack.c.l.b16 %v7299
      %v7413 = vunpack.c.l.b16 %v7300
      %v7414 = vunpack.c.l.b16 %v7301
      %v7415 = vpack.c.b16 %v7408, %v7407
      %v7416 = vpack.c.b16 %v7410, %v7409
      %v7417 = vpack.c.b16 %v7412, %v7411
      %v7418 = vpack.c.b16 %v7414, %v7413
      %v7424 = vsel %vm770, %v7289, 0
      %v7427 = vsel %vm770, %v7290, 0
      %v7430 = vsel %vm770, %v7291, 0
      %v7433 = vsel %vm770, %v7292, 0
      %v7436 = vsel %vm770, %v7293, 0
      %7438 = vmatpush.bf16.msra.mxu0 0
      %7439 = vmatpush.bf16.msra.mxu0 0
      %7440 = vmatpush.bf16.msra.mxu0 0
      %7441 = vmatpush.bf16.msra.mxu0 0
      %7442 = vmatpush.bf16.msra.mxu0 %v7418
      %7443 = vmatpush.bf16.msra.mxu0 %v7417
      %7444 = vmatpush.bf16.msra.mxu0 %v7416
      %7445 = vmatpush.bf16.msra.mxu0 %v7415
      %7446 = vmatmul.bf16.gmra.mxu0 %v7424
      %v7447 = vpop.f32.mrf.mxu0
      %v7448 = vadd.f32 %v7375, %v7447
      %v7449 = vpop.f32.mrf.mxu0
      %v7450 = vadd.f32 %v7377, %v7449
      %7451 = vmatmul.bf16.gmra.mxu0 %v7427
      %v7452 = vpop.f32.mrf.mxu0
      %v7453 = vadd.f32 %v7380, %v7452
      %v7454 = vpop.f32.mrf.mxu0
      %v7455 = vadd.f32 %v7382, %v7454
      %7456 = vmatmul.bf16.gmra.mxu0 %v7430
      %v7457 = vpop.f32.mrf.mxu0
      %v7458 = vadd.f32 %v7385, %v7457
      %v7459 = vpop.f32.mrf.mxu0
      %v7460 = vadd.f32 %v7387, %v7459
      %7461 = vmatmul.bf16.gmra.mxu0 %v7433
      %v7462 = vpop.f32.mrf.mxu0
      %v7463 = vadd.f32 %v7390, %v7462
      %v7464 = vpop.f32.mrf.mxu0
      %v7465 = vadd.f32 %v7392, %v7464
      %7466 = vmatmul.bf16.gmra.mxu0 %v7436
      %v7467 = vpop.f32.mrf.mxu0
      %v7468 = vadd.f32 %v7395, %v7467
      %v7469 = vpop.f32.mrf.mxu0
      %v7470 = vadd.f32 %v7397, %v7469
      %7471 = vdwg.mxu0
      %v7472 = vld [vmem:[#allocation8 + $0x2] sm:$0xff]
      %v7473 = vld [vmem:[#allocation8 + $0xa] sm:$0xff]
      %v7474 = vld [vmem:[#allocation8 + $0x12] sm:$0xff]
      %v7475 = vld [vmem:[#allocation8 + $0x1a] sm:$0xff]
      %v7476 = vld [vmem:[#allocation8 + $0x22] sm:$0xff]
      %v7477 = vld [vmem:[#allocation8 + $0x2a] sm:$0xff]
      %v7478 = vld [vmem:[#allocation8 + $0x32] sm:$0xff]
      %v7479 = vld [vmem:[#allocation8 + $0x3a] sm:$0xff]
      %v7480 = vld [vmem:[#allocation8 + $0x42] sm:$0xff]
      %v7481 = vld [vmem:[#allocation8 + $0x4a] sm:$0x3f]
      %v7482 = vpack.c.bf16 %v7473, %v7472
      %v7483 = vpack.c.bf16 %v7475, %v7474
      %v7484 = vpack.c.bf16 %v7477, %v7476
      %v7485 = vpack.c.bf16 %v7479, %v7478
      %v7486 = vpack.c.bf16 %v7481, %v7480
      %s7487 = scalar_lea.vmem %s21, 64
      %v7488 = vld [vmem:[%s7487] sm:$0xf]
      %v7489 = vld [vmem:[%s7487 + $0x4] sm:$0xf]
      %v7490 = vld [vmem:[%s7487 + $0x8] sm:$0xf]
      %v7491 = vld [vmem:[%s7487 + $0xc] sm:$0xf]
      %v7492 = vld [vmem:[%s7487 + $0x10] sm:$0xf]
      %v7493 = vld [vmem:[%s7487 + $0x14] sm:$0xf]
      %v7494 = vld [vmem:[%s7487 + $0x18] sm:$0xf]
      %v7495 = vld [vmem:[%s7487 + $0x1c] sm:$0xf]
      %v7504 = vunpack.c.l.b16 %v7488
      %v7505 = vunpack.c.l.b16 %v7489
      %v7506 = vunpack.c.l.b16 %v7490
      %v7507 = vunpack.c.l.b16 %v7491
      %v7508 = vunpack.c.l.b16 %v7492
      %v7509 = vunpack.c.l.b16 %v7493
      %v7510 = vunpack.c.l.b16 %v7494
      %v7511 = vunpack.c.l.b16 %v7495
      %v7512 = vpack.c.b16 %v7505, %v7504
      %v7513 = vpack.c.b16 %v7507, %v7506
      %v7514 = vpack.c.b16 %v7509, %v7508
      %v7515 = vpack.c.b16 %v7511, %v7510
      %v7521 = vsel %vm770, %v7482, 0
      %v7524 = vsel %vm770, %v7483, 0
      %v7527 = vsel %vm770, %v7484, 0
      %v7530 = vsel %vm770, %v7485, 0
      %v7533 = vsel %vm770, %v7486, 0
      %7535 = vmatpush.bf16.msra.mxu0 0
      %7536 = vmatpush.bf16.msra.mxu0 0
      %7537 = vmatpush.bf16.msra.mxu0 0
      %7538 = vmatpush.bf16.msra.mxu0 0
      %7539 = vmatpush.bf16.msra.mxu0 %v7515
      %7540 = vmatpush.bf16.msra.mxu0 %v7514
      %7541 = vmatpush.bf16.msra.mxu0 %v7513
      %7542 = vmatpush.bf16.msra.mxu0 %v7512
      %7543 = vmatmul.bf16.gmra.mxu0 %v7521
      %v7544 = vpop.f32.mrf.mxu0
      %v7545 = vadd.f32 0.0, %v7544
      %v7546 = vpop.f32.mrf.mxu0
      %v7547 = vadd.f32 0.0, %v7546
      %7548 = vmatmul.bf16.gmra.mxu0 %v7524
      %v7549 = vpop.f32.mrf.mxu0
      %v7550 = vadd.f32 0.0, %v7549
      %v7551 = vpop.f32.mrf.mxu0
      %v7552 = vadd.f32 0.0, %v7551
      %7553 = vmatmul.bf16.gmra.mxu0 %v7527
      %v7554 = vpop.f32.mrf.mxu0
      %v7555 = vadd.f32 0.0, %v7554
      %v7556 = vpop.f32.mrf.mxu0
      %v7557 = vadd.f32 0.0, %v7556
      %7558 = vmatmul.bf16.gmra.mxu0 %v7530
      %v7559 = vpop.f32.mrf.mxu0
      %v7560 = vadd.f32 0.0, %v7559
      %v7561 = vpop.f32.mrf.mxu0
      %v7562 = vadd.f32 0.0, %v7561
      %7563 = vmatmul.bf16.gmra.mxu0 %v7533
      %v7564 = vpop.f32.mrf.mxu0
      %v7565 = vadd.f32 0.0, %v7564
      %v7566 = vpop.f32.mrf.mxu0
      %v7567 = vadd.f32 0.0, %v7566
      %7568 = vdwg.mxu0
      %v7569 = vadd.f32 %v7448, %v7545
      %v7570 = vadd.f32 %v7450, %v7547
      %v7571 = vadd.f32 %v7453, %v7550
      %v7572 = vadd.f32 %v7455, %v7552
      %v7573 = vadd.f32 %v7458, %v7555
      %v7574 = vadd.f32 %v7460, %v7557
      %v7575 = vadd.f32 %v7463, %v7560
      %v7576 = vadd.f32 %v7465, %v7562
      %v7577 = vadd.f32 %v7468, %v7565
      %v7578 = vadd.f32 %v7470, %v7567
      %v7579 = vld [vmem:[#allocation8 + $0xa] sm:$0xff]
      %v7580 = vld [vmem:[#allocation8 + $0x12] sm:$0xff]
      %v7581 = vld [vmem:[#allocation8 + $0x1a] sm:$0xff]
      %v7582 = vld [vmem:[#allocation8 + $0x22] sm:$0xff]
      %v7583 = vld [vmem:[#allocation8 + $0x2a] sm:$0xff]
      %v7584 = vld [vmem:[#allocation8 + $0x32] sm:$0xff]
      %v7585 = vld [vmem:[#allocation8 + $0x3a] sm:$0xff]
      %v7586 = vld [vmem:[#allocation8 + $0x42] sm:$0xff]
      %v7587 = vld [vmem:[#allocation8 + $0x4a] sm:$0xff]
      %v7588 = vld [vmem:[#allocation8 + $0x52] sm:$0x3f]
      %v7589 = vpack.c.bf16 %v7580, %v7579
      %v7590 = vpack.c.bf16 %v7582, %v7581
      %v7591 = vpack.c.bf16 %v7584, %v7583
      %v7592 = vpack.c.bf16 %v7586, %v7585
      %v7593 = vpack.c.bf16 %v7588, %v7587
      %s7594 = scalar_lea.vmem %s21, 96
      %v7595 = vld [vmem:[%s7594] sm:$0xf]
      %v7596 = vld [vmem:[%s7594 + $0x4] sm:$0xf]
      %v7597 = vld [vmem:[%s7594 + $0x8] sm:$0xf]
      %v7598 = vld [vmem:[%s7594 + $0xc] sm:$0xf]
      %v7599 = vld [vmem:[%s7594 + $0x10] sm:$0xf]
      %v7600 = vld [vmem:[%s7594 + $0x14] sm:$0xf]
      %v7601 = vld [vmem:[%s7594 + $0x18] sm:$0xf]
      %v7602 = vld [vmem:[%s7594 + $0x1c] sm:$0xf]
      %v7611 = vunpack.c.l.b16 %v7595
      %v7612 = vunpack.c.l.b16 %v7596
      %v7613 = vunpack.c.l.b16 %v7597
      %v7614 = vunpack.c.l.b16 %v7598
      %v7615 = vunpack.c.l.b16 %v7599
      %v7616 = vunpack.c.l.b16 %v7600
      %v7617 = vunpack.c.l.b16 %v7601
      %v7618 = vunpack.c.l.b16 %v7602
      %v7619 = vpack.c.b16 %v7612, %v7611
      %v7620 = vpack.c.b16 %v7614, %v7613
      %v7621 = vpack.c.b16 %v7616, %v7615
      %v7622 = vpack.c.b16 %v7618, %v7617
      %v7628 = vsel %vm770, %v7589, 0
      %v7631 = vsel %vm770, %v7590, 0
      %v7634 = vsel %vm770, %v7591, 0
      %v7637 = vsel %vm770, %v7592, 0
      %v7640 = vsel %vm770, %v7593, 0
      %7642 = vmatpush.bf16.msra.mxu0 0
      %7643 = vmatpush.bf16.msra.mxu0 0
      %7644 = vmatpush.bf16.msra.mxu0 0
      %7645 = vmatpush.bf16.msra.mxu0 0
      %7646 = vmatpush.bf16.msra.mxu0 %v7622
      %7647 = vmatpush.bf16.msra.mxu0 %v7621
      %7648 = vmatpush.bf16.msra.mxu0 %v7620
      %7649 = vmatpush.bf16.msra.mxu0 %v7619
      %7650 = vmatmul.bf16.gmra.mxu0 %v7628
      %v7651 = vpop.f32.mrf.mxu0
      %v7652 = vadd.f32 0.0, %v7651
      %v7653 = vpop.f32.mrf.mxu0
      %v7654 = vadd.f32 0.0, %v7653
      %7655 = vmatmul.bf16.gmra.mxu0 %v7631
      %v7656 = vpop.f32.mrf.mxu0
      %v7657 = vadd.f32 0.0, %v7656
      %v7658 = vpop.f32.mrf.mxu0
      %v7659 = vadd.f32 0.0, %v7658
      %7660 = vmatmul.bf16.gmra.mxu0 %v7634
      %v7661 = vpop.f32.mrf.mxu0
      %v7662 = vadd.f32 0.0, %v7661
      %v7663 = vpop.f32.mrf.mxu0
      %v7664 = vadd.f32 0.0, %v7663
      %7665 = vmatmul.bf16.gmra.mxu0 %v7637
      %v7666 = vpop.f32.mrf.mxu0
      %v7667 = vadd.f32 0.0, %v7666
      %v7668 = vpop.f32.mrf.mxu0
      %v7669 = vadd.f32 0.0, %v7668
      %7670 = vmatmul.bf16.gmra.mxu0 %v7640
      %v7671 = vpop.f32.mrf.mxu0
      %v7672 = vadd.f32 0.0, %v7671
      %v7673 = vpop.f32.mrf.mxu0
      %v7674 = vadd.f32 0.0, %v7673
      %7675 = vdwg.mxu0
      %v7676 = vadd.f32 %v7569, %v7652
      %v7677 = vadd.f32 %v7570, %v7654
      %v7678 = vadd.f32 %v7571, %v7657
      %v7679 = vadd.f32 %v7572, %v7659
      %v7680 = vadd.f32 %v7573, %v7662
      %v7681 = vadd.f32 %v7574, %v7664
      %v7682 = vadd.f32 %v7575, %v7667
      %v7683 = vadd.f32 %v7576, %v7669
      %v7684 = vadd.f32 %v7577, %v7672
      %v7685 = vadd.f32 %v7578, %v7674
      %v7686 = vld [vmem:[#allocation8 + $0xb] sm:$0xff]
      %v7687 = vld [vmem:[#allocation8 + $0x13] sm:$0xff]
      %v7688 = vld [vmem:[#allocation8 + $0x1b] sm:$0xff]
      %v7689 = vld [vmem:[#allocation8 + $0x23] sm:$0xff]
      %v7690 = vld [vmem:[#allocation8 + $0x2b] sm:$0xff]
      %v7691 = vld [vmem:[#allocation8 + $0x33] sm:$0xff]
      %v7692 = vld [vmem:[#allocation8 + $0x3b] sm:$0xff]
      %v7693 = vld [vmem:[#allocation8 + $0x43] sm:$0xff]
      %v7694 = vld [vmem:[#allocation8 + $0x4b] sm:$0xff]
      %v7695 = vld [vmem:[#allocation8 + $0x53] sm:$0x3f]
      %v7696 = vpack.c.bf16 %v7687, %v7686
      %v7697 = vpack.c.bf16 %v7689, %v7688
      %v7698 = vpack.c.bf16 %v7691, %v7690
      %v7699 = vpack.c.bf16 %v7693, %v7692
      %v7700 = vpack.c.bf16 %v7695, %v7694
      %s7701 = scalar_lea.vmem %s21, 128
      %v7702 = vld [vmem:[%s7701] sm:$0xf]
      %v7703 = vld [vmem:[%s7701 + $0x4] sm:$0xf]
      %v7704 = vld [vmem:[%s7701 + $0x8] sm:$0xf]
      %v7705 = vld [vmem:[%s7701 + $0xc] sm:$0xf]
      %v7706 = vld [vmem:[%s7701 + $0x10] sm:$0xf]
      %v7707 = vld [vmem:[%s7701 + $0x14] sm:$0xf]
      %v7708 = vld [vmem:[%s7701 + $0x18] sm:$0xf]
      %v7709 = vld [vmem:[%s7701 + $0x1c] sm:$0xf]
      %v7718 = vunpack.c.l.b16 %v7702
      %v7719 = vunpack.c.l.b16 %v7703
      %v7720 = vunpack.c.l.b16 %v7704
      %v7721 = vunpack.c.l.b16 %v7705
      %v7722 = vunpack.c.l.b16 %v7706
      %v7723 = vunpack.c.l.b16 %v7707
      %v7724 = vunpack.c.l.b16 %v7708
      %v7725 = vunpack.c.l.b16 %v7709
      %v7726 = vpack.c.b16 %v7719, %v7718
      %v7727 = vpack.c.b16 %v7721, %v7720
      %v7728 = vpack.c.b16 %v7723, %v7722
      %v7729 = vpack.c.b16 %v7725, %v7724
      %v7735 = vsel %vm770, %v7696, 0
      %v7738 = vsel %vm770, %v7697, 0
      %v7741 = vsel %vm770, %v7698, 0
      %v7744 = vsel %vm770, %v7699, 0
      %v7747 = vsel %vm770, %v7700, 0
      %7749 = vmatpush.bf16.msra.mxu0 0
      %7750 = vmatpush.bf16.msra.mxu0 0
      %7751 = vmatpush.bf16.msra.mxu0 0
      %7752 = vmatpush.bf16.msra.mxu0 0
      %7753 = vmatpush.bf16.msra.mxu0 %v7729
      %7754 = vmatpush.bf16.msra.mxu0 %v7728
      %7755 = vmatpush.bf16.msra.mxu0 %v7727
      %7756 = vmatpush.bf16.msra.mxu0 %v7726
      %7757 = vmatmul.bf16.gmra.mxu0 %v7735
      %v7758 = vpop.f32.mrf.mxu0
      %v7759 = vadd.f32 0.0, %v7758
      %v7760 = vpop.f32.mrf.mxu0
      %v7761 = vadd.f32 0.0, %v7760
      %7762 = vmatmul.bf16.gmra.mxu0 %v7738
      %v7763 = vpop.f32.mrf.mxu0
      %v7764 = vadd.f32 0.0, %v7763
      %v7765 = vpop.f32.mrf.mxu0
      %v7766 = vadd.f32 0.0, %v7765
      %7767 = vmatmul.bf16.gmra.mxu0 %v7741
      %v7768 = vpop.f32.mrf.mxu0
      %v7769 = vadd.f32 0.0, %v7768
      %v7770 = vpop.f32.mrf.mxu0
      %v7771 = vadd.f32 0.0, %v7770
      %7772 = vmatmul.bf16.gmra.mxu0 %v7744
      %v7773 = vpop.f32.mrf.mxu0
      %v7774 = vadd.f32 0.0, %v7773
      %v7775 = vpop.f32.mrf.mxu0
      %v7776 = vadd.f32 0.0, %v7775
      %7777 = vmatmul.bf16.gmra.mxu0 %v7747
      %v7778 = vpop.f32.mrf.mxu0
      %v7779 = vadd.f32 0.0, %v7778
      %v7780 = vpop.f32.mrf.mxu0
      %v7781 = vadd.f32 0.0, %v7780
      %7782 = vdwg.mxu0
      %v7783 = vadd.f32 %v7676, %v7759
      %v7784 = vadd.f32 %v7677, %v7761
      %v7785 = vadd.f32 %v7678, %v7764
      %v7786 = vadd.f32 %v7679, %v7766
      %v7787 = vadd.f32 %v7680, %v7769
      %v7788 = vadd.f32 %v7681, %v7771
      %v7789 = vadd.f32 %v7682, %v7774
      %v7790 = vadd.f32 %v7683, %v7776
      %v7791 = vadd.f32 %v7684, %v7779
      %v7792 = vadd.f32 %v7685, %v7781
      %v7793 = vld [vmem:[#allocation8 + $0xc] sm:$0xff]
      %v7794 = vld [vmem:[#allocation8 + $0x14] sm:$0xff]
      %v7795 = vld [vmem:[#allocation8 + $0x1c] sm:$0xff]
      %v7796 = vld [vmem:[#allocation8 + $0x24] sm:$0xff]
      %v7797 = vld [vmem:[#allocation8 + $0x2c] sm:$0xff]
      %v7798 = vld [vmem:[#allocation8 + $0x34] sm:$0xff]
      %v7799 = vld [vmem:[#allocation8 + $0x3c] sm:$0xff]
      %v7800 = vld [vmem:[#allocation8 + $0x44] sm:$0xff]
      %v7801 = vld [vmem:[#allocation8 + $0x4c] sm:$0xff]
      %v7802 = vld [vmem:[#allocation8 + $0x54] sm:$0x3f]
      %v7803 = vpack.c.bf16 %v7794, %v7793
      %v7804 = vpack.c.bf16 %v7796, %v7795
      %v7805 = vpack.c.bf16 %v7798, %v7797
      %v7806 = vpack.c.bf16 %v7800, %v7799
      %v7807 = vpack.c.bf16 %v7802, %v7801
      %s7808 = scalar_lea.vmem %s21, 160
      %v7809 = vld [vmem:[%s7808] sm:$0xf]
      %v7810 = vld [vmem:[%s7808 + $0x4] sm:$0xf]
      %v7811 = vld [vmem:[%s7808 + $0x8] sm:$0xf]
      %v7812 = vld [vmem:[%s7808 + $0xc] sm:$0xf]
      %v7813 = vld [vmem:[%s7808 + $0x10] sm:$0xf]
      %v7814 = vld [vmem:[%s7808 + $0x14] sm:$0xf]
      %v7815 = vld [vmem:[%s7808 + $0x18] sm:$0xf]
      %v7816 = vld [vmem:[%s7808 + $0x1c] sm:$0xf]
      %v7825 = vunpack.c.l.b16 %v7809
      %v7826 = vunpack.c.l.b16 %v7810
      %v7827 = vunpack.c.l.b16 %v7811
      %v7828 = vunpack.c.l.b16 %v7812
      %v7829 = vunpack.c.l.b16 %v7813
      %v7830 = vunpack.c.l.b16 %v7814
      %v7831 = vunpack.c.l.b16 %v7815
      %v7832 = vunpack.c.l.b16 %v7816
      %v7833 = vpack.c.b16 %v7826, %v7825
      %v7834 = vpack.c.b16 %v7828, %v7827
      %v7835 = vpack.c.b16 %v7830, %v7829
      %v7836 = vpack.c.b16 %v7832, %v7831
      %v7842 = vsel %vm770, %v7803, 0
      %v7845 = vsel %vm770, %v7804, 0
      %v7848 = vsel %vm770, %v7805, 0
      %v7851 = vsel %vm770, %v7806, 0
      %v7854 = vsel %vm770, %v7807, 0
      %7856 = vmatpush.bf16.msra.mxu0 0
      %7857 = vmatpush.bf16.msra.mxu0 0
      %7858 = vmatpush.bf16.msra.mxu0 0
      %7859 = vmatpush.bf16.msra.mxu0 0
      %7860 = vmatpush.bf16.msra.mxu0 %v7836
      %7861 = vmatpush.bf16.msra.mxu0 %v7835
      %7862 = vmatpush.bf16.msra.mxu0 %v7834
      %7863 = vmatpush.bf16.msra.mxu0 %v7833
      %7864 = vmatmul.bf16.gmra.mxu0 %v7842
      %v7865 = vpop.f32.mrf.mxu0
      %v7866 = vadd.f32 0.0, %v7865
      %v7867 = vpop.f32.mrf.mxu0
      %v7868 = vadd.f32 0.0, %v7867
      %7869 = vmatmul.bf16.gmra.mxu0 %v7845
      %v7870 = vpop.f32.mrf.mxu0
      %v7871 = vadd.f32 0.0, %v7870
      %v7872 = vpop.f32.mrf.mxu0
      %v7873 = vadd.f32 0.0, %v7872
      %7874 = vmatmul.bf16.gmra.mxu0 %v7848
      %v7875 = vpop.f32.mrf.mxu0
      %v7876 = vadd.f32 0.0, %v7875
      %v7877 = vpop.f32.mrf.mxu0
      %v7878 = vadd.f32 0.0, %v7877
      %7879 = vmatmul.bf16.gmra.mxu0 %v7851
      %v7880 = vpop.f32.mrf.mxu0
      %v7881 = vadd.f32 0.0, %v7880
      %v7882 = vpop.f32.mrf.mxu0
      %v7883 = vadd.f32 0.0, %v7882
      %7884 = vmatmul.bf16.gmra.mxu0 %v7854
      %v7885 = vpop.f32.mrf.mxu0
      %v7886 = vadd.f32 0.0, %v7885
      %v7887 = vpop.f32.mrf.mxu0
      %v7888 = vadd.f32 0.0, %v7887
      %7889 = vdwg.mxu0
      %v7890 = vadd.f32 %v7783, %v7866
      %v7891 = vadd.f32 %v7784, %v7868
      %v7892 = vadd.f32 %v7785, %v7871
      %v7893 = vadd.f32 %v7786, %v7873
      %v7894 = vadd.f32 %v7787, %v7876
      %v7895 = vadd.f32 %v7788, %v7878
      %v7896 = vadd.f32 %v7789, %v7881
      %v7897 = vadd.f32 %v7790, %v7883
      %v7898 = vadd.f32 %v7791, %v7886
      %v7899 = vadd.f32 %v7792, %v7888
      %v7900 = vld [vmem:[#allocation8 + $0x14] sm:$0xff]
      %v7901 = vld [vmem:[#allocation8 + $0x1c] sm:$0xff]
      %v7902 = vld [vmem:[#allocation8 + $0x24] sm:$0xff]
      %v7903 = vld [vmem:[#allocation8 + $0x2c] sm:$0xff]
      %v7904 = vld [vmem:[#allocation8 + $0x34] sm:$0xff]
      %v7905 = vld [vmem:[#allocation8 + $0x3c] sm:$0xff]
      %v7906 = vld [vmem:[#allocation8 + $0x44] sm:$0xff]
      %v7907 = vld [vmem:[#allocation8 + $0x4c] sm:$0xff]
      %v7908 = vld [vmem:[#allocation8 + $0x54] sm:$0xff]
      %v7909 = vld [vmem:[#allocation8 + $0x5c] sm:$0x3f]
      %v7910 = vpack.c.bf16 %v7901, %v7900
      %v7911 = vpack.c.bf16 %v7903, %v7902
      %v7912 = vpack.c.bf16 %v7905, %v7904
      %v7913 = vpack.c.bf16 %v7907, %v7906
      %v7914 = vpack.c.bf16 %v7909, %v7908
      %s7915 = scalar_lea.vmem %s21, 192
      %v7916 = vld [vmem:[%s7915] sm:$0xf]
      %v7917 = vld [vmem:[%s7915 + $0x4] sm:$0xf]
      %v7918 = vld [vmem:[%s7915 + $0x8] sm:$0xf]
      %v7919 = vld [vmem:[%s7915 + $0xc] sm:$0xf]
      %v7920 = vld [vmem:[%s7915 + $0x10] sm:$0xf]
      %v7921 = vld [vmem:[%s7915 + $0x14] sm:$0xf]
      %v7922 = vld [vmem:[%s7915 + $0x18] sm:$0xf]
      %v7923 = vld [vmem:[%s7915 + $0x1c] sm:$0xf]
      %v7932 = vunpack.c.l.b16 %v7916
      %v7933 = vunpack.c.l.b16 %v7917
      %v7934 = vunpack.c.l.b16 %v7918
      %v7935 = vunpack.c.l.b16 %v7919
      %v7936 = vunpack.c.l.b16 %v7920
      %v7937 = vunpack.c.l.b16 %v7921
      %v7938 = vunpack.c.l.b16 %v7922
      %v7939 = vunpack.c.l.b16 %v7923
      %v7940 = vpack.c.b16 %v7933, %v7932
      %v7941 = vpack.c.b16 %v7935, %v7934
      %v7942 = vpack.c.b16 %v7937, %v7936
      %v7943 = vpack.c.b16 %v7939, %v7938
      %v7949 = vsel %vm770, %v7910, 0
      %v7952 = vsel %vm770, %v7911, 0
      %v7955 = vsel %vm770, %v7912, 0
      %v7958 = vsel %vm770, %v7913, 0
      %v7961 = vsel %vm770, %v7914, 0
      %7963 = vmatpush.bf16.msra.mxu0 0
      %7964 = vmatpush.bf16.msra.mxu0 0
      %7965 = vmatpush.bf16.msra.mxu0 0
      %7966 = vmatpush.bf16.msra.mxu0 0
      %7967 = vmatpush.bf16.msra.mxu0 %v7943
      %7968 = vmatpush.bf16.msra.mxu0 %v7942
      %7969 = vmatpush.bf16.msra.mxu0 %v7941
      %7970 = vmatpush.bf16.msra.mxu0 %v7940
      %7971 = vmatmul.bf16.gmra.mxu0 %v7949
      %v7972 = vpop.f32.mrf.mxu0
      %v7973 = vadd.f32 0.0, %v7972
      %v7974 = vpop.f32.mrf.mxu0
      %v7975 = vadd.f32 0.0, %v7974
      %7976 = vmatmul.bf16.gmra.mxu0 %v7952
      %v7977 = vpop.f32.mrf.mxu0
      %v7978 = vadd.f32 0.0, %v7977
      %v7979 = vpop.f32.mrf.mxu0
      %v7980 = vadd.f32 0.0, %v7979
      %7981 = vmatmul.bf16.gmra.mxu0 %v7955
      %v7982 = vpop.f32.mrf.mxu0
      %v7983 = vadd.f32 0.0, %v7982
      %v7984 = vpop.f32.mrf.mxu0
      %v7985 = vadd.f32 0.0, %v7984
      %7986 = vmatmul.bf16.gmra.mxu0 %v7958
      %v7987 = vpop.f32.mrf.mxu0
      %v7988 = vadd.f32 0.0, %v7987
      %v7989 = vpop.f32.mrf.mxu0
      %v7990 = vadd.f32 0.0, %v7989
      %7991 = vmatmul.bf16.gmra.mxu0 %v7961
      %v7992 = vpop.f32.mrf.mxu0
      %v7993 = vadd.f32 0.0, %v7992
      %v7994 = vpop.f32.mrf.mxu0
      %v7995 = vadd.f32 0.0, %v7994
      %7996 = vdwg.mxu0
      %v7997 = vadd.f32 %v7890, %v7973
      %v7998 = vadd.f32 %v7891, %v7975
      %v7999 = vadd.f32 %v7892, %v7978
      %v8000 = vadd.f32 %v7893, %v7980
      %v8001 = vadd.f32 %v7894, %v7983
      %v8002 = vadd.f32 %v7895, %v7985
      %v8003 = vadd.f32 %v7896, %v7988
      %v8004 = vadd.f32 %v7897, %v7990
      %v8005 = vadd.f32 %v7898, %v7993
      %v8006 = vadd.f32 %v7899, %v7995
      %v8007 = vld [vmem:[#allocation8 + $0x15] sm:$0xff]
      %v8008 = vld [vmem:[#allocation8 + $0x1d] sm:$0xff]
      %v8009 = vld [vmem:[#allocation8 + $0x25] sm:$0xff]
      %v8010 = vld [vmem:[#allocation8 + $0x2d] sm:$0xff]
      %v8011 = vld [vmem:[#allocation8 + $0x35] sm:$0xff]
      %v8012 = vld [vmem:[#allocation8 + $0x3d] sm:$0xff]
      %v8013 = vld [vmem:[#allocation8 + $0x45] sm:$0xff]
      %v8014 = vld [vmem:[#allocation8 + $0x4d] sm:$0xff]
      %v8015 = vld [vmem:[#allocation8 + $0x55] sm:$0xff]
      %v8016 = vld [vmem:[#allocation8 + $0x5d] sm:$0x3f]
      %v8017 = vpack.c.bf16 %v8008, %v8007
      %v8018 = vpack.c.bf16 %v8010, %v8009
      %v8019 = vpack.c.bf16 %v8012, %v8011
      %v8020 = vpack.c.bf16 %v8014, %v8013
      %v8021 = vpack.c.bf16 %v8016, %v8015
      %s8022 = scalar_lea.vmem %s21, 224
      %v8023 = vld [vmem:[%s8022] sm:$0xf]
      %v8024 = vld [vmem:[%s8022 + $0x4] sm:$0xf]
      %v8025 = vld [vmem:[%s8022 + $0x8] sm:$0xf]
      %v8026 = vld [vmem:[%s8022 + $0xc] sm:$0xf]
      %v8027 = vld [vmem:[%s8022 + $0x10] sm:$0xf]
      %v8028 = vld [vmem:[%s8022 + $0x14] sm:$0xf]
      %v8029 = vld [vmem:[%s8022 + $0x18] sm:$0xf]
      %v8030 = vld [vmem:[%s8022 + $0x1c] sm:$0xf]
      %v8039 = vunpack.c.l.b16 %v8023
      %v8040 = vunpack.c.l.b16 %v8024
      %v8041 = vunpack.c.l.b16 %v8025
      %v8042 = vunpack.c.l.b16 %v8026
      %v8043 = vunpack.c.l.b16 %v8027
      %v8044 = vunpack.c.l.b16 %v8028
      %v8045 = vunpack.c.l.b16 %v8029
      %v8046 = vunpack.c.l.b16 %v8030
      %v8047 = vpack.c.b16 %v8040, %v8039
      %v8048 = vpack.c.b16 %v8042, %v8041
      %v8049 = vpack.c.b16 %v8044, %v8043
      %v8050 = vpack.c.b16 %v8046, %v8045
      %v8056 = vsel %vm770, %v8017, 0
      %v8059 = vsel %vm770, %v8018, 0
      %v8062 = vsel %vm770, %v8019, 0
      %v8065 = vsel %vm770, %v8020, 0
      %v8068 = vsel %vm770, %v8021, 0
      %8070 = vmatpush.bf16.msra.mxu0 0
      %8071 = vmatpush.bf16.msra.mxu0 0
      %8072 = vmatpush.bf16.msra.mxu0 0
      %8073 = vmatpush.bf16.msra.mxu0 0
      %8074 = vmatpush.bf16.msra.mxu0 %v8050
      %8075 = vmatpush.bf16.msra.mxu0 %v8049
      %8076 = vmatpush.bf16.msra.mxu0 %v8048
      %8077 = vmatpush.bf16.msra.mxu0 %v8047
      %8078 = vmatmul.bf16.gmra.mxu0 %v8056
      %v8079 = vpop.f32.mrf.mxu0
      %v8080 = vadd.f32 0.0, %v8079
      %v8081 = vpop.f32.mrf.mxu0
      %v8082 = vadd.f32 0.0, %v8081
      %8083 = vmatmul.bf16.gmra.mxu0 %v8059
      %v8084 = vpop.f32.mrf.mxu0
      %v8085 = vadd.f32 0.0, %v8084
      %v8086 = vpop.f32.mrf.mxu0
      %v8087 = vadd.f32 0.0, %v8086
      %8088 = vmatmul.bf16.gmra.mxu0 %v8062
      %v8089 = vpop.f32.mrf.mxu0
      %v8090 = vadd.f32 0.0, %v8089
      %v8091 = vpop.f32.mrf.mxu0
      %v8092 = vadd.f32 0.0, %v8091
      %8093 = vmatmul.bf16.gmra.mxu0 %v8065
      %v8094 = vpop.f32.mrf.mxu0
      %v8095 = vadd.f32 0.0, %v8094
      %v8096 = vpop.f32.mrf.mxu0
      %v8097 = vadd.f32 0.0, %v8096
      %8098 = vmatmul.bf16.gmra.mxu0 %v8068
      %v8099 = vpop.f32.mrf.mxu0
      %v8100 = vadd.f32 0.0, %v8099
      %v8101 = vpop.f32.mrf.mxu0
      %v8102 = vadd.f32 0.0, %v8101
      %8103 = vdwg.mxu0
      %v8104 = vadd.f32 %v7997, %v8080
      %v8105 = vadd.f32 %v7998, %v8082
      %v8106 = vadd.f32 %v7999, %v8085
      %v8107 = vadd.f32 %v8000, %v8087
      %v8108 = vadd.f32 %v8001, %v8090
      %v8109 = vadd.f32 %v8002, %v8092
      %v8110 = vadd.f32 %v8003, %v8095
      %v8111 = vadd.f32 %v8004, %v8097
      %v8112 = vadd.f32 %v8005, %v8100
      %v8113 = vadd.f32 %v8006, %v8102
      %v8114 = vld [vmem:[#allocation8 + $0x16] sm:$0xff]
      %v8115 = vld [vmem:[#allocation8 + $0x1e] sm:$0xff]
      %v8116 = vld [vmem:[#allocation8 + $0x26] sm:$0xff]
      %v8117 = vld [vmem:[#allocation8 + $0x2e] sm:$0xff]
      %v8118 = vld [vmem:[#allocation8 + $0x36] sm:$0xff]
      %v8119 = vld [vmem:[#allocation8 + $0x3e] sm:$0xff]
      %v8120 = vld [vmem:[#allocation8 + $0x46] sm:$0xff]
      %v8121 = vld [vmem:[#allocation8 + $0x4e] sm:$0xff]
      %v8122 = vld [vmem:[#allocation8 + $0x56] sm:$0xff]
      %v8123 = vld [vmem:[#allocation8 + $0x5e] sm:$0x3f]
      %v8124 = vpack.c.bf16 %v8115, %v8114
      %v8125 = vpack.c.bf16 %v8117, %v8116
      %v8126 = vpack.c.bf16 %v8119, %v8118
      %v8127 = vpack.c.bf16 %v8121, %v8120
      %v8128 = vpack.c.bf16 %v8123, %v8122
      %s8129 = scalar_lea.vmem %s21, 256
      %v8130 = vld [vmem:[%s8129] sm:$0xf]
      %v8131 = vld [vmem:[%s8129 + $0x4] sm:$0xf]
      %v8132 = vld [vmem:[%s8129 + $0x8] sm:$0xf]
      %v8133 = vld [vmem:[%s8129 + $0xc] sm:$0xf]
      %v8134 = vld [vmem:[%s8129 + $0x10] sm:$0xf]
      %v8135 = vld [vmem:[%s8129 + $0x14] sm:$0xf]
      %v8136 = vld [vmem:[%s8129 + $0x18] sm:$0xf]
      %v8137 = vld [vmem:[%s8129 + $0x1c] sm:$0xf]
      %v8146 = vunpack.c.l.b16 %v8130
      %v8147 = vunpack.c.l.b16 %v8131
      %v8148 = vunpack.c.l.b16 %v8132
      %v8149 = vunpack.c.l.b16 %v8133
      %v8150 = vunpack.c.l.b16 %v8134
      %v8151 = vunpack.c.l.b16 %v8135
      %v8152 = vunpack.c.l.b16 %v8136
      %v8153 = vunpack.c.l.b16 %v8137
      %v8154 = vpack.c.b16 %v8147, %v8146
      %v8155 = vpack.c.b16 %v8149, %v8148
      %v8156 = vpack.c.b16 %v8151, %v8150
      %v8157 = vpack.c.b16 %v8153, %v8152
      %v8163 = vsel %vm770, %v8124, 0
      %v8166 = vsel %vm770, %v8125, 0
      %v8169 = vsel %vm770, %v8126, 0
      %v8172 = vsel %vm770, %v8127, 0
      %v8175 = vsel %vm770, %v8128, 0
      %8177 = vmatpush.bf16.msra.mxu0 0
      %8178 = vmatpush.bf16.msra.mxu0 0
      %8179 = vmatpush.bf16.msra.mxu0 0
      %8180 = vmatpush.bf16.msra.mxu0 0
      %8181 = vmatpush.bf16.msra.mxu0 %v8157
      %8182 = vmatpush.bf16.msra.mxu0 %v8156
      %8183 = vmatpush.bf16.msra.mxu0 %v8155
      %8184 = vmatpush.bf16.msra.mxu0 %v8154
      %8185 = vmatmul.bf16.gmra.mxu0 %v8163
      %v8186 = vpop.f32.mrf.mxu0
      %v8187 = vadd.f32 0.0, %v8186
      %v8188 = vpop.f32.mrf.mxu0
      %v8189 = vadd.f32 0.0, %v8188
      %8190 = vmatmul.bf16.gmra.mxu0 %v8166
      %v8191 = vpop.f32.mrf.mxu0
      %v8192 = vadd.f32 0.0, %v8191
      %v8193 = vpop.f32.mrf.mxu0
      %v8194 = vadd.f32 0.0, %v8193
      %8195 = vmatmul.bf16.gmra.mxu0 %v8169
      %v8196 = vpop.f32.mrf.mxu0
      %v8197 = vadd.f32 0.0, %v8196
      %v8198 = vpop.f32.mrf.mxu0
      %v8199 = vadd.f32 0.0, %v8198
      %8200 = vmatmul.bf16.gmra.mxu0 %v8172
      %v8201 = vpop.f32.mrf.mxu0
      %v8202 = vadd.f32 0.0, %v8201
      %v8203 = vpop.f32.mrf.mxu0
      %v8204 = vadd.f32 0.0, %v8203
      %8205 = vmatmul.bf16.gmra.mxu0 %v8175
      %v8206 = vpop.f32.mrf.mxu0
      %v8207 = vadd.f32 0.0, %v8206
      %v8208 = vpop.f32.mrf.mxu0
      %v8209 = vadd.f32 0.0, %v8208
      %8210 = vdwg.mxu0
      %v8211 = vadd.f32 %v8104, %v8187
      %v8212 = vadd.f32 %v8105, %v8189
      %v8213 = vadd.f32 %v8106, %v8192
      %v8214 = vadd.f32 %v8107, %v8194
      %v8215 = vadd.f32 %v8108, %v8197
      %v8216 = vadd.f32 %v8109, %v8199
      %v8217 = vadd.f32 %v8110, %v8202
      %v8218 = vadd.f32 %v8111, %v8204
      %v8219 = vadd.f32 %v8112, %v8207
      %v8220 = vadd.f32 %v8113, %v8209
      %v8221 = vld [vmem:[%s22] sm:$0x1]
      %v8223 = vperm.slane %v8221, 0
      %v8225 = vadd.f32 %v8211, %v8223
      %v8226 = vadd.f32 %v8212, %v8223
      %v8227 = vadd.f32 %v8213, %v8223
      %v8228 = vadd.f32 %v8214, %v8223
      %v8229 = vadd.f32 %v8215, %v8223
      %v8230 = vadd.f32 %v8216, %v8223
      %v8231 = vadd.f32 %v8217, %v8223
      %v8232 = vadd.f32 %v8218, %v8223
      %v8233 = vadd.f32 %v8219, %v8223
      %v8234 = vadd.f32 %v8220, %v8223
      %v8235 = vld [vmem:[%s9] sm:$0xff]
      %v8236 = vld [vmem:[%s9 + $0x8] sm:$0xff]
      %v8237 = vld [vmem:[%s9 + $0x10] sm:$0xff]
      %v8238 = vld [vmem:[%s9 + $0x18] sm:$0xff]
      %v8240 = vsel %vm1713, %v8235, 0
      %v8243 = vsel %vm1713, %v8236, 0
      %v8246 = vsel %vm1713, %v8237, 0
      %v8249 = vsel %vm1713, %v8238, 0
      %vm8251 = vcmask 1045504
      %v8253 = vsel %vm8251, %v8234, 0
      %8255 = vmatpush.msra.mxu0 0.0
      %8256 = vmatpush.msra.mxu0 0.0
      %8257 = vmatpush.msra.mxu0 0.0
      %8258 = vmatpush.msra.mxu0 0.0
      %8259 = vmatpush.msra.mxu0 0.0
      %8260 = vmatpush.msra.mxu0 0.0
      %8261 = vmatpush.msra.mxu0 %v8253
      %8262 = vmatpush.msra.mxu0 %v8233
      %8263 = vmatpush.msra.mxu0 %v8232
      %8264 = vmatpush.msra.mxu0 %v8231
      %8265 = vmatpush.msra.mxu0 %v8230
      %8266 = vmatpush.msra.mxu0 %v8229
      %8267 = vmatpush.msra.mxu0 %v8228
      %8268 = vmatpush.msra.mxu0 %v8227
      %8269 = vmatpush.msra.mxu0 %v8226
      %8270 = vmatpush.msra.mxu0 %v8225
      %8271 = vmatmul.f32.gmra.mxu0 %v8240
      %v8272 = vpop.f32.mrf.mxu0
      %v8273 = vadd.f32 0.0, %v8272
      %8274 = vmatmul.f32.gmra.mxu0 %v8243
      %v8275 = vpop.f32.mrf.mxu0
      %v8276 = vadd.f32 0.0, %v8275
      %8277 = vmatmul.f32.gmra.mxu0 %v8246
      %v8278 = vpop.f32.mrf.mxu0
      %v8279 = vadd.f32 0.0, %v8278
      %8280 = vmatmul.f32.gmra.mxu0 %v8249
      %v8281 = vpop.f32.mrf.mxu0
      %v8282 = vadd.f32 0.0, %v8281
      %8283 = vdwg.mxu0
      %v8284 = vld [vmem:[%s10] sm:$0xff]
      %v8285 = vld [vmem:[%s10 + $0x8] sm:$0xff]
      %v8286 = vld [vmem:[%s10 + $0x10] sm:$0xff]
      %v8287 = vld [vmem:[%s10 + $0x18] sm:$0xff]
      %v8288 = vld [vmem:[%s10 + $0x20] sm:$0xff]
      %v8289 = vld [vmem:[%s10 + $0x28] sm:$0xff]
      %v8290 = vld [vmem:[%s10 + $0x30] sm:$0xff]
      %v8291 = vld [vmem:[%s10 + $0x38] sm:$0xff]
      %s8292 = scalar_lea.vmem %s9, 32
      %v8293 = vld [vmem:[%s8292] sm:$0xff]
      %v8294 = vld [vmem:[%s8292 + $0x8] sm:$0xff]
      %v8295 = vld [vmem:[%s8292 + $0x10] sm:$0xff]
      %v8296 = vld [vmem:[%s8292 + $0x18] sm:$0xff]
      %v8298 = vsel %vm1713, %v8293, 0
      %v8301 = vsel %vm1713, %v8294, 0
      %v8304 = vsel %vm1713, %v8295, 0
      %v8307 = vsel %vm1713, %v8296, 0
      %8309 = vmatpush.msra.mxu0 0.0
      %8310 = vmatpush.msra.mxu0 0.0
      %8311 = vmatpush.msra.mxu0 0.0
      %8312 = vmatpush.msra.mxu0 0.0
      %8313 = vmatpush.msra.mxu0 0.0
      %8314 = vmatpush.msra.mxu0 0.0
      %8315 = vmatpush.msra.mxu0 %v8253
      %8316 = vmatpush.msra.mxu0 %v8233
      %8317 = vmatpush.msra.mxu0 %v8232
      %8318 = vmatpush.msra.mxu0 %v8231
      %8319 = vmatpush.msra.mxu0 %v8230
      %8320 = vmatpush.msra.mxu0 %v8229
      %8321 = vmatpush.msra.mxu0 %v8228
      %8322 = vmatpush.msra.mxu0 %v8227
      %8323 = vmatpush.msra.mxu0 %v8226
      %8324 = vmatpush.msra.mxu0 %v8225
      %8325 = vmatmul.f32.gmra.mxu0 %v8298
      %v8326 = vpop.f32.mrf.mxu0
      %v8327 = vadd.f32 0.0, %v8326
      %8328 = vmatmul.f32.gmra.mxu0 %v8301
      %v8329 = vpop.f32.mrf.mxu0
      %v8330 = vadd.f32 0.0, %v8329
      %8331 = vmatmul.f32.gmra.mxu0 %v8304
      %v8332 = vpop.f32.mrf.mxu0
      %v8333 = vadd.f32 0.0, %v8332
      %8334 = vmatmul.f32.gmra.mxu0 %v8307
      %v8335 = vpop.f32.mrf.mxu0
      %v8336 = vadd.f32 0.0, %v8335
      %8337 = vdwg.mxu0
      %s8338 = scalar_lea.vmem %s10, 64
      %v8339 = vld [vmem:[%s8338] sm:$0xff]
      %v8340 = vld [vmem:[%s8338 + $0x8] sm:$0xff]
      %v8341 = vld [vmem:[%s8338 + $0x10] sm:$0xff]
      %v8342 = vld [vmem:[%s8338 + $0x18] sm:$0xff]
      %v8343 = vld [vmem:[%s8338 + $0x20] sm:$0xff]
      %v8344 = vld [vmem:[%s8338 + $0x28] sm:$0xff]
      %v8345 = vld [vmem:[%s8338 + $0x30] sm:$0xff]
      %v8346 = vld [vmem:[%s8338 + $0x38] sm:$0xff]
      %v8348 = vsel %vm770, %v8327, 0
      %v8351 = vsel %vm770, %v8330, 0
      %v8354 = vsel %vm770, %v8333, 0
      %v8357 = vsel %vm770, %v8336, 0
      %8359 = vmatpush.msra.mxu0 0.0
      %8360 = vmatpush.msra.mxu0 0.0
      %8361 = vmatpush.msra.mxu0 0.0
      %8362 = vmatpush.msra.mxu0 0.0
      %8363 = vmatpush.msra.mxu0 0.0
      %8364 = vmatpush.msra.mxu0 0.0
      %8365 = vmatpush.msra.mxu0 0.0
      %8366 = vmatpush.msra.mxu0 0.0
      %8367 = vmatpush.msra.mxu0 %v8346
      %8368 = vmatpush.msra.mxu0 %v8345
      %8369 = vmatpush.msra.mxu0 %v8344
      %8370 = vmatpush.msra.mxu0 %v8343
      %8371 = vmatpush.msra.mxu0 %v8342
      %8372 = vmatpush.msra.mxu0 %v8341
      %8373 = vmatpush.msra.mxu0 %v8340
      %8374 = vmatpush.msra.mxu0 %v8339
      %8375 = vmatmul.f32.gmra.mxu0 %v8348
      %v8376 = vpop.f32.mrf.mxu0
      %v8377 = vadd.f32 0.0, %v8376
      %8378 = vmatmul.f32.gmra.mxu0 %v8351
      %v8379 = vpop.f32.mrf.mxu0
      %v8380 = vadd.f32 0.0, %v8379
      %8381 = vmatmul.f32.gmra.mxu0 %v8354
      %v8382 = vpop.f32.mrf.mxu0
      %v8383 = vadd.f32 0.0, %v8382
      %8384 = vmatmul.f32.gmra.mxu0 %v8357
      %v8385 = vpop.f32.mrf.mxu0
      %v8386 = vadd.f32 0.0, %v8385
      %8387 = vdwg.mxu0
      %v8389 = vsel %vm770, %v8273, 0
      %v8392 = vsel %vm770, %v8276, 0
      %v8395 = vsel %vm770, %v8279, 0
      %v8398 = vsel %vm770, %v8282, 0
      %8400 = vmatpush.msra.mxu0 0.0
      %8401 = vmatpush.msra.mxu0 0.0
      %8402 = vmatpush.msra.mxu0 0.0
      %8403 = vmatpush.msra.mxu0 0.0
      %8404 = vmatpush.msra.mxu0 0.0
      %8405 = vmatpush.msra.mxu0 0.0
      %8406 = vmatpush.msra.mxu0 0.0
      %8407 = vmatpush.msra.mxu0 0.0
      %8408 = vmatpush.msra.mxu0 %v8291
      %8409 = vmatpush.msra.mxu0 %v8290
      %8410 = vmatpush.msra.mxu0 %v8289
      %8411 = vmatpush.msra.mxu0 %v8288
      %8412 = vmatpush.msra.mxu0 %v8287
      %8413 = vmatpush.msra.mxu0 %v8286
      %8414 = vmatpush.msra.mxu0 %v8285
      %8415 = vmatpush.msra.mxu0 %v8284
      %8416 = vmatmul.f32.gmra.mxu0 %v8389
      %v8417 = vpop.f32.mrf.mxu0
      %v8418 = vadd.f32 %v8377, %v8417
      %8419 = vmatmul.f32.gmra.mxu0 %v8392
      %v8420 = vpop.f32.mrf.mxu0
      %v8421 = vadd.f32 %v8380, %v8420
      %8422 = vmatmul.f32.gmra.mxu0 %v8395
      %v8423 = vpop.f32.mrf.mxu0
      %v8424 = vadd.f32 %v8383, %v8423
      %8425 = vmatmul.f32.gmra.mxu0 %v8398
      %v8426 = vpop.f32.mrf.mxu0
      %v8427 = vadd.f32 %v8386, %v8426
      %8428 = vdwg.mxu0
      %8429 = vst [vmem:[%s710] sm:$0xff] %v8418
      %8430 = vst [vmem:[%s710 + $0x8] sm:$0xff] %v8421
      %8431 = vst [vmem:[%s710 + $0x10] sm:$0xff] %v8424
      %8432 = vst [vmem:[%s710 + $0x18] sm:$0xff] %v8427
      %p8433 = scmp.lt.s32.totalorder %s34, 1
      %s8434 = scalar_select %p8433, %s34, 1
      %s8435 = smul.addr %s8434, 4
      %s8436 = smul.addr %s8435, 8
      %s8437 = scalar_lea.vmem %s23, %s8436
      // Predicated region
      $region113: #{unet3d_layer_forward.1} parent=111 // pred_check
        %p8438 = pneg %p540
      $region114: #{unet3d_layer_forward.1} parent=111 // pred_check_branch
        %8440 = sbr.rel (%p8438) target = $region116
      $region115: #{unet3d_layer_forward.1} parent=111 // pred_region
        _
      $region116: #{unet3d_layer_forward.1} parent=111 // pred_fallthru
        _
    $region112: #{unet3d_layer_forward.1} parent=5 // pred_fallthru
      _
    %p8441 = scmp.le.s32.totalorder 2, %s29
    // Predicated region
    $region117: #{unet3d_layer_forward.1} parent=5 // pred_check
      %p8442 = pneg %p8441
    $region118: #{unet3d_layer_forward.1} parent=5 // pred_check_branch
      %8444 = sbr.rel (%p8442) target = $region120
    $region119: #{unet3d_layer_forward.1} parent=5 // pred_region
      %s8445 = ssub.s32 %s29, 2
      // Predicated region
      $region121: #{unet3d_layer_forward.1} parent=119 // pred_check
        %p8446 = pneg %p546
      $region122: #{unet3d_layer_forward.1} parent=119 // pred_check_branch
        %8448 = sbr.rel (%p8446) target = $region124
      $region123: #{unet3d_layer_forward.1} parent=119 // pred_region
        %p8449 = scmp.lt.s32.totalorder %s35, 1
        %s8450 = scalar_select %p8449, %s35, 1
        %s8451 = smul.addr %s8450, 4
        %s8452 = smul.addr %s8451, 8
        %s8453 = scalar_lea.vmem %s23, %s8452
      $region124: #{unet3d_layer_forward.1} parent=119 // pred_fallthru
        _
    $region120: #{unet3d_layer_forward.1} parent=5 // pred_fallthru
      _
  $region6: #{unet3d_layer_forward.1} parent=0 // loop_footer
    %s33 = sadd.s32 1, %s29
  $region7: #{unet3d_layer_forward.1} parent=0 // loop_footer_branch
    %28 = sbr.rel target = $region3
  $region8: #{unet3d_layer_forward.1} parent=0 // loop_exit
    _

</llo_original>
